<compile_context>
chip_gen: v6e
topology: v6e:2x2x1
jax: 0.10.0
libtpu: 0.0.40
codegen_flags: <defaults>
</compile_context>

<pallas_src>
import functools

import numpy as np
import jax
import jax.numpy as jnp
from jax.experimental import pallas as pl
from jax.experimental.pallas import tpu as pltpu

LRELU_SLOPE = 0.2
BN_EPS = 1e-5
KSIZE = 4


# ----------------------- constant selection matrices ----------------------- #
@functools.lru_cache(maxsize=None)
def _row_selectors(N, Hin, Ho, stride, pad):
    """R[kh, (n,oh), (n,hin)] = 1 where hin = stride*oh - pad + kh (if in range)."""
    R = np.zeros((KSIZE, N * Ho, N * Hin), np.float32)
    for kh in range(KSIZE):
        for n in range(N):
            for oh in range(Ho):
                hin = stride * oh - pad + kh
                if 0 <= hin < Hin:
                    R[kh, n * Ho + oh, n * Hin + hin] = 1.0
    return R


@functools.lru_cache(maxsize=None)
def _col_selectors(Win, Wo, stride, pad):
    """C[kw, win, ow] = 1 where win = stride*ow - pad + kw (if in range)."""
    C = np.zeros((KSIZE, Win, Wo), np.float32)
    for kw in range(KSIZE):
        for ow in range(Wo):
            win = stride * ow - pad + kw
            if 0 <= win < Win:
                C[kw, win, ow] = 1.0
    return C


@functools.lru_cache(maxsize=None)
def _channel_fold(Wo, Cout):
    """S[(ow,c), c'] = 1 iff c == c'  (collapses the (ow, c) lane axis to channels)."""
    S = np.zeros((Wo * Cout, Cout), np.float32)
    for ow in range(Wo):
        for c in range(Cout):
            S[ow * Cout + c, c] = 1.0
    return S


# ------------------------------ fused kernel ------------------------------- #
def _make_kernel(meta):
    """meta: per layer, ('bn', N*Ho*Wo) or ('sigmoid', None)."""

    def kernel(*refs):
        in_refs, o_ref = refs[:-1], refs[-1]
        idx = 0
        a = in_refs[idx][...]                      # bf16 activation [(n,h), (w,c)]
        idx += 1
        for kind, count in meta:
            r_ref, g_ref = in_refs[idx], in_refs[idx + 1]
            idx += 2
            a_bf = a.astype(jnp.bfloat16)
            y = None
            for kh in range(KSIZE):                # unrolled: 4 matmul pairs / layer
                t = jnp.dot(a_bf, g_ref[kh], preferred_element_type=jnp.float32)
                yk = jnp.dot(r_ref[kh], t, preferred_element_type=jnp.float32)
                y = yk if y is None else y + yk
            if kind == "bn":
                s, st = in_refs[idx][...], in_refs[idx + 1][...]
                gamma, beta = in_refs[idx + 2][...], in_refs[idx + 3][...]
                idx += 4
                inv_n = 1.0 / float(count)
                # single-pass batch statistics (training-mode BN, biased variance)
                col_sum = jnp.sum(y, axis=0, keepdims=True)        # [1, Wo*C]
                col_sqs = jnp.sum(y * y, axis=0, keepdims=True)    # [1, Wo*C]
                mean = jnp.dot(col_sum, s, preferred_element_type=jnp.float32) * inv_n
                ex2 = jnp.dot(col_sqs, s, preferred_element_type=jnp.float32) * inv_n
                var = ex2 - mean * mean
                scale = gamma * jax.lax.rsqrt(var + BN_EPS)        # [1, C]
                shift = beta - mean * scale                        # [1, C]
                z = (y * jnp.dot(scale, st, preferred_element_type=jnp.float32)
                     + jnp.dot(shift, st, preferred_element_type=jnp.float32))
                a = jnp.where(z > 0, z, LRELU_SLOPE * z)           # LeakyReLU(0.2)
            else:                                                  # final layer
                bias = in_refs[idx][...]
                idx += 1
                o_ref[...] = jax.nn.sigmoid(y + bias)

    return kernel


def _full_spec(arr):
    nd = arr.ndim
    return pl.BlockSpec(arr.shape, lambda i, _nd=nd: (0,) * _nd)


# ------------------------------- wrapper ----------------------------------- #
@jax.jit
def discriminator_forward(x_nchw, params):
    """params: list of (w[OIHW], b[Cout], gamma or None, beta or None) per layer."""
    cfgs = [(2, 1), (2, 1), (2, 1), (2, 1), (1, 0)]     # (stride, pad); k = 4
    N, Cin, Hin, Win = x_nchw.shape
    a0 = jnp.transpose(x_nchw, (0, 2, 3, 1)).reshape(N * Hin, Win * Cin)

    operands = [a0.astype(jnp.bfloat16)]
    meta = []
    for (w, b, g, bt), (stride, pad) in zip(params, cfgs):
        Cout = w.shape[0]
        Ho = (Hin + 2 * pad - KSIZE) // stride + 1
        Wo = (Win + 2 * pad - KSIZE) // stride + 1
        R = _row_selectors(N, Hin, Ho, stride, pad)            # [4, N*Ho, N*Hin]
        Csel = _col_selectors(Win, Wo, stride, pad)            # [4, Win, Wo]
        wm = jnp.transpose(w, (2, 3, 1, 0))                    # [kh, kw, Cin, Cout]
        # G[kh] = sum_kw Csel[kw] (x) W[:, :, kh, kw]^T  ->  [Win*Cin, Wo*Cout]
        G = jnp.einsum("wab,hwco->hacbo", Csel, wm).reshape(KSIZE, Win * Cin, Wo * Cout)
        operands += [jnp.asarray(R), G.astype(jnp.bfloat16)]
        if g is not None:
            # conv + BatchNorm + LeakyReLU.  Conv bias dropped: it is cancelled
            # exactly by the BN mean subtraction (training-mode batch stats).
            S = _channel_fold(Wo, Cout)                        # [Wo*Cout, Cout]
            operands += [jnp.asarray(S), jnp.asarray(np.ascontiguousarray(S.T)),
                         g.reshape(1, Cout), bt.reshape(1, Cout)]
            meta.append(("bn", N * Ho * Wo))
        else:                                                  # conv + bias + sigmoid
            operands += [b.reshape(1, Cout)]
            meta.append(("sigmoid", None))
        Hin, Win, Cin = Ho, Wo, Cout

    assert Hin == 1 and Win == 1 and Cin == 1, "final conv must reduce to 1x1x1"
    out = pl.pallas_call(
        _make_kernel(tuple(meta)),
        grid=(1,),
        in_specs=[_full_spec(a) for a in operands],
        out_specs=pl.BlockSpec((N, 1), lambda i: (0, 0)),
        out_shape=jax.ShapeDtypeStruct((N, 1), jnp.float32),
        compiler_params=pltpu.CompilerParams(dimension_semantics=("arbitrary",)),
    )(*operands)
    return out.reshape(N, 1, 1, 1)                             # NCHW like PyTorch


# ------------------------------ parameters --------------------------------- #
def make_params(dim, key):
    cfg_d = [
        (3, dim // 8, True),
        (dim // 8, dim // 4, True),
        (dim // 4, dim // 2, True),
        (dim // 2, dim, True),
        (dim, 1, False),
    ]
    params = []
    for (cin, cout, has_bn) in cfg_d:
        key, kw_, kb_ = jax.random.split(key, 3)
        w = 0.02 * jax.random.normal(kw_, (cout, cin, 4, 4), jnp.float32)  # OIHW
        b = 0.01 * jax.random.normal(kb_, (cout,), jnp.float32)
        if has_bn:
            gmm = jnp.ones((cout,), jnp.float32)
            bt = jnp.zeros((cout,), jnp.float32)
        else:
            gmm, bt = None, None
        params.append((w, b, gmm, bt))
    return params


# --------------------------- pure-JAX reference ----------------------------- #
def reference_forward(x_nchw, params):
    cfgs = [(2, 1), (2, 1), (2, 1), (2, 1), (1, 0)]
    x = x_nchw
    for (w, b, g, bt), (stride, pad) in zip(params, cfgs):
        y = jax.lax.conv_general_dilated(
            x, w, (stride, stride), [(pad, pad), (pad, pad)],
            dimension_numbers=("NCHW", "OIHW", "NCHW"))
        y = y + b.reshape(1, -1, 1, 1)
        if g is not None:
            mean = y.mean(axis=(0, 2, 3), keepdims=True)
            var = ((y - mean) ** 2).mean(axis=(0, 2, 3), keepdims=True)
            y = (y - mean) * jax.lax.rsqrt(var + BN_EPS) * g.reshape(1, -1, 1, 1) \
                + bt.reshape(1, -1, 1, 1)
            y = jnp.where(y > 0, y, LRELU_SLOPE * y)
        else:
            y = jax.nn.sigmoid(y)
        x = y
    return x


if __name__ == "__main__":
    key = jax.random.PRNGKey(0)
    k_x, k_p = jax.random.split(key)

    # spatial size 64 is required so the final 4x4 / stride-1 / pad-0 conv is valid
    dim = 32
    x = jax.random.normal(k_x, (2, 3, 64, 64), jnp.float32)    # NCHW like PyTorch
    params = make_params(dim, k_p)

    out = discriminator_forward(x, params)
    out = jax.block_until_ready(out)
    assert out.shape == (2, 1, 1, 1), out.shape

    ref = jax.block_until_ready(reference_forward(x, params))
    assert jnp.allclose(out, ref, rtol=5e-2, atol=5e-2), (out, ref)

    print("KERNEL_OK")
</pallas_src>

<mosaic_0001>
module attributes {stable_mosaic.version = 11 : i64} {
  func.func @kernel(%arg0: i32, %arg1: memref<128x192xbf16, #tpu.memory_space<vmem>>, %arg2: memref<4x64x128xf32, #tpu.memory_space<vmem>>, %arg3: memref<4x192x128xbf16, #tpu.memory_space<vmem>>, %arg4: memref<128x4xf32, #tpu.memory_space<vmem>>, %arg5: memref<4x128xf32, #tpu.memory_space<vmem>>, %arg6: memref<1x4xf32, #tpu.memory_space<vmem>>, %arg7: memref<1x4xf32, #tpu.memory_space<vmem>>, %arg8: memref<4x32x64xf32, #tpu.memory_space<vmem>>, %arg9: memref<4x128x128xbf16, #tpu.memory_space<vmem>>, %arg10: memref<128x8xf32, #tpu.memory_space<vmem>>, %arg11: memref<8x128xf32, #tpu.memory_space<vmem>>, %arg12: memref<1x8xf32, #tpu.memory_space<vmem>>, %arg13: memref<1x8xf32, #tpu.memory_space<vmem>>, %arg14: memref<4x16x32xf32, #tpu.memory_space<vmem>>, %arg15: memref<4x128x128xbf16, #tpu.memory_space<vmem>>, %arg16: memref<128x16xf32, #tpu.memory_space<vmem>>, %arg17: memref<16x128xf32, #tpu.memory_space<vmem>>, %arg18: memref<1x16xf32, #tpu.memory_space<vmem>>, %arg19: memref<1x16xf32, #tpu.memory_space<vmem>>, %arg20: memref<4x8x16xf32, #tpu.memory_space<vmem>>, %arg21: memref<4x128x128xbf16, #tpu.memory_space<vmem>>, %arg22: memref<128x32xf32, #tpu.memory_space<vmem>>, %arg23: memref<32x128xf32, #tpu.memory_space<vmem>>, %arg24: memref<1x32xf32, #tpu.memory_space<vmem>>, %arg25: memref<1x32xf32, #tpu.memory_space<vmem>>, %arg26: memref<4x2x8xf32, #tpu.memory_space<vmem>>, %arg27: memref<4x128x1xbf16, #tpu.memory_space<vmem>>, %arg28: memref<1x1xf32, #tpu.memory_space<vmem>>, %arg29: memref<2x1xf32, #tpu.memory_space<vmem>>) attributes {dimension_semantics = [#tpu.dimension_semantics<arbitrary>], iteration_bounds = array<i64: 1>, scalar_prefetch = 0 : i64, scratch_operands = 0 : i64, tpu.core_type = #tpu.core_type<tc>, window_params = [{pipeline_mode = #tpu.pipeline_mode<synchronous>, transform_indices = @transform_0, window_bounds = array<i64: 128, 192>}, {pipeline_mode = #tpu.pipeline_mode<synchronous>, transform_indices = @transform_1, window_bounds = array<i64: 4, 64, 128>}, {pipeline_mode = #tpu.pipeline_mode<synchronous>, transform_indices = @transform_2, window_bounds = array<i64: 4, 192, 128>}, {pipeline_mode = #tpu.pipeline_mode<synchronous>, transform_indices = @transform_3, window_bounds = array<i64: 128, 4>}, {pipeline_mode = #tpu.pipeline_mode<synchronous>, transform_indices = @transform_4, window_bounds = array<i64: 4, 128>}, {pipeline_mode = #tpu.pipeline_mode<synchronous>, transform_indices = @transform_5, window_bounds = array<i64: 1, 4>}, {pipeline_mode = #tpu.pipeline_mode<synchronous>, transform_indices = @transform_6, window_bounds = array<i64: 1, 4>}, {pipeline_mode = #tpu.pipeline_mode<synchronous>, transform_indices = @transform_7, window_bounds = array<i64: 4, 32, 64>}, {pipeline_mode = #tpu.pipeline_mode<synchronous>, transform_indices = @transform_8, window_bounds = array<i64: 4, 128, 128>}, {pipeline_mode = #tpu.pipeline_mode<synchronous>, transform_indices = @transform_9, window_bounds = array<i64: 128, 8>}, {pipeline_mode = #tpu.pipeline_mode<synchronous>, transform_indices = @transform_10, window_bounds = array<i64: 8, 128>}, {pipeline_mode = #tpu.pipeline_mode<synchronous>, transform_indices = @transform_11, window_bounds = array<i64: 1, 8>}, {pipeline_mode = #tpu.pipeline_mode<synchronous>, transform_indices = @transform_12, window_bounds = array<i64: 1, 8>}, {pipeline_mode = #tpu.pipeline_mode<synchronous>, transform_indices = @transform_13, window_bounds = array<i64: 4, 16, 32>}, {pipeline_mode = #tpu.pipeline_mode<synchronous>, transform_indices = @transform_14, window_bounds = array<i64: 4, 128, 128>}, {pipeline_mode = #tpu.pipeline_mode<synchronous>, transform_indices = @transform_15, window_bounds = array<i64: 128, 16>}, {pipeline_mode = #tpu.pipeline_mode<synchronous>, transform_indices = @transform_16, window_bounds = array<i64: 16, 128>}, {pipeline_mode = #tpu.pipeline_mode<synchronous>, transform_indices = @transform_17, window_bounds = array<i64: 1, 16>}, {pipeline_mode = #tpu.pipeline_mode<synchronous>, transform_indices = @transform_18, window_bounds = array<i64: 1, 16>}, {pipeline_mode = #tpu.pipeline_mode<synchronous>, transform_indices = @transform_19, window_bounds = array<i64: 4, 8, 16>}, {pipeline_mode = #tpu.pipeline_mode<synchronous>, transform_indices = @transform_20, window_bounds = array<i64: 4, 128, 128>}, {pipeline_mode = #tpu.pipeline_mode<synchronous>, transform_indices = @transform_21, window_bounds = array<i64: 128, 32>}, {pipeline_mode = #tpu.pipeline_mode<synchronous>, transform_indices = @transform_22, window_bounds = array<i64: 32, 128>}, {pipeline_mode = #tpu.pipeline_mode<synchronous>, transform_indices = @transform_23, window_bounds = array<i64: 1, 32>}, {pipeline_mode = #tpu.pipeline_mode<synchronous>, transform_indices = @transform_24, window_bounds = array<i64: 1, 32>}, {pipeline_mode = #tpu.pipeline_mode<synchronous>, transform_indices = @transform_25, window_bounds = array<i64: 4, 2, 8>}, {pipeline_mode = #tpu.pipeline_mode<synchronous>, transform_indices = @transform_26, window_bounds = array<i64: 4, 128, 1>}, {pipeline_mode = #tpu.pipeline_mode<synchronous>, transform_indices = @transform_27, window_bounds = array<i64: 1, 1>}, {pipeline_mode = #tpu.pipeline_mode<synchronous>, transform_indices = @transform_28, window_bounds = array<i64: 2, 1>}]} {
    %c0 = arith.constant 0 : index
    %c0_0 = arith.constant 0 : index
    %0 = vector.load %arg1[%c0, %c0_0] : memref<128x192xbf16, #tpu.memory_space<vmem>>, vector<128x192xbf16>
    %c0_1 = arith.constant 0 : index
    %c0_2 = arith.constant 0 : index
    %c0_3 = arith.constant 0 : index
    %1 = vector.load %arg3[%c0_1, %c0_2, %c0_3] : memref<4x192x128xbf16, #tpu.memory_space<vmem>>, vector<1x192x128xbf16>
    %2 = vector.shape_cast %1 : vector<1x192x128xbf16> to vector<192x128xbf16>
    %cst = arith.constant dense<0.000000e+00> : vector<128x128xf32>
    %3 = tpu.matmul %0, %2, %cst {dimension_numbers = #tpu.dot_dimension_numbers<[1], [0], [0], [1], [0, 0, 1, 1], [], []>} : vector<128x192xbf16>, vector<192x128xbf16>, vector<128x128xf32> -> vector<128x128xf32>
    %c0_4 = arith.constant 0 : index
    %c0_5 = arith.constant 0 : index
    %c0_6 = arith.constant 0 : index
    %4 = vector.load %arg2[%c0_4, %c0_5, %c0_6] : memref<4x64x128xf32, #tpu.memory_space<vmem>>, vector<1x64x128xf32>
    %5 = vector.shape_cast %4 : vector<1x64x128xf32> to vector<64x128xf32>
    %cst_7 = arith.constant dense<0.000000e+00> : vector<64x128xf32>
    %6 = tpu.matmul %5, %3, %cst_7 {dimension_numbers = #tpu.dot_dimension_numbers<[1], [0], [0], [1], [0, 0, 1, 1], [], []>} : vector<64x128xf32>, vector<128x128xf32>, vector<64x128xf32> -> vector<64x128xf32>
    %c1 = arith.constant 1 : index
    %c0_8 = arith.constant 0 : index
    %c0_9 = arith.constant 0 : index
    %7 = vector.load %arg3[%c1, %c0_8, %c0_9] : memref<4x192x128xbf16, #tpu.memory_space<vmem>>, vector<1x192x128xbf16>
    %8 = vector.shape_cast %7 : vector<1x192x128xbf16> to vector<192x128xbf16>
    %cst_10 = arith.constant dense<0.000000e+00> : vector<128x128xf32>
    %9 = tpu.matmul %0, %8, %cst_10 {dimension_numbers = #tpu.dot_dimension_numbers<[1], [0], [0], [1], [0, 0, 1, 1], [], []>} : vector<128x192xbf16>, vector<192x128xbf16>, vector<128x128xf32> -> vector<128x128xf32>
    %c1_11 = arith.constant 1 : index
    %c0_12 = arith.constant 0 : index
    %c0_13 = arith.constant 0 : index
    %10 = vector.load %arg2[%c1_11, %c0_12, %c0_13] : memref<4x64x128xf32, #tpu.memory_space<vmem>>, vector<1x64x128xf32>
    %11 = vector.shape_cast %10 : vector<1x64x128xf32> to vector<64x128xf32>
    %cst_14 = arith.constant dense<0.000000e+00> : vector<64x128xf32>
    %12 = tpu.matmul %11, %9, %cst_14 {dimension_numbers = #tpu.dot_dimension_numbers<[1], [0], [0], [1], [0, 0, 1, 1], [], []>} : vector<64x128xf32>, vector<128x128xf32>, vector<64x128xf32> -> vector<64x128xf32>
    %13 = arith.addf %6, %12 : vector<64x128xf32>
    %c2 = arith.constant 2 : index
    %c0_15 = arith.constant 0 : index
    %c0_16 = arith.constant 0 : index
    %14 = vector.load %arg3[%c2, %c0_15, %c0_16] : memref<4x192x128xbf16, #tpu.memory_space<vmem>>, vector<1x192x128xbf16>
    %15 = vector.shape_cast %14 : vector<1x192x128xbf16> to vector<192x128xbf16>
    %cst_17 = arith.constant dense<0.000000e+00> : vector<128x128xf32>
    %16 = tpu.matmul %0, %15, %cst_17 {dimension_numbers = #tpu.dot_dimension_numbers<[1], [0], [0], [1], [0, 0, 1, 1], [], []>} : vector<128x192xbf16>, vector<192x128xbf16>, vector<128x128xf32> -> vector<128x128xf32>
    %c2_18 = arith.constant 2 : index
    %c0_19 = arith.constant 0 : index
    %c0_20 = arith.constant 0 : index
    %17 = vector.load %arg2[%c2_18, %c0_19, %c0_20] : memref<4x64x128xf32, #tpu.memory_space<vmem>>, vector<1x64x128xf32>
    %18 = vector.shape_cast %17 : vector<1x64x128xf32> to vector<64x128xf32>
    %cst_21 = arith.constant dense<0.000000e+00> : vector<64x128xf32>
    %19 = tpu.matmul %18, %16, %cst_21 {dimension_numbers = #tpu.dot_dimension_numbers<[1], [0], [0], [1], [0, 0, 1, 1], [], []>} : vector<64x128xf32>, vector<128x128xf32>, vector<64x128xf32> -> vector<64x128xf32>
    %20 = arith.addf %13, %19 : vector<64x128xf32>
    %c3 = arith.constant 3 : index
    %c0_22 = arith.constant 0 : index
    %c0_23 = arith.constant 0 : index
    %21 = vector.load %arg3[%c3, %c0_22, %c0_23] : memref<4x192x128xbf16, #tpu.memory_space<vmem>>, vector<1x192x128xbf16>
    %22 = vector.shape_cast %21 : vector<1x192x128xbf16> to vector<192x128xbf16>
    %cst_24 = arith.constant dense<0.000000e+00> : vector<128x128xf32>
    %23 = tpu.matmul %0, %22, %cst_24 {dimension_numbers = #tpu.dot_dimension_numbers<[1], [0], [0], [1], [0, 0, 1, 1], [], []>} : vector<128x192xbf16>, vector<192x128xbf16>, vector<128x128xf32> -> vector<128x128xf32>
    %c3_25 = arith.constant 3 : index
    %c0_26 = arith.constant 0 : index
    %c0_27 = arith.constant 0 : index
    %24 = vector.load %arg2[%c3_25, %c0_26, %c0_27] : memref<4x64x128xf32, #tpu.memory_space<vmem>>, vector<1x64x128xf32>
    %25 = vector.shape_cast %24 : vector<1x64x128xf32> to vector<64x128xf32>
    %cst_28 = arith.constant dense<0.000000e+00> : vector<64x128xf32>
    %26 = tpu.matmul %25, %23, %cst_28 {dimension_numbers = #tpu.dot_dimension_numbers<[1], [0], [0], [1], [0, 0, 1, 1], [], []>} : vector<64x128xf32>, vector<128x128xf32>, vector<64x128xf32> -> vector<64x128xf32>
    %27 = arith.addf %20, %26 : vector<64x128xf32>
    %c0_29 = arith.constant 0 : index
    %c0_30 = arith.constant 0 : index
    %28 = vector.load %arg4[%c0_29, %c0_30] : memref<128x4xf32, #tpu.memory_space<vmem>>, vector<128x4xf32>
    %c0_31 = arith.constant 0 : index
    %c0_32 = arith.constant 0 : index
    %29 = vector.load %arg5[%c0_31, %c0_32] : memref<4x128xf32, #tpu.memory_space<vmem>>, vector<4x128xf32>
    %c0_33 = arith.constant 0 : index
    %c0_34 = arith.constant 0 : index
    %30 = vector.load %arg6[%c0_33, %c0_34] : memref<1x4xf32, #tpu.memory_space<vmem>>, vector<1x4xf32>
    %c0_35 = arith.constant 0 : index
    %c0_36 = arith.constant 0 : index
    %31 = vector.load %arg7[%c0_35, %c0_36] : memref<1x4xf32, #tpu.memory_space<vmem>>, vector<1x4xf32>
    %cst_37 = arith.constant dense<0.000000e+00> : vector<128xf32>
    %32 = vector.multi_reduction <add>, %27, %cst_37 [0] : vector<64x128xf32> to vector<128xf32>
    %33 = vector.shape_cast %32 : vector<128xf32> to vector<1x128xf32>
    %34 = arith.mulf %27, %27 : vector<64x128xf32>
    %cst_38 = arith.constant dense<0.000000e+00> : vector<128xf32>
    %35 = vector.multi_reduction <add>, %34, %cst_38 [0] : vector<64x128xf32> to vector<128xf32>
    %36 = vector.shape_cast %35 : vector<128xf32> to vector<1x128xf32>
    %cst_39 = arith.constant dense<0.000000e+00> : vector<1x4xf32>
    %37 = tpu.matmul %33, %28, %cst_39 {dimension_numbers = #tpu.dot_dimension_numbers<[1], [0], [0], [1], [0, 0, 1, 1], [], []>} : vector<1x128xf32>, vector<128x4xf32>, vector<1x4xf32> -> vector<1x4xf32>
    %cst_40 = arith.constant 4.8828125E-4 : f32
    %38 = vector.broadcast %cst_40 : f32 to vector<1x4xf32>
    %39 = arith.mulf %37, %38 : vector<1x4xf32>
    %cst_41 = arith.constant dense<0.000000e+00> : vector<1x4xf32>
    %40 = tpu.matmul %36, %28, %cst_41 {dimension_numbers = #tpu.dot_dimension_numbers<[1], [0], [0], [1], [0, 0, 1, 1], [], []>} : vector<1x128xf32>, vector<128x4xf32>, vector<1x4xf32> -> vector<1x4xf32>
    %cst_42 = arith.constant 4.8828125E-4 : f32
    %41 = vector.broadcast %cst_42 : f32 to vector<1x4xf32>
    %42 = arith.mulf %40, %41 : vector<1x4xf32>
    %43 = arith.mulf %39, %39 : vector<1x4xf32>
    %44 = arith.subf %42, %43 : vector<1x4xf32>
    %cst_43 = arith.constant 9.99999974E-6 : f32
    %45 = vector.broadcast %cst_43 : f32 to vector<1x4xf32>
    %46 = arith.addf %44, %45 : vector<1x4xf32>
    %47 = math.rsqrt %46 : vector<1x4xf32>
    %48 = arith.mulf %30, %47 : vector<1x4xf32>
    %49 = arith.mulf %39, %48 : vector<1x4xf32>
    %50 = arith.subf %31, %49 : vector<1x4xf32>
    %cst_44 = arith.constant dense<0.000000e+00> : vector<1x128xf32>
    %51 = tpu.matmul %48, %29, %cst_44 {dimension_numbers = #tpu.dot_dimension_numbers<[1], [0], [0], [1], [0, 0, 1, 1], [], []>} : vector<1x4xf32>, vector<4x128xf32>, vector<1x128xf32> -> vector<1x128xf32>
    %52 = vector.broadcast %51 : vector<1x128xf32> to vector<64x128xf32>
    %53 = arith.mulf %27, %52 : vector<64x128xf32>
    %cst_45 = arith.constant dense<0.000000e+00> : vector<1x128xf32>
    %54 = tpu.matmul %50, %29, %cst_45 {dimension_numbers = #tpu.dot_dimension_numbers<[1], [0], [0], [1], [0, 0, 1, 1], [], []>} : vector<1x4xf32>, vector<4x128xf32>, vector<1x128xf32> -> vector<1x128xf32>
    %55 = vector.broadcast %54 : vector<1x128xf32> to vector<64x128xf32>
    %56 = arith.addf %53, %55 : vector<64x128xf32>
    %cst_46 = arith.constant 0.000000e+00 : f32
    %57 = vector.broadcast %cst_46 : f32 to vector<64x128xf32>
    %58 = arith.cmpf ogt, %56, %57 : vector<64x128xf32>
    %cst_47 = arith.constant 2.000000e-01 : f32
    %59 = vector.broadcast %cst_47 : f32 to vector<64x128xf32>
    %60 = arith.mulf %59, %56 : vector<64x128xf32>
    %61 = arith.select %58, %56, %60 : vector<64x128xi1>, vector<64x128xf32>
    %62 = arith.truncf %61 : vector<64x128xf32> to vector<64x128xbf16>
    %c0_48 = arith.constant 0 : index
    %c0_49 = arith.constant 0 : index
    %c0_50 = arith.constant 0 : index
    %63 = vector.load %arg9[%c0_48, %c0_49, %c0_50] : memref<4x128x128xbf16, #tpu.memory_space<vmem>>, vector<1x128x128xbf16>
    %64 = vector.shape_cast %63 : vector<1x128x128xbf16> to vector<128x128xbf16>
    %cst_51 = arith.constant dense<0.000000e+00> : vector<64x128xf32>
    %65 = tpu.matmul %62, %64, %cst_51 {dimension_numbers = #tpu.dot_dimension_numbers<[1], [0], [0], [1], [0, 0, 1, 1], [], []>} : vector<64x128xbf16>, vector<128x128xbf16>, vector<64x128xf32> -> vector<64x128xf32>
    %c0_52 = arith.constant 0 : index
    %c0_53 = arith.constant 0 : index
    %c0_54 = arith.constant 0 : index
    %66 = vector.load %arg8[%c0_52, %c0_53, %c0_54] : memref<4x32x64xf32, #tpu.memory_space<vmem>>, vector<1x32x64xf32>
    %67 = vector.shape_cast %66 : vector<1x32x64xf32> to vector<32x64xf32>
    %cst_55 = arith.constant dense<0.000000e+00> : vector<32x128xf32>
    %68 = tpu.matmul %67, %65, %cst_55 {dimension_numbers = #tpu.dot_dimension_numbers<[1], [0], [0], [1], [0, 0, 1, 1], [], []>} : vector<32x64xf32>, vector<64x128xf32>, vector<32x128xf32> -> vector<32x128xf32>
    %c1_56 = arith.constant 1 : index
    %c0_57 = arith.constant 0 : index
    %c0_58 = arith.constant 0 : index
    %69 = vector.load %arg9[%c1_56, %c0_57, %c0_58] : memref<4x128x128xbf16, #tpu.memory_space<vmem>>, vector<1x128x128xbf16>
    %70 = vector.shape_cast %69 : vector<1x128x128xbf16> to vector<128x128xbf16>
    %cst_59 = arith.constant dense<0.000000e+00> : vector<64x128xf32>
    %71 = tpu.matmul %62, %70, %cst_59 {dimension_numbers = #tpu.dot_dimension_numbers<[1], [0], [0], [1], [0, 0, 1, 1], [], []>} : vector<64x128xbf16>, vector<128x128xbf16>, vector<64x128xf32> -> vector<64x128xf32>
    %c1_60 = arith.constant 1 : index
    %c0_61 = arith.constant 0 : index
    %c0_62 = arith.constant 0 : index
    %72 = vector.load %arg8[%c1_60, %c0_61, %c0_62] : memref<4x32x64xf32, #tpu.memory_space<vmem>>, vector<1x32x64xf32>
    %73 = vector.shape_cast %72 : vector<1x32x64xf32> to vector<32x64xf32>
    %cst_63 = arith.constant dense<0.000000e+00> : vector<32x128xf32>
    %74 = tpu.matmul %73, %71, %cst_63 {dimension_numbers = #tpu.dot_dimension_numbers<[1], [0], [0], [1], [0, 0, 1, 1], [], []>} : vector<32x64xf32>, vector<64x128xf32>, vector<32x128xf32> -> vector<32x128xf32>
    %75 = arith.addf %68, %74 : vector<32x128xf32>
    %c2_64 = arith.constant 2 : index
    %c0_65 = arith.constant 0 : index
    %c0_66 = arith.constant 0 : index
    %76 = vector.load %arg9[%c2_64, %c0_65, %c0_66] : memref<4x128x128xbf16, #tpu.memory_space<vmem>>, vector<1x128x128xbf16>
    %77 = vector.shape_cast %76 : vector<1x128x128xbf16> to vector<128x128xbf16>
    %cst_67 = arith.constant dense<0.000000e+00> : vector<64x128xf32>
    %78 = tpu.matmul %62, %77, %cst_67 {dimension_numbers = #tpu.dot_dimension_numbers<[1], [0], [0], [1], [0, 0, 1, 1], [], []>} : vector<64x128xbf16>, vector<128x128xbf16>, vector<64x128xf32> -> vector<64x128xf32>
    %c2_68 = arith.constant 2 : index
    %c0_69 = arith.constant 0 : index
    %c0_70 = arith.constant 0 : index
    %79 = vector.load %arg8[%c2_68, %c0_69, %c0_70] : memref<4x32x64xf32, #tpu.memory_space<vmem>>, vector<1x32x64xf32>
    %80 = vector.shape_cast %79 : vector<1x32x64xf32> to vector<32x64xf32>
    %cst_71 = arith.constant dense<0.000000e+00> : vector<32x128xf32>
    %81 = tpu.matmul %80, %78, %cst_71 {dimension_numbers = #tpu.dot_dimension_numbers<[1], [0], [0], [1], [0, 0, 1, 1], [], []>} : vector<32x64xf32>, vector<64x128xf32>, vector<32x128xf32> -> vector<32x128xf32>
    %82 = arith.addf %75, %81 : vector<32x128xf32>
    %c3_72 = arith.constant 3 : index
    %c0_73 = arith.constant 0 : index
    %c0_74 = arith.constant 0 : index
    %83 = vector.load %arg9[%c3_72, %c0_73, %c0_74] : memref<4x128x128xbf16, #tpu.memory_space<vmem>>, vector<1x128x128xbf16>
    %84 = vector.shape_cast %83 : vector<1x128x128xbf16> to vector<128x128xbf16>
    %cst_75 = arith.constant dense<0.000000e+00> : vector<64x128xf32>
    %85 = tpu.matmul %62, %84, %cst_75 {dimension_numbers = #tpu.dot_dimension_numbers<[1], [0], [0], [1], [0, 0, 1, 1], [], []>} : vector<64x128xbf16>, vector<128x128xbf16>, vector<64x128xf32> -> vector<64x128xf32>
    %c3_76 = arith.constant 3 : index
    %c0_77 = arith.constant 0 : index
    %c0_78 = arith.constant 0 : index
    %86 = vector.load %arg8[%c3_76, %c0_77, %c0_78] : memref<4x32x64xf32, #tpu.memory_space<vmem>>, vector<1x32x64xf32>
    %87 = vector.shape_cast %86 : vector<1x32x64xf32> to vector<32x64xf32>
    %cst_79 = arith.constant dense<0.000000e+00> : vector<32x128xf32>
    %88 = tpu.matmul %87, %85, %cst_79 {dimension_numbers = #tpu.dot_dimension_numbers<[1], [0], [0], [1], [0, 0, 1, 1], [], []>} : vector<32x64xf32>, vector<64x128xf32>, vector<32x128xf32> -> vector<32x128xf32>
    %89 = arith.addf %82, %88 : vector<32x128xf32>
    %c0_80 = arith.constant 0 : index
    %c0_81 = arith.constant 0 : index
    %90 = vector.load %arg10[%c0_80, %c0_81] : memref<128x8xf32, #tpu.memory_space<vmem>>, vector<128x8xf32>
    %c0_82 = arith.constant 0 : index
    %c0_83 = arith.constant 0 : index
    %91 = vector.load %arg11[%c0_82, %c0_83] : memref<8x128xf32, #tpu.memory_space<vmem>>, vector<8x128xf32>
    %c0_84 = arith.constant 0 : index
    %c0_85 = arith.constant 0 : index
    %92 = vector.load %arg12[%c0_84, %c0_85] : memref<1x8xf32, #tpu.memory_space<vmem>>, vector<1x8xf32>
    %c0_86 = arith.constant 0 : index
    %c0_87 = arith.constant 0 : index
    %93 = vector.load %arg13[%c0_86, %c0_87] : memref<1x8xf32, #tpu.memory_space<vmem>>, vector<1x8xf32>
    %cst_88 = arith.constant dense<0.000000e+00> : vector<128xf32>
    %94 = vector.multi_reduction <add>, %89, %cst_88 [0] : vector<32x128xf32> to vector<128xf32>
    %95 = vector.shape_cast %94 : vector<128xf32> to vector<1x128xf32>
    %96 = arith.mulf %89, %89 : vector<32x128xf32>
    %cst_89 = arith.constant dense<0.000000e+00> : vector<128xf32>
    %97 = vector.multi_reduction <add>, %96, %cst_89 [0] : vector<32x128xf32> to vector<128xf32>
    %98 = vector.shape_cast %97 : vector<128xf32> to vector<1x128xf32>
    %cst_90 = arith.constant dense<0.000000e+00> : vector<1x8xf32>
    %99 = tpu.matmul %95, %90, %cst_90 {dimension_numbers = #tpu.dot_dimension_numbers<[1], [0], [0], [1], [0, 0, 1, 1], [], []>} : vector<1x128xf32>, vector<128x8xf32>, vector<1x8xf32> -> vector<1x8xf32>
    %cst_91 = arith.constant 0.001953125 : f32
    %100 = vector.broadcast %cst_91 : f32 to vector<1x8xf32>
    %101 = arith.mulf %99, %100 : vector<1x8xf32>
    %cst_92 = arith.constant dense<0.000000e+00> : vector<1x8xf32>
    %102 = tpu.matmul %98, %90, %cst_92 {dimension_numbers = #tpu.dot_dimension_numbers<[1], [0], [0], [1], [0, 0, 1, 1], [], []>} : vector<1x128xf32>, vector<128x8xf32>, vector<1x8xf32> -> vector<1x8xf32>
    %cst_93 = arith.constant 0.001953125 : f32
    %103 = vector.broadcast %cst_93 : f32 to vector<1x8xf32>
    %104 = arith.mulf %102, %103 : vector<1x8xf32>
    %105 = arith.mulf %101, %101 : vector<1x8xf32>
    %106 = arith.subf %104, %105 : vector<1x8xf32>
    %cst_94 = arith.constant 9.99999974E-6 : f32
    %107 = vector.broadcast %cst_94 : f32 to vector<1x8xf32>
    %108 = arith.addf %106, %107 : vector<1x8xf32>
    %109 = math.rsqrt %108 : vector<1x8xf32>
    %110 = arith.mulf %92, %109 : vector<1x8xf32>
    %111 = arith.mulf %101, %110 : vector<1x8xf32>
    %112 = arith.subf %93, %111 : vector<1x8xf32>
    %cst_95 = arith.constant dense<0.000000e+00> : vector<1x128xf32>
    %113 = tpu.matmul %110, %91, %cst_95 {dimension_numbers = #tpu.dot_dimension_numbers<[1], [0], [0], [1], [0, 0, 1, 1], [], []>} : vector<1x8xf32>, vector<8x128xf32>, vector<1x128xf32> -> vector<1x128xf32>
    %114 = vector.broadcast %113 : vector<1x128xf32> to vector<32x128xf32>
    %115 = arith.mulf %89, %114 : vector<32x128xf32>
    %cst_96 = arith.constant dense<0.000000e+00> : vector<1x128xf32>
    %116 = tpu.matmul %112, %91, %cst_96 {dimension_numbers = #tpu.dot_dimension_numbers<[1], [0], [0], [1], [0, 0, 1, 1], [], []>} : vector<1x8xf32>, vector<8x128xf32>, vector<1x128xf32> -> vector<1x128xf32>
    %117 = vector.broadcast %116 : vector<1x128xf32> to vector<32x128xf32>
    %118 = arith.addf %115, %117 : vector<32x128xf32>
    %cst_97 = arith.constant 0.000000e+00 : f32
    %119 = vector.broadcast %cst_97 : f32 to vector<32x128xf32>
    %120 = arith.cmpf ogt, %118, %119 : vector<32x128xf32>
    %cst_98 = arith.constant 2.000000e-01 : f32
    %121 = vector.broadcast %cst_98 : f32 to vector<32x128xf32>
    %122 = arith.mulf %121, %118 : vector<32x128xf32>
    %123 = arith.select %120, %118, %122 : vector<32x128xi1>, vector<32x128xf32>
    %124 = arith.truncf %123 : vector<32x128xf32> to vector<32x128xbf16>
    %c0_99 = arith.constant 0 : index
    %c0_100 = arith.constant 0 : index
    %c0_101 = arith.constant 0 : index
    %125 = vector.load %arg15[%c0_99, %c0_100, %c0_101] : memref<4x128x128xbf16, #tpu.memory_space<vmem>>, vector<1x128x128xbf16>
    %126 = vector.shape_cast %125 : vector<1x128x128xbf16> to vector<128x128xbf16>
    %cst_102 = arith.constant dense<0.000000e+00> : vector<32x128xf32>
    %127 = tpu.matmul %124, %126, %cst_102 {dimension_numbers = #tpu.dot_dimension_numbers<[1], [0], [0], [1], [0, 0, 1, 1], [], []>} : vector<32x128xbf16>, vector<128x128xbf16>, vector<32x128xf32> -> vector<32x128xf32>
    %c0_103 = arith.constant 0 : index
    %c0_104 = arith.constant 0 : index
    %c0_105 = arith.constant 0 : index
    %128 = vector.load %arg14[%c0_103, %c0_104, %c0_105] : memref<4x16x32xf32, #tpu.memory_space<vmem>>, vector<1x16x32xf32>
    %129 = vector.shape_cast %128 : vector<1x16x32xf32> to vector<16x32xf32>
    %cst_106 = arith.constant dense<0.000000e+00> : vector<16x128xf32>
    %130 = tpu.matmul %129, %127, %cst_106 {dimension_numbers = #tpu.dot_dimension_numbers<[1], [0], [0], [1], [0, 0, 1, 1], [], []>} : vector<16x32xf32>, vector<32x128xf32>, vector<16x128xf32> -> vector<16x128xf32>
    %c1_107 = arith.constant 1 : index
    %c0_108 = arith.constant 0 : index
    %c0_109 = arith.constant 0 : index
    %131 = vector.load %arg15[%c1_107, %c0_108, %c0_109] : memref<4x128x128xbf16, #tpu.memory_space<vmem>>, vector<1x128x128xbf16>
    %132 = vector.shape_cast %131 : vector<1x128x128xbf16> to vector<128x128xbf16>
    %cst_110 = arith.constant dense<0.000000e+00> : vector<32x128xf32>
    %133 = tpu.matmul %124, %132, %cst_110 {dimension_numbers = #tpu.dot_dimension_numbers<[1], [0], [0], [1], [0, 0, 1, 1], [], []>} : vector<32x128xbf16>, vector<128x128xbf16>, vector<32x128xf32> -> vector<32x128xf32>
    %c1_111 = arith.constant 1 : index
    %c0_112 = arith.constant 0 : index
    %c0_113 = arith.constant 0 : index
    %134 = vector.load %arg14[%c1_111, %c0_112, %c0_113] : memref<4x16x32xf32, #tpu.memory_space<vmem>>, vector<1x16x32xf32>
    %135 = vector.shape_cast %134 : vector<1x16x32xf32> to vector<16x32xf32>
    %cst_114 = arith.constant dense<0.000000e+00> : vector<16x128xf32>
    %136 = tpu.matmul %135, %133, %cst_114 {dimension_numbers = #tpu.dot_dimension_numbers<[1], [0], [0], [1], [0, 0, 1, 1], [], []>} : vector<16x32xf32>, vector<32x128xf32>, vector<16x128xf32> -> vector<16x128xf32>
    %137 = arith.addf %130, %136 : vector<16x128xf32>
    %c2_115 = arith.constant 2 : index
    %c0_116 = arith.constant 0 : index
    %c0_117 = arith.constant 0 : index
    %138 = vector.load %arg15[%c2_115, %c0_116, %c0_117] : memref<4x128x128xbf16, #tpu.memory_space<vmem>>, vector<1x128x128xbf16>
    %139 = vector.shape_cast %138 : vector<1x128x128xbf16> to vector<128x128xbf16>
    %cst_118 = arith.constant dense<0.000000e+00> : vector<32x128xf32>
    %140 = tpu.matmul %124, %139, %cst_118 {dimension_numbers = #tpu.dot_dimension_numbers<[1], [0], [0], [1], [0, 0, 1, 1], [], []>} : vector<32x128xbf16>, vector<128x128xbf16>, vector<32x128xf32> -> vector<32x128xf32>
    %c2_119 = arith.constant 2 : index
    %c0_120 = arith.constant 0 : index
    %c0_121 = arith.constant 0 : index
    %141 = vector.load %arg14[%c2_119, %c0_120, %c0_121] : memref<4x16x32xf32, #tpu.memory_space<vmem>>, vector<1x16x32xf32>
    %142 = vector.shape_cast %141 : vector<1x16x32xf32> to vector<16x32xf32>
    %cst_122 = arith.constant dense<0.000000e+00> : vector<16x128xf32>
    %143 = tpu.matmul %142, %140, %cst_122 {dimension_numbers = #tpu.dot_dimension_numbers<[1], [0], [0], [1], [0, 0, 1, 1], [], []>} : vector<16x32xf32>, vector<32x128xf32>, vector<16x128xf32> -> vector<16x128xf32>
    %144 = arith.addf %137, %143 : vector<16x128xf32>
    %c3_123 = arith.constant 3 : index
    %c0_124 = arith.constant 0 : index
    %c0_125 = arith.constant 0 : index
    %145 = vector.load %arg15[%c3_123, %c0_124, %c0_125] : memref<4x128x128xbf16, #tpu.memory_space<vmem>>, vector<1x128x128xbf16>
    %146 = vector.shape_cast %145 : vector<1x128x128xbf16> to vector<128x128xbf16>
    %cst_126 = arith.constant dense<0.000000e+00> : vector<32x128xf32>
    %147 = tpu.matmul %124, %146, %cst_126 {dimension_numbers = #tpu.dot_dimension_numbers<[1], [0], [0], [1], [0, 0, 1, 1], [], []>} : vector<32x128xbf16>, vector<128x128xbf16>, vector<32x128xf32> -> vector<32x128xf32>
    %c3_127 = arith.constant 3 : index
    %c0_128 = arith.constant 0 : index
    %c0_129 = arith.constant 0 : index
    %148 = vector.load %arg14[%c3_127, %c0_128, %c0_129] : memref<4x16x32xf32, #tpu.memory_space<vmem>>, vector<1x16x32xf32>
    %149 = vector.shape_cast %148 : vector<1x16x32xf32> to vector<16x32xf32>
    %cst_130 = arith.constant dense<0.000000e+00> : vector<16x128xf32>
    %150 = tpu.matmul %149, %147, %cst_130 {dimension_numbers = #tpu.dot_dimension_numbers<[1], [0], [0], [1], [0, 0, 1, 1], [], []>} : vector<16x32xf32>, vector<32x128xf32>, vector<16x128xf32> -> vector<16x128xf32>
    %151 = arith.addf %144, %150 : vector<16x128xf32>
    %c0_131 = arith.constant 0 : index
    %c0_132 = arith.constant 0 : index
    %152 = vector.load %arg16[%c0_131, %c0_132] : memref<128x16xf32, #tpu.memory_space<vmem>>, vector<128x16xf32>
    %c0_133 = arith.constant 0 : index
    %c0_134 = arith.constant 0 : index
    %153 = vector.load %arg17[%c0_133, %c0_134] : memref<16x128xf32, #tpu.memory_space<vmem>>, vector<16x128xf32>
    %c0_135 = arith.constant 0 : index
    %c0_136 = arith.constant 0 : index
    %154 = vector.load %arg18[%c0_135, %c0_136] : memref<1x16xf32, #tpu.memory_space<vmem>>, vector<1x16xf32>
    %c0_137 = arith.constant 0 : index
    %c0_138 = arith.constant 0 : index
    %155 = vector.load %arg19[%c0_137, %c0_138] : memref<1x16xf32, #tpu.memory_space<vmem>>, vector<1x16xf32>
    %cst_139 = arith.constant dense<0.000000e+00> : vector<128xf32>
    %156 = vector.multi_reduction <add>, %151, %cst_139 [0] : vector<16x128xf32> to vector<128xf32>
    %157 = vector.shape_cast %156 : vector<128xf32> to vector<1x128xf32>
    %158 = arith.mulf %151, %151 : vector<16x128xf32>
    %cst_140 = arith.constant dense<0.000000e+00> : vector<128xf32>
    %159 = vector.multi_reduction <add>, %158, %cst_140 [0] : vector<16x128xf32> to vector<128xf32>
    %160 = vector.shape_cast %159 : vector<128xf32> to vector<1x128xf32>
    %cst_141 = arith.constant dense<0.000000e+00> : vector<1x16xf32>
    %161 = tpu.matmul %157, %152, %cst_141 {dimension_numbers = #tpu.dot_dimension_numbers<[1], [0], [0], [1], [0, 0, 1, 1], [], []>} : vector<1x128xf32>, vector<128x16xf32>, vector<1x16xf32> -> vector<1x16xf32>
    %cst_142 = arith.constant 7.812500e-03 : f32
    %162 = vector.broadcast %cst_142 : f32 to vector<1x16xf32>
    %163 = arith.mulf %161, %162 : vector<1x16xf32>
    %cst_143 = arith.constant dense<0.000000e+00> : vector<1x16xf32>
    %164 = tpu.matmul %160, %152, %cst_143 {dimension_numbers = #tpu.dot_dimension_numbers<[1], [0], [0], [1], [0, 0, 1, 1], [], []>} : vector<1x128xf32>, vector<128x16xf32>, vector<1x16xf32> -> vector<1x16xf32>
    %cst_144 = arith.constant 7.812500e-03 : f32
    %165 = vector.broadcast %cst_144 : f32 to vector<1x16xf32>
    %166 = arith.mulf %164, %165 : vector<1x16xf32>
    %167 = arith.mulf %163, %163 : vector<1x16xf32>
    %168 = arith.subf %166, %167 : vector<1x16xf32>
    %cst_145 = arith.constant 9.99999974E-6 : f32
    %169 = vector.broadcast %cst_145 : f32 to vector<1x16xf32>
    %170 = arith.addf %168, %169 : vector<1x16xf32>
    %171 = math.rsqrt %170 : vector<1x16xf32>
    %172 = arith.mulf %154, %171 : vector<1x16xf32>
    %173 = arith.mulf %163, %172 : vector<1x16xf32>
    %174 = arith.subf %155, %173 : vector<1x16xf32>
    %cst_146 = arith.constant dense<0.000000e+00> : vector<1x128xf32>
    %175 = tpu.matmul %172, %153, %cst_146 {dimension_numbers = #tpu.dot_dimension_numbers<[1], [0], [0], [1], [0, 0, 1, 1], [], []>} : vector<1x16xf32>, vector<16x128xf32>, vector<1x128xf32> -> vector<1x128xf32>
    %176 = vector.broadcast %175 : vector<1x128xf32> to vector<16x128xf32>
    %177 = arith.mulf %151, %176 : vector<16x128xf32>
    %cst_147 = arith.constant dense<0.000000e+00> : vector<1x128xf32>
    %178 = tpu.matmul %174, %153, %cst_147 {dimension_numbers = #tpu.dot_dimension_numbers<[1], [0], [0], [1], [0, 0, 1, 1], [], []>} : vector<1x16xf32>, vector<16x128xf32>, vector<1x128xf32> -> vector<1x128xf32>
    %179 = vector.broadcast %178 : vector<1x128xf32> to vector<16x128xf32>
    %180 = arith.addf %177, %179 : vector<16x128xf32>
    %cst_148 = arith.constant 0.000000e+00 : f32
    %181 = vector.broadcast %cst_148 : f32 to vector<16x128xf32>
    %182 = arith.cmpf ogt, %180, %181 : vector<16x128xf32>
    %cst_149 = arith.constant 2.000000e-01 : f32
    %183 = vector.broadcast %cst_149 : f32 to vector<16x128xf32>
    %184 = arith.mulf %183, %180 : vector<16x128xf32>
    %185 = arith.select %182, %180, %184 : vector<16x128xi1>, vector<16x128xf32>
    %186 = arith.truncf %185 : vector<16x128xf32> to vector<16x128xbf16>
    %c0_150 = arith.constant 0 : index
    %c0_151 = arith.constant 0 : index
    %c0_152 = arith.constant 0 : index
    %187 = vector.load %arg21[%c0_150, %c0_151, %c0_152] : memref<4x128x128xbf16, #tpu.memory_space<vmem>>, vector<1x128x128xbf16>
    %188 = vector.shape_cast %187 : vector<1x128x128xbf16> to vector<128x128xbf16>
    %cst_153 = arith.constant dense<0.000000e+00> : vector<16x128xf32>
    %189 = tpu.matmul %186, %188, %cst_153 {dimension_numbers = #tpu.dot_dimension_numbers<[1], [0], [0], [1], [0, 0, 1, 1], [], []>} : vector<16x128xbf16>, vector<128x128xbf16>, vector<16x128xf32> -> vector<16x128xf32>
    %c0_154 = arith.constant 0 : index
    %c0_155 = arith.constant 0 : index
    %c0_156 = arith.constant 0 : index
    %190 = vector.load %arg20[%c0_154, %c0_155, %c0_156] : memref<4x8x16xf32, #tpu.memory_space<vmem>>, vector<1x8x16xf32>
    %191 = vector.shape_cast %190 : vector<1x8x16xf32> to vector<8x16xf32>
    %cst_157 = arith.constant dense<0.000000e+00> : vector<8x128xf32>
    %192 = tpu.matmul %191, %189, %cst_157 {dimension_numbers = #tpu.dot_dimension_numbers<[1], [0], [0], [1], [0, 0, 1, 1], [], []>} : vector<8x16xf32>, vector<16x128xf32>, vector<8x128xf32> -> vector<8x128xf32>
    %c1_158 = arith.constant 1 : index
    %c0_159 = arith.constant 0 : index
    %c0_160 = arith.constant 0 : index
    %193 = vector.load %arg21[%c1_158, %c0_159, %c0_160] : memref<4x128x128xbf16, #tpu.memory_space<vmem>>, vector<1x128x128xbf16>
    %194 = vector.shape_cast %193 : vector<1x128x128xbf16> to vector<128x128xbf16>
    %cst_161 = arith.constant dense<0.000000e+00> : vector<16x128xf32>
    %195 = tpu.matmul %186, %194, %cst_161 {dimension_numbers = #tpu.dot_dimension_numbers<[1], [0], [0], [1], [0, 0, 1, 1], [], []>} : vector<16x128xbf16>, vector<128x128xbf16>, vector<16x128xf32> -> vector<16x128xf32>
    %c1_162 = arith.constant 1 : index
    %c0_163 = arith.constant 0 : index
    %c0_164 = arith.constant 0 : index
    %196 = vector.load %arg20[%c1_162, %c0_163, %c0_164] : memref<4x8x16xf32, #tpu.memory_space<vmem>>, vector<1x8x16xf32>
    %197 = vector.shape_cast %196 : vector<1x8x16xf32> to vector<8x16xf32>
    %cst_165 = arith.constant dense<0.000000e+00> : vector<8x128xf32>
    %198 = tpu.matmul %197, %195, %cst_165 {dimension_numbers = #tpu.dot_dimension_numbers<[1], [0], [0], [1], [0, 0, 1, 1], [], []>} : vector<8x16xf32>, vector<16x128xf32>, vector<8x128xf32> -> vector<8x128xf32>
    %199 = arith.addf %192, %198 : vector<8x128xf32>
    %c2_166 = arith.constant 2 : index
    %c0_167 = arith.constant 0 : index
    %c0_168 = arith.constant 0 : index
    %200 = vector.load %arg21[%c2_166, %c0_167, %c0_168] : memref<4x128x128xbf16, #tpu.memory_space<vmem>>, vector<1x128x128xbf16>
    %201 = vector.shape_cast %200 : vector<1x128x128xbf16> to vector<128x128xbf16>
    %cst_169 = arith.constant dense<0.000000e+00> : vector<16x128xf32>
    %202 = tpu.matmul %186, %201, %cst_169 {dimension_numbers = #tpu.dot_dimension_numbers<[1], [0], [0], [1], [0, 0, 1, 1], [], []>} : vector<16x128xbf16>, vector<128x128xbf16>, vector<16x128xf32> -> vector<16x128xf32>
    %c2_170 = arith.constant 2 : index
    %c0_171 = arith.constant 0 : index
    %c0_172 = arith.constant 0 : index
    %203 = vector.load %arg20[%c2_170, %c0_171, %c0_172] : memref<4x8x16xf32, #tpu.memory_space<vmem>>, vector<1x8x16xf32>
    %204 = vector.shape_cast %203 : vector<1x8x16xf32> to vector<8x16xf32>
    %cst_173 = arith.constant dense<0.000000e+00> : vector<8x128xf32>
    %205 = tpu.matmul %204, %202, %cst_173 {dimension_numbers = #tpu.dot_dimension_numbers<[1], [0], [0], [1], [0, 0, 1, 1], [], []>} : vector<8x16xf32>, vector<16x128xf32>, vector<8x128xf32> -> vector<8x128xf32>
    %206 = arith.addf %199, %205 : vector<8x128xf32>
    %c3_174 = arith.constant 3 : index
    %c0_175 = arith.constant 0 : index
    %c0_176 = arith.constant 0 : index
    %207 = vector.load %arg21[%c3_174, %c0_175, %c0_176] : memref<4x128x128xbf16, #tpu.memory_space<vmem>>, vector<1x128x128xbf16>
    %208 = vector.shape_cast %207 : vector<1x128x128xbf16> to vector<128x128xbf16>
    %cst_177 = arith.constant dense<0.000000e+00> : vector<16x128xf32>
    %209 = tpu.matmul %186, %208, %cst_177 {dimension_numbers = #tpu.dot_dimension_numbers<[1], [0], [0], [1], [0, 0, 1, 1], [], []>} : vector<16x128xbf16>, vector<128x128xbf16>, vector<16x128xf32> -> vector<16x128xf32>
    %c3_178 = arith.constant 3 : index
    %c0_179 = arith.constant 0 : index
    %c0_180 = arith.constant 0 : index
    %210 = vector.load %arg20[%c3_178, %c0_179, %c0_180] : memref<4x8x16xf32, #tpu.memory_space<vmem>>, vector<1x8x16xf32>
    %211 = vector.shape_cast %210 : vector<1x8x16xf32> to vector<8x16xf32>
    %cst_181 = arith.constant dense<0.000000e+00> : vector<8x128xf32>
    %212 = tpu.matmul %211, %209, %cst_181 {dimension_numbers = #tpu.dot_dimension_numbers<[1], [0], [0], [1], [0, 0, 1, 1], [], []>} : vector<8x16xf32>, vector<16x128xf32>, vector<8x128xf32> -> vector<8x128xf32>
    %213 = arith.addf %206, %212 : vector<8x128xf32>
    %c0_182 = arith.constant 0 : index
    %c0_183 = arith.constant 0 : index
    %214 = vector.load %arg22[%c0_182, %c0_183] : memref<128x32xf32, #tpu.memory_space<vmem>>, vector<128x32xf32>
    %c0_184 = arith.constant 0 : index
    %c0_185 = arith.constant 0 : index
    %215 = vector.load %arg23[%c0_184, %c0_185] : memref<32x128xf32, #tpu.memory_space<vmem>>, vector<32x128xf32>
    %c0_186 = arith.constant 0 : index
    %c0_187 = arith.constant 0 : index
    %216 = vector.load %arg24[%c0_186, %c0_187] : memref<1x32xf32, #tpu.memory_space<vmem>>, vector<1x32xf32>
    %c0_188 = arith.constant 0 : index
    %c0_189 = arith.constant 0 : index
    %217 = vector.load %arg25[%c0_188, %c0_189] : memref<1x32xf32, #tpu.memory_space<vmem>>, vector<1x32xf32>
    %cst_190 = arith.constant dense<0.000000e+00> : vector<128xf32>
    %218 = vector.multi_reduction <add>, %213, %cst_190 [0] : vector<8x128xf32> to vector<128xf32>
    %219 = vector.shape_cast %218 : vector<128xf32> to vector<1x128xf32>
    %220 = arith.mulf %213, %213 : vector<8x128xf32>
    %cst_191 = arith.constant dense<0.000000e+00> : vector<128xf32>
    %221 = vector.multi_reduction <add>, %220, %cst_191 [0] : vector<8x128xf32> to vector<128xf32>
    %222 = vector.shape_cast %221 : vector<128xf32> to vector<1x128xf32>
    %cst_192 = arith.constant dense<0.000000e+00> : vector<1x32xf32>
    %223 = tpu.matmul %219, %214, %cst_192 {dimension_numbers = #tpu.dot_dimension_numbers<[1], [0], [0], [1], [0, 0, 1, 1], [], []>} : vector<1x128xf32>, vector<128x32xf32>, vector<1x32xf32> -> vector<1x32xf32>
    %cst_193 = arith.constant 3.125000e-02 : f32
    %224 = vector.broadcast %cst_193 : f32 to vector<1x32xf32>
    %225 = arith.mulf %223, %224 : vector<1x32xf32>
    %cst_194 = arith.constant dense<0.000000e+00> : vector<1x32xf32>
    %226 = tpu.matmul %222, %214, %cst_194 {dimension_numbers = #tpu.dot_dimension_numbers<[1], [0], [0], [1], [0, 0, 1, 1], [], []>} : vector<1x128xf32>, vector<128x32xf32>, vector<1x32xf32> -> vector<1x32xf32>
    %cst_195 = arith.constant 3.125000e-02 : f32
    %227 = vector.broadcast %cst_195 : f32 to vector<1x32xf32>
    %228 = arith.mulf %226, %227 : vector<1x32xf32>
    %229 = arith.mulf %225, %225 : vector<1x32xf32>
    %230 = arith.subf %228, %229 : vector<1x32xf32>
    %cst_196 = arith.constant 9.99999974E-6 : f32
    %231 = vector.broadcast %cst_196 : f32 to vector<1x32xf32>
    %232 = arith.addf %230, %231 : vector<1x32xf32>
    %233 = math.rsqrt %232 : vector<1x32xf32>
    %234 = arith.mulf %216, %233 : vector<1x32xf32>
    %235 = arith.mulf %225, %234 : vector<1x32xf32>
    %236 = arith.subf %217, %235 : vector<1x32xf32>
    %cst_197 = arith.constant dense<0.000000e+00> : vector<1x128xf32>
    %237 = tpu.matmul %234, %215, %cst_197 {dimension_numbers = #tpu.dot_dimension_numbers<[1], [0], [0], [1], [0, 0, 1, 1], [], []>} : vector<1x32xf32>, vector<32x128xf32>, vector<1x128xf32> -> vector<1x128xf32>
    %238 = vector.broadcast %237 : vector<1x128xf32> to vector<8x128xf32>
    %239 = arith.mulf %213, %238 : vector<8x128xf32>
    %cst_198 = arith.constant dense<0.000000e+00> : vector<1x128xf32>
    %240 = tpu.matmul %236, %215, %cst_198 {dimension_numbers = #tpu.dot_dimension_numbers<[1], [0], [0], [1], [0, 0, 1, 1], [], []>} : vector<1x32xf32>, vector<32x128xf32>, vector<1x128xf32> -> vector<1x128xf32>
    %241 = vector.broadcast %240 : vector<1x128xf32> to vector<8x128xf32>
    %242 = arith.addf %239, %241 : vector<8x128xf32>
    %cst_199 = arith.constant 0.000000e+00 : f32
    %243 = vector.broadcast %cst_199 : f32 to vector<8x128xf32>
    %244 = arith.cmpf ogt, %242, %243 : vector<8x128xf32>
    %cst_200 = arith.constant 2.000000e-01 : f32
    %245 = vector.broadcast %cst_200 : f32 to vector<8x128xf32>
    %246 = arith.mulf %245, %242 : vector<8x128xf32>
    %247 = arith.select %244, %242, %246 : vector<8x128xi1>, vector<8x128xf32>
    %248 = arith.truncf %247 : vector<8x128xf32> to vector<8x128xbf16>
    %c0_201 = arith.constant 0 : index
    %c0_202 = arith.constant 0 : index
    %c0_203 = arith.constant 0 : index
    %249 = vector.load %arg27[%c0_201, %c0_202, %c0_203] : memref<4x128x1xbf16, #tpu.memory_space<vmem>>, vector<1x128x1xbf16>
    %250 = vector.shape_cast %249 : vector<1x128x1xbf16> to vector<128x1xbf16>
    %cst_204 = arith.constant dense<0.000000e+00> : vector<8x1xf32>
    %251 = tpu.matmul %248, %250, %cst_204 {dimension_numbers = #tpu.dot_dimension_numbers<[1], [0], [0], [1], [0, 0, 1, 1], [], []>} : vector<8x128xbf16>, vector<128x1xbf16>, vector<8x1xf32> -> vector<8x1xf32>
    %c0_205 = arith.constant 0 : index
    %c0_206 = arith.constant 0 : index
    %c0_207 = arith.constant 0 : index
    %252 = vector.load %arg26[%c0_205, %c0_206, %c0_207] : memref<4x2x8xf32, #tpu.memory_space<vmem>>, vector<1x2x8xf32>
    %253 = vector.shape_cast %252 : vector<1x2x8xf32> to vector<2x8xf32>
    %cst_208 = arith.constant dense<0.000000e+00> : vector<2x1xf32>
    %254 = tpu.matmul %253, %251, %cst_208 {dimension_numbers = #tpu.dot_dimension_numbers<[1], [0], [0], [1], [0, 0, 1, 1], [], []>} : vector<2x8xf32>, vector<8x1xf32>, vector<2x1xf32> -> vector<2x1xf32>
    %c1_209 = arith.constant 1 : index
    %c0_210 = arith.constant 0 : index
    %c0_211 = arith.constant 0 : index
    %255 = vector.load %arg27[%c1_209, %c0_210, %c0_211] : memref<4x128x1xbf16, #tpu.memory_space<vmem>>, vector<1x128x1xbf16>
    %256 = vector.shape_cast %255 : vector<1x128x1xbf16> to vector<128x1xbf16>
    %cst_212 = arith.constant dense<0.000000e+00> : vector<8x1xf32>
    %257 = tpu.matmul %248, %256, %cst_212 {dimension_numbers = #tpu.dot_dimension_numbers<[1], [0], [0], [1], [0, 0, 1, 1], [], []>} : vector<8x128xbf16>, vector<128x1xbf16>, vector<8x1xf32> -> vector<8x1xf32>
    %c1_213 = arith.constant 1 : index
    %c0_214 = arith.constant 0 : index
    %c0_215 = arith.constant 0 : index
    %258 = vector.load %arg26[%c1_213, %c0_214, %c0_215] : memref<4x2x8xf32, #tpu.memory_space<vmem>>, vector<1x2x8xf32>
    %259 = vector.shape_cast %258 : vector<1x2x8xf32> to vector<2x8xf32>
    %cst_216 = arith.constant dense<0.000000e+00> : vector<2x1xf32>
    %260 = tpu.matmul %259, %257, %cst_216 {dimension_numbers = #tpu.dot_dimension_numbers<[1], [0], [0], [1], [0, 0, 1, 1], [], []>} : vector<2x8xf32>, vector<8x1xf32>, vector<2x1xf32> -> vector<2x1xf32>
    %261 = arith.addf %254, %260 : vector<2x1xf32>
    %c2_217 = arith.constant 2 : index
    %c0_218 = arith.constant 0 : index
    %c0_219 = arith.constant 0 : index
    %262 = vector.load %arg27[%c2_217, %c0_218, %c0_219] : memref<4x128x1xbf16, #tpu.memory_space<vmem>>, vector<1x128x1xbf16>
    %263 = vector.shape_cast %262 : vector<1x128x1xbf16> to vector<128x1xbf16>
    %cst_220 = arith.constant dense<0.000000e+00> : vector<8x1xf32>
    %264 = tpu.matmul %248, %263, %cst_220 {dimension_numbers = #tpu.dot_dimension_numbers<[1], [0], [0], [1], [0, 0, 1, 1], [], []>} : vector<8x128xbf16>, vector<128x1xbf16>, vector<8x1xf32> -> vector<8x1xf32>
    %c2_221 = arith.constant 2 : index
    %c0_222 = arith.constant 0 : index
    %c0_223 = arith.constant 0 : index
    %265 = vector.load %arg26[%c2_221, %c0_222, %c0_223] : memref<4x2x8xf32, #tpu.memory_space<vmem>>, vector<1x2x8xf32>
    %266 = vector.shape_cast %265 : vector<1x2x8xf32> to vector<2x8xf32>
    %cst_224 = arith.constant dense<0.000000e+00> : vector<2x1xf32>
    %267 = tpu.matmul %266, %264, %cst_224 {dimension_numbers = #tpu.dot_dimension_numbers<[1], [0], [0], [1], [0, 0, 1, 1], [], []>} : vector<2x8xf32>, vector<8x1xf32>, vector<2x1xf32> -> vector<2x1xf32>
    %268 = arith.addf %261, %267 : vector<2x1xf32>
    %c3_225 = arith.constant 3 : index
    %c0_226 = arith.constant 0 : index
    %c0_227 = arith.constant 0 : index
    %269 = vector.load %arg27[%c3_225, %c0_226, %c0_227] : memref<4x128x1xbf16, #tpu.memory_space<vmem>>, vector<1x128x1xbf16>
    %270 = vector.shape_cast %269 : vector<1x128x1xbf16> to vector<128x1xbf16>
    %cst_228 = arith.constant dense<0.000000e+00> : vector<8x1xf32>
    %271 = tpu.matmul %248, %270, %cst_228 {dimension_numbers = #tpu.dot_dimension_numbers<[1], [0], [0], [1], [0, 0, 1, 1], [], []>} : vector<8x128xbf16>, vector<128x1xbf16>, vector<8x1xf32> -> vector<8x1xf32>
    %c3_229 = arith.constant 3 : index
    %c0_230 = arith.constant 0 : index
    %c0_231 = arith.constant 0 : index
    %272 = vector.load %arg26[%c3_229, %c0_230, %c0_231] : memref<4x2x8xf32, #tpu.memory_space<vmem>>, vector<1x2x8xf32>
    %273 = vector.shape_cast %272 : vector<1x2x8xf32> to vector<2x8xf32>
    %cst_232 = arith.constant dense<0.000000e+00> : vector<2x1xf32>
    %274 = tpu.matmul %273, %271, %cst_232 {dimension_numbers = #tpu.dot_dimension_numbers<[1], [0], [0], [1], [0, 0, 1, 1], [], []>} : vector<2x8xf32>, vector<8x1xf32>, vector<2x1xf32> -> vector<2x1xf32>
    %275 = arith.addf %268, %274 : vector<2x1xf32>
    %c0_233 = arith.constant 0 : index
    %c0_234 = arith.constant 0 : index
    %276 = vector.load %arg28[%c0_233, %c0_234] : memref<1x1xf32, #tpu.memory_space<vmem>>, vector<1x1xf32>
    %277 = vector.broadcast %276 : vector<1x1xf32> to vector<2x1xf32>
    %278 = arith.addf %275, %277 : vector<2x1xf32>
    %279 = arith.negf %278 : vector<2x1xf32>
    %280 = math.exp %279 : vector<2x1xf32>
    %cst_235 = arith.constant 1.000000e+00 : f32
    %281 = vector.broadcast %cst_235 : f32 to vector<2x1xf32>
    %282 = arith.addf %281, %280 : vector<2x1xf32>
    %283 = arith.divf %281, %282 : vector<2x1xf32>
    %c0_236 = arith.constant 0 : index
    %c0_237 = arith.constant 0 : index
    %284 = vector.load %arg29[%c0_236, %c0_237] : memref<2x1xf32, #tpu.memory_space<vmem>>, vector<2x1xf32>
    tpu.vector_store %arg29[%c0_236, %c0_237], %283 {strides = array<i32>} : memref<2x1xf32, #tpu.memory_space<vmem>>, vector<2x1xf32>,
    return
  }
  func.func @transform_0(%arg0: i32) -> (i32, i32) {
    %c0_i32 = arith.constant 0 : i32
    %c0_i32_0 = arith.constant 0 : i32
    %c0_i32_1 = arith.constant 0 : i32
    return %c0_i32, %c0_i32_0 : i32, i32
  }
  func.func @transform_1(%arg0: i32) -> (i32, i32, i32) {
    %c0_i32 = arith.constant 0 : i32
    %c0_i32_0 = arith.constant 0 : i32
    %c0_i32_1 = arith.constant 0 : i32
    %c0_i32_2 = arith.constant 0 : i32
    return %c0_i32, %c0_i32_0, %c0_i32_1 : i32, i32, i32
  }
  func.func @transform_2(%arg0: i32) -> (i32, i32, i32) {
    %c0_i32 = arith.constant 0 : i32
    %c0_i32_0 = arith.constant 0 : i32
    %c0_i32_1 = arith.constant 0 : i32
    %c0_i32_2 = arith.constant 0 : i32
    return %c0_i32, %c0_i32_0, %c0_i32_1 : i32, i32, i32
  }
  func.func @transform_3(%arg0: i32) -> (i32, i32) {
    %c0_i32 = arith.constant 0 : i32
    %c0_i32_0 = arith.constant 0 : i32
    %c0_i32_1 = arith.constant 0 : i32
    return %c0_i32, %c0_i32_0 : i32, i32
  }
  func.func @transform_4(%arg0: i32) -> (i32, i32) {
    %c0_i32 = arith.constant 0 : i32
    %c0_i32_0 = arith.constant 0 : i32
    %c0_i32_1 = arith.constant 0 : i32
    return %c0_i32, %c0_i32_0 : i32, i32
  }
  func.func @transform_5(%arg0: i32) -> (i32, i32) {
    %c0_i32 = arith.constant 0 : i32
    %c0_i32_0 = arith.constant 0 : i32
    %c0_i32_1 = arith.constant 0 : i32
    return %c0_i32, %c0_i32_0 : i32, i32
  }
  func.func @transform_6(%arg0: i32) -> (i32, i32) {
    %c0_i32 = arith.constant 0 : i32
    %c0_i32_0 = arith.constant 0 : i32
    %c0_i32_1 = arith.constant 0 : i32
    return %c0_i32, %c0_i32_0 : i32, i32
  }
  func.func @transform_7(%arg0: i32) -> (i32, i32, i32) {
    %c0_i32 = arith.constant 0 : i32
    %c0_i32_0 = arith.constant 0 : i32
    %c0_i32_1 = arith.constant 0 : i32
    %c0_i32_2 = arith.constant 0 : i32
    return %c0_i32, %c0_i32_0, %c0_i32_1 : i32, i32, i32
  }
  func.func @transform_8(%arg0: i32) -> (i32, i32, i32) {
    %c0_i32 = arith.constant 0 : i32
    %c0_i32_0 = arith.constant 0 : i32
    %c0_i32_1 = arith.constant 0 : i32
    %c0_i32_2 = arith.constant 0 : i32
    return %c0_i32, %c0_i32_0, %c0_i32_1 : i32, i32, i32
  }
  func.func @transform_9(%arg0: i32) -> (i32, i32) {
    %c0_i32 = arith.constant 0 : i32
    %c0_i32_0 = arith.constant 0 : i32
    %c0_i32_1 = arith.constant 0 : i32
    return %c0_i32, %c0_i32_0 : i32, i32
  }
  func.func @transform_10(%arg0: i32) -> (i32, i32) {
    %c0_i32 = arith.constant 0 : i32
    %c0_i32_0 = arith.constant 0 : i32
    %c0_i32_1 = arith.constant 0 : i32
    return %c0_i32, %c0_i32_0 : i32, i32
  }
  func.func @transform_11(%arg0: i32) -> (i32, i32) {
    %c0_i32 = arith.constant 0 : i32
    %c0_i32_0 = arith.constant 0 : i32
    %c0_i32_1 = arith.constant 0 : i32
    return %c0_i32, %c0_i32_0 : i32, i32
  }
  func.func @transform_12(%arg0: i32) -> (i32, i32) {
    %c0_i32 = arith.constant 0 : i32
    %c0_i32_0 = arith.constant 0 : i32
    %c0_i32_1 = arith.constant 0 : i32
    return %c0_i32, %c0_i32_0 : i32, i32
  }
  func.func @transform_13(%arg0: i32) -> (i32, i32, i32) {
    %c0_i32 = arith.constant 0 : i32
    %c0_i32_0 = arith.constant 0 : i32
    %c0_i32_1 = arith.constant 0 : i32
    %c0_i32_2 = arith.constant 0 : i32
    return %c0_i32, %c0_i32_0, %c0_i32_1 : i32, i32, i32
  }
  func.func @transform_14(%arg0: i32) -> (i32, i32, i32) {
    %c0_i32 = arith.constant 0 : i32
    %c0_i32_0 = arith.constant 0 : i32
    %c0_i32_1 = arith.constant 0 : i32
    %c0_i32_2 = arith.constant 0 : i32
    return %c0_i32, %c0_i32_0, %c0_i32_1 : i32, i32, i32
  }
  func.func @transform_15(%arg0: i32) -> (i32, i32) {
    %c0_i32 = arith.constant 0 : i32
    %c0_i32_0 = arith.constant 0 : i32
    %c0_i32_1 = arith.constant 0 : i32
    return %c0_i32, %c0_i32_0 : i32, i32
  }
  func.func @transform_16(%arg0: i32) -> (i32, i32) {
    %c0_i32 = arith.constant 0 : i32
    %c0_i32_0 = arith.constant 0 : i32
    %c0_i32_1 = arith.constant 0 : i32
    return %c0_i32, %c0_i32_0 : i32, i32
  }
  func.func @transform_17(%arg0: i32) -> (i32, i32) {
    %c0_i32 = arith.constant 0 : i32
    %c0_i32_0 = arith.constant 0 : i32
    %c0_i32_1 = arith.constant 0 : i32
    return %c0_i32, %c0_i32_0 : i32, i32
  }
  func.func @transform_18(%arg0: i32) -> (i32, i32) {
    %c0_i32 = arith.constant 0 : i32
    %c0_i32_0 = arith.constant 0 : i32
    %c0_i32_1 = arith.constant 0 : i32
    return %c0_i32, %c0_i32_0 : i32, i32
  }
  func.func @transform_19(%arg0: i32) -> (i32, i32, i32) {
    %c0_i32 = arith.constant 0 : i32
    %c0_i32_0 = arith.constant 0 : i32
    %c0_i32_1 = arith.constant 0 : i32
    %c0_i32_2 = arith.constant 0 : i32
    return %c0_i32, %c0_i32_0, %c0_i32_1 : i32, i32, i32
  }
  func.func @transform_20(%arg0: i32) -> (i32, i32, i32) {
    %c0_i32 = arith.constant 0 : i32
    %c0_i32_0 = arith.constant 0 : i32
    %c0_i32_1 = arith.constant 0 : i32
    %c0_i32_2 = arith.constant 0 : i32
    return %c0_i32, %c0_i32_0, %c0_i32_1 : i32, i32, i32
  }
  func.func @transform_21(%arg0: i32) -> (i32, i32) {
    %c0_i32 = arith.constant 0 : i32
    %c0_i32_0 = arith.constant 0 : i32
    %c0_i32_1 = arith.constant 0 : i32
    return %c0_i32, %c0_i32_0 : i32, i32
  }
  func.func @transform_22(%arg0: i32) -> (i32, i32) {
    %c0_i32 = arith.constant 0 : i32
    %c0_i32_0 = arith.constant 0 : i32
    %c0_i32_1 = arith.constant 0 : i32
    return %c0_i32, %c0_i32_0 : i32, i32
  }
  func.func @transform_23(%arg0: i32) -> (i32, i32) {
    %c0_i32 = arith.constant 0 : i32
    %c0_i32_0 = arith.constant 0 : i32
    %c0_i32_1 = arith.constant 0 : i32
    return %c0_i32, %c0_i32_0 : i32, i32
  }
  func.func @transform_24(%arg0: i32) -> (i32, i32) {
    %c0_i32 = arith.constant 0 : i32
    %c0_i32_0 = arith.constant 0 : i32
    %c0_i32_1 = arith.constant 0 : i32
    return %c0_i32, %c0_i32_0 : i32, i32
  }
  func.func @transform_25(%arg0: i32) -> (i32, i32, i32) {
    %c0_i32 = arith.constant 0 : i32
    %c0_i32_0 = arith.constant 0 : i32
    %c0_i32_1 = arith.constant 0 : i32
    %c0_i32_2 = arith.constant 0 : i32
    return %c0_i32, %c0_i32_0, %c0_i32_1 : i32, i32, i32
  }
  func.func @transform_26(%arg0: i32) -> (i32, i32, i32) {
    %c0_i32 = arith.constant 0 : i32
    %c0_i32_0 = arith.constant 0 : i32
    %c0_i32_1 = arith.constant 0 : i32
    %c0_i32_2 = arith.constant 0 : i32
    return %c0_i32, %c0_i32_0, %c0_i32_1 : i32, i32, i32
  }
  func.func @transform_27(%arg0: i32) -> (i32, i32) {
    %c0_i32 = arith.constant 0 : i32
    %c0_i32_0 = arith.constant 0 : i32
    %c0_i32_1 = arith.constant 0 : i32
    return %c0_i32, %c0_i32_0 : i32, i32
  }
  func.func @transform_28(%arg0: i32) -> (i32, i32) {
    %c0_i32 = arith.constant 0 : i32
    %c0_i32_0 = arith.constant 0 : i32
    %c0_i32_1 = arith.constant 0 : i32
    return %c0_i32, %c0_i32_0 : i32, i32
  }
}

</mosaic_0001>

<llo_original>
// kernel: discriminator_forward.1
$region0: #{discriminator_forward.1}
  #allocation0 [shape = 'u32[]', space=smem, size = 0x4, offset = 0x4, fixed_abs, tag = 'smem constant byte address 0x4 - core index']
  #allocation1 [shape = 'u32[144,128]{1,0:T(1,128)}', space=vmem, size = 0x12000, scoped, tag = 'internal scratch']
  #allocation2 [shape = 'f32[1,1]{1,0:T(1,128)S(1)}', space=vmem, size = 0x200, scoped, tag = 'scoped memory for discriminator_forward.1']
  %s0 = inlined_call_operand.vmem [shape: bf16[128,192], index: 0, kind: input, shape index: {}]
  %s1 = inlined_call_operand.vmem [shape: f32[4,64,128], index: 1, kind: input, shape index: {}]
  %s2 = inlined_call_operand.vmem [shape: bf16[4,192,128], index: 2, kind: input, shape index: {}]
  %s3 = inlined_call_operand.vmem [shape: f32[128,4], index: 3, kind: input, shape index: {}]
  %s4 = inlined_call_operand.vmem [shape: f32[4,128], index: 4, kind: input, shape index: {}]
  %s5 = inlined_call_operand.vmem [shape: f32[1,4], index: 5, kind: input, shape index: {}]
  %s6 = inlined_call_operand.vmem [shape: f32[1,4], index: 6, kind: input, shape index: {}]
  %s7 = inlined_call_operand.vmem [shape: f32[4,32,64], index: 7, kind: input, shape index: {}]
  %s8 = inlined_call_operand.vmem [shape: bf16[4,128,128], index: 8, kind: input, shape index: {}]
  %s9 = inlined_call_operand.vmem [shape: f32[128,8], index: 9, kind: input, shape index: {}]
  %s10 = inlined_call_operand.vmem [shape: f32[8,128], index: 10, kind: input, shape index: {}]
  %s11 = inlined_call_operand.vmem [shape: f32[1,8], index: 11, kind: input, shape index: {}]
  %s12 = inlined_call_operand.vmem [shape: f32[1,8], index: 12, kind: input, shape index: {}]
  %s13 = inlined_call_operand.vmem [shape: f32[4,16,32], index: 13, kind: input, shape index: {}]
  %s14 = inlined_call_operand.vmem [shape: bf16[4,128,128], index: 14, kind: input, shape index: {}]
  %s15 = inlined_call_operand.vmem [shape: f32[128,16], index: 15, kind: input, shape index: {}]
  %s16 = inlined_call_operand.vmem [shape: f32[16,128], index: 16, kind: input, shape index: {}]
  %s17 = inlined_call_operand.vmem [shape: f32[1,16], index: 17, kind: input, shape index: {}]
  %s18 = inlined_call_operand.vmem [shape: f32[1,16], index: 18, kind: input, shape index: {}]
  %s19 = inlined_call_operand.vmem [shape: f32[4,8,16], index: 19, kind: input, shape index: {}]
  %s20 = inlined_call_operand.vmem [shape: bf16[4,128,128], index: 20, kind: input, shape index: {}]
  %s21 = inlined_call_operand.vmem [shape: f32[128,32], index: 21, kind: input, shape index: {}]
  %s22 = inlined_call_operand.vmem [shape: f32[32,128], index: 22, kind: input, shape index: {}]
  %s23 = inlined_call_operand.vmem [shape: f32[1,32], index: 23, kind: input, shape index: {}]
  %s24 = inlined_call_operand.vmem [shape: f32[1,32], index: 24, kind: input, shape index: {}]
  %s25 = inlined_call_operand.vmem [shape: f32[4,2,8], index: 25, kind: input, shape index: {}]
  %s26 = inlined_call_operand.vmem [shape: bf16[4,128,1], index: 26, kind: input, shape index: {}]
  %s27 = inlined_call_operand.<no memory space> [shape: f32[1,1], index: 27, kind: input, shape index: {}]
  %s28 = inlined_call_operand.vmem [shape: f32[2,1], index: 28, kind: output, shape index: {}]
  %s29 = sld [smem:[#allocation0]]
  $region122: #{discriminator_forward.1} parent=0
    _
  %s31 = ssub.s32 1, %s29
  %s32 = scalar_select 0, %s31, %s29
  %v33 = vstv %s27
  %34 = vst [vmem:[#allocation2] sm:$0x1] %v33
  // Predicated region
  $region2: #{discriminator_forward.1} parent=0 // pred_check
    _
  $region3: #{discriminator_forward.1} parent=0 // pred_check_branch
    %36 = sbr.rel (0) target = $region5
  $region4: #{discriminator_forward.1} parent=0 // pred_region
    _
  $region5: #{discriminator_forward.1} parent=0 // pred_fallthru
    _
  // Predicated region
  $region6: #{discriminator_forward.1} parent=0 // pred_check
    _
  $region7: #{discriminator_forward.1} parent=0 // pred_check_branch
    %38 = sbr.rel (0) target = $region9
  $region8: #{discriminator_forward.1} parent=0 // pred_region
    _
  $region9: #{discriminator_forward.1} parent=0 // pred_fallthru
    _
  // Predicated region
  $region10: #{discriminator_forward.1} parent=0 // pred_check
    _
  $region11: #{discriminator_forward.1} parent=0 // pred_check_branch
    %40 = sbr.rel (0) target = $region13
  $region12: #{discriminator_forward.1} parent=0 // pred_region
    _
  $region13: #{discriminator_forward.1} parent=0 // pred_fallthru
    _
  // Predicated region
  $region14: #{discriminator_forward.1} parent=0 // pred_check
    _
  $region15: #{discriminator_forward.1} parent=0 // pred_check_branch
    %42 = sbr.rel (0) target = $region17
  $region16: #{discriminator_forward.1} parent=0 // pred_region
    _
  $region17: #{discriminator_forward.1} parent=0 // pred_fallthru
    _
  // Predicated region
  $region18: #{discriminator_forward.1} parent=0 // pred_check
    _
  $region19: #{discriminator_forward.1} parent=0 // pred_check_branch
    %44 = sbr.rel (0) target = $region21
  $region20: #{discriminator_forward.1} parent=0 // pred_region
    _
  $region21: #{discriminator_forward.1} parent=0 // pred_fallthru
    _
  // Predicated region
  $region22: #{discriminator_forward.1} parent=0 // pred_check
    _
  $region23: #{discriminator_forward.1} parent=0 // pred_check_branch
    %46 = sbr.rel (0) target = $region25
  $region24: #{discriminator_forward.1} parent=0 // pred_region
    _
  $region25: #{discriminator_forward.1} parent=0 // pred_fallthru
    _
  // Predicated region
  $region26: #{discriminator_forward.1} parent=0 // pred_check
    _
  $region27: #{discriminator_forward.1} parent=0 // pred_check_branch
    %48 = sbr.rel (0) target = $region29
  $region28: #{discriminator_forward.1} parent=0 // pred_region
    _
  $region29: #{discriminator_forward.1} parent=0 // pred_fallthru
    _
  // Predicated region
  $region30: #{discriminator_forward.1} parent=0 // pred_check
    _
  $region31: #{discriminator_forward.1} parent=0 // pred_check_branch
    %50 = sbr.rel (0) target = $region33
  $region32: #{discriminator_forward.1} parent=0 // pred_region
    _
  $region33: #{discriminator_forward.1} parent=0 // pred_fallthru
    _
  // Predicated region
  $region34: #{discriminator_forward.1} parent=0 // pred_check
    _
  $region35: #{discriminator_forward.1} parent=0 // pred_check_branch
    %52 = sbr.rel (0) target = $region37
  $region36: #{discriminator_forward.1} parent=0 // pred_region
    _
  $region37: #{discriminator_forward.1} parent=0 // pred_fallthru
    _
  // Predicated region
  $region38: #{discriminator_forward.1} parent=0 // pred_check
    _
  $region39: #{discriminator_forward.1} parent=0 // pred_check_branch
    %54 = sbr.rel (0) target = $region41
  $region40: #{discriminator_forward.1} parent=0 // pred_region
    _
  $region41: #{discriminator_forward.1} parent=0 // pred_fallthru
    _
  // Predicated region
  $region42: #{discriminator_forward.1} parent=0 // pred_check
    _
  $region43: #{discriminator_forward.1} parent=0 // pred_check_branch
    %56 = sbr.rel (0) target = $region45
  $region44: #{discriminator_forward.1} parent=0 // pred_region
    _
  $region45: #{discriminator_forward.1} parent=0 // pred_fallthru
    _
  // Predicated region
  $region46: #{discriminator_forward.1} parent=0 // pred_check
    _
  $region47: #{discriminator_forward.1} parent=0 // pred_check_branch
    %58 = sbr.rel (0) target = $region49
  $region48: #{discriminator_forward.1} parent=0 // pred_region
    _
  $region49: #{discriminator_forward.1} parent=0 // pred_fallthru
    _
  // Predicated region
  $region50: #{discriminator_forward.1} parent=0 // pred_check
    _
  $region51: #{discriminator_forward.1} parent=0 // pred_check_branch
    %60 = sbr.rel (0) target = $region53
  $region52: #{discriminator_forward.1} parent=0 // pred_region
    _
  $region53: #{discriminator_forward.1} parent=0 // pred_fallthru
    _
  // Predicated region
  $region54: #{discriminator_forward.1} parent=0 // pred_check
    _
  $region55: #{discriminator_forward.1} parent=0 // pred_check_branch
    %62 = sbr.rel (0) target = $region57
  $region56: #{discriminator_forward.1} parent=0 // pred_region
    _
  $region57: #{discriminator_forward.1} parent=0 // pred_fallthru
    _
  // Predicated region
  $region58: #{discriminator_forward.1} parent=0 // pred_check
    _
  $region59: #{discriminator_forward.1} parent=0 // pred_check_branch
    %64 = sbr.rel (0) target = $region61
  $region60: #{discriminator_forward.1} parent=0 // pred_region
    _
  $region61: #{discriminator_forward.1} parent=0 // pred_fallthru
    _
  // Predicated region
  $region62: #{discriminator_forward.1} parent=0 // pred_check
    _
  $region63: #{discriminator_forward.1} parent=0 // pred_check_branch
    %66 = sbr.rel (0) target = $region65
  $region64: #{discriminator_forward.1} parent=0 // pred_region
    _
  $region65: #{discriminator_forward.1} parent=0 // pred_fallthru
    _
  // Predicated region
  $region66: #{discriminator_forward.1} parent=0 // pred_check
    _
  $region67: #{discriminator_forward.1} parent=0 // pred_check_branch
    %68 = sbr.rel (0) target = $region69
  $region68: #{discriminator_forward.1} parent=0 // pred_region
    _
  $region69: #{discriminator_forward.1} parent=0 // pred_fallthru
    _
  // Predicated region
  $region70: #{discriminator_forward.1} parent=0 // pred_check
    _
  $region71: #{discriminator_forward.1} parent=0 // pred_check_branch
    %70 = sbr.rel (0) target = $region73
  $region72: #{discriminator_forward.1} parent=0 // pred_region
    _
  $region73: #{discriminator_forward.1} parent=0 // pred_fallthru
    _
  // Predicated region
  $region74: #{discriminator_forward.1} parent=0 // pred_check
    _
  $region75: #{discriminator_forward.1} parent=0 // pred_check_branch
    %72 = sbr.rel (0) target = $region77
  $region76: #{discriminator_forward.1} parent=0 // pred_region
    _
  $region77: #{discriminator_forward.1} parent=0 // pred_fallthru
    _
  // Predicated region
  $region78: #{discriminator_forward.1} parent=0 // pred_check
    _
  $region79: #{discriminator_forward.1} parent=0 // pred_check_branch
    %74 = sbr.rel (0) target = $region81
  $region80: #{discriminator_forward.1} parent=0 // pred_region
    _
  $region81: #{discriminator_forward.1} parent=0 // pred_fallthru
    _
  // Predicated region
  $region82: #{discriminator_forward.1} parent=0 // pred_check
    _
  $region83: #{discriminator_forward.1} parent=0 // pred_check_branch
    %76 = sbr.rel (0) target = $region85
  $region84: #{discriminator_forward.1} parent=0 // pred_region
    _
  $region85: #{discriminator_forward.1} parent=0 // pred_fallthru
    _
  // Predicated region
  $region86: #{discriminator_forward.1} parent=0 // pred_check
    _
  $region87: #{discriminator_forward.1} parent=0 // pred_check_branch
    %78 = sbr.rel (0) target = $region89
  $region88: #{discriminator_forward.1} parent=0 // pred_region
    _
  $region89: #{discriminator_forward.1} parent=0 // pred_fallthru
    _
  // Predicated region
  $region90: #{discriminator_forward.1} parent=0 // pred_check
    _
  $region91: #{discriminator_forward.1} parent=0 // pred_check_branch
    %80 = sbr.rel (0) target = $region93
  $region92: #{discriminator_forward.1} parent=0 // pred_region
    _
  $region93: #{discriminator_forward.1} parent=0 // pred_fallthru
    _
  // Predicated region
  $region94: #{discriminator_forward.1} parent=0 // pred_check
    _
  $region95: #{discriminator_forward.1} parent=0 // pred_check_branch
    %82 = sbr.rel (0) target = $region97
  $region96: #{discriminator_forward.1} parent=0 // pred_region
    _
  $region97: #{discriminator_forward.1} parent=0 // pred_fallthru
    _
  // Predicated region
  $region98: #{discriminator_forward.1} parent=0 // pred_check
    _
  $region99: #{discriminator_forward.1} parent=0 // pred_check_branch
    %84 = sbr.rel (0) target = $region101
  $region100: #{discriminator_forward.1} parent=0 // pred_region
    _
  $region101: #{discriminator_forward.1} parent=0 // pred_fallthru
    _
  // Predicated region
  $region102: #{discriminator_forward.1} parent=0 // pred_check
    _
  $region103: #{discriminator_forward.1} parent=0 // pred_check_branch
    %86 = sbr.rel (0) target = $region105
  $region104: #{discriminator_forward.1} parent=0 // pred_region
    _
  $region105: #{discriminator_forward.1} parent=0 // pred_fallthru
    _
  // Predicated region
  $region106: #{discriminator_forward.1} parent=0 // pred_check
    _
  $region107: #{discriminator_forward.1} parent=0 // pred_check_branch
    %88 = sbr.rel (0) target = $region109
  $region108: #{discriminator_forward.1} parent=0 // pred_region
    _
  $region109: #{discriminator_forward.1} parent=0 // pred_fallthru
    _
  // Predicated region
  $region110: #{discriminator_forward.1} parent=0 // pred_check
    _
  $region111: #{discriminator_forward.1} parent=0 // pred_check_branch
    %90 = sbr.rel (0) target = $region113
  $region112: #{discriminator_forward.1} parent=0 // pred_region
    _
  $region113: #{discriminator_forward.1} parent=0 // pred_fallthru
    _
  %v92 = vld [vmem:[%s0] sm:$0xff]
  %v93 = vld [vmem:[%s0 + $0x8] sm:$0xff]
  %v94 = vld [vmem:[%s0 + $0x10] sm:$0xff]
  %v95 = vld [vmem:[%s0 + $0x18] sm:$0xff]
  %v96 = vld [vmem:[%s0 + $0x20] sm:$0xff]
  %v97 = vld [vmem:[%s0 + $0x28] sm:$0xff]
  %v98 = vld [vmem:[%s0 + $0x30] sm:$0xff]
  %v99 = vld [vmem:[%s0 + $0x38] sm:$0xff]
  %v100 = vld [vmem:[%s0 + $0x40] sm:$0xff]
  %v101 = vld [vmem:[%s0 + $0x48] sm:$0xff]
  %v102 = vld [vmem:[%s0 + $0x50] sm:$0xff]
  %v103 = vld [vmem:[%s0 + $0x58] sm:$0xff]
  %v104 = vld [vmem:[%s0 + $0x60] sm:$0xff]
  %v105 = vld [vmem:[%s0 + $0x68] sm:$0xff]
  %v106 = vld [vmem:[%s0 + $0x70] sm:$0xff]
  %v107 = vld [vmem:[%s0 + $0x78] sm:$0xff]
  %v108 = vld [vmem:[%s2] sm:$0xf]
  %v109 = vld [vmem:[%s2 + $0x4] sm:$0xf]
  %v110 = vld [vmem:[%s2 + $0x8] sm:$0xf]
  %v111 = vld [vmem:[%s2 + $0xc] sm:$0xf]
  %v112 = vld [vmem:[%s2 + $0x10] sm:$0xf]
  %v113 = vld [vmem:[%s2 + $0x14] sm:$0xf]
  %v114 = vld [vmem:[%s2 + $0x18] sm:$0xf]
  %v115 = vld [vmem:[%s2 + $0x1c] sm:$0xf]
  %v116 = vld [vmem:[%s2 + $0x20] sm:$0xf]
  %v117 = vld [vmem:[%s2 + $0x24] sm:$0xf]
  %v118 = vld [vmem:[%s2 + $0x28] sm:$0xf]
  %v119 = vld [vmem:[%s2 + $0x2c] sm:$0xf]
  %v120 = vld [vmem:[%s2 + $0x30] sm:$0xf]
  %v121 = vld [vmem:[%s2 + $0x34] sm:$0xf]
  %v122 = vld [vmem:[%s2 + $0x38] sm:$0xf]
  %v123 = vld [vmem:[%s2 + $0x3c] sm:$0xf]
  %v124 = vld [vmem:[%s2 + $0x40] sm:$0xf]
  %v125 = vld [vmem:[%s2 + $0x44] sm:$0xf]
  %v126 = vld [vmem:[%s2 + $0x48] sm:$0xf]
  %v127 = vld [vmem:[%s2 + $0x4c] sm:$0xf]
  %v128 = vld [vmem:[%s2 + $0x50] sm:$0xf]
  %v129 = vld [vmem:[%s2 + $0x54] sm:$0xf]
  %v130 = vld [vmem:[%s2 + $0x58] sm:$0xf]
  %v131 = vld [vmem:[%s2 + $0x5c] sm:$0xf]
  %v148 = vunpack.c.l.b16 %v92
  %v149 = vunpack.c.h.b16 %v92
  %v150 = vunpack.c.l.b16 %v93
  %v151 = vunpack.c.h.b16 %v93
  %v152 = vunpack.c.l.b16 %v94
  %v153 = vunpack.c.h.b16 %v94
  %v154 = vunpack.c.l.b16 %v95
  %v155 = vunpack.c.h.b16 %v95
  %v156 = vunpack.c.l.b16 %v96
  %v157 = vunpack.c.h.b16 %v96
  %v158 = vunpack.c.l.b16 %v97
  %v159 = vunpack.c.h.b16 %v97
  %v160 = vunpack.c.l.b16 %v98
  %v161 = vunpack.c.h.b16 %v98
  %v162 = vunpack.c.l.b16 %v99
  %v163 = vunpack.c.h.b16 %v99
  %v164 = vunpack.c.l.b16 %v100
  %v165 = vunpack.c.h.b16 %v100
  %v166 = vunpack.c.l.b16 %v101
  %v167 = vunpack.c.h.b16 %v101
  %v168 = vunpack.c.l.b16 %v102
  %v169 = vunpack.c.h.b16 %v102
  %v170 = vunpack.c.l.b16 %v103
  %v171 = vunpack.c.h.b16 %v103
  %v172 = vunpack.c.l.b16 %v104
  %v173 = vunpack.c.h.b16 %v104
  %v174 = vunpack.c.l.b16 %v105
  %v175 = vunpack.c.h.b16 %v105
  %v176 = vunpack.c.l.b16 %v106
  %v177 = vunpack.c.h.b16 %v106
  %v178 = vunpack.c.l.b16 %v107
  %v179 = vunpack.c.h.b16 %v107
  %v180 = vpack.c.b16 %v150, %v148
  %v181 = vpack.c.b16 %v151, %v149
  %v182 = vpack.c.b16 %v154, %v152
  %v183 = vpack.c.b16 %v155, %v153
  %v184 = vpack.c.b16 %v158, %v156
  %v185 = vpack.c.b16 %v159, %v157
  %v186 = vpack.c.b16 %v162, %v160
  %v187 = vpack.c.b16 %v163, %v161
  %v188 = vpack.c.b16 %v166, %v164
  %v189 = vpack.c.b16 %v167, %v165
  %v190 = vpack.c.b16 %v170, %v168
  %v191 = vpack.c.b16 %v171, %v169
  %v192 = vpack.c.b16 %v174, %v172
  %v193 = vpack.c.b16 %v175, %v173
  %v194 = vpack.c.b16 %v178, %v176
  %v195 = vpack.c.b16 %v179, %v177
  %v228 = vunpack.c.l.b16 %v108
  %v229 = vunpack.c.l.b16 %v109
  %v230 = vunpack.c.l.b16 %v110
  %v231 = vunpack.c.l.b16 %v111
  %v232 = vunpack.c.l.b16 %v112
  %v233 = vunpack.c.l.b16 %v113
  %v234 = vunpack.c.l.b16 %v114
  %v235 = vunpack.c.l.b16 %v115
  %v236 = vunpack.c.l.b16 %v116
  %v237 = vunpack.c.l.b16 %v117
  %v238 = vunpack.c.l.b16 %v118
  %v239 = vunpack.c.l.b16 %v119
  %v240 = vunpack.c.l.b16 %v120
  %v241 = vunpack.c.l.b16 %v121
  %v242 = vunpack.c.l.b16 %v122
  %v243 = vunpack.c.l.b16 %v123
  %v244 = vunpack.c.l.b16 %v124
  %v245 = vunpack.c.l.b16 %v125
  %v246 = vunpack.c.l.b16 %v126
  %v247 = vunpack.c.l.b16 %v127
  %v248 = vunpack.c.l.b16 %v128
  %v249 = vunpack.c.l.b16 %v129
  %v250 = vunpack.c.l.b16 %v130
  %v251 = vunpack.c.l.b16 %v131
  %v252 = vpack.c.b16 %v229, %v228
  %v253 = vpack.c.b16 %v231, %v230
  %v254 = vpack.c.b16 %v233, %v232
  %v255 = vpack.c.b16 %v235, %v234
  %v256 = vpack.c.b16 %v237, %v236
  %v257 = vpack.c.b16 %v239, %v238
  %v258 = vpack.c.b16 %v241, %v240
  %v259 = vpack.c.b16 %v243, %v242
  %v260 = vpack.c.b16 %v245, %v244
  %v261 = vpack.c.b16 %v247, %v246
  %v262 = vpack.c.b16 %v249, %v248
  %v263 = vpack.c.b16 %v251, %v250
  %vm276 = vcmask 523264
  %v278 = vsel %vm276, %v181, 0
  %v281 = vsel %vm276, %v183, 0
  %v284 = vsel %vm276, %v185, 0
  %v287 = vsel %vm276, %v187, 0
  %v290 = vsel %vm276, %v189, 0
  %v293 = vsel %vm276, %v191, 0
  %v296 = vsel %vm276, %v193, 0
  %v299 = vsel %vm276, %v195, 0
  %301 = vmatprep.subr.bf16.mxu0 0
  %302 = vmatpush1.bf16.msra.mxu0 %v259
  %303 = vmatprep.subr.bf16.mxu0 0
  %304 = vmatpush1.bf16.msra.mxu0 %v258
  %305 = vmatprep.subr.bf16.mxu0 0
  %306 = vmatpush1.bf16.msra.mxu0 %v257
  %307 = vmatprep.subr.bf16.mxu0 0
  %308 = vmatpush1.bf16.msra.mxu0 %v256
  %309 = vmatprep.subr.bf16.mxu0 0
  %310 = vmatpush1.bf16.msra.mxu0 %v255
  %311 = vmatprep.subr.bf16.mxu0 0
  %312 = vmatpush1.bf16.msra.mxu0 %v254
  %313 = vmatprep.subr.bf16.mxu0 0
  %314 = vmatpush1.bf16.msra.mxu0 %v253
  %315 = vmatprep.subr.bf16.mxu0 0
  %316 = vmatpush1.bf16.msra.mxu0 %v252
  %317 = vmatprep.subr.bf16.mxu0 0
  %318 = vmatpush2.bf16.msra.mxu0 0
  %319 = vmatprep.subr.bf16.mxu0 0
  %320 = vmatpush2.bf16.msra.mxu0 0
  %321 = vmatprep.subr.bf16.mxu0 0
  %322 = vmatpush2.bf16.msra.mxu0 0
  %323 = vmatprep.subr.bf16.mxu0 0
  %324 = vmatpush2.bf16.msra.mxu0 0
  %325 = vmatprep.subr.bf16.mxu0 0
  %326 = vmatpush2.bf16.msra.mxu0 %v263
  %327 = vmatprep.subr.bf16.mxu0 0
  %328 = vmatpush2.bf16.msra.mxu0 %v262
  %329 = vmatprep.subr.bf16.mxu0 0
  %330 = vmatpush2.bf16.msra.mxu0 %v261
  %331 = vmatprep.subr.bf16.mxu0 0
  %332 = vmatpush2.bf16.msra.mxu0 %v260
  %333 = vmatprep.mubr.bf16.mxu0 %v278
  %334 = vmatmul.mubr.bf16.gmra.mxu0 %v180
  %v335 = vpop.f32.mrf.mxu0
  %v336 = vadd.f32 0.0, %v335
  %v337 = vpop.f32.mrf.mxu0
  %v338 = vpop.f32.mrf.mxu0
  %v339 = vadd.f32 0.0, %v338
  %v340 = vpop.f32.mrf.mxu0
  %341 = vmatprep.mubr.bf16.mxu0 %v281
  %342 = vmatmul.mubr.bf16.gmra.mxu0 %v182
  %v343 = vpop.f32.mrf.mxu0
  %v344 = vadd.f32 0.0, %v343
  %v345 = vpop.f32.mrf.mxu0
  %v346 = vpop.f32.mrf.mxu0
  %v347 = vadd.f32 0.0, %v346
  %v348 = vpop.f32.mrf.mxu0
  %349 = vmatprep.mubr.bf16.mxu0 %v284
  %350 = vmatmul.mubr.bf16.gmra.mxu0 %v184
  %v351 = vpop.f32.mrf.mxu0
  %v352 = vadd.f32 0.0, %v351
  %v353 = vpop.f32.mrf.mxu0
  %v354 = vpop.f32.mrf.mxu0
  %v355 = vadd.f32 0.0, %v354
  %v356 = vpop.f32.mrf.mxu0
  %357 = vmatprep.mubr.bf16.mxu0 %v287
  %358 = vmatmul.mubr.bf16.gmra.mxu0 %v186
  %v359 = vpop.f32.mrf.mxu0
  %v360 = vadd.f32 0.0, %v359
  %v361 = vpop.f32.mrf.mxu0
  %v362 = vpop.f32.mrf.mxu0
  %v363 = vadd.f32 0.0, %v362
  %v364 = vpop.f32.mrf.mxu0
  %365 = vmatprep.mubr.bf16.mxu0 %v290
  %366 = vmatmul.mubr.bf16.gmra.mxu0 %v188
  %v367 = vpop.f32.mrf.mxu0
  %v368 = vadd.f32 0.0, %v367
  %v369 = vpop.f32.mrf.mxu0
  %v370 = vpop.f32.mrf.mxu0
  %v371 = vadd.f32 0.0, %v370
  %v372 = vpop.f32.mrf.mxu0
  %373 = vmatprep.mubr.bf16.mxu0 %v293
  %374 = vmatmul.mubr.bf16.gmra.mxu0 %v190
  %v375 = vpop.f32.mrf.mxu0
  %v376 = vadd.f32 0.0, %v375
  %v377 = vpop.f32.mrf.mxu0
  %v378 = vpop.f32.mrf.mxu0
  %v379 = vadd.f32 0.0, %v378
  %v380 = vpop.f32.mrf.mxu0
  %381 = vmatprep.mubr.bf16.mxu0 %v296
  %382 = vmatmul.mubr.bf16.gmra.mxu0 %v192
  %v383 = vpop.f32.mrf.mxu0
  %v384 = vadd.f32 0.0, %v383
  %v385 = vpop.f32.mrf.mxu0
  %v386 = vpop.f32.mrf.mxu0
  %v387 = vadd.f32 0.0, %v386
  %v388 = vpop.f32.mrf.mxu0
  %389 = vmatprep.mubr.bf16.mxu0 %v299
  %390 = vmatmul.mubr.bf16.gmra.mxu0 %v194
  %v391 = vpop.f32.mrf.mxu0
  %v392 = vadd.f32 0.0, %v391
  %v393 = vpop.f32.mrf.mxu0
  %v394 = vpop.f32.mrf.mxu0
  %v395 = vadd.f32 0.0, %v394
  %v396 = vpop.f32.mrf.mxu0
  %397 = vdwg.mxu0
  %v398 = vld [vmem:[%s1] sm:$0xff]
  %v399 = vld [vmem:[%s1 + $0x8] sm:$0xff]
  %v400 = vld [vmem:[%s1 + $0x10] sm:$0xff]
  %v401 = vld [vmem:[%s1 + $0x18] sm:$0xff]
  %v402 = vld [vmem:[%s1 + $0x20] sm:$0xff]
  %v403 = vld [vmem:[%s1 + $0x28] sm:$0xff]
  %v404 = vld [vmem:[%s1 + $0x30] sm:$0xff]
  %v405 = vld [vmem:[%s1 + $0x38] sm:$0xff]
  %s406 = scalar_lea.vmem %s2, 96
  %v407 = vld [vmem:[%s406] sm:$0xf]
  %v408 = vld [vmem:[%s406 + $0x4] sm:$0xf]
  %v409 = vld [vmem:[%s406 + $0x8] sm:$0xf]
  %v410 = vld [vmem:[%s406 + $0xc] sm:$0xf]
  %v411 = vld [vmem:[%s406 + $0x10] sm:$0xf]
  %v412 = vld [vmem:[%s406 + $0x14] sm:$0xf]
  %v413 = vld [vmem:[%s406 + $0x18] sm:$0xf]
  %v414 = vld [vmem:[%s406 + $0x1c] sm:$0xf]
  %v415 = vld [vmem:[%s406 + $0x20] sm:$0xf]
  %v416 = vld [vmem:[%s406 + $0x24] sm:$0xf]
  %v417 = vld [vmem:[%s406 + $0x28] sm:$0xf]
  %v418 = vld [vmem:[%s406 + $0x2c] sm:$0xf]
  %v419 = vld [vmem:[%s406 + $0x30] sm:$0xf]
  %v420 = vld [vmem:[%s406 + $0x34] sm:$0xf]
  %v421 = vld [vmem:[%s406 + $0x38] sm:$0xf]
  %v422 = vld [vmem:[%s406 + $0x3c] sm:$0xf]
  %v423 = vld [vmem:[%s406 + $0x40] sm:$0xf]
  %v424 = vld [vmem:[%s406 + $0x44] sm:$0xf]
  %v425 = vld [vmem:[%s406 + $0x48] sm:$0xf]
  %v426 = vld [vmem:[%s406 + $0x4c] sm:$0xf]
  %v427 = vld [vmem:[%s406 + $0x50] sm:$0xf]
  %v428 = vld [vmem:[%s406 + $0x54] sm:$0xf]
  %v429 = vld [vmem:[%s406 + $0x58] sm:$0xf]
  %v430 = vld [vmem:[%s406 + $0x5c] sm:$0xf]
  %v455 = vunpack.c.l.b16 %v407
  %v456 = vunpack.c.l.b16 %v408
  %v457 = vunpack.c.l.b16 %v409
  %v458 = vunpack.c.l.b16 %v410
  %v459 = vunpack.c.l.b16 %v411
  %v460 = vunpack.c.l.b16 %v412
  %v461 = vunpack.c.l.b16 %v413
  %v462 = vunpack.c.l.b16 %v414
  %v463 = vunpack.c.l.b16 %v415
  %v464 = vunpack.c.l.b16 %v416
  %v465 = vunpack.c.l.b16 %v417
  %v466 = vunpack.c.l.b16 %v418
  %v467 = vunpack.c.l.b16 %v419
  %v468 = vunpack.c.l.b16 %v420
  %v469 = vunpack.c.l.b16 %v421
  %v470 = vunpack.c.l.b16 %v422
  %v471 = vunpack.c.l.b16 %v423
  %v472 = vunpack.c.l.b16 %v424
  %v473 = vunpack.c.l.b16 %v425
  %v474 = vunpack.c.l.b16 %v426
  %v475 = vunpack.c.l.b16 %v427
  %v476 = vunpack.c.l.b16 %v428
  %v477 = vunpack.c.l.b16 %v429
  %v478 = vunpack.c.l.b16 %v430
  %v479 = vpack.c.b16 %v456, %v455
  %v480 = vpack.c.b16 %v458, %v457
  %v481 = vpack.c.b16 %v460, %v459
  %v482 = vpack.c.b16 %v462, %v461
  %v483 = vpack.c.b16 %v464, %v463
  %v484 = vpack.c.b16 %v466, %v465
  %v485 = vpack.c.b16 %v468, %v467
  %v486 = vpack.c.b16 %v470, %v469
  %v487 = vpack.c.b16 %v472, %v471
  %v488 = vpack.c.b16 %v474, %v473
  %v489 = vpack.c.b16 %v476, %v475
  %v490 = vpack.c.b16 %v478, %v477
  %503 = vmatprep.subr.bf16.mxu0 0
  %504 = vmatpush1.bf16.msra.mxu0 %v486
  %505 = vmatprep.subr.bf16.mxu0 0
  %506 = vmatpush1.bf16.msra.mxu0 %v485
  %507 = vmatprep.subr.bf16.mxu0 0
  %508 = vmatpush1.bf16.msra.mxu0 %v484
  %509 = vmatprep.subr.bf16.mxu0 0
  %510 = vmatpush1.bf16.msra.mxu0 %v483
  %511 = vmatprep.subr.bf16.mxu0 0
  %512 = vmatpush1.bf16.msra.mxu0 %v482
  %513 = vmatprep.subr.bf16.mxu0 0
  %514 = vmatpush1.bf16.msra.mxu0 %v481
  %515 = vmatprep.subr.bf16.mxu0 0
  %516 = vmatpush1.bf16.msra.mxu0 %v480
  %517 = vmatprep.subr.bf16.mxu0 0
  %518 = vmatpush1.bf16.msra.mxu0 %v479
  %519 = vmatprep.subr.bf16.mxu0 0
  %520 = vmatpush2.bf16.msra.mxu0 0
  %521 = vmatprep.subr.bf16.mxu0 0
  %522 = vmatpush2.bf16.msra.mxu0 0
  %523 = vmatprep.subr.bf16.mxu0 0
  %524 = vmatpush2.bf16.msra.mxu0 0
  %525 = vmatprep.subr.bf16.mxu0 0
  %526 = vmatpush2.bf16.msra.mxu0 0
  %527 = vmatprep.subr.bf16.mxu0 0
  %528 = vmatpush2.bf16.msra.mxu0 %v490
  %529 = vmatprep.subr.bf16.mxu0 0
  %530 = vmatpush2.bf16.msra.mxu0 %v489
  %531 = vmatprep.subr.bf16.mxu0 0
  %532 = vmatpush2.bf16.msra.mxu0 %v488
  %533 = vmatprep.subr.bf16.mxu0 0
  %534 = vmatpush2.bf16.msra.mxu0 %v487
  %535 = vmatprep.mubr.bf16.mxu0 %v278
  %536 = vmatmul.mubr.bf16.gmra.mxu0 %v180
  %v537 = vpop.f32.mrf.mxu0
  %v538 = vadd.f32 0.0, %v537
  %v539 = vpop.f32.mrf.mxu0
  %v540 = vpop.f32.mrf.mxu0
  %v541 = vadd.f32 0.0, %v540
  %v542 = vpop.f32.mrf.mxu0
  %543 = vmatprep.mubr.bf16.mxu0 %v281
  %544 = vmatmul.mubr.bf16.gmra.mxu0 %v182
  %v545 = vpop.f32.mrf.mxu0
  %v546 = vadd.f32 0.0, %v545
  %v547 = vpop.f32.mrf.mxu0
  %v548 = vpop.f32.mrf.mxu0
  %v549 = vadd.f32 0.0, %v548
  %v550 = vpop.f32.mrf.mxu0
  %551 = vmatprep.mubr.bf16.mxu0 %v284
  %552 = vmatmul.mubr.bf16.gmra.mxu0 %v184
  %v553 = vpop.f32.mrf.mxu0
  %v554 = vadd.f32 0.0, %v553
  %v555 = vpop.f32.mrf.mxu0
  %v556 = vpop.f32.mrf.mxu0
  %v557 = vadd.f32 0.0, %v556
  %v558 = vpop.f32.mrf.mxu0
  %559 = vmatprep.mubr.bf16.mxu0 %v287
  %560 = vmatmul.mubr.bf16.gmra.mxu0 %v186
  %v561 = vpop.f32.mrf.mxu0
  %v562 = vadd.f32 0.0, %v561
  %v563 = vpop.f32.mrf.mxu0
  %v564 = vpop.f32.mrf.mxu0
  %v565 = vadd.f32 0.0, %v564
  %v566 = vpop.f32.mrf.mxu0
  %567 = vmatprep.mubr.bf16.mxu0 %v290
  %568 = vmatmul.mubr.bf16.gmra.mxu0 %v188
  %v569 = vpop.f32.mrf.mxu0
  %v570 = vadd.f32 0.0, %v569
  %v571 = vpop.f32.mrf.mxu0
  %v572 = vpop.f32.mrf.mxu0
  %v573 = vadd.f32 0.0, %v572
  %v574 = vpop.f32.mrf.mxu0
  %575 = vmatprep.mubr.bf16.mxu0 %v293
  %576 = vmatmul.mubr.bf16.gmra.mxu0 %v190
  %v577 = vpop.f32.mrf.mxu0
  %v578 = vadd.f32 0.0, %v577
  %v579 = vpop.f32.mrf.mxu0
  %v580 = vpop.f32.mrf.mxu0
  %v581 = vadd.f32 0.0, %v580
  %v582 = vpop.f32.mrf.mxu0
  %583 = vmatprep.mubr.bf16.mxu0 %v296
  %584 = vmatmul.mubr.bf16.gmra.mxu0 %v192
  %v585 = vpop.f32.mrf.mxu0
  %v586 = vadd.f32 0.0, %v585
  %v587 = vpop.f32.mrf.mxu0
  %v588 = vpop.f32.mrf.mxu0
  %v589 = vadd.f32 0.0, %v588
  %v590 = vpop.f32.mrf.mxu0
  %591 = vmatprep.mubr.bf16.mxu0 %v299
  %592 = vmatmul.mubr.bf16.gmra.mxu0 %v194
  %v593 = vpop.f32.mrf.mxu0
  %v594 = vadd.f32 0.0, %v593
  %v595 = vpop.f32.mrf.mxu0
  %v596 = vpop.f32.mrf.mxu0
  %v597 = vadd.f32 0.0, %v596
  %v598 = vpop.f32.mrf.mxu0
  %599 = vdwg.mxu0
  %s600 = scalar_lea.vmem %s1, 64
  %v601 = vld [vmem:[%s600] sm:$0xff]
  %v602 = vld [vmem:[%s600 + $0x8] sm:$0xff]
  %v603 = vld [vmem:[%s600 + $0x10] sm:$0xff]
  %v604 = vld [vmem:[%s600 + $0x18] sm:$0xff]
  %v605 = vld [vmem:[%s600 + $0x20] sm:$0xff]
  %v606 = vld [vmem:[%s600 + $0x28] sm:$0xff]
  %v607 = vld [vmem:[%s600 + $0x30] sm:$0xff]
  %v608 = vld [vmem:[%s600 + $0x38] sm:$0xff]
  %609 = vmatprep.subr.mxu0 0.0
  %610 = vmatpush1.msra.mxu0 %v597
  %611 = vmatprep.subr.mxu0 0.0
  %612 = vmatpush1.msra.mxu0 %v594
  %613 = vmatprep.subr.mxu0 0.0
  %614 = vmatpush1.msra.mxu0 %v589
  %615 = vmatprep.subr.mxu0 0.0
  %616 = vmatpush1.msra.mxu0 %v586
  %617 = vmatprep.subr.mxu0 0.0
  %618 = vmatpush1.msra.mxu0 %v581
  %619 = vmatprep.subr.mxu0 0.0
  %620 = vmatpush1.msra.mxu0 %v578
  %621 = vmatprep.subr.mxu0 0.0
  %622 = vmatpush1.msra.mxu0 %v573
  %623 = vmatprep.subr.mxu0 0.0
  %624 = vmatpush1.msra.mxu0 %v570
  %625 = vmatprep.subr.mxu0 0.0
  %626 = vmatpush1.msra.mxu0 %v565
  %627 = vmatprep.subr.mxu0 0.0
  %628 = vmatpush1.msra.mxu0 %v562
  %629 = vmatprep.subr.mxu0 0.0
  %630 = vmatpush1.msra.mxu0 %v557
  %631 = vmatprep.subr.mxu0 0.0
  %632 = vmatpush1.msra.mxu0 %v554
  %633 = vmatprep.subr.mxu0 0.0
  %634 = vmatpush1.msra.mxu0 %v549
  %635 = vmatprep.subr.mxu0 0.0
  %636 = vmatpush1.msra.mxu0 %v546
  %637 = vmatprep.subr.mxu0 0.0
  %638 = vmatpush1.msra.mxu0 %v541
  %639 = vmatprep.subr.mxu0 0.0
  %640 = vmatpush1.msra.mxu0 %v538
  %641 = vmatprep.subr.mxu0 0.0
  %642 = vmatpush2.msra.mxu0 0.0
  %643 = vmatprep.subr.mxu0 0.0
  %644 = vmatpush2.msra.mxu0 0.0
  %645 = vmatprep.subr.mxu0 0.0
  %646 = vmatpush2.msra.mxu0 0.0
  %647 = vmatprep.subr.mxu0 0.0
  %648 = vmatpush2.msra.mxu0 0.0
  %649 = vmatprep.subr.mxu0 0.0
  %650 = vmatpush2.msra.mxu0 0.0
  %651 = vmatprep.subr.mxu0 0.0
  %652 = vmatpush2.msra.mxu0 0.0
  %653 = vmatprep.subr.mxu0 0.0
  %654 = vmatpush2.msra.mxu0 0.0
  %655 = vmatprep.subr.mxu0 0.0
  %656 = vmatpush2.msra.mxu0 0.0
  %657 = vmatprep.subr.mxu0 0.0
  %658 = vmatpush2.msra.mxu0 0.0
  %659 = vmatprep.subr.mxu0 0.0
  %660 = vmatpush2.msra.mxu0 0.0
  %661 = vmatprep.subr.mxu0 0.0
  %662 = vmatpush2.msra.mxu0 0.0
  %663 = vmatprep.subr.mxu0 0.0
  %664 = vmatpush2.msra.mxu0 0.0
  %665 = vmatprep.subr.mxu0 0.0
  %666 = vmatpush2.msra.mxu0 0.0
  %667 = vmatprep.subr.mxu0 0.0
  %668 = vmatpush2.msra.mxu0 0.0
  %669 = vmatprep.subr.mxu0 0.0
  %670 = vmatpush2.msra.mxu0 0.0
  %671 = vmatprep.subr.mxu0 0.0
  %672 = vmatpush2.msra.mxu0 0.0
  %673 = vmatprep.mubr.f32.mxu0 0.0
  %674 = vmatmul.mubr.f32.gmra.mxu0 %v601
  %v675 = vpop.f32.mrf.mxu0
  %v676 = vadd.f32 0.0, %v675
  %v677 = vpop.f32.mrf.mxu0
  %678 = vmatprep.mubr.f32.mxu0 0.0
  %679 = vmatmul.mubr.f32.gmra.mxu0 %v602
  %v680 = vpop.f32.mrf.mxu0
  %v681 = vadd.f32 0.0, %v680
  %v682 = vpop.f32.mrf.mxu0
  %683 = vmatprep.mubr.f32.mxu0 0.0
  %684 = vmatmul.mubr.f32.gmra.mxu0 %v603
  %v685 = vpop.f32.mrf.mxu0
  %v686 = vadd.f32 0.0, %v685
  %v687 = vpop.f32.mrf.mxu0
  %688 = vmatprep.mubr.f32.mxu0 0.0
  %689 = vmatmul.mubr.f32.gmra.mxu0 %v604
  %v690 = vpop.f32.mrf.mxu0
  %v691 = vadd.f32 0.0, %v690
  %v692 = vpop.f32.mrf.mxu0
  %693 = vmatprep.mubr.f32.mxu0 0.0
  %694 = vmatmul.mubr.f32.gmra.mxu0 %v605
  %v695 = vpop.f32.mrf.mxu0
  %v696 = vadd.f32 0.0, %v695
  %v697 = vpop.f32.mrf.mxu0
  %698 = vmatprep.mubr.f32.mxu0 0.0
  %699 = vmatmul.mubr.f32.gmra.mxu0 %v606
  %v700 = vpop.f32.mrf.mxu0
  %v701 = vadd.f32 0.0, %v700
  %v702 = vpop.f32.mrf.mxu0
  %703 = vmatprep.mubr.f32.mxu0 0.0
  %704 = vmatmul.mubr.f32.gmra.mxu0 %v607
  %v705 = vpop.f32.mrf.mxu0
  %v706 = vadd.f32 0.0, %v705
  %v707 = vpop.f32.mrf.mxu0
  %708 = vmatprep.mubr.f32.mxu0 0.0
  %709 = vmatmul.mubr.f32.gmra.mxu0 %v608
  %v710 = vpop.f32.mrf.mxu0
  %v711 = vadd.f32 0.0, %v710
  %v712 = vpop.f32.mrf.mxu0
  %713 = vdwg.mxu0
  %714 = vmatprep.subr.mxu0 0.0
  %715 = vmatpush1.msra.mxu0 %v395
  %716 = vmatprep.subr.mxu0 0.0
  %717 = vmatpush1.msra.mxu0 %v392
  %718 = vmatprep.subr.mxu0 0.0
  %719 = vmatpush1.msra.mxu0 %v387
  %720 = vmatprep.subr.mxu0 0.0
  %721 = vmatpush1.msra.mxu0 %v384
  %722 = vmatprep.subr.mxu0 0.0
  %723 = vmatpush1.msra.mxu0 %v379
  %724 = vmatprep.subr.mxu0 0.0
  %725 = vmatpush1.msra.mxu0 %v376
  %726 = vmatprep.subr.mxu0 0.0
  %727 = vmatpush1.msra.mxu0 %v371
  %728 = vmatprep.subr.mxu0 0.0
  %729 = vmatpush1.msra.mxu0 %v368
  %730 = vmatprep.subr.mxu0 0.0
  %731 = vmatpush1.msra.mxu0 %v363
  %732 = vmatprep.subr.mxu0 0.0
  %733 = vmatpush1.msra.mxu0 %v360
  %734 = vmatprep.subr.mxu0 0.0
  %735 = vmatpush1.msra.mxu0 %v355
  %736 = vmatprep.subr.mxu0 0.0
  %737 = vmatpush1.msra.mxu0 %v352
  %738 = vmatprep.subr.mxu0 0.0
  %739 = vmatpush1.msra.mxu0 %v347
  %740 = vmatprep.subr.mxu0 0.0
  %741 = vmatpush1.msra.mxu0 %v344
  %742 = vmatprep.subr.mxu0 0.0
  %743 = vmatpush1.msra.mxu0 %v339
  %744 = vmatprep.subr.mxu0 0.0
  %745 = vmatpush1.msra.mxu0 %v336
  %746 = vmatprep.subr.mxu0 0.0
  %747 = vmatpush2.msra.mxu0 0.0
  %748 = vmatprep.subr.mxu0 0.0
  %749 = vmatpush2.msra.mxu0 0.0
  %750 = vmatprep.subr.mxu0 0.0
  %751 = vmatpush2.msra.mxu0 0.0
  %752 = vmatprep.subr.mxu0 0.0
  %753 = vmatpush2.msra.mxu0 0.0
  %754 = vmatprep.subr.mxu0 0.0
  %755 = vmatpush2.msra.mxu0 0.0
  %756 = vmatprep.subr.mxu0 0.0
  %757 = vmatpush2.msra.mxu0 0.0
  %758 = vmatprep.subr.mxu0 0.0
  %759 = vmatpush2.msra.mxu0 0.0
  %760 = vmatprep.subr.mxu0 0.0
  %761 = vmatpush2.msra.mxu0 0.0
  %762 = vmatprep.subr.mxu0 0.0
  %763 = vmatpush2.msra.mxu0 0.0
  %764 = vmatprep.subr.mxu0 0.0
  %765 = vmatpush2.msra.mxu0 0.0
  %766 = vmatprep.subr.mxu0 0.0
  %767 = vmatpush2.msra.mxu0 0.0
  %768 = vmatprep.subr.mxu0 0.0
  %769 = vmatpush2.msra.mxu0 0.0
  %770 = vmatprep.subr.mxu0 0.0
  %771 = vmatpush2.msra.mxu0 0.0
  %772 = vmatprep.subr.mxu0 0.0
  %773 = vmatpush2.msra.mxu0 0.0
  %774 = vmatprep.subr.mxu0 0.0
  %775 = vmatpush2.msra.mxu0 0.0
  %776 = vmatprep.subr.mxu0 0.0
  %777 = vmatpush2.msra.mxu0 0.0
  %778 = vmatprep.mubr.f32.mxu0 0.0
  %779 = vmatmul.mubr.f32.gmra.mxu0 %v398
  %v780 = vpop.f32.mrf.mxu0
  %v781 = vadd.f32 %v676, %v780
  %v782 = vpop.f32.mrf.mxu0
  %783 = vmatprep.mubr.f32.mxu0 0.0
  %784 = vmatmul.mubr.f32.gmra.mxu0 %v399
  %v785 = vpop.f32.mrf.mxu0
  %v786 = vadd.f32 %v681, %v785
  %v787 = vpop.f32.mrf.mxu0
  %788 = vmatprep.mubr.f32.mxu0 0.0
  %789 = vmatmul.mubr.f32.gmra.mxu0 %v400
  %v790 = vpop.f32.mrf.mxu0
  %v791 = vadd.f32 %v686, %v790
  %v792 = vpop.f32.mrf.mxu0
  %793 = vmatprep.mubr.f32.mxu0 0.0
  %794 = vmatmul.mubr.f32.gmra.mxu0 %v401
  %v795 = vpop.f32.mrf.mxu0
  %v796 = vadd.f32 %v691, %v795
  %v797 = vpop.f32.mrf.mxu0
  %798 = vmatprep.mubr.f32.mxu0 0.0
  %799 = vmatmul.mubr.f32.gmra.mxu0 %v402
  %v800 = vpop.f32.mrf.mxu0
  %v801 = vadd.f32 %v696, %v800
  %v802 = vpop.f32.mrf.mxu0
  %803 = vmatprep.mubr.f32.mxu0 0.0
  %804 = vmatmul.mubr.f32.gmra.mxu0 %v403
  %v805 = vpop.f32.mrf.mxu0
  %v806 = vadd.f32 %v701, %v805
  %v807 = vpop.f32.mrf.mxu0
  %808 = vmatprep.mubr.f32.mxu0 0.0
  %809 = vmatmul.mubr.f32.gmra.mxu0 %v404
  %v810 = vpop.f32.mrf.mxu0
  %v811 = vadd.f32 %v706, %v810
  %v812 = vpop.f32.mrf.mxu0
  %813 = vmatprep.mubr.f32.mxu0 0.0
  %814 = vmatmul.mubr.f32.gmra.mxu0 %v405
  %v815 = vpop.f32.mrf.mxu0
  %v816 = vadd.f32 %v711, %v815
  %v817 = vpop.f32.mrf.mxu0
  %818 = vdwg.mxu0
  %s819 = scalar_lea.vmem %s2, 192
  %v820 = vld [vmem:[%s819] sm:$0xf]
  %v821 = vld [vmem:[%s819 + $0x4] sm:$0xf]
  %v822 = vld [vmem:[%s819 + $0x8] sm:$0xf]
  %v823 = vld [vmem:[%s819 + $0xc] sm:$0xf]
  %v824 = vld [vmem:[%s819 + $0x10] sm:$0xf]
  %v825 = vld [vmem:[%s819 + $0x14] sm:$0xf]
  %v826 = vld [vmem:[%s819 + $0x18] sm:$0xf]
  %v827 = vld [vmem:[%s819 + $0x1c] sm:$0xf]
  %v828 = vld [vmem:[%s819 + $0x20] sm:$0xf]
  %v829 = vld [vmem:[%s819 + $0x24] sm:$0xf]
  %v830 = vld [vmem:[%s819 + $0x28] sm:$0xf]
  %v831 = vld [vmem:[%s819 + $0x2c] sm:$0xf]
  %v832 = vld [vmem:[%s819 + $0x30] sm:$0xf]
  %v833 = vld [vmem:[%s819 + $0x34] sm:$0xf]
  %v834 = vld [vmem:[%s819 + $0x38] sm:$0xf]
  %v835 = vld [vmem:[%s819 + $0x3c] sm:$0xf]
  %v836 = vld [vmem:[%s819 + $0x40] sm:$0xf]
  %v837 = vld [vmem:[%s819 + $0x44] sm:$0xf]
  %v838 = vld [vmem:[%s819 + $0x48] sm:$0xf]
  %v839 = vld [vmem:[%s819 + $0x4c] sm:$0xf]
  %v840 = vld [vmem:[%s819 + $0x50] sm:$0xf]
  %v841 = vld [vmem:[%s819 + $0x54] sm:$0xf]
  %v842 = vld [vmem:[%s819 + $0x58] sm:$0xf]
  %v843 = vld [vmem:[%s819 + $0x5c] sm:$0xf]
  %v868 = vunpack.c.l.b16 %v820
  %v869 = vunpack.c.l.b16 %v821
  %v870 = vunpack.c.l.b16 %v822
  %v871 = vunpack.c.l.b16 %v823
  %v872 = vunpack.c.l.b16 %v824
  %v873 = vunpack.c.l.b16 %v825
  %v874 = vunpack.c.l.b16 %v826
  %v875 = vunpack.c.l.b16 %v827
  %v876 = vunpack.c.l.b16 %v828
  %v877 = vunpack.c.l.b16 %v829
  %v878 = vunpack.c.l.b16 %v830
  %v879 = vunpack.c.l.b16 %v831
  %v880 = vunpack.c.l.b16 %v832
  %v881 = vunpack.c.l.b16 %v833
  %v882 = vunpack.c.l.b16 %v834
  %v883 = vunpack.c.l.b16 %v835
  %v884 = vunpack.c.l.b16 %v836
  %v885 = vunpack.c.l.b16 %v837
  %v886 = vunpack.c.l.b16 %v838
  %v887 = vunpack.c.l.b16 %v839
  %v888 = vunpack.c.l.b16 %v840
  %v889 = vunpack.c.l.b16 %v841
  %v890 = vunpack.c.l.b16 %v842
  %v891 = vunpack.c.l.b16 %v843
  %v892 = vpack.c.b16 %v869, %v868
  %v893 = vpack.c.b16 %v871, %v870
  %v894 = vpack.c.b16 %v873, %v872
  %v895 = vpack.c.b16 %v875, %v874
  %v896 = vpack.c.b16 %v877, %v876
  %v897 = vpack.c.b16 %v879, %v878
  %v898 = vpack.c.b16 %v881, %v880
  %v899 = vpack.c.b16 %v883, %v882
  %v900 = vpack.c.b16 %v885, %v884
  %v901 = vpack.c.b16 %v887, %v886
  %v902 = vpack.c.b16 %v889, %v888
  %v903 = vpack.c.b16 %v891, %v890
  %916 = vmatprep.subr.bf16.mxu0 0
  %917 = vmatpush1.bf16.msra.mxu0 %v899
  %918 = vmatprep.subr.bf16.mxu0 0
  %919 = vmatpush1.bf16.msra.mxu0 %v898
  %920 = vmatprep.subr.bf16.mxu0 0
  %921 = vmatpush1.bf16.msra.mxu0 %v897
  %922 = vmatprep.subr.bf16.mxu0 0
  %923 = vmatpush1.bf16.msra.mxu0 %v896
  %924 = vmatprep.subr.bf16.mxu0 0
  %925 = vmatpush1.bf16.msra.mxu0 %v895
  %926 = vmatprep.subr.bf16.mxu0 0
  %927 = vmatpush1.bf16.msra.mxu0 %v894
  %928 = vmatprep.subr.bf16.mxu0 0
  %929 = vmatpush1.bf16.msra.mxu0 %v893
  %930 = vmatprep.subr.bf16.mxu0 0
  %931 = vmatpush1.bf16.msra.mxu0 %v892
  %932 = vmatprep.subr.bf16.mxu0 0
  %933 = vmatpush2.bf16.msra.mxu0 0
  %934 = vmatprep.subr.bf16.mxu0 0
  %935 = vmatpush2.bf16.msra.mxu0 0
  %936 = vmatprep.subr.bf16.mxu0 0
  %937 = vmatpush2.bf16.msra.mxu0 0
  %938 = vmatprep.subr.bf16.mxu0 0
  %939 = vmatpush2.bf16.msra.mxu0 0
  %940 = vmatprep.subr.bf16.mxu0 0
  %941 = vmatpush2.bf16.msra.mxu0 %v903
  %942 = vmatprep.subr.bf16.mxu0 0
  %943 = vmatpush2.bf16.msra.mxu0 %v902
  %944 = vmatprep.subr.bf16.mxu0 0
  %945 = vmatpush2.bf16.msra.mxu0 %v901
  %946 = vmatprep.subr.bf16.mxu0 0
  %947 = vmatpush2.bf16.msra.mxu0 %v900
  %948 = vmatprep.mubr.bf16.mxu0 %v278
  %949 = vmatmul.mubr.bf16.gmra.mxu0 %v180
  %v950 = vpop.f32.mrf.mxu0
  %v951 = vadd.f32 0.0, %v950
  %v952 = vpop.f32.mrf.mxu0
  %v953 = vpop.f32.mrf.mxu0
  %v954 = vadd.f32 0.0, %v953
  %v955 = vpop.f32.mrf.mxu0
  %956 = vmatprep.mubr.bf16.mxu0 %v281
  %957 = vmatmul.mubr.bf16.gmra.mxu0 %v182
  %v958 = vpop.f32.mrf.mxu0
  %v959 = vadd.f32 0.0, %v958
  %v960 = vpop.f32.mrf.mxu0
  %v961 = vpop.f32.mrf.mxu0
  %v962 = vadd.f32 0.0, %v961
  %v963 = vpop.f32.mrf.mxu0
  %964 = vmatprep.mubr.bf16.mxu0 %v284
  %965 = vmatmul.mubr.bf16.gmra.mxu0 %v184
  %v966 = vpop.f32.mrf.mxu0
  %v967 = vadd.f32 0.0, %v966
  %v968 = vpop.f32.mrf.mxu0
  %v969 = vpop.f32.mrf.mxu0
  %v970 = vadd.f32 0.0, %v969
  %v971 = vpop.f32.mrf.mxu0
  %972 = vmatprep.mubr.bf16.mxu0 %v287
  %973 = vmatmul.mubr.bf16.gmra.mxu0 %v186
  %v974 = vpop.f32.mrf.mxu0
  %v975 = vadd.f32 0.0, %v974
  %v976 = vpop.f32.mrf.mxu0
  %v977 = vpop.f32.mrf.mxu0
  %v978 = vadd.f32 0.0, %v977
  %v979 = vpop.f32.mrf.mxu0
  %980 = vmatprep.mubr.bf16.mxu0 %v290
  %981 = vmatmul.mubr.bf16.gmra.mxu0 %v188
  %v982 = vpop.f32.mrf.mxu0
  %v983 = vadd.f32 0.0, %v982
  %v984 = vpop.f32.mrf.mxu0
  %v985 = vpop.f32.mrf.mxu0
  %v986 = vadd.f32 0.0, %v985
  %v987 = vpop.f32.mrf.mxu0
  %988 = vmatprep.mubr.bf16.mxu0 %v293
  %989 = vmatmul.mubr.bf16.gmra.mxu0 %v190
  %v990 = vpop.f32.mrf.mxu0
  %v991 = vadd.f32 0.0, %v990
  %v992 = vpop.f32.mrf.mxu0
  %v993 = vpop.f32.mrf.mxu0
  %v994 = vadd.f32 0.0, %v993
  %v995 = vpop.f32.mrf.mxu0
  %996 = vmatprep.mubr.bf16.mxu0 %v296
  %997 = vmatmul.mubr.bf16.gmra.mxu0 %v192
  %v998 = vpop.f32.mrf.mxu0
  %v999 = vadd.f32 0.0, %v998
  %v1000 = vpop.f32.mrf.mxu0
  %v1001 = vpop.f32.mrf.mxu0
  %v1002 = vadd.f32 0.0, %v1001
  %v1003 = vpop.f32.mrf.mxu0
  %1004 = vmatprep.mubr.bf16.mxu0 %v299
  %1005 = vmatmul.mubr.bf16.gmra.mxu0 %v194
  %v1006 = vpop.f32.mrf.mxu0
  %v1007 = vadd.f32 0.0, %v1006
  %v1008 = vpop.f32.mrf.mxu0
  %v1009 = vpop.f32.mrf.mxu0
  %v1010 = vadd.f32 0.0, %v1009
  %v1011 = vpop.f32.mrf.mxu0
  %1012 = vdwg.mxu0
  %s1013 = scalar_lea.vmem %s1, 128
  %v1014 = vld [vmem:[%s1013] sm:$0xff]
  %v1015 = vld [vmem:[%s1013 + $0x8] sm:$0xff]
  %v1016 = vld [vmem:[%s1013 + $0x10] sm:$0xff]
  %v1017 = vld [vmem:[%s1013 + $0x18] sm:$0xff]
  %v1018 = vld [vmem:[%s1013 + $0x20] sm:$0xff]
  %v1019 = vld [vmem:[%s1013 + $0x28] sm:$0xff]
  %v1020 = vld [vmem:[%s1013 + $0x30] sm:$0xff]
  %v1021 = vld [vmem:[%s1013 + $0x38] sm:$0xff]
  %1022 = vmatprep.subr.mxu0 0.0
  %1023 = vmatpush1.msra.mxu0 %v1010
  %1024 = vmatprep.subr.mxu0 0.0
  %1025 = vmatpush1.msra.mxu0 %v1007
  %1026 = vmatprep.subr.mxu0 0.0
  %1027 = vmatpush1.msra.mxu0 %v1002
  %1028 = vmatprep.subr.mxu0 0.0
  %1029 = vmatpush1.msra.mxu0 %v999
  %1030 = vmatprep.subr.mxu0 0.0
  %1031 = vmatpush1.msra.mxu0 %v994
  %1032 = vmatprep.subr.mxu0 0.0
  %1033 = vmatpush1.msra.mxu0 %v991
  %1034 = vmatprep.subr.mxu0 0.0
  %1035 = vmatpush1.msra.mxu0 %v986
  %1036 = vmatprep.subr.mxu0 0.0
  %1037 = vmatpush1.msra.mxu0 %v983
  %1038 = vmatprep.subr.mxu0 0.0
  %1039 = vmatpush1.msra.mxu0 %v978
  %1040 = vmatprep.subr.mxu0 0.0
  %1041 = vmatpush1.msra.mxu0 %v975
  %1042 = vmatprep.subr.mxu0 0.0
  %1043 = vmatpush1.msra.mxu0 %v970
  %1044 = vmatprep.subr.mxu0 0.0
  %1045 = vmatpush1.msra.mxu0 %v967
  %1046 = vmatprep.subr.mxu0 0.0
  %1047 = vmatpush1.msra.mxu0 %v962
  %1048 = vmatprep.subr.mxu0 0.0
  %1049 = vmatpush1.msra.mxu0 %v959
  %1050 = vmatprep.subr.mxu0 0.0
  %1051 = vmatpush1.msra.mxu0 %v954
  %1052 = vmatprep.subr.mxu0 0.0
  %1053 = vmatpush1.msra.mxu0 %v951
  %1054 = vmatprep.subr.mxu0 0.0
  %1055 = vmatpush2.msra.mxu0 0.0
  %1056 = vmatprep.subr.mxu0 0.0
  %1057 = vmatpush2.msra.mxu0 0.0
  %1058 = vmatprep.subr.mxu0 0.0
  %1059 = vmatpush2.msra.mxu0 0.0
  %1060 = vmatprep.subr.mxu0 0.0
  %1061 = vmatpush2.msra.mxu0 0.0
  %1062 = vmatprep.subr.mxu0 0.0
  %1063 = vmatpush2.msra.mxu0 0.0
  %1064 = vmatprep.subr.mxu0 0.0
  %1065 = vmatpush2.msra.mxu0 0.0
  %1066 = vmatprep.subr.mxu0 0.0
  %1067 = vmatpush2.msra.mxu0 0.0
  %1068 = vmatprep.subr.mxu0 0.0
  %1069 = vmatpush2.msra.mxu0 0.0
  %1070 = vmatprep.subr.mxu0 0.0
  %1071 = vmatpush2.msra.mxu0 0.0
  %1072 = vmatprep.subr.mxu0 0.0
  %1073 = vmatpush2.msra.mxu0 0.0
  %1074 = vmatprep.subr.mxu0 0.0
  %1075 = vmatpush2.msra.mxu0 0.0
  %1076 = vmatprep.subr.mxu0 0.0
  %1077 = vmatpush2.msra.mxu0 0.0
  %1078 = vmatprep.subr.mxu0 0.0
  %1079 = vmatpush2.msra.mxu0 0.0
  %1080 = vmatprep.subr.mxu0 0.0
  %1081 = vmatpush2.msra.mxu0 0.0
  %1082 = vmatprep.subr.mxu0 0.0
  %1083 = vmatpush2.msra.mxu0 0.0
  %1084 = vmatprep.subr.mxu0 0.0
  %1085 = vmatpush2.msra.mxu0 0.0
  %1086 = vmatprep.mubr.f32.mxu0 0.0
  %1087 = vmatmul.mubr.f32.gmra.mxu0 %v1014
  %v1088 = vpop.f32.mrf.mxu0
  %v1089 = vadd.f32 0.0, %v1088
  %v1090 = vpop.f32.mrf.mxu0
  %1091 = vmatprep.mubr.f32.mxu0 0.0
  %1092 = vmatmul.mubr.f32.gmra.mxu0 %v1015
  %v1093 = vpop.f32.mrf.mxu0
  %v1094 = vadd.f32 0.0, %v1093
  %v1095 = vpop.f32.mrf.mxu0
  %1096 = vmatprep.mubr.f32.mxu0 0.0
  %1097 = vmatmul.mubr.f32.gmra.mxu0 %v1016
  %v1098 = vpop.f32.mrf.mxu0
  %v1099 = vadd.f32 0.0, %v1098
  %v1100 = vpop.f32.mrf.mxu0
  %1101 = vmatprep.mubr.f32.mxu0 0.0
  %1102 = vmatmul.mubr.f32.gmra.mxu0 %v1017
  %v1103 = vpop.f32.mrf.mxu0
  %v1104 = vadd.f32 0.0, %v1103
  %v1105 = vpop.f32.mrf.mxu0
  %1106 = vmatprep.mubr.f32.mxu0 0.0
  %1107 = vmatmul.mubr.f32.gmra.mxu0 %v1018
  %v1108 = vpop.f32.mrf.mxu0
  %v1109 = vadd.f32 0.0, %v1108
  %v1110 = vpop.f32.mrf.mxu0
  %1111 = vmatprep.mubr.f32.mxu0 0.0
  %1112 = vmatmul.mubr.f32.gmra.mxu0 %v1019
  %v1113 = vpop.f32.mrf.mxu0
  %v1114 = vadd.f32 0.0, %v1113
  %v1115 = vpop.f32.mrf.mxu0
  %1116 = vmatprep.mubr.f32.mxu0 0.0
  %1117 = vmatmul.mubr.f32.gmra.mxu0 %v1020
  %v1118 = vpop.f32.mrf.mxu0
  %v1119 = vadd.f32 0.0, %v1118
  %v1120 = vpop.f32.mrf.mxu0
  %1121 = vmatprep.mubr.f32.mxu0 0.0
  %1122 = vmatmul.mubr.f32.gmra.mxu0 %v1021
  %v1123 = vpop.f32.mrf.mxu0
  %v1124 = vadd.f32 0.0, %v1123
  %v1125 = vpop.f32.mrf.mxu0
  %1126 = vdwg.mxu0
  %v1127 = vadd.f32 %v781, %v1089
  %v1128 = vadd.f32 %v786, %v1094
  %v1129 = vadd.f32 %v791, %v1099
  %v1130 = vadd.f32 %v796, %v1104
  %v1131 = vadd.f32 %v801, %v1109
  %v1132 = vadd.f32 %v806, %v1114
  %v1133 = vadd.f32 %v811, %v1119
  %v1134 = vadd.f32 %v816, %v1124
  %s1135 = scalar_lea.vmem %s2, 288
  %v1136 = vld [vmem:[%s1135] sm:$0xf]
  %v1137 = vld [vmem:[%s1135 + $0x4] sm:$0xf]
  %v1138 = vld [vmem:[%s1135 + $0x8] sm:$0xf]
  %v1139 = vld [vmem:[%s1135 + $0xc] sm:$0xf]
  %v1140 = vld [vmem:[%s1135 + $0x10] sm:$0xf]
  %v1141 = vld [vmem:[%s1135 + $0x14] sm:$0xf]
  %v1142 = vld [vmem:[%s1135 + $0x18] sm:$0xf]
  %v1143 = vld [vmem:[%s1135 + $0x1c] sm:$0xf]
  %v1144 = vld [vmem:[%s1135 + $0x20] sm:$0xf]
  %v1145 = vld [vmem:[%s1135 + $0x24] sm:$0xf]
  %v1146 = vld [vmem:[%s1135 + $0x28] sm:$0xf]
  %v1147 = vld [vmem:[%s1135 + $0x2c] sm:$0xf]
  %v1148 = vld [vmem:[%s1135 + $0x30] sm:$0xf]
  %v1149 = vld [vmem:[%s1135 + $0x34] sm:$0xf]
  %v1150 = vld [vmem:[%s1135 + $0x38] sm:$0xf]
  %v1151 = vld [vmem:[%s1135 + $0x3c] sm:$0xf]
  %v1152 = vld [vmem:[%s1135 + $0x40] sm:$0xf]
  %v1153 = vld [vmem:[%s1135 + $0x44] sm:$0xf]
  %v1154 = vld [vmem:[%s1135 + $0x48] sm:$0xf]
  %v1155 = vld [vmem:[%s1135 + $0x4c] sm:$0xf]
  %v1156 = vld [vmem:[%s1135 + $0x50] sm:$0xf]
  %v1157 = vld [vmem:[%s1135 + $0x54] sm:$0xf]
  %v1158 = vld [vmem:[%s1135 + $0x58] sm:$0xf]
  %v1159 = vld [vmem:[%s1135 + $0x5c] sm:$0xf]
  %v1184 = vunpack.c.l.b16 %v1136
  %v1185 = vunpack.c.l.b16 %v1137
  %v1186 = vunpack.c.l.b16 %v1138
  %v1187 = vunpack.c.l.b16 %v1139
  %v1188 = vunpack.c.l.b16 %v1140
  %v1189 = vunpack.c.l.b16 %v1141
  %v1190 = vunpack.c.l.b16 %v1142
  %v1191 = vunpack.c.l.b16 %v1143
  %v1192 = vunpack.c.l.b16 %v1144
  %v1193 = vunpack.c.l.b16 %v1145
  %v1194 = vunpack.c.l.b16 %v1146
  %v1195 = vunpack.c.l.b16 %v1147
  %v1196 = vunpack.c.l.b16 %v1148
  %v1197 = vunpack.c.l.b16 %v1149
  %v1198 = vunpack.c.l.b16 %v1150
  %v1199 = vunpack.c.l.b16 %v1151
  %v1200 = vunpack.c.l.b16 %v1152
  %v1201 = vunpack.c.l.b16 %v1153
  %v1202 = vunpack.c.l.b16 %v1154
  %v1203 = vunpack.c.l.b16 %v1155
  %v1204 = vunpack.c.l.b16 %v1156
  %v1205 = vunpack.c.l.b16 %v1157
  %v1206 = vunpack.c.l.b16 %v1158
  %v1207 = vunpack.c.l.b16 %v1159
  %v1208 = vpack.c.b16 %v1185, %v1184
  %v1209 = vpack.c.b16 %v1187, %v1186
  %v1210 = vpack.c.b16 %v1189, %v1188
  %v1211 = vpack.c.b16 %v1191, %v1190
  %v1212 = vpack.c.b16 %v1193, %v1192
  %v1213 = vpack.c.b16 %v1195, %v1194
  %v1214 = vpack.c.b16 %v1197, %v1196
  %v1215 = vpack.c.b16 %v1199, %v1198
  %v1216 = vpack.c.b16 %v1201, %v1200
  %v1217 = vpack.c.b16 %v1203, %v1202
  %v1218 = vpack.c.b16 %v1205, %v1204
  %v1219 = vpack.c.b16 %v1207, %v1206
  %1232 = vmatprep.subr.bf16.mxu0 0
  %1233 = vmatpush1.bf16.msra.mxu0 %v1215
  %1234 = vmatprep.subr.bf16.mxu0 0
  %1235 = vmatpush1.bf16.msra.mxu0 %v1214
  %1236 = vmatprep.subr.bf16.mxu0 0
  %1237 = vmatpush1.bf16.msra.mxu0 %v1213
  %1238 = vmatprep.subr.bf16.mxu0 0
  %1239 = vmatpush1.bf16.msra.mxu0 %v1212
  %1240 = vmatprep.subr.bf16.mxu0 0
  %1241 = vmatpush1.bf16.msra.mxu0 %v1211
  %1242 = vmatprep.subr.bf16.mxu0 0
  %1243 = vmatpush1.bf16.msra.mxu0 %v1210
  %1244 = vmatprep.subr.bf16.mxu0 0
  %1245 = vmatpush1.bf16.msra.mxu0 %v1209
  %1246 = vmatprep.subr.bf16.mxu0 0
  %1247 = vmatpush1.bf16.msra.mxu0 %v1208
  %1248 = vmatprep.subr.bf16.mxu0 0
  %1249 = vmatpush2.bf16.msra.mxu0 0
  %1250 = vmatprep.subr.bf16.mxu0 0
  %1251 = vmatpush2.bf16.msra.mxu0 0
  %1252 = vmatprep.subr.bf16.mxu0 0
  %1253 = vmatpush2.bf16.msra.mxu0 0
  %1254 = vmatprep.subr.bf16.mxu0 0
  %1255 = vmatpush2.bf16.msra.mxu0 0
  %1256 = vmatprep.subr.bf16.mxu0 0
  %1257 = vmatpush2.bf16.msra.mxu0 %v1219
  %1258 = vmatprep.subr.bf16.mxu0 0
  %1259 = vmatpush2.bf16.msra.mxu0 %v1218
  %1260 = vmatprep.subr.bf16.mxu0 0
  %1261 = vmatpush2.bf16.msra.mxu0 %v1217
  %1262 = vmatprep.subr.bf16.mxu0 0
  %1263 = vmatpush2.bf16.msra.mxu0 %v1216
  %1264 = vmatprep.mubr.bf16.mxu0 %v278
  %1265 = vmatmul.mubr.bf16.gmra.mxu0 %v180
  %v1266 = vpop.f32.mrf.mxu0
  %v1267 = vadd.f32 0.0, %v1266
  %v1268 = vpop.f32.mrf.mxu0
  %v1269 = vpop.f32.mrf.mxu0
  %v1270 = vadd.f32 0.0, %v1269
  %v1271 = vpop.f32.mrf.mxu0
  %1272 = vmatprep.mubr.bf16.mxu0 %v281
  %1273 = vmatmul.mubr.bf16.gmra.mxu0 %v182
  %v1274 = vpop.f32.mrf.mxu0
  %v1275 = vadd.f32 0.0, %v1274
  %v1276 = vpop.f32.mrf.mxu0
  %v1277 = vpop.f32.mrf.mxu0
  %v1278 = vadd.f32 0.0, %v1277
  %v1279 = vpop.f32.mrf.mxu0
  %1280 = vmatprep.mubr.bf16.mxu0 %v284
  %1281 = vmatmul.mubr.bf16.gmra.mxu0 %v184
  %v1282 = vpop.f32.mrf.mxu0
  %v1283 = vadd.f32 0.0, %v1282
  %v1284 = vpop.f32.mrf.mxu0
  %v1285 = vpop.f32.mrf.mxu0
  %v1286 = vadd.f32 0.0, %v1285
  %v1287 = vpop.f32.mrf.mxu0
  %1288 = vmatprep.mubr.bf16.mxu0 %v287
  %1289 = vmatmul.mubr.bf16.gmra.mxu0 %v186
  %v1290 = vpop.f32.mrf.mxu0
  %v1291 = vadd.f32 0.0, %v1290
  %v1292 = vpop.f32.mrf.mxu0
  %v1293 = vpop.f32.mrf.mxu0
  %v1294 = vadd.f32 0.0, %v1293
  %v1295 = vpop.f32.mrf.mxu0
  %1296 = vmatprep.mubr.bf16.mxu0 %v290
  %1297 = vmatmul.mubr.bf16.gmra.mxu0 %v188
  %v1298 = vpop.f32.mrf.mxu0
  %v1299 = vadd.f32 0.0, %v1298
  %v1300 = vpop.f32.mrf.mxu0
  %v1301 = vpop.f32.mrf.mxu0
  %v1302 = vadd.f32 0.0, %v1301
  %v1303 = vpop.f32.mrf.mxu0
  %1304 = vmatprep.mubr.bf16.mxu0 %v293
  %1305 = vmatmul.mubr.bf16.gmra.mxu0 %v190
  %v1306 = vpop.f32.mrf.mxu0
  %v1307 = vadd.f32 0.0, %v1306
  %v1308 = vpop.f32.mrf.mxu0
  %v1309 = vpop.f32.mrf.mxu0
  %v1310 = vadd.f32 0.0, %v1309
  %v1311 = vpop.f32.mrf.mxu0
  %1312 = vmatprep.mubr.bf16.mxu0 %v296
  %1313 = vmatmul.mubr.bf16.gmra.mxu0 %v192
  %v1314 = vpop.f32.mrf.mxu0
  %v1315 = vadd.f32 0.0, %v1314
  %v1316 = vpop.f32.mrf.mxu0
  %v1317 = vpop.f32.mrf.mxu0
  %v1318 = vadd.f32 0.0, %v1317
  %v1319 = vpop.f32.mrf.mxu0
  %1320 = vmatprep.mubr.bf16.mxu0 %v299
  %1321 = vmatmul.mubr.bf16.gmra.mxu0 %v194
  %v1322 = vpop.f32.mrf.mxu0
  %v1323 = vadd.f32 0.0, %v1322
  %v1324 = vpop.f32.mrf.mxu0
  %v1325 = vpop.f32.mrf.mxu0
  %v1326 = vadd.f32 0.0, %v1325
  %v1327 = vpop.f32.mrf.mxu0
  %1328 = vdwg.mxu0
  %s1329 = scalar_lea.vmem %s1, 192
  %v1330 = vld [vmem:[%s1329] sm:$0xff]
  %v1331 = vld [vmem:[%s1329 + $0x8] sm:$0xff]
  %v1332 = vld [vmem:[%s1329 + $0x10] sm:$0xff]
  %v1333 = vld [vmem:[%s1329 + $0x18] sm:$0xff]
  %v1334 = vld [vmem:[%s1329 + $0x20] sm:$0xff]
  %v1335 = vld [vmem:[%s1329 + $0x28] sm:$0xff]
  %v1336 = vld [vmem:[%s1329 + $0x30] sm:$0xff]
  %v1337 = vld [vmem:[%s1329 + $0x38] sm:$0xff]
  %1338 = vmatprep.subr.mxu0 0.0
  %1339 = vmatpush1.msra.mxu0 %v1326
  %1340 = vmatprep.subr.mxu0 0.0
  %1341 = vmatpush1.msra.mxu0 %v1323
  %1342 = vmatprep.subr.mxu0 0.0
  %1343 = vmatpush1.msra.mxu0 %v1318
  %1344 = vmatprep.subr.mxu0 0.0
  %1345 = vmatpush1.msra.mxu0 %v1315
  %1346 = vmatprep.subr.mxu0 0.0
  %1347 = vmatpush1.msra.mxu0 %v1310
  %1348 = vmatprep.subr.mxu0 0.0
  %1349 = vmatpush1.msra.mxu0 %v1307
  %1350 = vmatprep.subr.mxu0 0.0
  %1351 = vmatpush1.msra.mxu0 %v1302
  %1352 = vmatprep.subr.mxu0 0.0
  %1353 = vmatpush1.msra.mxu0 %v1299
  %1354 = vmatprep.subr.mxu0 0.0
  %1355 = vmatpush1.msra.mxu0 %v1294
  %1356 = vmatprep.subr.mxu0 0.0
  %1357 = vmatpush1.msra.mxu0 %v1291
  %1358 = vmatprep.subr.mxu0 0.0
  %1359 = vmatpush1.msra.mxu0 %v1286
  %1360 = vmatprep.subr.mxu0 0.0
  %1361 = vmatpush1.msra.mxu0 %v1283
  %1362 = vmatprep.subr.mxu0 0.0
  %1363 = vmatpush1.msra.mxu0 %v1278
  %1364 = vmatprep.subr.mxu0 0.0
  %1365 = vmatpush1.msra.mxu0 %v1275
  %1366 = vmatprep.subr.mxu0 0.0
  %1367 = vmatpush1.msra.mxu0 %v1270
  %1368 = vmatprep.subr.mxu0 0.0
  %1369 = vmatpush1.msra.mxu0 %v1267
  %1370 = vmatprep.subr.mxu0 0.0
  %1371 = vmatpush2.msra.mxu0 0.0
  %1372 = vmatprep.subr.mxu0 0.0
  %1373 = vmatpush2.msra.mxu0 0.0
  %1374 = vmatprep.subr.mxu0 0.0
  %1375 = vmatpush2.msra.mxu0 0.0
  %1376 = vmatprep.subr.mxu0 0.0
  %1377 = vmatpush2.msra.mxu0 0.0
  %1378 = vmatprep.subr.mxu0 0.0
  %1379 = vmatpush2.msra.mxu0 0.0
  %1380 = vmatprep.subr.mxu0 0.0
  %1381 = vmatpush2.msra.mxu0 0.0
  %1382 = vmatprep.subr.mxu0 0.0
  %1383 = vmatpush2.msra.mxu0 0.0
  %1384 = vmatprep.subr.mxu0 0.0
  %1385 = vmatpush2.msra.mxu0 0.0
  %1386 = vmatprep.subr.mxu0 0.0
  %1387 = vmatpush2.msra.mxu0 0.0
  %1388 = vmatprep.subr.mxu0 0.0
  %1389 = vmatpush2.msra.mxu0 0.0
  %1390 = vmatprep.subr.mxu0 0.0
  %1391 = vmatpush2.msra.mxu0 0.0
  %1392 = vmatprep.subr.mxu0 0.0
  %1393 = vmatpush2.msra.mxu0 0.0
  %1394 = vmatprep.subr.mxu0 0.0
  %1395 = vmatpush2.msra.mxu0 0.0
  %1396 = vmatprep.subr.mxu0 0.0
  %1397 = vmatpush2.msra.mxu0 0.0
  %1398 = vmatprep.subr.mxu0 0.0
  %1399 = vmatpush2.msra.mxu0 0.0
  %1400 = vmatprep.subr.mxu0 0.0
  %1401 = vmatpush2.msra.mxu0 0.0
  %1402 = vmatprep.mubr.f32.mxu0 0.0
  %1403 = vmatmul.mubr.f32.gmra.mxu0 %v1330
  %v1404 = vpop.f32.mrf.mxu0
  %v1405 = vadd.f32 0.0, %v1404
  %v1406 = vpop.f32.mrf.mxu0
  %1407 = vmatprep.mubr.f32.mxu0 0.0
  %1408 = vmatmul.mubr.f32.gmra.mxu0 %v1331
  %v1409 = vpop.f32.mrf.mxu0
  %v1410 = vadd.f32 0.0, %v1409
  %v1411 = vpop.f32.mrf.mxu0
  %1412 = vmatprep.mubr.f32.mxu0 0.0
  %1413 = vmatmul.mubr.f32.gmra.mxu0 %v1332
  %v1414 = vpop.f32.mrf.mxu0
  %v1415 = vadd.f32 0.0, %v1414
  %v1416 = vpop.f32.mrf.mxu0
  %1417 = vmatprep.mubr.f32.mxu0 0.0
  %1418 = vmatmul.mubr.f32.gmra.mxu0 %v1333
  %v1419 = vpop.f32.mrf.mxu0
  %v1420 = vadd.f32 0.0, %v1419
  %v1421 = vpop.f32.mrf.mxu0
  %1422 = vmatprep.mubr.f32.mxu0 0.0
  %1423 = vmatmul.mubr.f32.gmra.mxu0 %v1334
  %v1424 = vpop.f32.mrf.mxu0
  %v1425 = vadd.f32 0.0, %v1424
  %v1426 = vpop.f32.mrf.mxu0
  %1427 = vmatprep.mubr.f32.mxu0 0.0
  %1428 = vmatmul.mubr.f32.gmra.mxu0 %v1335
  %v1429 = vpop.f32.mrf.mxu0
  %v1430 = vadd.f32 0.0, %v1429
  %v1431 = vpop.f32.mrf.mxu0
  %1432 = vmatprep.mubr.f32.mxu0 0.0
  %1433 = vmatmul.mubr.f32.gmra.mxu0 %v1336
  %v1434 = vpop.f32.mrf.mxu0
  %v1435 = vadd.f32 0.0, %v1434
  %v1436 = vpop.f32.mrf.mxu0
  %1437 = vmatprep.mubr.f32.mxu0 0.0
  %1438 = vmatmul.mubr.f32.gmra.mxu0 %v1337
  %v1439 = vpop.f32.mrf.mxu0
  %v1440 = vadd.f32 0.0, %v1439
  %v1441 = vpop.f32.mrf.mxu0
  %1442 = vdwg.mxu0
  %v1443 = vadd.f32 %v1127, %v1405
  %v1444 = vadd.f32 %v1128, %v1410
  %v1445 = vadd.f32 %v1129, %v1415
  %v1446 = vadd.f32 %v1130, %v1420
  %v1447 = vadd.f32 %v1131, %v1425
  %v1448 = vadd.f32 %v1132, %v1430
  %v1449 = vadd.f32 %v1133, %v1435
  %v1450 = vadd.f32 %v1134, %v1440
  %v1451 = vld [vmem:[%s3] sm:$0xff]
  %v1452 = vld [vmem:[%s3 + $0x8] sm:$0xff]
  %v1453 = vld [vmem:[%s3 + $0x10] sm:$0xff]
  %v1454 = vld [vmem:[%s3 + $0x18] sm:$0xff]
  %v1455 = vld [vmem:[%s3 + $0x20] sm:$0xff]
  %v1456 = vld [vmem:[%s3 + $0x28] sm:$0xff]
  %v1457 = vld [vmem:[%s3 + $0x30] sm:$0xff]
  %v1458 = vld [vmem:[%s3 + $0x38] sm:$0xff]
  %v1459 = vld [vmem:[%s3 + $0x40] sm:$0xff]
  %v1460 = vld [vmem:[%s3 + $0x48] sm:$0xff]
  %v1461 = vld [vmem:[%s3 + $0x50] sm:$0xff]
  %v1462 = vld [vmem:[%s3 + $0x58] sm:$0xff]
  %v1463 = vld [vmem:[%s3 + $0x60] sm:$0xff]
  %v1464 = vld [vmem:[%s3 + $0x68] sm:$0xff]
  %v1465 = vld [vmem:[%s3 + $0x70] sm:$0xff]
  %v1466 = vld [vmem:[%s3 + $0x78] sm:$0xff]
  %v1467 = vld [vmem:[%s4] sm:$0xf]
  %v1468 = vld [vmem:[%s5] sm:$0x1]
  %v1469 = vld [vmem:[%s6] sm:$0x1]
  %v1470 = vadd.f32 %v1443, %v1444
  %v1471 = vadd.f32 %v1470, %v1445
  %v1472 = vadd.f32 %v1471, %v1446
  %v1473 = vadd.f32 %v1472, %v1447
  %v1474 = vadd.f32 %v1473, %v1448
  %v1475 = vadd.f32 %v1474, %v1449
  %v1476 = vadd.f32 %v1475, %v1450
  %v1477 = vrot.slane %v1476, 4
  %v1478 = vadd.f32 %v1476, %v1477
  %v1479 = vrot.slane %v1478, 2
  %v1480 = vadd.f32 %v1478, %v1479
  %v1481 = vrot.slane %v1480, 1
  %v1482 = vadd.f32 %v1480, %v1481
  %v1483 = vmul.f32 %v1443, %v1443
  %v1484 = vmul.f32 %v1444, %v1444
  %v1485 = vmul.f32 %v1445, %v1445
  %v1486 = vmul.f32 %v1446, %v1446
  %v1487 = vmul.f32 %v1447, %v1447
  %v1488 = vmul.f32 %v1448, %v1448
  %v1489 = vmul.f32 %v1449, %v1449
  %v1490 = vmul.f32 %v1450, %v1450
  %v1491 = vadd.f32 %v1483, %v1484
  %v1492 = vadd.f32 %v1491, %v1485
  %v1493 = vadd.f32 %v1492, %v1486
  %v1494 = vadd.f32 %v1493, %v1487
  %v1495 = vadd.f32 %v1494, %v1488
  %v1496 = vadd.f32 %v1495, %v1489
  %v1497 = vadd.f32 %v1496, %v1490
  %v1498 = vrot.slane %v1497, 4
  %v1499 = vadd.f32 %v1497, %v1498
  %v1500 = vrot.slane %v1499, 2
  %v1501 = vadd.f32 %v1499, %v1500
  %v1502 = vrot.slane %v1501, 1
  %v1503 = vadd.f32 %v1501, %v1502
  %1504 = vmatprep.subr.mxu0 0.0
  %1505 = vmatpush1.msra.mxu0 %v1466
  %1506 = vmatprep.subr.mxu0 0.0
  %1507 = vmatpush1.msra.mxu0 %v1465
  %1508 = vmatprep.subr.mxu0 0.0
  %1509 = vmatpush1.msra.mxu0 %v1464
  %1510 = vmatprep.subr.mxu0 0.0
  %1511 = vmatpush1.msra.mxu0 %v1463
  %1512 = vmatprep.subr.mxu0 0.0
  %1513 = vmatpush1.msra.mxu0 %v1462
  %1514 = vmatprep.subr.mxu0 0.0
  %1515 = vmatpush1.msra.mxu0 %v1461
  %1516 = vmatprep.subr.mxu0 0.0
  %1517 = vmatpush1.msra.mxu0 %v1460
  %1518 = vmatprep.subr.mxu0 0.0
  %1519 = vmatpush1.msra.mxu0 %v1459
  %1520 = vmatprep.subr.mxu0 0.0
  %1521 = vmatpush1.msra.mxu0 %v1458
  %1522 = vmatprep.subr.mxu0 0.0
  %1523 = vmatpush1.msra.mxu0 %v1457
  %1524 = vmatprep.subr.mxu0 0.0
  %1525 = vmatpush1.msra.mxu0 %v1456
  %1526 = vmatprep.subr.mxu0 0.0
  %1527 = vmatpush1.msra.mxu0 %v1455
  %1528 = vmatprep.subr.mxu0 0.0
  %1529 = vmatpush1.msra.mxu0 %v1454
  %1530 = vmatprep.subr.mxu0 0.0
  %1531 = vmatpush1.msra.mxu0 %v1453
  %1532 = vmatprep.subr.mxu0 0.0
  %1533 = vmatpush1.msra.mxu0 %v1452
  %1534 = vmatprep.subr.mxu0 0.0
  %1535 = vmatpush1.msra.mxu0 %v1451
  %1536 = vmatprep.subr.mxu0 0.0
  %1537 = vmatpush2.msra.mxu0 0.0
  %1538 = vmatprep.subr.mxu0 0.0
  %1539 = vmatpush2.msra.mxu0 0.0
  %1540 = vmatprep.subr.mxu0 0.0
  %1541 = vmatpush2.msra.mxu0 0.0
  %1542 = vmatprep.subr.mxu0 0.0
  %1543 = vmatpush2.msra.mxu0 0.0
  %1544 = vmatprep.subr.mxu0 0.0
  %1545 = vmatpush2.msra.mxu0 0.0
  %1546 = vmatprep.subr.mxu0 0.0
  %1547 = vmatpush2.msra.mxu0 0.0
  %1548 = vmatprep.subr.mxu0 0.0
  %1549 = vmatpush2.msra.mxu0 0.0
  %1550 = vmatprep.subr.mxu0 0.0
  %1551 = vmatpush2.msra.mxu0 0.0
  %1552 = vmatprep.subr.mxu0 0.0
  %1553 = vmatpush2.msra.mxu0 0.0
  %1554 = vmatprep.subr.mxu0 0.0
  %1555 = vmatpush2.msra.mxu0 0.0
  %1556 = vmatprep.subr.mxu0 0.0
  %1557 = vmatpush2.msra.mxu0 0.0
  %1558 = vmatprep.subr.mxu0 0.0
  %1559 = vmatpush2.msra.mxu0 0.0
  %1560 = vmatprep.subr.mxu0 0.0
  %1561 = vmatpush2.msra.mxu0 0.0
  %1562 = vmatprep.subr.mxu0 0.0
  %1563 = vmatpush2.msra.mxu0 0.0
  %1564 = vmatprep.subr.mxu0 0.0
  %1565 = vmatpush2.msra.mxu0 0.0
  %1566 = vmatprep.subr.mxu0 0.0
  %1567 = vmatpush2.msra.mxu0 0.0
  %1568 = vmatprep.mubr.f32.mxu0 0.0
  %1569 = vmatmul.mubr.f32.gmra.mxu0 %v1482
  %v1570 = vpop.f32.mrf.mxu0
  %v1571 = vadd.f32 0.0, %v1570
  %v1572 = vpop.f32.mrf.mxu0
  %1573 = vdwg.mxu0
  %v1574 = vmul.f32 %v1571, 0.00048828125
  %1575 = vmatprep.subr.mxu0 0.0
  %1576 = vmatpush1.msra.mxu0 %v1466
  %1577 = vmatprep.subr.mxu0 0.0
  %1578 = vmatpush1.msra.mxu0 %v1465
  %1579 = vmatprep.subr.mxu0 0.0
  %1580 = vmatpush1.msra.mxu0 %v1464
  %1581 = vmatprep.subr.mxu0 0.0
  %1582 = vmatpush1.msra.mxu0 %v1463
  %1583 = vmatprep.subr.mxu0 0.0
  %1584 = vmatpush1.msra.mxu0 %v1462
  %1585 = vmatprep.subr.mxu0 0.0
  %1586 = vmatpush1.msra.mxu0 %v1461
  %1587 = vmatprep.subr.mxu0 0.0
  %1588 = vmatpush1.msra.mxu0 %v1460
  %1589 = vmatprep.subr.mxu0 0.0
  %1590 = vmatpush1.msra.mxu0 %v1459
  %1591 = vmatprep.subr.mxu0 0.0
  %1592 = vmatpush1.msra.mxu0 %v1458
  %1593 = vmatprep.subr.mxu0 0.0
  %1594 = vmatpush1.msra.mxu0 %v1457
  %1595 = vmatprep.subr.mxu0 0.0
  %1596 = vmatpush1.msra.mxu0 %v1456
  %1597 = vmatprep.subr.mxu0 0.0
  %1598 = vmatpush1.msra.mxu0 %v1455
  %1599 = vmatprep.subr.mxu0 0.0
  %1600 = vmatpush1.msra.mxu0 %v1454
  %1601 = vmatprep.subr.mxu0 0.0
  %1602 = vmatpush1.msra.mxu0 %v1453
  %1603 = vmatprep.subr.mxu0 0.0
  %1604 = vmatpush1.msra.mxu0 %v1452
  %1605 = vmatprep.subr.mxu0 0.0
  %1606 = vmatpush1.msra.mxu0 %v1451
  %1607 = vmatprep.subr.mxu0 0.0
  %1608 = vmatpush2.msra.mxu0 0.0
  %1609 = vmatprep.subr.mxu0 0.0
  %1610 = vmatpush2.msra.mxu0 0.0
  %1611 = vmatprep.subr.mxu0 0.0
  %1612 = vmatpush2.msra.mxu0 0.0
  %1613 = vmatprep.subr.mxu0 0.0
  %1614 = vmatpush2.msra.mxu0 0.0
  %1615 = vmatprep.subr.mxu0 0.0
  %1616 = vmatpush2.msra.mxu0 0.0
  %1617 = vmatprep.subr.mxu0 0.0
  %1618 = vmatpush2.msra.mxu0 0.0
  %1619 = vmatprep.subr.mxu0 0.0
  %1620 = vmatpush2.msra.mxu0 0.0
  %1621 = vmatprep.subr.mxu0 0.0
  %1622 = vmatpush2.msra.mxu0 0.0
  %1623 = vmatprep.subr.mxu0 0.0
  %1624 = vmatpush2.msra.mxu0 0.0
  %1625 = vmatprep.subr.mxu0 0.0
  %1626 = vmatpush2.msra.mxu0 0.0
  %1627 = vmatprep.subr.mxu0 0.0
  %1628 = vmatpush2.msra.mxu0 0.0
  %1629 = vmatprep.subr.mxu0 0.0
  %1630 = vmatpush2.msra.mxu0 0.0
  %1631 = vmatprep.subr.mxu0 0.0
  %1632 = vmatpush2.msra.mxu0 0.0
  %1633 = vmatprep.subr.mxu0 0.0
  %1634 = vmatpush2.msra.mxu0 0.0
  %1635 = vmatprep.subr.mxu0 0.0
  %1636 = vmatpush2.msra.mxu0 0.0
  %1637 = vmatprep.subr.mxu0 0.0
  %1638 = vmatpush2.msra.mxu0 0.0
  %1639 = vmatprep.mubr.f32.mxu0 0.0
  %1640 = vmatmul.mubr.f32.gmra.mxu0 %v1503
  %v1641 = vpop.f32.mrf.mxu0
  %v1642 = vadd.f32 0.0, %v1641
  %v1643 = vpop.f32.mrf.mxu0
  %1644 = vdwg.mxu0
  %v1645 = vmul.f32 %v1642, 0.00048828125
  %v1646 = vmul.f32 %v1574, %v1574
  %v1647 = vsub.f32 %v1645, %v1646
  %v1648 = vadd.f32 %v1647, 1e-05
  %v1649 = vrsqrt.pop %v1648
  %v1650 = vmul.f32 %v1468, %v1649
  %v1651 = vmul.f32 %v1574, %v1650
  %v1652 = vsub.f32 %v1469, %v1651
  %vm1653 = vcmask 31744
  %v1655 = vsel %vm1653, %v1650, 0
  %vm1657 = vcmask 1043456
  %v1659 = vsel %vm1657, %v1467, 0
  %1661 = vmatprep.subr.mxu0 0.0
  %1662 = vmatpush1.msra.mxu0 0.0
  %1663 = vmatprep.subr.mxu0 0.0
  %1664 = vmatpush1.msra.mxu0 0.0
  %1665 = vmatprep.subr.mxu0 0.0
  %1666 = vmatpush1.msra.mxu0 0.0
  %1667 = vmatprep.subr.mxu0 0.0
  %1668 = vmatpush1.msra.mxu0 0.0
  %1669 = vmatprep.subr.mxu0 0.0
  %1670 = vmatpush1.msra.mxu0 0.0
  %1671 = vmatprep.subr.mxu0 0.0
  %1672 = vmatpush1.msra.mxu0 0.0
  %1673 = vmatprep.subr.mxu0 0.0
  %1674 = vmatpush1.msra.mxu0 0.0
  %1675 = vmatprep.subr.mxu0 0.0
  %1676 = vmatpush1.msra.mxu0 0.0
  %1677 = vmatprep.subr.mxu0 0.0
  %1678 = vmatpush1.msra.mxu0 0.0
  %1679 = vmatprep.subr.mxu0 0.0
  %1680 = vmatpush1.msra.mxu0 0.0
  %1681 = vmatprep.subr.mxu0 0.0
  %1682 = vmatpush1.msra.mxu0 0.0
  %1683 = vmatprep.subr.mxu0 0.0
  %1684 = vmatpush1.msra.mxu0 0.0
  %1685 = vmatprep.subr.mxu0 0.0
  %1686 = vmatpush1.msra.mxu0 0.0
  %1687 = vmatprep.subr.mxu0 0.0
  %1688 = vmatpush1.msra.mxu0 0.0
  %1689 = vmatprep.subr.mxu0 0.0
  %1690 = vmatpush1.msra.mxu0 0.0
  %1691 = vmatprep.subr.mxu0 0.0
  %1692 = vmatpush1.msra.mxu0 %v1659
  %1693 = vmatprep.subr.mxu0 0.0
  %1694 = vmatpush2.msra.mxu0 0.0
  %1695 = vmatprep.subr.mxu0 0.0
  %1696 = vmatpush2.msra.mxu0 0.0
  %1697 = vmatprep.subr.mxu0 0.0
  %1698 = vmatpush2.msra.mxu0 0.0
  %1699 = vmatprep.subr.mxu0 0.0
  %1700 = vmatpush2.msra.mxu0 0.0
  %1701 = vmatprep.subr.mxu0 0.0
  %1702 = vmatpush2.msra.mxu0 0.0
  %1703 = vmatprep.subr.mxu0 0.0
  %1704 = vmatpush2.msra.mxu0 0.0
  %1705 = vmatprep.subr.mxu0 0.0
  %1706 = vmatpush2.msra.mxu0 0.0
  %1707 = vmatprep.subr.mxu0 0.0
  %1708 = vmatpush2.msra.mxu0 0.0
  %1709 = vmatprep.subr.mxu0 0.0
  %1710 = vmatpush2.msra.mxu0 0.0
  %1711 = vmatprep.subr.mxu0 0.0
  %1712 = vmatpush2.msra.mxu0 0.0
  %1713 = vmatprep.subr.mxu0 0.0
  %1714 = vmatpush2.msra.mxu0 0.0
  %1715 = vmatprep.subr.mxu0 0.0
  %1716 = vmatpush2.msra.mxu0 0.0
  %1717 = vmatprep.subr.mxu0 0.0
  %1718 = vmatpush2.msra.mxu0 0.0
  %1719 = vmatprep.subr.mxu0 0.0
  %1720 = vmatpush2.msra.mxu0 0.0
  %1721 = vmatprep.subr.mxu0 0.0
  %1722 = vmatpush2.msra.mxu0 0.0
  %1723 = vmatprep.subr.mxu0 0.0
  %1724 = vmatpush2.msra.mxu0 0.0
  %1725 = vmatprep.mubr.f32.mxu0 0.0
  %1726 = vmatmul.mubr.f32.gmra.mxu0 %v1655
  %v1727 = vpop.f32.mrf.mxu0
  %v1728 = vadd.f32 0.0, %v1727
  %v1729 = vpop.f32.mrf.mxu0
  %1730 = vdwg.mxu0
  %v1731 = vlaneseq
  %v1732 = vshrl.u32 %v1731, 7
  %v1733 = vsub.s32 0, %v1732
  %v1734 = vrot.slane %v1728, %v1733
  %v1735 = vmul.f32 %v1443, %v1734
  %v1736 = vmul.f32 %v1444, %v1734
  %v1737 = vmul.f32 %v1445, %v1734
  %v1738 = vmul.f32 %v1446, %v1734
  %v1739 = vmul.f32 %v1447, %v1734
  %v1740 = vmul.f32 %v1448, %v1734
  %v1741 = vmul.f32 %v1449, %v1734
  %v1742 = vmul.f32 %v1450, %v1734
  %v1744 = vsel %vm1653, %v1652, 0
  %1746 = vmatprep.subr.mxu0 0.0
  %1747 = vmatpush1.msra.mxu0 0.0
  %1748 = vmatprep.subr.mxu0 0.0
  %1749 = vmatpush1.msra.mxu0 0.0
  %1750 = vmatprep.subr.mxu0 0.0
  %1751 = vmatpush1.msra.mxu0 0.0
  %1752 = vmatprep.subr.mxu0 0.0
  %1753 = vmatpush1.msra.mxu0 0.0
  %1754 = vmatprep.subr.mxu0 0.0
  %1755 = vmatpush1.msra.mxu0 0.0
  %1756 = vmatprep.subr.mxu0 0.0
  %1757 = vmatpush1.msra.mxu0 0.0
  %1758 = vmatprep.subr.mxu0 0.0
  %1759 = vmatpush1.msra.mxu0 0.0
  %1760 = vmatprep.subr.mxu0 0.0
  %1761 = vmatpush1.msra.mxu0 0.0
  %1762 = vmatprep.subr.mxu0 0.0
  %1763 = vmatpush1.msra.mxu0 0.0
  %1764 = vmatprep.subr.mxu0 0.0
  %1765 = vmatpush1.msra.mxu0 0.0
  %1766 = vmatprep.subr.mxu0 0.0
  %1767 = vmatpush1.msra.mxu0 0.0
  %1768 = vmatprep.subr.mxu0 0.0
  %1769 = vmatpush1.msra.mxu0 0.0
  %1770 = vmatprep.subr.mxu0 0.0
  %1771 = vmatpush1.msra.mxu0 0.0
  %1772 = vmatprep.subr.mxu0 0.0
  %1773 = vmatpush1.msra.mxu0 0.0
  %1774 = vmatprep.subr.mxu0 0.0
  %1775 = vmatpush1.msra.mxu0 0.0
  %1776 = vmatprep.subr.mxu0 0.0
  %1777 = vmatpush1.msra.mxu0 %v1659
  %1778 = vmatprep.subr.mxu0 0.0
  %1779 = vmatpush2.msra.mxu0 0.0
  %1780 = vmatprep.subr.mxu0 0.0
  %1781 = vmatpush2.msra.mxu0 0.0
  %1782 = vmatprep.subr.mxu0 0.0
  %1783 = vmatpush2.msra.mxu0 0.0
  %1784 = vmatprep.subr.mxu0 0.0
  %1785 = vmatpush2.msra.mxu0 0.0
  %1786 = vmatprep.subr.mxu0 0.0
  %1787 = vmatpush2.msra.mxu0 0.0
  %1788 = vmatprep.subr.mxu0 0.0
  %1789 = vmatpush2.msra.mxu0 0.0
  %1790 = vmatprep.subr.mxu0 0.0
  %1791 = vmatpush2.msra.mxu0 0.0
  %1792 = vmatprep.subr.mxu0 0.0
  %1793 = vmatpush2.msra.mxu0 0.0
  %1794 = vmatprep.subr.mxu0 0.0
  %1795 = vmatpush2.msra.mxu0 0.0
  %1796 = vmatprep.subr.mxu0 0.0
  %1797 = vmatpush2.msra.mxu0 0.0
  %1798 = vmatprep.subr.mxu0 0.0
  %1799 = vmatpush2.msra.mxu0 0.0
  %1800 = vmatprep.subr.mxu0 0.0
  %1801 = vmatpush2.msra.mxu0 0.0
  %1802 = vmatprep.subr.mxu0 0.0
  %1803 = vmatpush2.msra.mxu0 0.0
  %1804 = vmatprep.subr.mxu0 0.0
  %1805 = vmatpush2.msra.mxu0 0.0
  %1806 = vmatprep.subr.mxu0 0.0
  %1807 = vmatpush2.msra.mxu0 0.0
  %1808 = vmatprep.subr.mxu0 0.0
  %1809 = vmatpush2.msra.mxu0 0.0
  %1810 = vmatprep.mubr.f32.mxu0 0.0
  %1811 = vmatmul.mubr.f32.gmra.mxu0 %v1744
  %v1812 = vpop.f32.mrf.mxu0
  %v1813 = vadd.f32 0.0, %v1812
  %v1814 = vpop.f32.mrf.mxu0
  %1815 = vdwg.mxu0
  %v1816 = vlaneseq
  %v1817 = vshrl.u32 %v1816, 7
  %v1818 = vsub.s32 0, %v1817
  %v1819 = vrot.slane %v1813, %v1818
  %v1820 = vadd.f32 %v1735, %v1819
  %v1821 = vadd.f32 %v1736, %v1819
  %v1822 = vadd.f32 %v1737, %v1819
  %v1823 = vadd.f32 %v1738, %v1819
  %v1824 = vadd.f32 %v1739, %v1819
  %v1825 = vadd.f32 %v1740, %v1819
  %v1826 = vadd.f32 %v1741, %v1819
  %v1827 = vadd.f32 %v1742, %v1819
  %vm1828 = vcmp.gt.f32.partialorder %v1820, 0.0
  %vm1829 = vcmp.gt.f32.partialorder %v1821, 0.0
  %vm1830 = vcmp.gt.f32.partialorder %v1822, 0.0
  %vm1831 = vcmp.gt.f32.partialorder %v1823, 0.0
  %vm1832 = vcmp.gt.f32.partialorder %v1824, 0.0
  %vm1833 = vcmp.gt.f32.partialorder %v1825, 0.0
  %vm1834 = vcmp.gt.f32.partialorder %v1826, 0.0
  %vm1835 = vcmp.gt.f32.partialorder %v1827, 0.0
  %v1836 = vmul.f32 %v1820, 0.2
  %v1837 = vmul.f32 %v1821, 0.2
  %v1838 = vmul.f32 %v1822, 0.2
  %v1839 = vmul.f32 %v1823, 0.2
  %v1840 = vmul.f32 %v1824, 0.2
  %v1841 = vmul.f32 %v1825, 0.2
  %v1842 = vmul.f32 %v1826, 0.2
  %v1843 = vmul.f32 %v1827, 0.2
  %v1844 = vsel %vm1828, %v1820, %v1836
  %v1845 = vsel %vm1829, %v1821, %v1837
  %v1846 = vsel %vm1830, %v1822, %v1838
  %v1847 = vsel %vm1831, %v1823, %v1839
  %v1848 = vsel %vm1832, %v1824, %v1840
  %v1849 = vsel %vm1833, %v1825, %v1841
  %v1850 = vsel %vm1834, %v1826, %v1842
  %v1851 = vsel %vm1835, %v1827, %v1843
  %v1852 = vpack.c.bf16 %v1845, %v1844
  %v1853 = vpack.c.bf16 %v1847, %v1846
  %v1854 = vpack.c.bf16 %v1849, %v1848
  %v1855 = vpack.c.bf16 %v1851, %v1850
  %v1856 = vld [vmem:[%s8] sm:$0xf]
  %v1857 = vld [vmem:[%s8 + $0x4] sm:$0xf]
  %v1858 = vld [vmem:[%s8 + $0x8] sm:$0xf]
  %v1859 = vld [vmem:[%s8 + $0xc] sm:$0xf]
  %v1860 = vld [vmem:[%s8 + $0x10] sm:$0xf]
  %v1861 = vld [vmem:[%s8 + $0x14] sm:$0xf]
  %v1862 = vld [vmem:[%s8 + $0x18] sm:$0xf]
  %v1863 = vld [vmem:[%s8 + $0x1c] sm:$0xf]
  %v1864 = vld [vmem:[%s8 + $0x20] sm:$0xf]
  %v1865 = vld [vmem:[%s8 + $0x24] sm:$0xf]
  %v1866 = vld [vmem:[%s8 + $0x28] sm:$0xf]
  %v1867 = vld [vmem:[%s8 + $0x2c] sm:$0xf]
  %v1868 = vld [vmem:[%s8 + $0x30] sm:$0xf]
  %v1869 = vld [vmem:[%s8 + $0x34] sm:$0xf]
  %v1870 = vld [vmem:[%s8 + $0x38] sm:$0xf]
  %v1871 = vld [vmem:[%s8 + $0x3c] sm:$0xf]
  %v1888 = vunpack.c.l.b16 %v1856
  %v1889 = vunpack.c.l.b16 %v1857
  %v1890 = vunpack.c.l.b16 %v1858
  %v1891 = vunpack.c.l.b16 %v1859
  %v1892 = vunpack.c.l.b16 %v1860
  %v1893 = vunpack.c.l.b16 %v1861
  %v1894 = vunpack.c.l.b16 %v1862
  %v1895 = vunpack.c.l.b16 %v1863
  %v1896 = vunpack.c.l.b16 %v1864
  %v1897 = vunpack.c.l.b16 %v1865
  %v1898 = vunpack.c.l.b16 %v1866
  %v1899 = vunpack.c.l.b16 %v1867
  %v1900 = vunpack.c.l.b16 %v1868
  %v1901 = vunpack.c.l.b16 %v1869
  %v1902 = vunpack.c.l.b16 %v1870
  %v1903 = vunpack.c.l.b16 %v1871
  %v1904 = vpack.c.b16 %v1889, %v1888
  %v1905 = vpack.c.b16 %v1891, %v1890
  %v1906 = vpack.c.b16 %v1893, %v1892
  %v1907 = vpack.c.b16 %v1895, %v1894
  %v1908 = vpack.c.b16 %v1897, %v1896
  %v1909 = vpack.c.b16 %v1899, %v1898
  %v1910 = vpack.c.b16 %v1901, %v1900
  %v1911 = vpack.c.b16 %v1903, %v1902
  %1920 = vmatprep.subr.bf16.mxu0 0
  %1921 = vmatpush1.bf16.msra.mxu0 %v1911
  %1922 = vmatprep.subr.bf16.mxu0 0
  %1923 = vmatpush1.bf16.msra.mxu0 %v1910
  %1924 = vmatprep.subr.bf16.mxu0 0
  %1925 = vmatpush1.bf16.msra.mxu0 %v1909
  %1926 = vmatprep.subr.bf16.mxu0 0
  %1927 = vmatpush1.bf16.msra.mxu0 %v1908
  %1928 = vmatprep.subr.bf16.mxu0 0
  %1929 = vmatpush1.bf16.msra.mxu0 %v1907
  %1930 = vmatprep.subr.bf16.mxu0 0
  %1931 = vmatpush1.bf16.msra.mxu0 %v1906
  %1932 = vmatprep.subr.bf16.mxu0 0
  %1933 = vmatpush1.bf16.msra.mxu0 %v1905
  %1934 = vmatprep.subr.bf16.mxu0 0
  %1935 = vmatpush1.bf16.msra.mxu0 %v1904
  %1936 = vmatprep.subr.bf16.mxu0 0
  %1937 = vmatpush2.bf16.msra.mxu0 0
  %1938 = vmatprep.subr.bf16.mxu0 0
  %1939 = vmatpush2.bf16.msra.mxu0 0
  %1940 = vmatprep.subr.bf16.mxu0 0
  %1941 = vmatpush2.bf16.msra.mxu0 0
  %1942 = vmatprep.subr.bf16.mxu0 0
  %1943 = vmatpush2.bf16.msra.mxu0 0
  %1944 = vmatprep.subr.bf16.mxu0 0
  %1945 = vmatpush2.bf16.msra.mxu0 0
  %1946 = vmatprep.subr.bf16.mxu0 0
  %1947 = vmatpush2.bf16.msra.mxu0 0
  %1948 = vmatprep.subr.bf16.mxu0 0
  %1949 = vmatpush2.bf16.msra.mxu0 0
  %1950 = vmatprep.subr.bf16.mxu0 0
  %1951 = vmatpush2.bf16.msra.mxu0 0
  %1952 = vmatprep.mubr.bf16.mxu0 0
  %1953 = vmatmul.mubr.bf16.gmra.mxu0 %v1852
  %v1954 = vpop.f32.mrf.mxu0
  %v1955 = vadd.f32 0.0, %v1954
  %v1956 = vpop.f32.mrf.mxu0
  %v1957 = vpop.f32.mrf.mxu0
  %v1958 = vadd.f32 0.0, %v1957
  %v1959 = vpop.f32.mrf.mxu0
  %1960 = vmatprep.mubr.bf16.mxu0 0
  %1961 = vmatmul.mubr.bf16.gmra.mxu0 %v1853
  %v1962 = vpop.f32.mrf.mxu0
  %v1963 = vadd.f32 0.0, %v1962
  %v1964 = vpop.f32.mrf.mxu0
  %v1965 = vpop.f32.mrf.mxu0
  %v1966 = vadd.f32 0.0, %v1965
  %v1967 = vpop.f32.mrf.mxu0
  %1968 = vmatprep.mubr.bf16.mxu0 0
  %1969 = vmatmul.mubr.bf16.gmra.mxu0 %v1854
  %v1970 = vpop.f32.mrf.mxu0
  %v1971 = vadd.f32 0.0, %v1970
  %v1972 = vpop.f32.mrf.mxu0
  %v1973 = vpop.f32.mrf.mxu0
  %v1974 = vadd.f32 0.0, %v1973
  %v1975 = vpop.f32.mrf.mxu0
  %1976 = vmatprep.mubr.bf16.mxu0 0
  %1977 = vmatmul.mubr.bf16.gmra.mxu0 %v1855
  %v1978 = vpop.f32.mrf.mxu0
  %v1979 = vadd.f32 0.0, %v1978
  %v1980 = vpop.f32.mrf.mxu0
  %v1981 = vpop.f32.mrf.mxu0
  %v1982 = vadd.f32 0.0, %v1981
  %v1983 = vpop.f32.mrf.mxu0
  %1984 = vdwg.mxu0
  %v1985 = vld [vmem:[%s7] sm:$0xff]
  %v1986 = vld [vmem:[%s7 + $0x8] sm:$0xff]
  %v1987 = vld [vmem:[%s7 + $0x10] sm:$0xff]
  %v1988 = vld [vmem:[%s7 + $0x18] sm:$0xff]
  %s1989 = scalar_lea.vmem %s8, 64
  %v1990 = vld [vmem:[%s1989] sm:$0xf]
  %v1991 = vld [vmem:[%s1989 + $0x4] sm:$0xf]
  %v1992 = vld [vmem:[%s1989 + $0x8] sm:$0xf]
  %v1993 = vld [vmem:[%s1989 + $0xc] sm:$0xf]
  %v1994 = vld [vmem:[%s1989 + $0x10] sm:$0xf]
  %v1995 = vld [vmem:[%s1989 + $0x14] sm:$0xf]
  %v1996 = vld [vmem:[%s1989 + $0x18] sm:$0xf]
  %v1997 = vld [vmem:[%s1989 + $0x1c] sm:$0xf]
  %v1998 = vld [vmem:[%s1989 + $0x20] sm:$0xf]
  %v1999 = vld [vmem:[%s1989 + $0x24] sm:$0xf]
  %v2000 = vld [vmem:[%s1989 + $0x28] sm:$0xf]
  %v2001 = vld [vmem:[%s1989 + $0x2c] sm:$0xf]
  %v2002 = vld [vmem:[%s1989 + $0x30] sm:$0xf]
  %v2003 = vld [vmem:[%s1989 + $0x34] sm:$0xf]
  %v2004 = vld [vmem:[%s1989 + $0x38] sm:$0xf]
  %v2005 = vld [vmem:[%s1989 + $0x3c] sm:$0xf]
  %v2022 = vunpack.c.l.b16 %v1990
  %v2023 = vunpack.c.l.b16 %v1991
  %v2024 = vunpack.c.l.b16 %v1992
  %v2025 = vunpack.c.l.b16 %v1993
  %v2026 = vunpack.c.l.b16 %v1994
  %v2027 = vunpack.c.l.b16 %v1995
  %v2028 = vunpack.c.l.b16 %v1996
  %v2029 = vunpack.c.l.b16 %v1997
  %v2030 = vunpack.c.l.b16 %v1998
  %v2031 = vunpack.c.l.b16 %v1999
  %v2032 = vunpack.c.l.b16 %v2000
  %v2033 = vunpack.c.l.b16 %v2001
  %v2034 = vunpack.c.l.b16 %v2002
  %v2035 = vunpack.c.l.b16 %v2003
  %v2036 = vunpack.c.l.b16 %v2004
  %v2037 = vunpack.c.l.b16 %v2005
  %v2038 = vpack.c.b16 %v2023, %v2022
  %v2039 = vpack.c.b16 %v2025, %v2024
  %v2040 = vpack.c.b16 %v2027, %v2026
  %v2041 = vpack.c.b16 %v2029, %v2028
  %v2042 = vpack.c.b16 %v2031, %v2030
  %v2043 = vpack.c.b16 %v2033, %v2032
  %v2044 = vpack.c.b16 %v2035, %v2034
  %v2045 = vpack.c.b16 %v2037, %v2036
  %2054 = vmatprep.subr.bf16.mxu0 0
  %2055 = vmatpush1.bf16.msra.mxu0 %v2045
  %2056 = vmatprep.subr.bf16.mxu0 0
  %2057 = vmatpush1.bf16.msra.mxu0 %v2044
  %2058 = vmatprep.subr.bf16.mxu0 0
  %2059 = vmatpush1.bf16.msra.mxu0 %v2043
  %2060 = vmatprep.subr.bf16.mxu0 0
  %2061 = vmatpush1.bf16.msra.mxu0 %v2042
  %2062 = vmatprep.subr.bf16.mxu0 0
  %2063 = vmatpush1.bf16.msra.mxu0 %v2041
  %2064 = vmatprep.subr.bf16.mxu0 0
  %2065 = vmatpush1.bf16.msra.mxu0 %v2040
  %2066 = vmatprep.subr.bf16.mxu0 0
  %2067 = vmatpush1.bf16.msra.mxu0 %v2039
  %2068 = vmatprep.subr.bf16.mxu0 0
  %2069 = vmatpush1.bf16.msra.mxu0 %v2038
  %2070 = vmatprep.subr.bf16.mxu0 0
  %2071 = vmatpush2.bf16.msra.mxu0 0
  %2072 = vmatprep.subr.bf16.mxu0 0
  %2073 = vmatpush2.bf16.msra.mxu0 0
  %2074 = vmatprep.subr.bf16.mxu0 0
  %2075 = vmatpush2.bf16.msra.mxu0 0
  %2076 = vmatprep.subr.bf16.mxu0 0
  %2077 = vmatpush2.bf16.msra.mxu0 0
  %2078 = vmatprep.subr.bf16.mxu0 0
  %2079 = vmatpush2.bf16.msra.mxu0 0
  %2080 = vmatprep.subr.bf16.mxu0 0
  %2081 = vmatpush2.bf16.msra.mxu0 0
  %2082 = vmatprep.subr.bf16.mxu0 0
  %2083 = vmatpush2.bf16.msra.mxu0 0
  %2084 = vmatprep.subr.bf16.mxu0 0
  %2085 = vmatpush2.bf16.msra.mxu0 0
  %2086 = vmatprep.mubr.bf16.mxu0 0
  %2087 = vmatmul.mubr.bf16.gmra.mxu0 %v1852
  %v2088 = vpop.f32.mrf.mxu0
  %v2089 = vadd.f32 0.0, %v2088
  %v2090 = vpop.f32.mrf.mxu0
  %v2091 = vpop.f32.mrf.mxu0
  %v2092 = vadd.f32 0.0, %v2091
  %v2093 = vpop.f32.mrf.mxu0
  %2094 = vmatprep.mubr.bf16.mxu0 0
  %2095 = vmatmul.mubr.bf16.gmra.mxu0 %v1853
  %v2096 = vpop.f32.mrf.mxu0
  %v2097 = vadd.f32 0.0, %v2096
  %v2098 = vpop.f32.mrf.mxu0
  %v2099 = vpop.f32.mrf.mxu0
  %v2100 = vadd.f32 0.0, %v2099
  %v2101 = vpop.f32.mrf.mxu0
  %2102 = vmatprep.mubr.bf16.mxu0 0
  %2103 = vmatmul.mubr.bf16.gmra.mxu0 %v1854
  %v2104 = vpop.f32.mrf.mxu0
  %v2105 = vadd.f32 0.0, %v2104
  %v2106 = vpop.f32.mrf.mxu0
  %v2107 = vpop.f32.mrf.mxu0
  %v2108 = vadd.f32 0.0, %v2107
  %v2109 = vpop.f32.mrf.mxu0
  %2110 = vmatprep.mubr.bf16.mxu0 0
  %2111 = vmatmul.mubr.bf16.gmra.mxu0 %v1855
  %v2112 = vpop.f32.mrf.mxu0
  %v2113 = vadd.f32 0.0, %v2112
  %v2114 = vpop.f32.mrf.mxu0
  %v2115 = vpop.f32.mrf.mxu0
  %v2116 = vadd.f32 0.0, %v2115
  %v2117 = vpop.f32.mrf.mxu0
  %2118 = vdwg.mxu0
  %s2119 = scalar_lea.vmem %s7, 32
  %v2120 = vld [vmem:[%s2119] sm:$0xff]
  %v2121 = vld [vmem:[%s2119 + $0x8] sm:$0xff]
  %v2122 = vld [vmem:[%s2119 + $0x10] sm:$0xff]
  %v2123 = vld [vmem:[%s2119 + $0x18] sm:$0xff]
  %v2125 = vsel %vm276, %v2120, 0
  %v2128 = vsel %vm276, %v2121, 0
  %v2131 = vsel %vm276, %v2122, 0
  %v2134 = vsel %vm276, %v2123, 0
  %2136 = vmatprep.subr.mxu0 0.0
  %2137 = vmatpush1.msra.mxu0 0.0
  %2138 = vmatprep.subr.mxu0 0.0
  %2139 = vmatpush1.msra.mxu0 0.0
  %2140 = vmatprep.subr.mxu0 0.0
  %2141 = vmatpush1.msra.mxu0 0.0
  %2142 = vmatprep.subr.mxu0 0.0
  %2143 = vmatpush1.msra.mxu0 0.0
  %2144 = vmatprep.subr.mxu0 0.0
  %2145 = vmatpush1.msra.mxu0 0.0
  %2146 = vmatprep.subr.mxu0 0.0
  %2147 = vmatpush1.msra.mxu0 0.0
  %2148 = vmatprep.subr.mxu0 0.0
  %2149 = vmatpush1.msra.mxu0 0.0
  %2150 = vmatprep.subr.mxu0 0.0
  %2151 = vmatpush1.msra.mxu0 0.0
  %2152 = vmatprep.subr.mxu0 0.0
  %2153 = vmatpush1.msra.mxu0 %v2116
  %2154 = vmatprep.subr.mxu0 0.0
  %2155 = vmatpush1.msra.mxu0 %v2113
  %2156 = vmatprep.subr.mxu0 0.0
  %2157 = vmatpush1.msra.mxu0 %v2108
  %2158 = vmatprep.subr.mxu0 0.0
  %2159 = vmatpush1.msra.mxu0 %v2105
  %2160 = vmatprep.subr.mxu0 0.0
  %2161 = vmatpush1.msra.mxu0 %v2100
  %2162 = vmatprep.subr.mxu0 0.0
  %2163 = vmatpush1.msra.mxu0 %v2097
  %2164 = vmatprep.subr.mxu0 0.0
  %2165 = vmatpush1.msra.mxu0 %v2092
  %2166 = vmatprep.subr.mxu0 0.0
  %2167 = vmatpush1.msra.mxu0 %v2089
  %2168 = vmatprep.subr.mxu0 0.0
  %2169 = vmatpush2.msra.mxu0 0.0
  %2170 = vmatprep.subr.mxu0 0.0
  %2171 = vmatpush2.msra.mxu0 0.0
  %2172 = vmatprep.subr.mxu0 0.0
  %2173 = vmatpush2.msra.mxu0 0.0
  %2174 = vmatprep.subr.mxu0 0.0
  %2175 = vmatpush2.msra.mxu0 0.0
  %2176 = vmatprep.subr.mxu0 0.0
  %2177 = vmatpush2.msra.mxu0 0.0
  %2178 = vmatprep.subr.mxu0 0.0
  %2179 = vmatpush2.msra.mxu0 0.0
  %2180 = vmatprep.subr.mxu0 0.0
  %2181 = vmatpush2.msra.mxu0 0.0
  %2182 = vmatprep.subr.mxu0 0.0
  %2183 = vmatpush2.msra.mxu0 0.0
  %2184 = vmatprep.subr.mxu0 0.0
  %2185 = vmatpush2.msra.mxu0 0.0
  %2186 = vmatprep.subr.mxu0 0.0
  %2187 = vmatpush2.msra.mxu0 0.0
  %2188 = vmatprep.subr.mxu0 0.0
  %2189 = vmatpush2.msra.mxu0 0.0
  %2190 = vmatprep.subr.mxu0 0.0
  %2191 = vmatpush2.msra.mxu0 0.0
  %2192 = vmatprep.subr.mxu0 0.0
  %2193 = vmatpush2.msra.mxu0 0.0
  %2194 = vmatprep.subr.mxu0 0.0
  %2195 = vmatpush2.msra.mxu0 0.0
  %2196 = vmatprep.subr.mxu0 0.0
  %2197 = vmatpush2.msra.mxu0 0.0
  %2198 = vmatprep.subr.mxu0 0.0
  %2199 = vmatpush2.msra.mxu0 0.0
  %2200 = vmatprep.mubr.f32.mxu0 0.0
  %2201 = vmatmul.mubr.f32.gmra.mxu0 %v2125
  %v2202 = vpop.f32.mrf.mxu0
  %v2203 = vadd.f32 0.0, %v2202
  %v2204 = vpop.f32.mrf.mxu0
  %2205 = vmatprep.mubr.f32.mxu0 0.0
  %2206 = vmatmul.mubr.f32.gmra.mxu0 %v2128
  %v2207 = vpop.f32.mrf.mxu0
  %v2208 = vadd.f32 0.0, %v2207
  %v2209 = vpop.f32.mrf.mxu0
  %2210 = vmatprep.mubr.f32.mxu0 0.0
  %2211 = vmatmul.mubr.f32.gmra.mxu0 %v2131
  %v2212 = vpop.f32.mrf.mxu0
  %v2213 = vadd.f32 0.0, %v2212
  %v2214 = vpop.f32.mrf.mxu0
  %2215 = vmatprep.mubr.f32.mxu0 0.0
  %2216 = vmatmul.mubr.f32.gmra.mxu0 %v2134
  %v2217 = vpop.f32.mrf.mxu0
  %v2218 = vadd.f32 0.0, %v2217
  %v2219 = vpop.f32.mrf.mxu0
  %2220 = vdwg.mxu0
  %v2222 = vsel %vm276, %v1985, 0
  %v2225 = vsel %vm276, %v1986, 0
  %v2228 = vsel %vm276, %v1987, 0
  %v2231 = vsel %vm276, %v1988, 0
  %2233 = vmatprep.subr.mxu0 0.0
  %2234 = vmatpush1.msra.mxu0 0.0
  %2235 = vmatprep.subr.mxu0 0.0
  %2236 = vmatpush1.msra.mxu0 0.0
  %2237 = vmatprep.subr.mxu0 0.0
  %2238 = vmatpush1.msra.mxu0 0.0
  %2239 = vmatprep.subr.mxu0 0.0
  %2240 = vmatpush1.msra.mxu0 0.0
  %2241 = vmatprep.subr.mxu0 0.0
  %2242 = vmatpush1.msra.mxu0 0.0
  %2243 = vmatprep.subr.mxu0 0.0
  %2244 = vmatpush1.msra.mxu0 0.0
  %2245 = vmatprep.subr.mxu0 0.0
  %2246 = vmatpush1.msra.mxu0 0.0
  %2247 = vmatprep.subr.mxu0 0.0
  %2248 = vmatpush1.msra.mxu0 0.0
  %2249 = vmatprep.subr.mxu0 0.0
  %2250 = vmatpush1.msra.mxu0 %v1982
  %2251 = vmatprep.subr.mxu0 0.0
  %2252 = vmatpush1.msra.mxu0 %v1979
  %2253 = vmatprep.subr.mxu0 0.0
  %2254 = vmatpush1.msra.mxu0 %v1974
  %2255 = vmatprep.subr.mxu0 0.0
  %2256 = vmatpush1.msra.mxu0 %v1971
  %2257 = vmatprep.subr.mxu0 0.0
  %2258 = vmatpush1.msra.mxu0 %v1966
  %2259 = vmatprep.subr.mxu0 0.0
  %2260 = vmatpush1.msra.mxu0 %v1963
  %2261 = vmatprep.subr.mxu0 0.0
  %2262 = vmatpush1.msra.mxu0 %v1958
  %2263 = vmatprep.subr.mxu0 0.0
  %2264 = vmatpush1.msra.mxu0 %v1955
  %2265 = vmatprep.subr.mxu0 0.0
  %2266 = vmatpush2.msra.mxu0 0.0
  %2267 = vmatprep.subr.mxu0 0.0
  %2268 = vmatpush2.msra.mxu0 0.0
  %2269 = vmatprep.subr.mxu0 0.0
  %2270 = vmatpush2.msra.mxu0 0.0
  %2271 = vmatprep.subr.mxu0 0.0
  %2272 = vmatpush2.msra.mxu0 0.0
  %2273 = vmatprep.subr.mxu0 0.0
  %2274 = vmatpush2.msra.mxu0 0.0
  %2275 = vmatprep.subr.mxu0 0.0
  %2276 = vmatpush2.msra.mxu0 0.0
  %2277 = vmatprep.subr.mxu0 0.0
  %2278 = vmatpush2.msra.mxu0 0.0
  %2279 = vmatprep.subr.mxu0 0.0
  %2280 = vmatpush2.msra.mxu0 0.0
  %2281 = vmatprep.subr.mxu0 0.0
  %2282 = vmatpush2.msra.mxu0 0.0
  %2283 = vmatprep.subr.mxu0 0.0
  %2284 = vmatpush2.msra.mxu0 0.0
  %2285 = vmatprep.subr.mxu0 0.0
  %2286 = vmatpush2.msra.mxu0 0.0
  %2287 = vmatprep.subr.mxu0 0.0
  %2288 = vmatpush2.msra.mxu0 0.0
  %2289 = vmatprep.subr.mxu0 0.0
  %2290 = vmatpush2.msra.mxu0 0.0
  %2291 = vmatprep.subr.mxu0 0.0
  %2292 = vmatpush2.msra.mxu0 0.0
  %2293 = vmatprep.subr.mxu0 0.0
  %2294 = vmatpush2.msra.mxu0 0.0
  %2295 = vmatprep.subr.mxu0 0.0
  %2296 = vmatpush2.msra.mxu0 0.0
  %2297 = vmatprep.mubr.f32.mxu0 0.0
  %2298 = vmatmul.mubr.f32.gmra.mxu0 %v2222
  %v2299 = vpop.f32.mrf.mxu0
  %v2300 = vadd.f32 %v2203, %v2299
  %v2301 = vpop.f32.mrf.mxu0
  %2302 = vmatprep.mubr.f32.mxu0 0.0
  %2303 = vmatmul.mubr.f32.gmra.mxu0 %v2225
  %v2304 = vpop.f32.mrf.mxu0
  %v2305 = vadd.f32 %v2208, %v2304
  %v2306 = vpop.f32.mrf.mxu0
  %2307 = vmatprep.mubr.f32.mxu0 0.0
  %2308 = vmatmul.mubr.f32.gmra.mxu0 %v2228
  %v2309 = vpop.f32.mrf.mxu0
  %v2310 = vadd.f32 %v2213, %v2309
  %v2311 = vpop.f32.mrf.mxu0
  %2312 = vmatprep.mubr.f32.mxu0 0.0
  %2313 = vmatmul.mubr.f32.gmra.mxu0 %v2231
  %v2314 = vpop.f32.mrf.mxu0
  %v2315 = vadd.f32 %v2218, %v2314
  %v2316 = vpop.f32.mrf.mxu0
  %2317 = vdwg.mxu0
  %s2318 = scalar_lea.vmem %s8, 128
  %v2319 = vld [vmem:[%s2318] sm:$0xf]
  %v2320 = vld [vmem:[%s2318 + $0x4] sm:$0xf]
  %v2321 = vld [vmem:[%s2318 + $0x8] sm:$0xf]
  %v2322 = vld [vmem:[%s2318 + $0xc] sm:$0xf]
  %v2323 = vld [vmem:[%s2318 + $0x10] sm:$0xf]
  %v2324 = vld [vmem:[%s2318 + $0x14] sm:$0xf]
  %v2325 = vld [vmem:[%s2318 + $0x18] sm:$0xf]
  %v2326 = vld [vmem:[%s2318 + $0x1c] sm:$0xf]
  %v2327 = vld [vmem:[%s2318 + $0x20] sm:$0xf]
  %v2328 = vld [vmem:[%s2318 + $0x24] sm:$0xf]
  %v2329 = vld [vmem:[%s2318 + $0x28] sm:$0xf]
  %v2330 = vld [vmem:[%s2318 + $0x2c] sm:$0xf]
  %v2331 = vld [vmem:[%s2318 + $0x30] sm:$0xf]
  %v2332 = vld [vmem:[%s2318 + $0x34] sm:$0xf]
  %v2333 = vld [vmem:[%s2318 + $0x38] sm:$0xf]
  %v2334 = vld [vmem:[%s2318 + $0x3c] sm:$0xf]
  %v2351 = vunpack.c.l.b16 %v2319
  %v2352 = vunpack.c.l.b16 %v2320
  %v2353 = vunpack.c.l.b16 %v2321
  %v2354 = vunpack.c.l.b16 %v2322
  %v2355 = vunpack.c.l.b16 %v2323
  %v2356 = vunpack.c.l.b16 %v2324
  %v2357 = vunpack.c.l.b16 %v2325
  %v2358 = vunpack.c.l.b16 %v2326
  %v2359 = vunpack.c.l.b16 %v2327
  %v2360 = vunpack.c.l.b16 %v2328
  %v2361 = vunpack.c.l.b16 %v2329
  %v2362 = vunpack.c.l.b16 %v2330
  %v2363 = vunpack.c.l.b16 %v2331
  %v2364 = vunpack.c.l.b16 %v2332
  %v2365 = vunpack.c.l.b16 %v2333
  %v2366 = vunpack.c.l.b16 %v2334
  %v2367 = vpack.c.b16 %v2352, %v2351
  %v2368 = vpack.c.b16 %v2354, %v2353
  %v2369 = vpack.c.b16 %v2356, %v2355
  %v2370 = vpack.c.b16 %v2358, %v2357
  %v2371 = vpack.c.b16 %v2360, %v2359
  %v2372 = vpack.c.b16 %v2362, %v2361
  %v2373 = vpack.c.b16 %v2364, %v2363
  %v2374 = vpack.c.b16 %v2366, %v2365
  %2383 = vmatprep.subr.bf16.mxu0 0
  %2384 = vmatpush1.bf16.msra.mxu0 %v2374
  %2385 = vmatprep.subr.bf16.mxu0 0
  %2386 = vmatpush1.bf16.msra.mxu0 %v2373
  %2387 = vmatprep.subr.bf16.mxu0 0
  %2388 = vmatpush1.bf16.msra.mxu0 %v2372
  %2389 = vmatprep.subr.bf16.mxu0 0
  %2390 = vmatpush1.bf16.msra.mxu0 %v2371
  %2391 = vmatprep.subr.bf16.mxu0 0
  %2392 = vmatpush1.bf16.msra.mxu0 %v2370
  %2393 = vmatprep.subr.bf16.mxu0 0
  %2394 = vmatpush1.bf16.msra.mxu0 %v2369
  %2395 = vmatprep.subr.bf16.mxu0 0
  %2396 = vmatpush1.bf16.msra.mxu0 %v2368
  %2397 = vmatprep.subr.bf16.mxu0 0
  %2398 = vmatpush1.bf16.msra.mxu0 %v2367
  %2399 = vmatprep.subr.bf16.mxu0 0
  %2400 = vmatpush2.bf16.msra.mxu0 0
  %2401 = vmatprep.subr.bf16.mxu0 0
  %2402 = vmatpush2.bf16.msra.mxu0 0
  %2403 = vmatprep.subr.bf16.mxu0 0
  %2404 = vmatpush2.bf16.msra.mxu0 0
  %2405 = vmatprep.subr.bf16.mxu0 0
  %2406 = vmatpush2.bf16.msra.mxu0 0
  %2407 = vmatprep.subr.bf16.mxu0 0
  %2408 = vmatpush2.bf16.msra.mxu0 0
  %2409 = vmatprep.subr.bf16.mxu0 0
  %2410 = vmatpush2.bf16.msra.mxu0 0
  %2411 = vmatprep.subr.bf16.mxu0 0
  %2412 = vmatpush2.bf16.msra.mxu0 0
  %2413 = vmatprep.subr.bf16.mxu0 0
  %2414 = vmatpush2.bf16.msra.mxu0 0
  %2415 = vmatprep.mubr.bf16.mxu0 0
  %2416 = vmatmul.mubr.bf16.gmra.mxu0 %v1852
  %v2417 = vpop.f32.mrf.mxu0
  %v2418 = vadd.f32 0.0, %v2417
  %v2419 = vpop.f32.mrf.mxu0
  %v2420 = vpop.f32.mrf.mxu0
  %v2421 = vadd.f32 0.0, %v2420
  %v2422 = vpop.f32.mrf.mxu0
  %2423 = vmatprep.mubr.bf16.mxu0 0
  %2424 = vmatmul.mubr.bf16.gmra.mxu0 %v1853
  %v2425 = vpop.f32.mrf.mxu0
  %v2426 = vadd.f32 0.0, %v2425
  %v2427 = vpop.f32.mrf.mxu0
  %v2428 = vpop.f32.mrf.mxu0
  %v2429 = vadd.f32 0.0, %v2428
  %v2430 = vpop.f32.mrf.mxu0
  %2431 = vmatprep.mubr.bf16.mxu0 0
  %2432 = vmatmul.mubr.bf16.gmra.mxu0 %v1854
  %v2433 = vpop.f32.mrf.mxu0
  %v2434 = vadd.f32 0.0, %v2433
  %v2435 = vpop.f32.mrf.mxu0
  %v2436 = vpop.f32.mrf.mxu0
  %v2437 = vadd.f32 0.0, %v2436
  %v2438 = vpop.f32.mrf.mxu0
  %2439 = vmatprep.mubr.bf16.mxu0 0
  %2440 = vmatmul.mubr.bf16.gmra.mxu0 %v1855
  %v2441 = vpop.f32.mrf.mxu0
  %v2442 = vadd.f32 0.0, %v2441
  %v2443 = vpop.f32.mrf.mxu0
  %v2444 = vpop.f32.mrf.mxu0
  %v2445 = vadd.f32 0.0, %v2444
  %v2446 = vpop.f32.mrf.mxu0
  %2447 = vdwg.mxu0
  %s2448 = scalar_lea.vmem %s7, 64
  %v2449 = vld [vmem:[%s2448] sm:$0xff]
  %v2450 = vld [vmem:[%s2448 + $0x8] sm:$0xff]
  %v2451 = vld [vmem:[%s2448 + $0x10] sm:$0xff]
  %v2452 = vld [vmem:[%s2448 + $0x18] sm:$0xff]
  %v2454 = vsel %vm276, %v2449, 0
  %v2457 = vsel %vm276, %v2450, 0
  %v2460 = vsel %vm276, %v2451, 0
  %v2463 = vsel %vm276, %v2452, 0
  %2465 = vmatprep.subr.mxu0 0.0
  %2466 = vmatpush1.msra.mxu0 0.0
  %2467 = vmatprep.subr.mxu0 0.0
  %2468 = vmatpush1.msra.mxu0 0.0
  %2469 = vmatprep.subr.mxu0 0.0
  %2470 = vmatpush1.msra.mxu0 0.0
  %2471 = vmatprep.subr.mxu0 0.0
  %2472 = vmatpush1.msra.mxu0 0.0
  %2473 = vmatprep.subr.mxu0 0.0
  %2474 = vmatpush1.msra.mxu0 0.0
  %2475 = vmatprep.subr.mxu0 0.0
  %2476 = vmatpush1.msra.mxu0 0.0
  %2477 = vmatprep.subr.mxu0 0.0
  %2478 = vmatpush1.msra.mxu0 0.0
  %2479 = vmatprep.subr.mxu0 0.0
  %2480 = vmatpush1.msra.mxu0 0.0
  %2481 = vmatprep.subr.mxu0 0.0
  %2482 = vmatpush1.msra.mxu0 %v2445
  %2483 = vmatprep.subr.mxu0 0.0
  %2484 = vmatpush1.msra.mxu0 %v2442
  %2485 = vmatprep.subr.mxu0 0.0
  %2486 = vmatpush1.msra.mxu0 %v2437
  %2487 = vmatprep.subr.mxu0 0.0
  %2488 = vmatpush1.msra.mxu0 %v2434
  %2489 = vmatprep.subr.mxu0 0.0
  %2490 = vmatpush1.msra.mxu0 %v2429
  %2491 = vmatprep.subr.mxu0 0.0
  %2492 = vmatpush1.msra.mxu0 %v2426
  %2493 = vmatprep.subr.mxu0 0.0
  %2494 = vmatpush1.msra.mxu0 %v2421
  %2495 = vmatprep.subr.mxu0 0.0
  %2496 = vmatpush1.msra.mxu0 %v2418
  %2497 = vmatprep.subr.mxu0 0.0
  %2498 = vmatpush2.msra.mxu0 0.0
  %2499 = vmatprep.subr.mxu0 0.0
  %2500 = vmatpush2.msra.mxu0 0.0
  %2501 = vmatprep.subr.mxu0 0.0
  %2502 = vmatpush2.msra.mxu0 0.0
  %2503 = vmatprep.subr.mxu0 0.0
  %2504 = vmatpush2.msra.mxu0 0.0
  %2505 = vmatprep.subr.mxu0 0.0
  %2506 = vmatpush2.msra.mxu0 0.0
  %2507 = vmatprep.subr.mxu0 0.0
  %2508 = vmatpush2.msra.mxu0 0.0
  %2509 = vmatprep.subr.mxu0 0.0
  %2510 = vmatpush2.msra.mxu0 0.0
  %2511 = vmatprep.subr.mxu0 0.0
  %2512 = vmatpush2.msra.mxu0 0.0
  %2513 = vmatprep.subr.mxu0 0.0
  %2514 = vmatpush2.msra.mxu0 0.0
  %2515 = vmatprep.subr.mxu0 0.0
  %2516 = vmatpush2.msra.mxu0 0.0
  %2517 = vmatprep.subr.mxu0 0.0
  %2518 = vmatpush2.msra.mxu0 0.0
  %2519 = vmatprep.subr.mxu0 0.0
  %2520 = vmatpush2.msra.mxu0 0.0
  %2521 = vmatprep.subr.mxu0 0.0
  %2522 = vmatpush2.msra.mxu0 0.0
  %2523 = vmatprep.subr.mxu0 0.0
  %2524 = vmatpush2.msra.mxu0 0.0
  %2525 = vmatprep.subr.mxu0 0.0
  %2526 = vmatpush2.msra.mxu0 0.0
  %2527 = vmatprep.subr.mxu0 0.0
  %2528 = vmatpush2.msra.mxu0 0.0
  %2529 = vmatprep.mubr.f32.mxu0 0.0
  %2530 = vmatmul.mubr.f32.gmra.mxu0 %v2454
  %v2531 = vpop.f32.mrf.mxu0
  %v2532 = vadd.f32 0.0, %v2531
  %v2533 = vpop.f32.mrf.mxu0
  %2534 = vmatprep.mubr.f32.mxu0 0.0
  %2535 = vmatmul.mubr.f32.gmra.mxu0 %v2457
  %v2536 = vpop.f32.mrf.mxu0
  %v2537 = vadd.f32 0.0, %v2536
  %v2538 = vpop.f32.mrf.mxu0
  %2539 = vmatprep.mubr.f32.mxu0 0.0
  %2540 = vmatmul.mubr.f32.gmra.mxu0 %v2460
  %v2541 = vpop.f32.mrf.mxu0
  %v2542 = vadd.f32 0.0, %v2541
  %v2543 = vpop.f32.mrf.mxu0
  %2544 = vmatprep.mubr.f32.mxu0 0.0
  %2545 = vmatmul.mubr.f32.gmra.mxu0 %v2463
  %v2546 = vpop.f32.mrf.mxu0
  %v2547 = vadd.f32 0.0, %v2546
  %v2548 = vpop.f32.mrf.mxu0
  %2549 = vdwg.mxu0
  %v2550 = vadd.f32 %v2300, %v2532
  %v2551 = vadd.f32 %v2305, %v2537
  %v2552 = vadd.f32 %v2310, %v2542
  %v2553 = vadd.f32 %v2315, %v2547
  %s2554 = scalar_lea.vmem %s8, 192
  %v2555 = vld [vmem:[%s2554] sm:$0xf]
  %v2556 = vld [vmem:[%s2554 + $0x4] sm:$0xf]
  %v2557 = vld [vmem:[%s2554 + $0x8] sm:$0xf]
  %v2558 = vld [vmem:[%s2554 + $0xc] sm:$0xf]
  %v2559 = vld [vmem:[%s2554 + $0x10] sm:$0xf]
  %v2560 = vld [vmem:[%s2554 + $0x14] sm:$0xf]
  %v2561 = vld [vmem:[%s2554 + $0x18] sm:$0xf]
  %v2562 = vld [vmem:[%s2554 + $0x1c] sm:$0xf]
  %v2563 = vld [vmem:[%s2554 + $0x20] sm:$0xf]
  %v2564 = vld [vmem:[%s2554 + $0x24] sm:$0xf]
  %v2565 = vld [vmem:[%s2554 + $0x28] sm:$0xf]
  %v2566 = vld [vmem:[%s2554 + $0x2c] sm:$0xf]
  %v2567 = vld [vmem:[%s2554 + $0x30] sm:$0xf]
  %v2568 = vld [vmem:[%s2554 + $0x34] sm:$0xf]
  %v2569 = vld [vmem:[%s2554 + $0x38] sm:$0xf]
  %v2570 = vld [vmem:[%s2554 + $0x3c] sm:$0xf]
  %v2587 = vunpack.c.l.b16 %v2555
  %v2588 = vunpack.c.l.b16 %v2556
  %v2589 = vunpack.c.l.b16 %v2557
  %v2590 = vunpack.c.l.b16 %v2558
  %v2591 = vunpack.c.l.b16 %v2559
  %v2592 = vunpack.c.l.b16 %v2560
  %v2593 = vunpack.c.l.b16 %v2561
  %v2594 = vunpack.c.l.b16 %v2562
  %v2595 = vunpack.c.l.b16 %v2563
  %v2596 = vunpack.c.l.b16 %v2564
  %v2597 = vunpack.c.l.b16 %v2565
  %v2598 = vunpack.c.l.b16 %v2566
  %v2599 = vunpack.c.l.b16 %v2567
  %v2600 = vunpack.c.l.b16 %v2568
  %v2601 = vunpack.c.l.b16 %v2569
  %v2602 = vunpack.c.l.b16 %v2570
  %v2603 = vpack.c.b16 %v2588, %v2587
  %v2604 = vpack.c.b16 %v2590, %v2589
  %v2605 = vpack.c.b16 %v2592, %v2591
  %v2606 = vpack.c.b16 %v2594, %v2593
  %v2607 = vpack.c.b16 %v2596, %v2595
  %v2608 = vpack.c.b16 %v2598, %v2597
  %v2609 = vpack.c.b16 %v2600, %v2599
  %v2610 = vpack.c.b16 %v2602, %v2601
  %2619 = vmatprep.subr.bf16.mxu0 0
  %2620 = vmatpush1.bf16.msra.mxu0 %v2610
  %2621 = vmatprep.subr.bf16.mxu0 0
  %2622 = vmatpush1.bf16.msra.mxu0 %v2609
  %2623 = vmatprep.subr.bf16.mxu0 0
  %2624 = vmatpush1.bf16.msra.mxu0 %v2608
  %2625 = vmatprep.subr.bf16.mxu0 0
  %2626 = vmatpush1.bf16.msra.mxu0 %v2607
  %2627 = vmatprep.subr.bf16.mxu0 0
  %2628 = vmatpush1.bf16.msra.mxu0 %v2606
  %2629 = vmatprep.subr.bf16.mxu0 0
  %2630 = vmatpush1.bf16.msra.mxu0 %v2605
  %2631 = vmatprep.subr.bf16.mxu0 0
  %2632 = vmatpush1.bf16.msra.mxu0 %v2604
  %2633 = vmatprep.subr.bf16.mxu0 0
  %2634 = vmatpush1.bf16.msra.mxu0 %v2603
  %2635 = vmatprep.subr.bf16.mxu0 0
  %2636 = vmatpush2.bf16.msra.mxu0 0
  %2637 = vmatprep.subr.bf16.mxu0 0
  %2638 = vmatpush2.bf16.msra.mxu0 0
  %2639 = vmatprep.subr.bf16.mxu0 0
  %2640 = vmatpush2.bf16.msra.mxu0 0
  %2641 = vmatprep.subr.bf16.mxu0 0
  %2642 = vmatpush2.bf16.msra.mxu0 0
  %2643 = vmatprep.subr.bf16.mxu0 0
  %2644 = vmatpush2.bf16.msra.mxu0 0
  %2645 = vmatprep.subr.bf16.mxu0 0
  %2646 = vmatpush2.bf16.msra.mxu0 0
  %2647 = vmatprep.subr.bf16.mxu0 0
  %2648 = vmatpush2.bf16.msra.mxu0 0
  %2649 = vmatprep.subr.bf16.mxu0 0
  %2650 = vmatpush2.bf16.msra.mxu0 0
  %2651 = vmatprep.mubr.bf16.mxu0 0
  %2652 = vmatmul.mubr.bf16.gmra.mxu0 %v1852
  %v2653 = vpop.f32.mrf.mxu0
  %v2654 = vadd.f32 0.0, %v2653
  %v2655 = vpop.f32.mrf.mxu0
  %v2656 = vpop.f32.mrf.mxu0
  %v2657 = vadd.f32 0.0, %v2656
  %v2658 = vpop.f32.mrf.mxu0
  %2659 = vmatprep.mubr.bf16.mxu0 0
  %2660 = vmatmul.mubr.bf16.gmra.mxu0 %v1853
  %v2661 = vpop.f32.mrf.mxu0
  %v2662 = vadd.f32 0.0, %v2661
  %v2663 = vpop.f32.mrf.mxu0
  %v2664 = vpop.f32.mrf.mxu0
  %v2665 = vadd.f32 0.0, %v2664
  %v2666 = vpop.f32.mrf.mxu0
  %2667 = vmatprep.mubr.bf16.mxu0 0
  %2668 = vmatmul.mubr.bf16.gmra.mxu0 %v1854
  %v2669 = vpop.f32.mrf.mxu0
  %v2670 = vadd.f32 0.0, %v2669
  %v2671 = vpop.f32.mrf.mxu0
  %v2672 = vpop.f32.mrf.mxu0
  %v2673 = vadd.f32 0.0, %v2672
  %v2674 = vpop.f32.mrf.mxu0
  %2675 = vmatprep.mubr.bf16.mxu0 0
  %2676 = vmatmul.mubr.bf16.gmra.mxu0 %v1855
  %v2677 = vpop.f32.mrf.mxu0
  %v2678 = vadd.f32 0.0, %v2677
  %v2679 = vpop.f32.mrf.mxu0
  %v2680 = vpop.f32.mrf.mxu0
  %v2681 = vadd.f32 0.0, %v2680
  %v2682 = vpop.f32.mrf.mxu0
  %2683 = vdwg.mxu0
  %s2684 = scalar_lea.vmem %s7, 96
  %v2685 = vld [vmem:[%s2684] sm:$0xff]
  %v2686 = vld [vmem:[%s2684 + $0x8] sm:$0xff]
  %v2687 = vld [vmem:[%s2684 + $0x10] sm:$0xff]
  %v2688 = vld [vmem:[%s2684 + $0x18] sm:$0xff]
  %v2690 = vsel %vm276, %v2685, 0
  %v2693 = vsel %vm276, %v2686, 0
  %v2696 = vsel %vm276, %v2687, 0
  %v2699 = vsel %vm276, %v2688, 0
  %2701 = vmatprep.subr.mxu0 0.0
  %2702 = vmatpush1.msra.mxu0 0.0
  %2703 = vmatprep.subr.mxu0 0.0
  %2704 = vmatpush1.msra.mxu0 0.0
  %2705 = vmatprep.subr.mxu0 0.0
  %2706 = vmatpush1.msra.mxu0 0.0
  %2707 = vmatprep.subr.mxu0 0.0
  %2708 = vmatpush1.msra.mxu0 0.0
  %2709 = vmatprep.subr.mxu0 0.0
  %2710 = vmatpush1.msra.mxu0 0.0
  %2711 = vmatprep.subr.mxu0 0.0
  %2712 = vmatpush1.msra.mxu0 0.0
  %2713 = vmatprep.subr.mxu0 0.0
  %2714 = vmatpush1.msra.mxu0 0.0
  %2715 = vmatprep.subr.mxu0 0.0
  %2716 = vmatpush1.msra.mxu0 0.0
  %2717 = vmatprep.subr.mxu0 0.0
  %2718 = vmatpush1.msra.mxu0 %v2681
  %2719 = vmatprep.subr.mxu0 0.0
  %2720 = vmatpush1.msra.mxu0 %v2678
  %2721 = vmatprep.subr.mxu0 0.0
  %2722 = vmatpush1.msra.mxu0 %v2673
  %2723 = vmatprep.subr.mxu0 0.0
  %2724 = vmatpush1.msra.mxu0 %v2670
  %2725 = vmatprep.subr.mxu0 0.0
  %2726 = vmatpush1.msra.mxu0 %v2665
  %2727 = vmatprep.subr.mxu0 0.0
  %2728 = vmatpush1.msra.mxu0 %v2662
  %2729 = vmatprep.subr.mxu0 0.0
  %2730 = vmatpush1.msra.mxu0 %v2657
  %2731 = vmatprep.subr.mxu0 0.0
  %2732 = vmatpush1.msra.mxu0 %v2654
  %2733 = vmatprep.subr.mxu0 0.0
  %2734 = vmatpush2.msra.mxu0 0.0
  %2735 = vmatprep.subr.mxu0 0.0
  %2736 = vmatpush2.msra.mxu0 0.0
  %2737 = vmatprep.subr.mxu0 0.0
  %2738 = vmatpush2.msra.mxu0 0.0
  %2739 = vmatprep.subr.mxu0 0.0
  %2740 = vmatpush2.msra.mxu0 0.0
  %2741 = vmatprep.subr.mxu0 0.0
  %2742 = vmatpush2.msra.mxu0 0.0
  %2743 = vmatprep.subr.mxu0 0.0
  %2744 = vmatpush2.msra.mxu0 0.0
  %2745 = vmatprep.subr.mxu0 0.0
  %2746 = vmatpush2.msra.mxu0 0.0
  %2747 = vmatprep.subr.mxu0 0.0
  %2748 = vmatpush2.msra.mxu0 0.0
  %2749 = vmatprep.subr.mxu0 0.0
  %2750 = vmatpush2.msra.mxu0 0.0
  %2751 = vmatprep.subr.mxu0 0.0
  %2752 = vmatpush2.msra.mxu0 0.0
  %2753 = vmatprep.subr.mxu0 0.0
  %2754 = vmatpush2.msra.mxu0 0.0
  %2755 = vmatprep.subr.mxu0 0.0
  %2756 = vmatpush2.msra.mxu0 0.0
  %2757 = vmatprep.subr.mxu0 0.0
  %2758 = vmatpush2.msra.mxu0 0.0
  %2759 = vmatprep.subr.mxu0 0.0
  %2760 = vmatpush2.msra.mxu0 0.0
  %2761 = vmatprep.subr.mxu0 0.0
  %2762 = vmatpush2.msra.mxu0 0.0
  %2763 = vmatprep.subr.mxu0 0.0
  %2764 = vmatpush2.msra.mxu0 0.0
  %2765 = vmatprep.mubr.f32.mxu0 0.0
  %2766 = vmatmul.mubr.f32.gmra.mxu0 %v2690
  %v2767 = vpop.f32.mrf.mxu0
  %v2768 = vadd.f32 0.0, %v2767
  %v2769 = vpop.f32.mrf.mxu0
  %2770 = vmatprep.mubr.f32.mxu0 0.0
  %2771 = vmatmul.mubr.f32.gmra.mxu0 %v2693
  %v2772 = vpop.f32.mrf.mxu0
  %v2773 = vadd.f32 0.0, %v2772
  %v2774 = vpop.f32.mrf.mxu0
  %2775 = vmatprep.mubr.f32.mxu0 0.0
  %2776 = vmatmul.mubr.f32.gmra.mxu0 %v2696
  %v2777 = vpop.f32.mrf.mxu0
  %v2778 = vadd.f32 0.0, %v2777
  %v2779 = vpop.f32.mrf.mxu0
  %2780 = vmatprep.mubr.f32.mxu0 0.0
  %2781 = vmatmul.mubr.f32.gmra.mxu0 %v2699
  %v2782 = vpop.f32.mrf.mxu0
  %v2783 = vadd.f32 0.0, %v2782
  %v2784 = vpop.f32.mrf.mxu0
  %2785 = vdwg.mxu0
  %v2786 = vadd.f32 %v2550, %v2768
  %v2787 = vadd.f32 %v2551, %v2773
  %v2788 = vadd.f32 %v2552, %v2778
  %v2789 = vadd.f32 %v2553, %v2783
  %v2790 = vld [vmem:[%s9] sm:$0xff]
  %v2791 = vld [vmem:[%s9 + $0x8] sm:$0xff]
  %v2792 = vld [vmem:[%s9 + $0x10] sm:$0xff]
  %v2793 = vld [vmem:[%s9 + $0x18] sm:$0xff]
  %v2794 = vld [vmem:[%s9 + $0x20] sm:$0xff]
  %v2795 = vld [vmem:[%s9 + $0x28] sm:$0xff]
  %v2796 = vld [vmem:[%s9 + $0x30] sm:$0xff]
  %v2797 = vld [vmem:[%s9 + $0x38] sm:$0xff]
  %v2798 = vld [vmem:[%s9 + $0x40] sm:$0xff]
  %v2799 = vld [vmem:[%s9 + $0x48] sm:$0xff]
  %v2800 = vld [vmem:[%s9 + $0x50] sm:$0xff]
  %v2801 = vld [vmem:[%s9 + $0x58] sm:$0xff]
  %v2802 = vld [vmem:[%s9 + $0x60] sm:$0xff]
  %v2803 = vld [vmem:[%s9 + $0x68] sm:$0xff]
  %v2804 = vld [vmem:[%s9 + $0x70] sm:$0xff]
  %v2805 = vld [vmem:[%s9 + $0x78] sm:$0xff]
  %v2806 = vld [vmem:[%s10] sm:$0xff]
  %v2807 = vld [vmem:[%s11] sm:$0x1]
  %v2808 = vld [vmem:[%s12] sm:$0x1]
  %v2809 = vadd.f32 %v2786, %v2787
  %v2810 = vadd.f32 %v2809, %v2788
  %v2811 = vadd.f32 %v2810, %v2789
  %v2812 = vrot.slane %v2811, 4
  %v2813 = vadd.f32 %v2811, %v2812
  %v2814 = vrot.slane %v2813, 2
  %v2815 = vadd.f32 %v2813, %v2814
  %v2816 = vrot.slane %v2815, 1
  %v2817 = vadd.f32 %v2815, %v2816
  %v2818 = vmul.f32 %v2786, %v2786
  %v2819 = vmul.f32 %v2787, %v2787
  %v2820 = vmul.f32 %v2788, %v2788
  %v2821 = vmul.f32 %v2789, %v2789
  %v2822 = vadd.f32 %v2818, %v2819
  %v2823 = vadd.f32 %v2822, %v2820
  %v2824 = vadd.f32 %v2823, %v2821
  %v2825 = vrot.slane %v2824, 4
  %v2826 = vadd.f32 %v2824, %v2825
  %v2827 = vrot.slane %v2826, 2
  %v2828 = vadd.f32 %v2826, %v2827
  %v2829 = vrot.slane %v2828, 1
  %v2830 = vadd.f32 %v2828, %v2829
  %2831 = vmatprep.subr.mxu0 0.0
  %2832 = vmatpush1.msra.mxu0 %v2805
  %2833 = vmatprep.subr.mxu0 0.0
  %2834 = vmatpush1.msra.mxu0 %v2804
  %2835 = vmatprep.subr.mxu0 0.0
  %2836 = vmatpush1.msra.mxu0 %v2803
  %2837 = vmatprep.subr.mxu0 0.0
  %2838 = vmatpush1.msra.mxu0 %v2802
  %2839 = vmatprep.subr.mxu0 0.0
  %2840 = vmatpush1.msra.mxu0 %v2801
  %2841 = vmatprep.subr.mxu0 0.0
  %2842 = vmatpush1.msra.mxu0 %v2800
  %2843 = vmatprep.subr.mxu0 0.0
  %2844 = vmatpush1.msra.mxu0 %v2799
  %2845 = vmatprep.subr.mxu0 0.0
  %2846 = vmatpush1.msra.mxu0 %v2798
  %2847 = vmatprep.subr.mxu0 0.0
  %2848 = vmatpush1.msra.mxu0 %v2797
  %2849 = vmatprep.subr.mxu0 0.0
  %2850 = vmatpush1.msra.mxu0 %v2796
  %2851 = vmatprep.subr.mxu0 0.0
  %2852 = vmatpush1.msra.mxu0 %v2795
  %2853 = vmatprep.subr.mxu0 0.0
  %2854 = vmatpush1.msra.mxu0 %v2794
  %2855 = vmatprep.subr.mxu0 0.0
  %2856 = vmatpush1.msra.mxu0 %v2793
  %2857 = vmatprep.subr.mxu0 0.0
  %2858 = vmatpush1.msra.mxu0 %v2792
  %2859 = vmatprep.subr.mxu0 0.0
  %2860 = vmatpush1.msra.mxu0 %v2791
  %2861 = vmatprep.subr.mxu0 0.0
  %2862 = vmatpush1.msra.mxu0 %v2790
  %2863 = vmatprep.subr.mxu0 0.0
  %2864 = vmatpush2.msra.mxu0 0.0
  %2865 = vmatprep.subr.mxu0 0.0
  %2866 = vmatpush2.msra.mxu0 0.0
  %2867 = vmatprep.subr.mxu0 0.0
  %2868 = vmatpush2.msra.mxu0 0.0
  %2869 = vmatprep.subr.mxu0 0.0
  %2870 = vmatpush2.msra.mxu0 0.0
  %2871 = vmatprep.subr.mxu0 0.0
  %2872 = vmatpush2.msra.mxu0 0.0
  %2873 = vmatprep.subr.mxu0 0.0
  %2874 = vmatpush2.msra.mxu0 0.0
  %2875 = vmatprep.subr.mxu0 0.0
  %2876 = vmatpush2.msra.mxu0 0.0
  %2877 = vmatprep.subr.mxu0 0.0
  %2878 = vmatpush2.msra.mxu0 0.0
  %2879 = vmatprep.subr.mxu0 0.0
  %2880 = vmatpush2.msra.mxu0 0.0
  %2881 = vmatprep.subr.mxu0 0.0
  %2882 = vmatpush2.msra.mxu0 0.0
  %2883 = vmatprep.subr.mxu0 0.0
  %2884 = vmatpush2.msra.mxu0 0.0
  %2885 = vmatprep.subr.mxu0 0.0
  %2886 = vmatpush2.msra.mxu0 0.0
  %2887 = vmatprep.subr.mxu0 0.0
  %2888 = vmatpush2.msra.mxu0 0.0
  %2889 = vmatprep.subr.mxu0 0.0
  %2890 = vmatpush2.msra.mxu0 0.0
  %2891 = vmatprep.subr.mxu0 0.0
  %2892 = vmatpush2.msra.mxu0 0.0
  %2893 = vmatprep.subr.mxu0 0.0
  %2894 = vmatpush2.msra.mxu0 0.0
  %2895 = vmatprep.mubr.f32.mxu0 0.0
  %2896 = vmatmul.mubr.f32.gmra.mxu0 %v2817
  %v2897 = vpop.f32.mrf.mxu0
  %v2898 = vadd.f32 0.0, %v2897
  %v2899 = vpop.f32.mrf.mxu0
  %2900 = vdwg.mxu0
  %v2901 = vmul.f32 %v2898, 0.001953125
  %2902 = vmatprep.subr.mxu0 0.0
  %2903 = vmatpush1.msra.mxu0 %v2805
  %2904 = vmatprep.subr.mxu0 0.0
  %2905 = vmatpush1.msra.mxu0 %v2804
  %2906 = vmatprep.subr.mxu0 0.0
  %2907 = vmatpush1.msra.mxu0 %v2803
  %2908 = vmatprep.subr.mxu0 0.0
  %2909 = vmatpush1.msra.mxu0 %v2802
  %2910 = vmatprep.subr.mxu0 0.0
  %2911 = vmatpush1.msra.mxu0 %v2801
  %2912 = vmatprep.subr.mxu0 0.0
  %2913 = vmatpush1.msra.mxu0 %v2800
  %2914 = vmatprep.subr.mxu0 0.0
  %2915 = vmatpush1.msra.mxu0 %v2799
  %2916 = vmatprep.subr.mxu0 0.0
  %2917 = vmatpush1.msra.mxu0 %v2798
  %2918 = vmatprep.subr.mxu0 0.0
  %2919 = vmatpush1.msra.mxu0 %v2797
  %2920 = vmatprep.subr.mxu0 0.0
  %2921 = vmatpush1.msra.mxu0 %v2796
  %2922 = vmatprep.subr.mxu0 0.0
  %2923 = vmatpush1.msra.mxu0 %v2795
  %2924 = vmatprep.subr.mxu0 0.0
  %2925 = vmatpush1.msra.mxu0 %v2794
  %2926 = vmatprep.subr.mxu0 0.0
  %2927 = vmatpush1.msra.mxu0 %v2793
  %2928 = vmatprep.subr.mxu0 0.0
  %2929 = vmatpush1.msra.mxu0 %v2792
  %2930 = vmatprep.subr.mxu0 0.0
  %2931 = vmatpush1.msra.mxu0 %v2791
  %2932 = vmatprep.subr.mxu0 0.0
  %2933 = vmatpush1.msra.mxu0 %v2790
  %2934 = vmatprep.subr.mxu0 0.0
  %2935 = vmatpush2.msra.mxu0 0.0
  %2936 = vmatprep.subr.mxu0 0.0
  %2937 = vmatpush2.msra.mxu0 0.0
  %2938 = vmatprep.subr.mxu0 0.0
  %2939 = vmatpush2.msra.mxu0 0.0
  %2940 = vmatprep.subr.mxu0 0.0
  %2941 = vmatpush2.msra.mxu0 0.0
  %2942 = vmatprep.subr.mxu0 0.0
  %2943 = vmatpush2.msra.mxu0 0.0
  %2944 = vmatprep.subr.mxu0 0.0
  %2945 = vmatpush2.msra.mxu0 0.0
  %2946 = vmatprep.subr.mxu0 0.0
  %2947 = vmatpush2.msra.mxu0 0.0
  %2948 = vmatprep.subr.mxu0 0.0
  %2949 = vmatpush2.msra.mxu0 0.0
  %2950 = vmatprep.subr.mxu0 0.0
  %2951 = vmatpush2.msra.mxu0 0.0
  %2952 = vmatprep.subr.mxu0 0.0
  %2953 = vmatpush2.msra.mxu0 0.0
  %2954 = vmatprep.subr.mxu0 0.0
  %2955 = vmatpush2.msra.mxu0 0.0
  %2956 = vmatprep.subr.mxu0 0.0
  %2957 = vmatpush2.msra.mxu0 0.0
  %2958 = vmatprep.subr.mxu0 0.0
  %2959 = vmatpush2.msra.mxu0 0.0
  %2960 = vmatprep.subr.mxu0 0.0
  %2961 = vmatpush2.msra.mxu0 0.0
  %2962 = vmatprep.subr.mxu0 0.0
  %2963 = vmatpush2.msra.mxu0 0.0
  %2964 = vmatprep.subr.mxu0 0.0
  %2965 = vmatpush2.msra.mxu0 0.0
  %2966 = vmatprep.mubr.f32.mxu0 0.0
  %2967 = vmatmul.mubr.f32.gmra.mxu0 %v2830
  %v2968 = vpop.f32.mrf.mxu0
  %v2969 = vadd.f32 0.0, %v2968
  %v2970 = vpop.f32.mrf.mxu0
  %2971 = vdwg.mxu0
  %v2972 = vmul.f32 %v2969, 0.001953125
  %v2973 = vmul.f32 %v2901, %v2901
  %v2974 = vsub.f32 %v2972, %v2973
  %v2975 = vadd.f32 %v2974, 1e-05
  %v2976 = vrsqrt.pop %v2975
  %v2977 = vmul.f32 %v2807, %v2976
  %v2978 = vmul.f32 %v2901, %v2977
  %v2979 = vsub.f32 %v2808, %v2978
  %vm2980 = vcmask 64512
  %v2982 = vsel %vm2980, %v2977, 0
  %2984 = vmatprep.subr.mxu0 0.0
  %2985 = vmatpush1.msra.mxu0 0.0
  %2986 = vmatprep.subr.mxu0 0.0
  %2987 = vmatpush1.msra.mxu0 0.0
  %2988 = vmatprep.subr.mxu0 0.0
  %2989 = vmatpush1.msra.mxu0 0.0
  %2990 = vmatprep.subr.mxu0 0.0
  %2991 = vmatpush1.msra.mxu0 0.0
  %2992 = vmatprep.subr.mxu0 0.0
  %2993 = vmatpush1.msra.mxu0 0.0
  %2994 = vmatprep.subr.mxu0 0.0
  %2995 = vmatpush1.msra.mxu0 0.0
  %2996 = vmatprep.subr.mxu0 0.0
  %2997 = vmatpush1.msra.mxu0 0.0
  %2998 = vmatprep.subr.mxu0 0.0
  %2999 = vmatpush1.msra.mxu0 0.0
  %3000 = vmatprep.subr.mxu0 0.0
  %3001 = vmatpush1.msra.mxu0 0.0
  %3002 = vmatprep.subr.mxu0 0.0
  %3003 = vmatpush1.msra.mxu0 0.0
  %3004 = vmatprep.subr.mxu0 0.0
  %3005 = vmatpush1.msra.mxu0 0.0
  %3006 = vmatprep.subr.mxu0 0.0
  %3007 = vmatpush1.msra.mxu0 0.0
  %3008 = vmatprep.subr.mxu0 0.0
  %3009 = vmatpush1.msra.mxu0 0.0
  %3010 = vmatprep.subr.mxu0 0.0
  %3011 = vmatpush1.msra.mxu0 0.0
  %3012 = vmatprep.subr.mxu0 0.0
  %3013 = vmatpush1.msra.mxu0 0.0
  %3014 = vmatprep.subr.mxu0 0.0
  %3015 = vmatpush1.msra.mxu0 %v2806
  %3016 = vmatprep.subr.mxu0 0.0
  %3017 = vmatpush2.msra.mxu0 0.0
  %3018 = vmatprep.subr.mxu0 0.0
  %3019 = vmatpush2.msra.mxu0 0.0
  %3020 = vmatprep.subr.mxu0 0.0
  %3021 = vmatpush2.msra.mxu0 0.0
  %3022 = vmatprep.subr.mxu0 0.0
  %3023 = vmatpush2.msra.mxu0 0.0
  %3024 = vmatprep.subr.mxu0 0.0
  %3025 = vmatpush2.msra.mxu0 0.0
  %3026 = vmatprep.subr.mxu0 0.0
  %3027 = vmatpush2.msra.mxu0 0.0
  %3028 = vmatprep.subr.mxu0 0.0
  %3029 = vmatpush2.msra.mxu0 0.0
  %3030 = vmatprep.subr.mxu0 0.0
  %3031 = vmatpush2.msra.mxu0 0.0
  %3032 = vmatprep.subr.mxu0 0.0
  %3033 = vmatpush2.msra.mxu0 0.0
  %3034 = vmatprep.subr.mxu0 0.0
  %3035 = vmatpush2.msra.mxu0 0.0
  %3036 = vmatprep.subr.mxu0 0.0
  %3037 = vmatpush2.msra.mxu0 0.0
  %3038 = vmatprep.subr.mxu0 0.0
  %3039 = vmatpush2.msra.mxu0 0.0
  %3040 = vmatprep.subr.mxu0 0.0
  %3041 = vmatpush2.msra.mxu0 0.0
  %3042 = vmatprep.subr.mxu0 0.0
  %3043 = vmatpush2.msra.mxu0 0.0
  %3044 = vmatprep.subr.mxu0 0.0
  %3045 = vmatpush2.msra.mxu0 0.0
  %3046 = vmatprep.subr.mxu0 0.0
  %3047 = vmatpush2.msra.mxu0 0.0
  %3048 = vmatprep.mubr.f32.mxu0 0.0
  %3049 = vmatmul.mubr.f32.gmra.mxu0 %v2982
  %v3050 = vpop.f32.mrf.mxu0
  %v3051 = vadd.f32 0.0, %v3050
  %v3052 = vpop.f32.mrf.mxu0
  %3053 = vdwg.mxu0
  %v3054 = vlaneseq
  %v3055 = vshrl.u32 %v3054, 7
  %v3056 = vsub.s32 0, %v3055
  %v3057 = vrot.slane %v3051, %v3056
  %v3058 = vmul.f32 %v2786, %v3057
  %v3059 = vmul.f32 %v2787, %v3057
  %v3060 = vmul.f32 %v2788, %v3057
  %v3061 = vmul.f32 %v2789, %v3057
  %v3063 = vsel %vm2980, %v2979, 0
  %3065 = vmatprep.subr.mxu0 0.0
  %3066 = vmatpush1.msra.mxu0 0.0
  %3067 = vmatprep.subr.mxu0 0.0
  %3068 = vmatpush1.msra.mxu0 0.0
  %3069 = vmatprep.subr.mxu0 0.0
  %3070 = vmatpush1.msra.mxu0 0.0
  %3071 = vmatprep.subr.mxu0 0.0
  %3072 = vmatpush1.msra.mxu0 0.0
  %3073 = vmatprep.subr.mxu0 0.0
  %3074 = vmatpush1.msra.mxu0 0.0
  %3075 = vmatprep.subr.mxu0 0.0
  %3076 = vmatpush1.msra.mxu0 0.0
  %3077 = vmatprep.subr.mxu0 0.0
  %3078 = vmatpush1.msra.mxu0 0.0
  %3079 = vmatprep.subr.mxu0 0.0
  %3080 = vmatpush1.msra.mxu0 0.0
  %3081 = vmatprep.subr.mxu0 0.0
  %3082 = vmatpush1.msra.mxu0 0.0
  %3083 = vmatprep.subr.mxu0 0.0
  %3084 = vmatpush1.msra.mxu0 0.0
  %3085 = vmatprep.subr.mxu0 0.0
  %3086 = vmatpush1.msra.mxu0 0.0
  %3087 = vmatprep.subr.mxu0 0.0
  %3088 = vmatpush1.msra.mxu0 0.0
  %3089 = vmatprep.subr.mxu0 0.0
  %3090 = vmatpush1.msra.mxu0 0.0
  %3091 = vmatprep.subr.mxu0 0.0
  %3092 = vmatpush1.msra.mxu0 0.0
  %3093 = vmatprep.subr.mxu0 0.0
  %3094 = vmatpush1.msra.mxu0 0.0
  %3095 = vmatprep.subr.mxu0 0.0
  %3096 = vmatpush1.msra.mxu0 %v2806
  %3097 = vmatprep.subr.mxu0 0.0
  %3098 = vmatpush2.msra.mxu0 0.0
  %3099 = vmatprep.subr.mxu0 0.0
  %3100 = vmatpush2.msra.mxu0 0.0
  %3101 = vmatprep.subr.mxu0 0.0
  %3102 = vmatpush2.msra.mxu0 0.0
  %3103 = vmatprep.subr.mxu0 0.0
  %3104 = vmatpush2.msra.mxu0 0.0
  %3105 = vmatprep.subr.mxu0 0.0
  %3106 = vmatpush2.msra.mxu0 0.0
  %3107 = vmatprep.subr.mxu0 0.0
  %3108 = vmatpush2.msra.mxu0 0.0
  %3109 = vmatprep.subr.mxu0 0.0
  %3110 = vmatpush2.msra.mxu0 0.0
  %3111 = vmatprep.subr.mxu0 0.0
  %3112 = vmatpush2.msra.mxu0 0.0
  %3113 = vmatprep.subr.mxu0 0.0
  %3114 = vmatpush2.msra.mxu0 0.0
  %3115 = vmatprep.subr.mxu0 0.0
  %3116 = vmatpush2.msra.mxu0 0.0
  %3117 = vmatprep.subr.mxu0 0.0
  %3118 = vmatpush2.msra.mxu0 0.0
  %3119 = vmatprep.subr.mxu0 0.0
  %3120 = vmatpush2.msra.mxu0 0.0
  %3121 = vmatprep.subr.mxu0 0.0
  %3122 = vmatpush2.msra.mxu0 0.0
  %3123 = vmatprep.subr.mxu0 0.0
  %3124 = vmatpush2.msra.mxu0 0.0
  %3125 = vmatprep.subr.mxu0 0.0
  %3126 = vmatpush2.msra.mxu0 0.0
  %3127 = vmatprep.subr.mxu0 0.0
  %3128 = vmatpush2.msra.mxu0 0.0
  %3129 = vmatprep.mubr.f32.mxu0 0.0
  %3130 = vmatmul.mubr.f32.gmra.mxu0 %v3063
  %v3131 = vpop.f32.mrf.mxu0
  %v3132 = vadd.f32 0.0, %v3131
  %v3133 = vpop.f32.mrf.mxu0
  %3134 = vdwg.mxu0
  %v3135 = vlaneseq
  %v3136 = vshrl.u32 %v3135, 7
  %v3137 = vsub.s32 0, %v3136
  %v3138 = vrot.slane %v3132, %v3137
  %v3139 = vadd.f32 %v3058, %v3138
  %v3140 = vadd.f32 %v3059, %v3138
  %v3141 = vadd.f32 %v3060, %v3138
  %v3142 = vadd.f32 %v3061, %v3138
  %vm3143 = vcmp.gt.f32.partialorder %v3139, 0.0
  %vm3144 = vcmp.gt.f32.partialorder %v3140, 0.0
  %vm3145 = vcmp.gt.f32.partialorder %v3141, 0.0
  %vm3146 = vcmp.gt.f32.partialorder %v3142, 0.0
  %v3147 = vmul.f32 %v3139, 0.2
  %v3148 = vmul.f32 %v3140, 0.2
  %v3149 = vmul.f32 %v3141, 0.2
  %v3150 = vmul.f32 %v3142, 0.2
  %v3151 = vsel %vm3143, %v3139, %v3147
  %v3152 = vsel %vm3144, %v3140, %v3148
  %v3153 = vsel %vm3145, %v3141, %v3149
  %v3154 = vsel %vm3146, %v3142, %v3150
  %v3155 = vpack.c.bf16 %v3152, %v3151
  %v3156 = vpack.c.bf16 %v3154, %v3153
  %v3157 = vld [vmem:[%s14] sm:$0xf]
  %v3158 = vld [vmem:[%s14 + $0x4] sm:$0xf]
  %v3159 = vld [vmem:[%s14 + $0x8] sm:$0xf]
  %v3160 = vld [vmem:[%s14 + $0xc] sm:$0xf]
  %v3161 = vld [vmem:[%s14 + $0x10] sm:$0xf]
  %v3162 = vld [vmem:[%s14 + $0x14] sm:$0xf]
  %v3163 = vld [vmem:[%s14 + $0x18] sm:$0xf]
  %v3164 = vld [vmem:[%s14 + $0x1c] sm:$0xf]
  %v3165 = vld [vmem:[%s14 + $0x20] sm:$0xf]
  %v3166 = vld [vmem:[%s14 + $0x24] sm:$0xf]
  %v3167 = vld [vmem:[%s14 + $0x28] sm:$0xf]
  %v3168 = vld [vmem:[%s14 + $0x2c] sm:$0xf]
  %v3169 = vld [vmem:[%s14 + $0x30] sm:$0xf]
  %v3170 = vld [vmem:[%s14 + $0x34] sm:$0xf]
  %v3171 = vld [vmem:[%s14 + $0x38] sm:$0xf]
  %v3172 = vld [vmem:[%s14 + $0x3c] sm:$0xf]
  %v3189 = vunpack.c.l.b16 %v3157
  %v3190 = vunpack.c.l.b16 %v3158
  %v3191 = vunpack.c.l.b16 %v3159
  %v3192 = vunpack.c.l.b16 %v3160
  %v3193 = vunpack.c.l.b16 %v3161
  %v3194 = vunpack.c.l.b16 %v3162
  %v3195 = vunpack.c.l.b16 %v3163
  %v3196 = vunpack.c.l.b16 %v3164
  %v3197 = vunpack.c.l.b16 %v3165
  %v3198 = vunpack.c.l.b16 %v3166
  %v3199 = vunpack.c.l.b16 %v3167
  %v3200 = vunpack.c.l.b16 %v3168
  %v3201 = vunpack.c.l.b16 %v3169
  %v3202 = vunpack.c.l.b16 %v3170
  %v3203 = vunpack.c.l.b16 %v3171
  %v3204 = vunpack.c.l.b16 %v3172
  %v3205 = vpack.c.b16 %v3190, %v3189
  %v3206 = vpack.c.b16 %v3192, %v3191
  %v3207 = vpack.c.b16 %v3194, %v3193
  %v3208 = vpack.c.b16 %v3196, %v3195
  %v3209 = vpack.c.b16 %v3198, %v3197
  %v3210 = vpack.c.b16 %v3200, %v3199
  %v3211 = vpack.c.b16 %v3202, %v3201
  %v3212 = vpack.c.b16 %v3204, %v3203
  %3221 = vmatprep.subr.bf16.mxu0 0
  %3222 = vmatpush1.bf16.msra.mxu0 %v3212
  %3223 = vmatprep.subr.bf16.mxu0 0
  %3224 = vmatpush1.bf16.msra.mxu0 %v3211
  %3225 = vmatprep.subr.bf16.mxu0 0
  %3226 = vmatpush1.bf16.msra.mxu0 %v3210
  %3227 = vmatprep.subr.bf16.mxu0 0
  %3228 = vmatpush1.bf16.msra.mxu0 %v3209
  %3229 = vmatprep.subr.bf16.mxu0 0
  %3230 = vmatpush1.bf16.msra.mxu0 %v3208
  %3231 = vmatprep.subr.bf16.mxu0 0
  %3232 = vmatpush1.bf16.msra.mxu0 %v3207
  %3233 = vmatprep.subr.bf16.mxu0 0
  %3234 = vmatpush1.bf16.msra.mxu0 %v3206
  %3235 = vmatprep.subr.bf16.mxu0 0
  %3236 = vmatpush1.bf16.msra.mxu0 %v3205
  %3237 = vmatprep.subr.bf16.mxu0 0
  %3238 = vmatpush2.bf16.msra.mxu0 0
  %3239 = vmatprep.subr.bf16.mxu0 0
  %3240 = vmatpush2.bf16.msra.mxu0 0
  %3241 = vmatprep.subr.bf16.mxu0 0
  %3242 = vmatpush2.bf16.msra.mxu0 0
  %3243 = vmatprep.subr.bf16.mxu0 0
  %3244 = vmatpush2.bf16.msra.mxu0 0
  %3245 = vmatprep.subr.bf16.mxu0 0
  %3246 = vmatpush2.bf16.msra.mxu0 0
  %3247 = vmatprep.subr.bf16.mxu0 0
  %3248 = vmatpush2.bf16.msra.mxu0 0
  %3249 = vmatprep.subr.bf16.mxu0 0
  %3250 = vmatpush2.bf16.msra.mxu0 0
  %3251 = vmatprep.subr.bf16.mxu0 0
  %3252 = vmatpush2.bf16.msra.mxu0 0
  %3253 = vmatprep.mubr.bf16.mxu0 0
  %3254 = vmatmul.mubr.bf16.gmra.mxu0 %v3155
  %v3255 = vpop.f32.mrf.mxu0
  %v3256 = vadd.f32 0.0, %v3255
  %v3257 = vpop.f32.mrf.mxu0
  %v3258 = vpop.f32.mrf.mxu0
  %v3259 = vadd.f32 0.0, %v3258
  %v3260 = vpop.f32.mrf.mxu0
  %3261 = vmatprep.mubr.bf16.mxu0 0
  %3262 = vmatmul.mubr.bf16.gmra.mxu0 %v3156
  %v3263 = vpop.f32.mrf.mxu0
  %v3264 = vadd.f32 0.0, %v3263
  %v3265 = vpop.f32.mrf.mxu0
  %v3266 = vpop.f32.mrf.mxu0
  %v3267 = vadd.f32 0.0, %v3266
  %v3268 = vpop.f32.mrf.mxu0
  %3269 = vdwg.mxu0
  %v3270 = vld [vmem:[%s13] sm:$0xff]
  %v3271 = vld [vmem:[%s13 + $0x8] sm:$0xff]
  %s3272 = scalar_lea.vmem %s14, 64
  %v3273 = vld [vmem:[%s3272] sm:$0xf]
  %v3274 = vld [vmem:[%s3272 + $0x4] sm:$0xf]
  %v3275 = vld [vmem:[%s3272 + $0x8] sm:$0xf]
  %v3276 = vld [vmem:[%s3272 + $0xc] sm:$0xf]
  %v3277 = vld [vmem:[%s3272 + $0x10] sm:$0xf]
  %v3278 = vld [vmem:[%s3272 + $0x14] sm:$0xf]
  %v3279 = vld [vmem:[%s3272 + $0x18] sm:$0xf]
  %v3280 = vld [vmem:[%s3272 + $0x1c] sm:$0xf]
  %v3281 = vld [vmem:[%s3272 + $0x20] sm:$0xf]
  %v3282 = vld [vmem:[%s3272 + $0x24] sm:$0xf]
  %v3283 = vld [vmem:[%s3272 + $0x28] sm:$0xf]
  %v3284 = vld [vmem:[%s3272 + $0x2c] sm:$0xf]
  %v3285 = vld [vmem:[%s3272 + $0x30] sm:$0xf]
  %v3286 = vld [vmem:[%s3272 + $0x34] sm:$0xf]
  %v3287 = vld [vmem:[%s3272 + $0x38] sm:$0xf]
  %v3288 = vld [vmem:[%s3272 + $0x3c] sm:$0xf]
  %v3305 = vunpack.c.l.b16 %v3273
  %v3306 = vunpack.c.l.b16 %v3274
  %v3307 = vunpack.c.l.b16 %v3275
  %v3308 = vunpack.c.l.b16 %v3276
  %v3309 = vunpack.c.l.b16 %v3277
  %v3310 = vunpack.c.l.b16 %v3278
  %v3311 = vunpack.c.l.b16 %v3279
  %v3312 = vunpack.c.l.b16 %v3280
  %v3313 = vunpack.c.l.b16 %v3281
  %v3314 = vunpack.c.l.b16 %v3282
  %v3315 = vunpack.c.l.b16 %v3283
  %v3316 = vunpack.c.l.b16 %v3284
  %v3317 = vunpack.c.l.b16 %v3285
  %v3318 = vunpack.c.l.b16 %v3286
  %v3319 = vunpack.c.l.b16 %v3287
  %v3320 = vunpack.c.l.b16 %v3288
  %v3321 = vpack.c.b16 %v3306, %v3305
  %v3322 = vpack.c.b16 %v3308, %v3307
  %v3323 = vpack.c.b16 %v3310, %v3309
  %v3324 = vpack.c.b16 %v3312, %v3311
  %v3325 = vpack.c.b16 %v3314, %v3313
  %v3326 = vpack.c.b16 %v3316, %v3315
  %v3327 = vpack.c.b16 %v3318, %v3317
  %v3328 = vpack.c.b16 %v3320, %v3319
  %3337 = vmatprep.subr.bf16.mxu0 0
  %3338 = vmatpush1.bf16.msra.mxu0 %v3328
  %3339 = vmatprep.subr.bf16.mxu0 0
  %3340 = vmatpush1.bf16.msra.mxu0 %v3327
  %3341 = vmatprep.subr.bf16.mxu0 0
  %3342 = vmatpush1.bf16.msra.mxu0 %v3326
  %3343 = vmatprep.subr.bf16.mxu0 0
  %3344 = vmatpush1.bf16.msra.mxu0 %v3325
  %3345 = vmatprep.subr.bf16.mxu0 0
  %3346 = vmatpush1.bf16.msra.mxu0 %v3324
  %3347 = vmatprep.subr.bf16.mxu0 0
  %3348 = vmatpush1.bf16.msra.mxu0 %v3323
  %3349 = vmatprep.subr.bf16.mxu0 0
  %3350 = vmatpush1.bf16.msra.mxu0 %v3322
  %3351 = vmatprep.subr.bf16.mxu0 0
  %3352 = vmatpush1.bf16.msra.mxu0 %v3321
  %3353 = vmatprep.subr.bf16.mxu0 0
  %3354 = vmatpush2.bf16.msra.mxu0 0
  %3355 = vmatprep.subr.bf16.mxu0 0
  %3356 = vmatpush2.bf16.msra.mxu0 0
  %3357 = vmatprep.subr.bf16.mxu0 0
  %3358 = vmatpush2.bf16.msra.mxu0 0
  %3359 = vmatprep.subr.bf16.mxu0 0
  %3360 = vmatpush2.bf16.msra.mxu0 0
  %3361 = vmatprep.subr.bf16.mxu0 0
  %3362 = vmatpush2.bf16.msra.mxu0 0
  %3363 = vmatprep.subr.bf16.mxu0 0
  %3364 = vmatpush2.bf16.msra.mxu0 0
  %3365 = vmatprep.subr.bf16.mxu0 0
  %3366 = vmatpush2.bf16.msra.mxu0 0
  %3367 = vmatprep.subr.bf16.mxu0 0
  %3368 = vmatpush2.bf16.msra.mxu0 0
  %3369 = vmatprep.mubr.bf16.mxu0 0
  %3370 = vmatmul.mubr.bf16.gmra.mxu0 %v3155
  %v3371 = vpop.f32.mrf.mxu0
  %v3372 = vadd.f32 0.0, %v3371
  %v3373 = vpop.f32.mrf.mxu0
  %v3374 = vpop.f32.mrf.mxu0
  %v3375 = vadd.f32 0.0, %v3374
  %v3376 = vpop.f32.mrf.mxu0
  %3377 = vmatprep.mubr.bf16.mxu0 0
  %3378 = vmatmul.mubr.bf16.gmra.mxu0 %v3156
  %v3379 = vpop.f32.mrf.mxu0
  %v3380 = vadd.f32 0.0, %v3379
  %v3381 = vpop.f32.mrf.mxu0
  %v3382 = vpop.f32.mrf.mxu0
  %v3383 = vadd.f32 0.0, %v3382
  %v3384 = vpop.f32.mrf.mxu0
  %3385 = vdwg.mxu0
  %s3386 = scalar_lea.vmem %s13, 16
  %v3387 = vld [vmem:[%s3386] sm:$0xff]
  %v3388 = vld [vmem:[%s3386 + $0x8] sm:$0xff]
  %vm3389 = vcmask 261120
  %v3391 = vsel %vm3389, %v3387, 0
  %v3394 = vsel %vm3389, %v3388, 0
  %3396 = vmatprep.subr.mxu0 0.0
  %3397 = vmatpush1.msra.mxu0 0.0
  %3398 = vmatprep.subr.mxu0 0.0
  %3399 = vmatpush1.msra.mxu0 0.0
  %3400 = vmatprep.subr.mxu0 0.0
  %3401 = vmatpush1.msra.mxu0 0.0
  %3402 = vmatprep.subr.mxu0 0.0
  %3403 = vmatpush1.msra.mxu0 0.0
  %3404 = vmatprep.subr.mxu0 0.0
  %3405 = vmatpush1.msra.mxu0 0.0
  %3406 = vmatprep.subr.mxu0 0.0
  %3407 = vmatpush1.msra.mxu0 0.0
  %3408 = vmatprep.subr.mxu0 0.0
  %3409 = vmatpush1.msra.mxu0 0.0
  %3410 = vmatprep.subr.mxu0 0.0
  %3411 = vmatpush1.msra.mxu0 0.0
  %3412 = vmatprep.subr.mxu0 0.0
  %3413 = vmatpush1.msra.mxu0 0.0
  %3414 = vmatprep.subr.mxu0 0.0
  %3415 = vmatpush1.msra.mxu0 0.0
  %3416 = vmatprep.subr.mxu0 0.0
  %3417 = vmatpush1.msra.mxu0 0.0
  %3418 = vmatprep.subr.mxu0 0.0
  %3419 = vmatpush1.msra.mxu0 0.0
  %3420 = vmatprep.subr.mxu0 0.0
  %3421 = vmatpush1.msra.mxu0 %v3383
  %3422 = vmatprep.subr.mxu0 0.0
  %3423 = vmatpush1.msra.mxu0 %v3380
  %3424 = vmatprep.subr.mxu0 0.0
  %3425 = vmatpush1.msra.mxu0 %v3375
  %3426 = vmatprep.subr.mxu0 0.0
  %3427 = vmatpush1.msra.mxu0 %v3372
  %3428 = vmatprep.subr.mxu0 0.0
  %3429 = vmatpush2.msra.mxu0 0.0
  %3430 = vmatprep.subr.mxu0 0.0
  %3431 = vmatpush2.msra.mxu0 0.0
  %3432 = vmatprep.subr.mxu0 0.0
  %3433 = vmatpush2.msra.mxu0 0.0
  %3434 = vmatprep.subr.mxu0 0.0
  %3435 = vmatpush2.msra.mxu0 0.0
  %3436 = vmatprep.subr.mxu0 0.0
  %3437 = vmatpush2.msra.mxu0 0.0
  %3438 = vmatprep.subr.mxu0 0.0
  %3439 = vmatpush2.msra.mxu0 0.0
  %3440 = vmatprep.subr.mxu0 0.0
  %3441 = vmatpush2.msra.mxu0 0.0
  %3442 = vmatprep.subr.mxu0 0.0
  %3443 = vmatpush2.msra.mxu0 0.0
  %3444 = vmatprep.subr.mxu0 0.0
  %3445 = vmatpush2.msra.mxu0 0.0
  %3446 = vmatprep.subr.mxu0 0.0
  %3447 = vmatpush2.msra.mxu0 0.0
  %3448 = vmatprep.subr.mxu0 0.0
  %3449 = vmatpush2.msra.mxu0 0.0
  %3450 = vmatprep.subr.mxu0 0.0
  %3451 = vmatpush2.msra.mxu0 0.0
  %3452 = vmatprep.subr.mxu0 0.0
  %3453 = vmatpush2.msra.mxu0 0.0
  %3454 = vmatprep.subr.mxu0 0.0
  %3455 = vmatpush2.msra.mxu0 0.0
  %3456 = vmatprep.subr.mxu0 0.0
  %3457 = vmatpush2.msra.mxu0 0.0
  %3458 = vmatprep.subr.mxu0 0.0
  %3459 = vmatpush2.msra.mxu0 0.0
  %3460 = vmatprep.mubr.f32.mxu0 0.0
  %3461 = vmatmul.mubr.f32.gmra.mxu0 %v3391
  %v3462 = vpop.f32.mrf.mxu0
  %v3463 = vadd.f32 0.0, %v3462
  %v3464 = vpop.f32.mrf.mxu0
  %3465 = vmatprep.mubr.f32.mxu0 0.0
  %3466 = vmatmul.mubr.f32.gmra.mxu0 %v3394
  %v3467 = vpop.f32.mrf.mxu0
  %v3468 = vadd.f32 0.0, %v3467
  %v3469 = vpop.f32.mrf.mxu0
  %3470 = vdwg.mxu0
  %v3472 = vsel %vm3389, %v3270, 0
  %v3475 = vsel %vm3389, %v3271, 0
  %3477 = vmatprep.subr.mxu0 0.0
  %3478 = vmatpush1.msra.mxu0 0.0
  %3479 = vmatprep.subr.mxu0 0.0
  %3480 = vmatpush1.msra.mxu0 0.0
  %3481 = vmatprep.subr.mxu0 0.0
  %3482 = vmatpush1.msra.mxu0 0.0
  %3483 = vmatprep.subr.mxu0 0.0
  %3484 = vmatpush1.msra.mxu0 0.0
  %3485 = vmatprep.subr.mxu0 0.0
  %3486 = vmatpush1.msra.mxu0 0.0
  %3487 = vmatprep.subr.mxu0 0.0
  %3488 = vmatpush1.msra.mxu0 0.0
  %3489 = vmatprep.subr.mxu0 0.0
  %3490 = vmatpush1.msra.mxu0 0.0
  %3491 = vmatprep.subr.mxu0 0.0
  %3492 = vmatpush1.msra.mxu0 0.0
  %3493 = vmatprep.subr.mxu0 0.0
  %3494 = vmatpush1.msra.mxu0 0.0
  %3495 = vmatprep.subr.mxu0 0.0
  %3496 = vmatpush1.msra.mxu0 0.0
  %3497 = vmatprep.subr.mxu0 0.0
  %3498 = vmatpush1.msra.mxu0 0.0
  %3499 = vmatprep.subr.mxu0 0.0
  %3500 = vmatpush1.msra.mxu0 0.0
  %3501 = vmatprep.subr.mxu0 0.0
  %3502 = vmatpush1.msra.mxu0 %v3267
  %3503 = vmatprep.subr.mxu0 0.0
  %3504 = vmatpush1.msra.mxu0 %v3264
  %3505 = vmatprep.subr.mxu0 0.0
  %3506 = vmatpush1.msra.mxu0 %v3259
  %3507 = vmatprep.subr.mxu0 0.0
  %3508 = vmatpush1.msra.mxu0 %v3256
  %3509 = vmatprep.subr.mxu0 0.0
  %3510 = vmatpush2.msra.mxu0 0.0
  %3511 = vmatprep.subr.mxu0 0.0
  %3512 = vmatpush2.msra.mxu0 0.0
  %3513 = vmatprep.subr.mxu0 0.0
  %3514 = vmatpush2.msra.mxu0 0.0
  %3515 = vmatprep.subr.mxu0 0.0
  %3516 = vmatpush2.msra.mxu0 0.0
  %3517 = vmatprep.subr.mxu0 0.0
  %3518 = vmatpush2.msra.mxu0 0.0
  %3519 = vmatprep.subr.mxu0 0.0
  %3520 = vmatpush2.msra.mxu0 0.0
  %3521 = vmatprep.subr.mxu0 0.0
  %3522 = vmatpush2.msra.mxu0 0.0
  %3523 = vmatprep.subr.mxu0 0.0
  %3524 = vmatpush2.msra.mxu0 0.0
  %3525 = vmatprep.subr.mxu0 0.0
  %3526 = vmatpush2.msra.mxu0 0.0
  %3527 = vmatprep.subr.mxu0 0.0
  %3528 = vmatpush2.msra.mxu0 0.0
  %3529 = vmatprep.subr.mxu0 0.0
  %3530 = vmatpush2.msra.mxu0 0.0
  %3531 = vmatprep.subr.mxu0 0.0
  %3532 = vmatpush2.msra.mxu0 0.0
  %3533 = vmatprep.subr.mxu0 0.0
  %3534 = vmatpush2.msra.mxu0 0.0
  %3535 = vmatprep.subr.mxu0 0.0
  %3536 = vmatpush2.msra.mxu0 0.0
  %3537 = vmatprep.subr.mxu0 0.0
  %3538 = vmatpush2.msra.mxu0 0.0
  %3539 = vmatprep.subr.mxu0 0.0
  %3540 = vmatpush2.msra.mxu0 0.0
  %3541 = vmatprep.mubr.f32.mxu0 0.0
  %3542 = vmatmul.mubr.f32.gmra.mxu0 %v3472
  %v3543 = vpop.f32.mrf.mxu0
  %v3544 = vadd.f32 %v3463, %v3543
  %v3545 = vpop.f32.mrf.mxu0
  %3546 = vmatprep.mubr.f32.mxu0 0.0
  %3547 = vmatmul.mubr.f32.gmra.mxu0 %v3475
  %v3548 = vpop.f32.mrf.mxu0
  %v3549 = vadd.f32 %v3468, %v3548
  %v3550 = vpop.f32.mrf.mxu0
  %3551 = vdwg.mxu0
  %s3552 = scalar_lea.vmem %s14, 128
  %v3553 = vld [vmem:[%s3552] sm:$0xf]
  %v3554 = vld [vmem:[%s3552 + $0x4] sm:$0xf]
  %v3555 = vld [vmem:[%s3552 + $0x8] sm:$0xf]
  %v3556 = vld [vmem:[%s3552 + $0xc] sm:$0xf]
  %v3557 = vld [vmem:[%s3552 + $0x10] sm:$0xf]
  %v3558 = vld [vmem:[%s3552 + $0x14] sm:$0xf]
  %v3559 = vld [vmem:[%s3552 + $0x18] sm:$0xf]
  %v3560 = vld [vmem:[%s3552 + $0x1c] sm:$0xf]
  %v3561 = vld [vmem:[%s3552 + $0x20] sm:$0xf]
  %v3562 = vld [vmem:[%s3552 + $0x24] sm:$0xf]
  %v3563 = vld [vmem:[%s3552 + $0x28] sm:$0xf]
  %v3564 = vld [vmem:[%s3552 + $0x2c] sm:$0xf]
  %v3565 = vld [vmem:[%s3552 + $0x30] sm:$0xf]
  %v3566 = vld [vmem:[%s3552 + $0x34] sm:$0xf]
  %v3567 = vld [vmem:[%s3552 + $0x38] sm:$0xf]
  %v3568 = vld [vmem:[%s3552 + $0x3c] sm:$0xf]
  %v3585 = vunpack.c.l.b16 %v3553
  %v3586 = vunpack.c.l.b16 %v3554
  %v3587 = vunpack.c.l.b16 %v3555
  %v3588 = vunpack.c.l.b16 %v3556
  %v3589 = vunpack.c.l.b16 %v3557
  %v3590 = vunpack.c.l.b16 %v3558
  %v3591 = vunpack.c.l.b16 %v3559
  %v3592 = vunpack.c.l.b16 %v3560
  %v3593 = vunpack.c.l.b16 %v3561
  %v3594 = vunpack.c.l.b16 %v3562
  %v3595 = vunpack.c.l.b16 %v3563
  %v3596 = vunpack.c.l.b16 %v3564
  %v3597 = vunpack.c.l.b16 %v3565
  %v3598 = vunpack.c.l.b16 %v3566
  %v3599 = vunpack.c.l.b16 %v3567
  %v3600 = vunpack.c.l.b16 %v3568
  %v3601 = vpack.c.b16 %v3586, %v3585
  %v3602 = vpack.c.b16 %v3588, %v3587
  %v3603 = vpack.c.b16 %v3590, %v3589
  %v3604 = vpack.c.b16 %v3592, %v3591
  %v3605 = vpack.c.b16 %v3594, %v3593
  %v3606 = vpack.c.b16 %v3596, %v3595
  %v3607 = vpack.c.b16 %v3598, %v3597
  %v3608 = vpack.c.b16 %v3600, %v3599
  %3617 = vmatprep.subr.bf16.mxu0 0
  %3618 = vmatpush1.bf16.msra.mxu0 %v3608
  %3619 = vmatprep.subr.bf16.mxu0 0
  %3620 = vmatpush1.bf16.msra.mxu0 %v3607
  %3621 = vmatprep.subr.bf16.mxu0 0
  %3622 = vmatpush1.bf16.msra.mxu0 %v3606
  %3623 = vmatprep.subr.bf16.mxu0 0
  %3624 = vmatpush1.bf16.msra.mxu0 %v3605
  %3625 = vmatprep.subr.bf16.mxu0 0
  %3626 = vmatpush1.bf16.msra.mxu0 %v3604
  %3627 = vmatprep.subr.bf16.mxu0 0
  %3628 = vmatpush1.bf16.msra.mxu0 %v3603
  %3629 = vmatprep.subr.bf16.mxu0 0
  %3630 = vmatpush1.bf16.msra.mxu0 %v3602
  %3631 = vmatprep.subr.bf16.mxu0 0
  %3632 = vmatpush1.bf16.msra.mxu0 %v3601
  %3633 = vmatprep.subr.bf16.mxu0 0
  %3634 = vmatpush2.bf16.msra.mxu0 0
  %3635 = vmatprep.subr.bf16.mxu0 0
  %3636 = vmatpush2.bf16.msra.mxu0 0
  %3637 = vmatprep.subr.bf16.mxu0 0
  %3638 = vmatpush2.bf16.msra.mxu0 0
  %3639 = vmatprep.subr.bf16.mxu0 0
  %3640 = vmatpush2.bf16.msra.mxu0 0
  %3641 = vmatprep.subr.bf16.mxu0 0
  %3642 = vmatpush2.bf16.msra.mxu0 0
  %3643 = vmatprep.subr.bf16.mxu0 0
  %3644 = vmatpush2.bf16.msra.mxu0 0
  %3645 = vmatprep.subr.bf16.mxu0 0
  %3646 = vmatpush2.bf16.msra.mxu0 0
  %3647 = vmatprep.subr.bf16.mxu0 0
  %3648 = vmatpush2.bf16.msra.mxu0 0
  %3649 = vmatprep.mubr.bf16.mxu0 0
  %3650 = vmatmul.mubr.bf16.gmra.mxu0 %v3155
  %v3651 = vpop.f32.mrf.mxu0
  %v3652 = vadd.f32 0.0, %v3651
  %v3653 = vpop.f32.mrf.mxu0
  %v3654 = vpop.f32.mrf.mxu0
  %v3655 = vadd.f32 0.0, %v3654
  %v3656 = vpop.f32.mrf.mxu0
  %3657 = vmatprep.mubr.bf16.mxu0 0
  %3658 = vmatmul.mubr.bf16.gmra.mxu0 %v3156
  %v3659 = vpop.f32.mrf.mxu0
  %v3660 = vadd.f32 0.0, %v3659
  %v3661 = vpop.f32.mrf.mxu0
  %v3662 = vpop.f32.mrf.mxu0
  %v3663 = vadd.f32 0.0, %v3662
  %v3664 = vpop.f32.mrf.mxu0
  %3665 = vdwg.mxu0
  %s3666 = scalar_lea.vmem %s13, 32
  %v3667 = vld [vmem:[%s3666] sm:$0xff]
  %v3668 = vld [vmem:[%s3666 + $0x8] sm:$0xff]
  %v3670 = vsel %vm3389, %v3667, 0
  %v3673 = vsel %vm3389, %v3668, 0
  %3675 = vmatprep.subr.mxu0 0.0
  %3676 = vmatpush1.msra.mxu0 0.0
  %3677 = vmatprep.subr.mxu0 0.0
  %3678 = vmatpush1.msra.mxu0 0.0
  %3679 = vmatprep.subr.mxu0 0.0
  %3680 = vmatpush1.msra.mxu0 0.0
  %3681 = vmatprep.subr.mxu0 0.0
  %3682 = vmatpush1.msra.mxu0 0.0
  %3683 = vmatprep.subr.mxu0 0.0
  %3684 = vmatpush1.msra.mxu0 0.0
  %3685 = vmatprep.subr.mxu0 0.0
  %3686 = vmatpush1.msra.mxu0 0.0
  %3687 = vmatprep.subr.mxu0 0.0
  %3688 = vmatpush1.msra.mxu0 0.0
  %3689 = vmatprep.subr.mxu0 0.0
  %3690 = vmatpush1.msra.mxu0 0.0
  %3691 = vmatprep.subr.mxu0 0.0
  %3692 = vmatpush1.msra.mxu0 0.0
  %3693 = vmatprep.subr.mxu0 0.0
  %3694 = vmatpush1.msra.mxu0 0.0
  %3695 = vmatprep.subr.mxu0 0.0
  %3696 = vmatpush1.msra.mxu0 0.0
  %3697 = vmatprep.subr.mxu0 0.0
  %3698 = vmatpush1.msra.mxu0 0.0
  %3699 = vmatprep.subr.mxu0 0.0
  %3700 = vmatpush1.msra.mxu0 %v3663
  %3701 = vmatprep.subr.mxu0 0.0
  %3702 = vmatpush1.msra.mxu0 %v3660
  %3703 = vmatprep.subr.mxu0 0.0
  %3704 = vmatpush1.msra.mxu0 %v3655
  %3705 = vmatprep.subr.mxu0 0.0
  %3706 = vmatpush1.msra.mxu0 %v3652
  %3707 = vmatprep.subr.mxu0 0.0
  %3708 = vmatpush2.msra.mxu0 0.0
  %3709 = vmatprep.subr.mxu0 0.0
  %3710 = vmatpush2.msra.mxu0 0.0
  %3711 = vmatprep.subr.mxu0 0.0
  %3712 = vmatpush2.msra.mxu0 0.0
  %3713 = vmatprep.subr.mxu0 0.0
  %3714 = vmatpush2.msra.mxu0 0.0
  %3715 = vmatprep.subr.mxu0 0.0
  %3716 = vmatpush2.msra.mxu0 0.0
  %3717 = vmatprep.subr.mxu0 0.0
  %3718 = vmatpush2.msra.mxu0 0.0
  %3719 = vmatprep.subr.mxu0 0.0
  %3720 = vmatpush2.msra.mxu0 0.0
  %3721 = vmatprep.subr.mxu0 0.0
  %3722 = vmatpush2.msra.mxu0 0.0
  %3723 = vmatprep.subr.mxu0 0.0
  %3724 = vmatpush2.msra.mxu0 0.0
  %3725 = vmatprep.subr.mxu0 0.0
  %3726 = vmatpush2.msra.mxu0 0.0
  %3727 = vmatprep.subr.mxu0 0.0
  %3728 = vmatpush2.msra.mxu0 0.0
  %3729 = vmatprep.subr.mxu0 0.0
  %3730 = vmatpush2.msra.mxu0 0.0
  %3731 = vmatprep.subr.mxu0 0.0
  %3732 = vmatpush2.msra.mxu0 0.0
  %3733 = vmatprep.subr.mxu0 0.0
  %3734 = vmatpush2.msra.mxu0 0.0
  %3735 = vmatprep.subr.mxu0 0.0
  %3736 = vmatpush2.msra.mxu0 0.0
  %3737 = vmatprep.subr.mxu0 0.0
  %3738 = vmatpush2.msra.mxu0 0.0
  %3739 = vmatprep.mubr.f32.mxu0 0.0
  %3740 = vmatmul.mubr.f32.gmra.mxu0 %v3670
  %v3741 = vpop.f32.mrf.mxu0
  %v3742 = vadd.f32 0.0, %v3741
  %v3743 = vpop.f32.mrf.mxu0
  %3744 = vmatprep.mubr.f32.mxu0 0.0
  %3745 = vmatmul.mubr.f32.gmra.mxu0 %v3673
  %v3746 = vpop.f32.mrf.mxu0
  %v3747 = vadd.f32 0.0, %v3746
  %v3748 = vpop.f32.mrf.mxu0
  %3749 = vdwg.mxu0
  %v3750 = vadd.f32 %v3544, %v3742
  %v3751 = vadd.f32 %v3549, %v3747
  %s3752 = scalar_lea.vmem %s14, 192
  %v3753 = vld [vmem:[%s3752] sm:$0xf]
  %v3754 = vld [vmem:[%s3752 + $0x4] sm:$0xf]
  %v3755 = vld [vmem:[%s3752 + $0x8] sm:$0xf]
  %v3756 = vld [vmem:[%s3752 + $0xc] sm:$0xf]
  %v3757 = vld [vmem:[%s3752 + $0x10] sm:$0xf]
  %v3758 = vld [vmem:[%s3752 + $0x14] sm:$0xf]
  %v3759 = vld [vmem:[%s3752 + $0x18] sm:$0xf]
  %v3760 = vld [vmem:[%s3752 + $0x1c] sm:$0xf]
  %v3761 = vld [vmem:[%s3752 + $0x20] sm:$0xf]
  %v3762 = vld [vmem:[%s3752 + $0x24] sm:$0xf]
  %v3763 = vld [vmem:[%s3752 + $0x28] sm:$0xf]
  %v3764 = vld [vmem:[%s3752 + $0x2c] sm:$0xf]
  %v3765 = vld [vmem:[%s3752 + $0x30] sm:$0xf]
  %v3766 = vld [vmem:[%s3752 + $0x34] sm:$0xf]
  %v3767 = vld [vmem:[%s3752 + $0x38] sm:$0xf]
  %v3768 = vld [vmem:[%s3752 + $0x3c] sm:$0xf]
  %v3785 = vunpack.c.l.b16 %v3753
  %v3786 = vunpack.c.l.b16 %v3754
  %v3787 = vunpack.c.l.b16 %v3755
  %v3788 = vunpack.c.l.b16 %v3756
  %v3789 = vunpack.c.l.b16 %v3757
  %v3790 = vunpack.c.l.b16 %v3758
  %v3791 = vunpack.c.l.b16 %v3759
  %v3792 = vunpack.c.l.b16 %v3760
  %v3793 = vunpack.c.l.b16 %v3761
  %v3794 = vunpack.c.l.b16 %v3762
  %v3795 = vunpack.c.l.b16 %v3763
  %v3796 = vunpack.c.l.b16 %v3764
  %v3797 = vunpack.c.l.b16 %v3765
  %v3798 = vunpack.c.l.b16 %v3766
  %v3799 = vunpack.c.l.b16 %v3767
  %v3800 = vunpack.c.l.b16 %v3768
  %v3801 = vpack.c.b16 %v3786, %v3785
  %v3802 = vpack.c.b16 %v3788, %v3787
  %v3803 = vpack.c.b16 %v3790, %v3789
  %v3804 = vpack.c.b16 %v3792, %v3791
  %v3805 = vpack.c.b16 %v3794, %v3793
  %v3806 = vpack.c.b16 %v3796, %v3795
  %v3807 = vpack.c.b16 %v3798, %v3797
  %v3808 = vpack.c.b16 %v3800, %v3799
  %3817 = vmatprep.subr.bf16.mxu0 0
  %3818 = vmatpush1.bf16.msra.mxu0 %v3808
  %3819 = vmatprep.subr.bf16.mxu0 0
  %3820 = vmatpush1.bf16.msra.mxu0 %v3807
  %3821 = vmatprep.subr.bf16.mxu0 0
  %3822 = vmatpush1.bf16.msra.mxu0 %v3806
  %3823 = vmatprep.subr.bf16.mxu0 0
  %3824 = vmatpush1.bf16.msra.mxu0 %v3805
  %3825 = vmatprep.subr.bf16.mxu0 0
  %3826 = vmatpush1.bf16.msra.mxu0 %v3804
  %3827 = vmatprep.subr.bf16.mxu0 0
  %3828 = vmatpush1.bf16.msra.mxu0 %v3803
  %3829 = vmatprep.subr.bf16.mxu0 0
  %3830 = vmatpush1.bf16.msra.mxu0 %v3802
  %3831 = vmatprep.subr.bf16.mxu0 0
  %3832 = vmatpush1.bf16.msra.mxu0 %v3801
  %3833 = vmatprep.subr.bf16.mxu0 0
  %3834 = vmatpush2.bf16.msra.mxu0 0
  %3835 = vmatprep.subr.bf16.mxu0 0
  %3836 = vmatpush2.bf16.msra.mxu0 0
  %3837 = vmatprep.subr.bf16.mxu0 0
  %3838 = vmatpush2.bf16.msra.mxu0 0
  %3839 = vmatprep.subr.bf16.mxu0 0
  %3840 = vmatpush2.bf16.msra.mxu0 0
  %3841 = vmatprep.subr.bf16.mxu0 0
  %3842 = vmatpush2.bf16.msra.mxu0 0
  %3843 = vmatprep.subr.bf16.mxu0 0
  %3844 = vmatpush2.bf16.msra.mxu0 0
  %3845 = vmatprep.subr.bf16.mxu0 0
  %3846 = vmatpush2.bf16.msra.mxu0 0
  %3847 = vmatprep.subr.bf16.mxu0 0
  %3848 = vmatpush2.bf16.msra.mxu0 0
  %3849 = vmatprep.mubr.bf16.mxu0 0
  %3850 = vmatmul.mubr.bf16.gmra.mxu0 %v3155
  %v3851 = vpop.f32.mrf.mxu0
  %v3852 = vadd.f32 0.0, %v3851
  %v3853 = vpop.f32.mrf.mxu0
  %v3854 = vpop.f32.mrf.mxu0
  %v3855 = vadd.f32 0.0, %v3854
  %v3856 = vpop.f32.mrf.mxu0
  %3857 = vmatprep.mubr.bf16.mxu0 0
  %3858 = vmatmul.mubr.bf16.gmra.mxu0 %v3156
  %v3859 = vpop.f32.mrf.mxu0
  %v3860 = vadd.f32 0.0, %v3859
  %v3861 = vpop.f32.mrf.mxu0
  %v3862 = vpop.f32.mrf.mxu0
  %v3863 = vadd.f32 0.0, %v3862
  %v3864 = vpop.f32.mrf.mxu0
  %3865 = vdwg.mxu0
  %s3866 = scalar_lea.vmem %s13, 48
  %v3867 = vld [vmem:[%s3866] sm:$0xff]
  %v3868 = vld [vmem:[%s3866 + $0x8] sm:$0xff]
  %v3870 = vsel %vm3389, %v3867, 0
  %v3873 = vsel %vm3389, %v3868, 0
  %3875 = vmatprep.subr.mxu0 0.0
  %3876 = vmatpush1.msra.mxu0 0.0
  %3877 = vmatprep.subr.mxu0 0.0
  %3878 = vmatpush1.msra.mxu0 0.0
  %3879 = vmatprep.subr.mxu0 0.0
  %3880 = vmatpush1.msra.mxu0 0.0
  %3881 = vmatprep.subr.mxu0 0.0
  %3882 = vmatpush1.msra.mxu0 0.0
  %3883 = vmatprep.subr.mxu0 0.0
  %3884 = vmatpush1.msra.mxu0 0.0
  %3885 = vmatprep.subr.mxu0 0.0
  %3886 = vmatpush1.msra.mxu0 0.0
  %3887 = vmatprep.subr.mxu0 0.0
  %3888 = vmatpush1.msra.mxu0 0.0
  %3889 = vmatprep.subr.mxu0 0.0
  %3890 = vmatpush1.msra.mxu0 0.0
  %3891 = vmatprep.subr.mxu0 0.0
  %3892 = vmatpush1.msra.mxu0 0.0
  %3893 = vmatprep.subr.mxu0 0.0
  %3894 = vmatpush1.msra.mxu0 0.0
  %3895 = vmatprep.subr.mxu0 0.0
  %3896 = vmatpush1.msra.mxu0 0.0
  %3897 = vmatprep.subr.mxu0 0.0
  %3898 = vmatpush1.msra.mxu0 0.0
  %3899 = vmatprep.subr.mxu0 0.0
  %3900 = vmatpush1.msra.mxu0 %v3863
  %3901 = vmatprep.subr.mxu0 0.0
  %3902 = vmatpush1.msra.mxu0 %v3860
  %3903 = vmatprep.subr.mxu0 0.0
  %3904 = vmatpush1.msra.mxu0 %v3855
  %3905 = vmatprep.subr.mxu0 0.0
  %3906 = vmatpush1.msra.mxu0 %v3852
  %3907 = vmatprep.subr.mxu0 0.0
  %3908 = vmatpush2.msra.mxu0 0.0
  %3909 = vmatprep.subr.mxu0 0.0
  %3910 = vmatpush2.msra.mxu0 0.0
  %3911 = vmatprep.subr.mxu0 0.0
  %3912 = vmatpush2.msra.mxu0 0.0
  %3913 = vmatprep.subr.mxu0 0.0
  %3914 = vmatpush2.msra.mxu0 0.0
  %3915 = vmatprep.subr.mxu0 0.0
  %3916 = vmatpush2.msra.mxu0 0.0
  %3917 = vmatprep.subr.mxu0 0.0
  %3918 = vmatpush2.msra.mxu0 0.0
  %3919 = vmatprep.subr.mxu0 0.0
  %3920 = vmatpush2.msra.mxu0 0.0
  %3921 = vmatprep.subr.mxu0 0.0
  %3922 = vmatpush2.msra.mxu0 0.0
  %3923 = vmatprep.subr.mxu0 0.0
  %3924 = vmatpush2.msra.mxu0 0.0
  %3925 = vmatprep.subr.mxu0 0.0
  %3926 = vmatpush2.msra.mxu0 0.0
  %3927 = vmatprep.subr.mxu0 0.0
  %3928 = vmatpush2.msra.mxu0 0.0
  %3929 = vmatprep.subr.mxu0 0.0
  %3930 = vmatpush2.msra.mxu0 0.0
  %3931 = vmatprep.subr.mxu0 0.0
  %3932 = vmatpush2.msra.mxu0 0.0
  %3933 = vmatprep.subr.mxu0 0.0
  %3934 = vmatpush2.msra.mxu0 0.0
  %3935 = vmatprep.subr.mxu0 0.0
  %3936 = vmatpush2.msra.mxu0 0.0
  %3937 = vmatprep.subr.mxu0 0.0
  %3938 = vmatpush2.msra.mxu0 0.0
  %3939 = vmatprep.mubr.f32.mxu0 0.0
  %3940 = vmatmul.mubr.f32.gmra.mxu0 %v3870
  %v3941 = vpop.f32.mrf.mxu0
  %v3942 = vadd.f32 0.0, %v3941
  %v3943 = vpop.f32.mrf.mxu0
  %3944 = vmatprep.mubr.f32.mxu0 0.0
  %3945 = vmatmul.mubr.f32.gmra.mxu0 %v3873
  %v3946 = vpop.f32.mrf.mxu0
  %v3947 = vadd.f32 0.0, %v3946
  %v3948 = vpop.f32.mrf.mxu0
  %3949 = vdwg.mxu0
  %v3950 = vadd.f32 %v3750, %v3942
  %v3951 = vadd.f32 %v3751, %v3947
  %v3952 = vld [vmem:[%s15] sm:$0xff]
  %v3953 = vld [vmem:[%s15 + $0x8] sm:$0xff]
  %v3954 = vld [vmem:[%s15 + $0x10] sm:$0xff]
  %v3955 = vld [vmem:[%s15 + $0x18] sm:$0xff]
  %v3956 = vld [vmem:[%s15 + $0x20] sm:$0xff]
  %v3957 = vld [vmem:[%s15 + $0x28] sm:$0xff]
  %v3958 = vld [vmem:[%s15 + $0x30] sm:$0xff]
  %v3959 = vld [vmem:[%s15 + $0x38] sm:$0xff]
  %v3960 = vld [vmem:[%s15 + $0x40] sm:$0xff]
  %v3961 = vld [vmem:[%s15 + $0x48] sm:$0xff]
  %v3962 = vld [vmem:[%s15 + $0x50] sm:$0xff]
  %v3963 = vld [vmem:[%s15 + $0x58] sm:$0xff]
  %v3964 = vld [vmem:[%s15 + $0x60] sm:$0xff]
  %v3965 = vld [vmem:[%s15 + $0x68] sm:$0xff]
  %v3966 = vld [vmem:[%s15 + $0x70] sm:$0xff]
  %v3967 = vld [vmem:[%s15 + $0x78] sm:$0xff]
  %v3968 = vld [vmem:[%s16] sm:$0xff]
  %v3969 = vld [vmem:[%s16 + $0x8] sm:$0xff]
  %v3970 = vld [vmem:[%s17] sm:$0x1]
  %v3971 = vld [vmem:[%s18] sm:$0x1]
  %v3972 = vadd.f32 %v3950, %v3951
  %v3973 = vrot.slane %v3972, 4
  %v3974 = vadd.f32 %v3972, %v3973
  %v3975 = vrot.slane %v3974, 2
  %v3976 = vadd.f32 %v3974, %v3975
  %v3977 = vrot.slane %v3976, 1
  %v3978 = vadd.f32 %v3976, %v3977
  %v3979 = vmul.f32 %v3950, %v3950
  %v3980 = vmul.f32 %v3951, %v3951
  %v3981 = vadd.f32 %v3979, %v3980
  %v3982 = vrot.slane %v3981, 4
  %v3983 = vadd.f32 %v3981, %v3982
  %v3984 = vrot.slane %v3983, 2
  %v3985 = vadd.f32 %v3983, %v3984
  %v3986 = vrot.slane %v3985, 1
  %v3987 = vadd.f32 %v3985, %v3986
  %3988 = vmatprep.subr.mxu0 0.0
  %3989 = vmatpush1.msra.mxu0 %v3967
  %3990 = vmatprep.subr.mxu0 0.0
  %3991 = vmatpush1.msra.mxu0 %v3966
  %3992 = vmatprep.subr.mxu0 0.0
  %3993 = vmatpush1.msra.mxu0 %v3965
  %3994 = vmatprep.subr.mxu0 0.0
  %3995 = vmatpush1.msra.mxu0 %v3964
  %3996 = vmatprep.subr.mxu0 0.0
  %3997 = vmatpush1.msra.mxu0 %v3963
  %3998 = vmatprep.subr.mxu0 0.0
  %3999 = vmatpush1.msra.mxu0 %v3962
  %4000 = vmatprep.subr.mxu0 0.0
  %4001 = vmatpush1.msra.mxu0 %v3961
  %4002 = vmatprep.subr.mxu0 0.0
  %4003 = vmatpush1.msra.mxu0 %v3960
  %4004 = vmatprep.subr.mxu0 0.0
  %4005 = vmatpush1.msra.mxu0 %v3959
  %4006 = vmatprep.subr.mxu0 0.0
  %4007 = vmatpush1.msra.mxu0 %v3958
  %4008 = vmatprep.subr.mxu0 0.0
  %4009 = vmatpush1.msra.mxu0 %v3957
  %4010 = vmatprep.subr.mxu0 0.0
  %4011 = vmatpush1.msra.mxu0 %v3956
  %4012 = vmatprep.subr.mxu0 0.0
  %4013 = vmatpush1.msra.mxu0 %v3955
  %4014 = vmatprep.subr.mxu0 0.0
  %4015 = vmatpush1.msra.mxu0 %v3954
  %4016 = vmatprep.subr.mxu0 0.0
  %4017 = vmatpush1.msra.mxu0 %v3953
  %4018 = vmatprep.subr.mxu0 0.0
  %4019 = vmatpush1.msra.mxu0 %v3952
  %4020 = vmatprep.subr.mxu0 0.0
  %4021 = vmatpush2.msra.mxu0 0.0
  %4022 = vmatprep.subr.mxu0 0.0
  %4023 = vmatpush2.msra.mxu0 0.0
  %4024 = vmatprep.subr.mxu0 0.0
  %4025 = vmatpush2.msra.mxu0 0.0
  %4026 = vmatprep.subr.mxu0 0.0
  %4027 = vmatpush2.msra.mxu0 0.0
  %4028 = vmatprep.subr.mxu0 0.0
  %4029 = vmatpush2.msra.mxu0 0.0
  %4030 = vmatprep.subr.mxu0 0.0
  %4031 = vmatpush2.msra.mxu0 0.0
  %4032 = vmatprep.subr.mxu0 0.0
  %4033 = vmatpush2.msra.mxu0 0.0
  %4034 = vmatprep.subr.mxu0 0.0
  %4035 = vmatpush2.msra.mxu0 0.0
  %4036 = vmatprep.subr.mxu0 0.0
  %4037 = vmatpush2.msra.mxu0 0.0
  %4038 = vmatprep.subr.mxu0 0.0
  %4039 = vmatpush2.msra.mxu0 0.0
  %4040 = vmatprep.subr.mxu0 0.0
  %4041 = vmatpush2.msra.mxu0 0.0
  %4042 = vmatprep.subr.mxu0 0.0
  %4043 = vmatpush2.msra.mxu0 0.0
  %4044 = vmatprep.subr.mxu0 0.0
  %4045 = vmatpush2.msra.mxu0 0.0
  %4046 = vmatprep.subr.mxu0 0.0
  %4047 = vmatpush2.msra.mxu0 0.0
  %4048 = vmatprep.subr.mxu0 0.0
  %4049 = vmatpush2.msra.mxu0 0.0
  %4050 = vmatprep.subr.mxu0 0.0
  %4051 = vmatpush2.msra.mxu0 0.0
  %4052 = vmatprep.mubr.f32.mxu0 0.0
  %4053 = vmatmul.mubr.f32.gmra.mxu0 %v3978
  %v4054 = vpop.f32.mrf.mxu0
  %v4055 = vadd.f32 0.0, %v4054
  %v4056 = vpop.f32.mrf.mxu0
  %4057 = vdwg.mxu0
  %v4058 = vmul.f32 %v4055, 0.0078125
  %4059 = vmatprep.subr.mxu0 0.0
  %4060 = vmatpush1.msra.mxu0 %v3967
  %4061 = vmatprep.subr.mxu0 0.0
  %4062 = vmatpush1.msra.mxu0 %v3966
  %4063 = vmatprep.subr.mxu0 0.0
  %4064 = vmatpush1.msra.mxu0 %v3965
  %4065 = vmatprep.subr.mxu0 0.0
  %4066 = vmatpush1.msra.mxu0 %v3964
  %4067 = vmatprep.subr.mxu0 0.0
  %4068 = vmatpush1.msra.mxu0 %v3963
  %4069 = vmatprep.subr.mxu0 0.0
  %4070 = vmatpush1.msra.mxu0 %v3962
  %4071 = vmatprep.subr.mxu0 0.0
  %4072 = vmatpush1.msra.mxu0 %v3961
  %4073 = vmatprep.subr.mxu0 0.0
  %4074 = vmatpush1.msra.mxu0 %v3960
  %4075 = vmatprep.subr.mxu0 0.0
  %4076 = vmatpush1.msra.mxu0 %v3959
  %4077 = vmatprep.subr.mxu0 0.0
  %4078 = vmatpush1.msra.mxu0 %v3958
  %4079 = vmatprep.subr.mxu0 0.0
  %4080 = vmatpush1.msra.mxu0 %v3957
  %4081 = vmatprep.subr.mxu0 0.0
  %4082 = vmatpush1.msra.mxu0 %v3956
  %4083 = vmatprep.subr.mxu0 0.0
  %4084 = vmatpush1.msra.mxu0 %v3955
  %4085 = vmatprep.subr.mxu0 0.0
  %4086 = vmatpush1.msra.mxu0 %v3954
  %4087 = vmatprep.subr.mxu0 0.0
  %4088 = vmatpush1.msra.mxu0 %v3953
  %4089 = vmatprep.subr.mxu0 0.0
  %4090 = vmatpush1.msra.mxu0 %v3952
  %4091 = vmatprep.subr.mxu0 0.0
  %4092 = vmatpush2.msra.mxu0 0.0
  %4093 = vmatprep.subr.mxu0 0.0
  %4094 = vmatpush2.msra.mxu0 0.0
  %4095 = vmatprep.subr.mxu0 0.0
  %4096 = vmatpush2.msra.mxu0 0.0
  %4097 = vmatprep.subr.mxu0 0.0
  %4098 = vmatpush2.msra.mxu0 0.0
  %4099 = vmatprep.subr.mxu0 0.0
  %4100 = vmatpush2.msra.mxu0 0.0
  %4101 = vmatprep.subr.mxu0 0.0
  %4102 = vmatpush2.msra.mxu0 0.0
  %4103 = vmatprep.subr.mxu0 0.0
  %4104 = vmatpush2.msra.mxu0 0.0
  %4105 = vmatprep.subr.mxu0 0.0
  %4106 = vmatpush2.msra.mxu0 0.0
  %4107 = vmatprep.subr.mxu0 0.0
  %4108 = vmatpush2.msra.mxu0 0.0
  %4109 = vmatprep.subr.mxu0 0.0
  %4110 = vmatpush2.msra.mxu0 0.0
  %4111 = vmatprep.subr.mxu0 0.0
  %4112 = vmatpush2.msra.mxu0 0.0
  %4113 = vmatprep.subr.mxu0 0.0
  %4114 = vmatpush2.msra.mxu0 0.0
  %4115 = vmatprep.subr.mxu0 0.0
  %4116 = vmatpush2.msra.mxu0 0.0
  %4117 = vmatprep.subr.mxu0 0.0
  %4118 = vmatpush2.msra.mxu0 0.0
  %4119 = vmatprep.subr.mxu0 0.0
  %4120 = vmatpush2.msra.mxu0 0.0
  %4121 = vmatprep.subr.mxu0 0.0
  %4122 = vmatpush2.msra.mxu0 0.0
  %4123 = vmatprep.mubr.f32.mxu0 0.0
  %4124 = vmatmul.mubr.f32.gmra.mxu0 %v3987
  %v4125 = vpop.f32.mrf.mxu0
  %v4126 = vadd.f32 0.0, %v4125
  %v4127 = vpop.f32.mrf.mxu0
  %4128 = vdwg.mxu0
  %v4129 = vmul.f32 %v4126, 0.0078125
  %v4130 = vmul.f32 %v4058, %v4058
  %v4131 = vsub.f32 %v4129, %v4130
  %v4132 = vadd.f32 %v4131, 1e-05
  %v4133 = vrsqrt.pop %v4132
  %v4134 = vmul.f32 %v3970, %v4133
  %v4135 = vmul.f32 %v4058, %v4134
  %v4136 = vsub.f32 %v3971, %v4135
  %vm4137 = vcmask 130048
  %v4139 = vsel %vm4137, %v4134, 0
  %4141 = vmatprep.subr.mxu0 0.0
  %4142 = vmatpush1.msra.mxu0 0.0
  %4143 = vmatprep.subr.mxu0 0.0
  %4144 = vmatpush1.msra.mxu0 0.0
  %4145 = vmatprep.subr.mxu0 0.0
  %4146 = vmatpush1.msra.mxu0 0.0
  %4147 = vmatprep.subr.mxu0 0.0
  %4148 = vmatpush1.msra.mxu0 0.0
  %4149 = vmatprep.subr.mxu0 0.0
  %4150 = vmatpush1.msra.mxu0 0.0
  %4151 = vmatprep.subr.mxu0 0.0
  %4152 = vmatpush1.msra.mxu0 0.0
  %4153 = vmatprep.subr.mxu0 0.0
  %4154 = vmatpush1.msra.mxu0 0.0
  %4155 = vmatprep.subr.mxu0 0.0
  %4156 = vmatpush1.msra.mxu0 0.0
  %4157 = vmatprep.subr.mxu0 0.0
  %4158 = vmatpush1.msra.mxu0 0.0
  %4159 = vmatprep.subr.mxu0 0.0
  %4160 = vmatpush1.msra.mxu0 0.0
  %4161 = vmatprep.subr.mxu0 0.0
  %4162 = vmatpush1.msra.mxu0 0.0
  %4163 = vmatprep.subr.mxu0 0.0
  %4164 = vmatpush1.msra.mxu0 0.0
  %4165 = vmatprep.subr.mxu0 0.0
  %4166 = vmatpush1.msra.mxu0 0.0
  %4167 = vmatprep.subr.mxu0 0.0
  %4168 = vmatpush1.msra.mxu0 0.0
  %4169 = vmatprep.subr.mxu0 0.0
  %4170 = vmatpush1.msra.mxu0 %v3969
  %4171 = vmatprep.subr.mxu0 0.0
  %4172 = vmatpush1.msra.mxu0 %v3968
  %4173 = vmatprep.subr.mxu0 0.0
  %4174 = vmatpush2.msra.mxu0 0.0
  %4175 = vmatprep.subr.mxu0 0.0
  %4176 = vmatpush2.msra.mxu0 0.0
  %4177 = vmatprep.subr.mxu0 0.0
  %4178 = vmatpush2.msra.mxu0 0.0
  %4179 = vmatprep.subr.mxu0 0.0
  %4180 = vmatpush2.msra.mxu0 0.0
  %4181 = vmatprep.subr.mxu0 0.0
  %4182 = vmatpush2.msra.mxu0 0.0
  %4183 = vmatprep.subr.mxu0 0.0
  %4184 = vmatpush2.msra.mxu0 0.0
  %4185 = vmatprep.subr.mxu0 0.0
  %4186 = vmatpush2.msra.mxu0 0.0
  %4187 = vmatprep.subr.mxu0 0.0
  %4188 = vmatpush2.msra.mxu0 0.0
  %4189 = vmatprep.subr.mxu0 0.0
  %4190 = vmatpush2.msra.mxu0 0.0
  %4191 = vmatprep.subr.mxu0 0.0
  %4192 = vmatpush2.msra.mxu0 0.0
  %4193 = vmatprep.subr.mxu0 0.0
  %4194 = vmatpush2.msra.mxu0 0.0
  %4195 = vmatprep.subr.mxu0 0.0
  %4196 = vmatpush2.msra.mxu0 0.0
  %4197 = vmatprep.subr.mxu0 0.0
  %4198 = vmatpush2.msra.mxu0 0.0
  %4199 = vmatprep.subr.mxu0 0.0
  %4200 = vmatpush2.msra.mxu0 0.0
  %4201 = vmatprep.subr.mxu0 0.0
  %4202 = vmatpush2.msra.mxu0 0.0
  %4203 = vmatprep.subr.mxu0 0.0
  %4204 = vmatpush2.msra.mxu0 0.0
  %4205 = vmatprep.mubr.f32.mxu0 0.0
  %4206 = vmatmul.mubr.f32.gmra.mxu0 %v4139
  %v4207 = vpop.f32.mrf.mxu0
  %v4208 = vadd.f32 0.0, %v4207
  %v4209 = vpop.f32.mrf.mxu0
  %4210 = vdwg.mxu0
  %v4211 = vlaneseq
  %v4212 = vshrl.u32 %v4211, 7
  %v4213 = vsub.s32 0, %v4212
  %v4214 = vrot.slane %v4208, %v4213
  %v4215 = vmul.f32 %v3950, %v4214
  %v4216 = vmul.f32 %v3951, %v4214
  %v4218 = vsel %vm4137, %v4136, 0
  %4220 = vmatprep.subr.mxu0 0.0
  %4221 = vmatpush1.msra.mxu0 0.0
  %4222 = vmatprep.subr.mxu0 0.0
  %4223 = vmatpush1.msra.mxu0 0.0
  %4224 = vmatprep.subr.mxu0 0.0
  %4225 = vmatpush1.msra.mxu0 0.0
  %4226 = vmatprep.subr.mxu0 0.0
  %4227 = vmatpush1.msra.mxu0 0.0
  %4228 = vmatprep.subr.mxu0 0.0
  %4229 = vmatpush1.msra.mxu0 0.0
  %4230 = vmatprep.subr.mxu0 0.0
  %4231 = vmatpush1.msra.mxu0 0.0
  %4232 = vmatprep.subr.mxu0 0.0
  %4233 = vmatpush1.msra.mxu0 0.0
  %4234 = vmatprep.subr.mxu0 0.0
  %4235 = vmatpush1.msra.mxu0 0.0
  %4236 = vmatprep.subr.mxu0 0.0
  %4237 = vmatpush1.msra.mxu0 0.0
  %4238 = vmatprep.subr.mxu0 0.0
  %4239 = vmatpush1.msra.mxu0 0.0
  %4240 = vmatprep.subr.mxu0 0.0
  %4241 = vmatpush1.msra.mxu0 0.0
  %4242 = vmatprep.subr.mxu0 0.0
  %4243 = vmatpush1.msra.mxu0 0.0
  %4244 = vmatprep.subr.mxu0 0.0
  %4245 = vmatpush1.msra.mxu0 0.0
  %4246 = vmatprep.subr.mxu0 0.0
  %4247 = vmatpush1.msra.mxu0 0.0
  %4248 = vmatprep.subr.mxu0 0.0
  %4249 = vmatpush1.msra.mxu0 %v3969
  %4250 = vmatprep.subr.mxu0 0.0
  %4251 = vmatpush1.msra.mxu0 %v3968
  %4252 = vmatprep.subr.mxu0 0.0
  %4253 = vmatpush2.msra.mxu0 0.0
  %4254 = vmatprep.subr.mxu0 0.0
  %4255 = vmatpush2.msra.mxu0 0.0
  %4256 = vmatprep.subr.mxu0 0.0
  %4257 = vmatpush2.msra.mxu0 0.0
  %4258 = vmatprep.subr.mxu0 0.0
  %4259 = vmatpush2.msra.mxu0 0.0
  %4260 = vmatprep.subr.mxu0 0.0
  %4261 = vmatpush2.msra.mxu0 0.0
  %4262 = vmatprep.subr.mxu0 0.0
  %4263 = vmatpush2.msra.mxu0 0.0
  %4264 = vmatprep.subr.mxu0 0.0
  %4265 = vmatpush2.msra.mxu0 0.0
  %4266 = vmatprep.subr.mxu0 0.0
  %4267 = vmatpush2.msra.mxu0 0.0
  %4268 = vmatprep.subr.mxu0 0.0
  %4269 = vmatpush2.msra.mxu0 0.0
  %4270 = vmatprep.subr.mxu0 0.0
  %4271 = vmatpush2.msra.mxu0 0.0
  %4272 = vmatprep.subr.mxu0 0.0
  %4273 = vmatpush2.msra.mxu0 0.0
  %4274 = vmatprep.subr.mxu0 0.0
  %4275 = vmatpush2.msra.mxu0 0.0
  %4276 = vmatprep.subr.mxu0 0.0
  %4277 = vmatpush2.msra.mxu0 0.0
  %4278 = vmatprep.subr.mxu0 0.0
  %4279 = vmatpush2.msra.mxu0 0.0
  %4280 = vmatprep.subr.mxu0 0.0
  %4281 = vmatpush2.msra.mxu0 0.0
  %4282 = vmatprep.subr.mxu0 0.0
  %4283 = vmatpush2.msra.mxu0 0.0
  %4284 = vmatprep.mubr.f32.mxu0 0.0
  %4285 = vmatmul.mubr.f32.gmra.mxu0 %v4218
  %v4286 = vpop.f32.mrf.mxu0
  %v4287 = vadd.f32 0.0, %v4286
  %v4288 = vpop.f32.mrf.mxu0
  %4289 = vdwg.mxu0
  %v4290 = vlaneseq
  %v4291 = vshrl.u32 %v4290, 7
  %v4292 = vsub.s32 0, %v4291
  %v4293 = vrot.slane %v4287, %v4292
  %v4294 = vadd.f32 %v4215, %v4293
  %v4295 = vadd.f32 %v4216, %v4293
  %vm4296 = vcmp.gt.f32.partialorder %v4294, 0.0
  %vm4297 = vcmp.gt.f32.partialorder %v4295, 0.0
  %v4298 = vmul.f32 %v4294, 0.2
  %v4299 = vmul.f32 %v4295, 0.2
  %v4300 = vsel %vm4296, %v4294, %v4298
  %v4301 = vsel %vm4297, %v4295, %v4299
  %v4302 = vpack.c.bf16 %v4301, %v4300
  %v4303 = vld [vmem:[%s20] sm:$0xf]
  %v4304 = vld [vmem:[%s20 + $0x4] sm:$0xf]
  %v4305 = vld [vmem:[%s20 + $0x8] sm:$0xf]
  %v4306 = vld [vmem:[%s20 + $0xc] sm:$0xf]
  %v4307 = vld [vmem:[%s20 + $0x10] sm:$0xf]
  %v4308 = vld [vmem:[%s20 + $0x14] sm:$0xf]
  %v4309 = vld [vmem:[%s20 + $0x18] sm:$0xf]
  %v4310 = vld [vmem:[%s20 + $0x1c] sm:$0xf]
  %v4311 = vld [vmem:[%s20 + $0x20] sm:$0xf]
  %v4312 = vld [vmem:[%s20 + $0x24] sm:$0xf]
  %v4313 = vld [vmem:[%s20 + $0x28] sm:$0xf]
  %v4314 = vld [vmem:[%s20 + $0x2c] sm:$0xf]
  %v4315 = vld [vmem:[%s20 + $0x30] sm:$0xf]
  %v4316 = vld [vmem:[%s20 + $0x34] sm:$0xf]
  %v4317 = vld [vmem:[%s20 + $0x38] sm:$0xf]
  %v4318 = vld [vmem:[%s20 + $0x3c] sm:$0xf]
  %v4335 = vunpack.c.l.b16 %v4303
  %v4336 = vunpack.c.l.b16 %v4304
  %v4337 = vunpack.c.l.b16 %v4305
  %v4338 = vunpack.c.l.b16 %v4306
  %v4339 = vunpack.c.l.b16 %v4307
  %v4340 = vunpack.c.l.b16 %v4308
  %v4341 = vunpack.c.l.b16 %v4309
  %v4342 = vunpack.c.l.b16 %v4310
  %v4343 = vunpack.c.l.b16 %v4311
  %v4344 = vunpack.c.l.b16 %v4312
  %v4345 = vunpack.c.l.b16 %v4313
  %v4346 = vunpack.c.l.b16 %v4314
  %v4347 = vunpack.c.l.b16 %v4315
  %v4348 = vunpack.c.l.b16 %v4316
  %v4349 = vunpack.c.l.b16 %v4317
  %v4350 = vunpack.c.l.b16 %v4318
  %v4351 = vpack.c.b16 %v4336, %v4335
  %v4352 = vpack.c.b16 %v4338, %v4337
  %v4353 = vpack.c.b16 %v4340, %v4339
  %v4354 = vpack.c.b16 %v4342, %v4341
  %v4355 = vpack.c.b16 %v4344, %v4343
  %v4356 = vpack.c.b16 %v4346, %v4345
  %v4357 = vpack.c.b16 %v4348, %v4347
  %v4358 = vpack.c.b16 %v4350, %v4349
  %4367 = vmatprep.subr.bf16.mxu0 0
  %4368 = vmatpush1.bf16.msra.mxu0 %v4358
  %4369 = vmatprep.subr.bf16.mxu0 0
  %4370 = vmatpush1.bf16.msra.mxu0 %v4357
  %4371 = vmatprep.subr.bf16.mxu0 0
  %4372 = vmatpush1.bf16.msra.mxu0 %v4356
  %4373 = vmatprep.subr.bf16.mxu0 0
  %4374 = vmatpush1.bf16.msra.mxu0 %v4355
  %4375 = vmatprep.subr.bf16.mxu0 0
  %4376 = vmatpush1.bf16.msra.mxu0 %v4354
  %4377 = vmatprep.subr.bf16.mxu0 0
  %4378 = vmatpush1.bf16.msra.mxu0 %v4353
  %4379 = vmatprep.subr.bf16.mxu0 0
  %4380 = vmatpush1.bf16.msra.mxu0 %v4352
  %4381 = vmatprep.subr.bf16.mxu0 0
  %4382 = vmatpush1.bf16.msra.mxu0 %v4351
  %4383 = vmatprep.subr.bf16.mxu0 0
  %4384 = vmatpush2.bf16.msra.mxu0 0
  %4385 = vmatprep.subr.bf16.mxu0 0
  %4386 = vmatpush2.bf16.msra.mxu0 0
  %4387 = vmatprep.subr.bf16.mxu0 0
  %4388 = vmatpush2.bf16.msra.mxu0 0
  %4389 = vmatprep.subr.bf16.mxu0 0
  %4390 = vmatpush2.bf16.msra.mxu0 0
  %4391 = vmatprep.subr.bf16.mxu0 0
  %4392 = vmatpush2.bf16.msra.mxu0 0
  %4393 = vmatprep.subr.bf16.mxu0 0
  %4394 = vmatpush2.bf16.msra.mxu0 0
  %4395 = vmatprep.subr.bf16.mxu0 0
  %4396 = vmatpush2.bf16.msra.mxu0 0
  %4397 = vmatprep.subr.bf16.mxu0 0
  %4398 = vmatpush2.bf16.msra.mxu0 0
  %4399 = vmatprep.mubr.bf16.mxu0 0
  %4400 = vmatmul.mubr.bf16.gmra.mxu0 %v4302
  %v4401 = vpop.f32.mrf.mxu0
  %v4402 = vadd.f32 0.0, %v4401
  %v4403 = vpop.f32.mrf.mxu0
  %v4404 = vpop.f32.mrf.mxu0
  %v4405 = vadd.f32 0.0, %v4404
  %v4406 = vpop.f32.mrf.mxu0
  %4407 = vdwg.mxu0
  %v4408 = vld [vmem:[%s19] sm:$0xff]
  %s4409 = scalar_lea.vmem %s20, 64
  %v4410 = vld [vmem:[%s4409] sm:$0xf]
  %v4411 = vld [vmem:[%s4409 + $0x4] sm:$0xf]
  %v4412 = vld [vmem:[%s4409 + $0x8] sm:$0xf]
  %v4413 = vld [vmem:[%s4409 + $0xc] sm:$0xf]
  %v4414 = vld [vmem:[%s4409 + $0x10] sm:$0xf]
  %v4415 = vld [vmem:[%s4409 + $0x14] sm:$0xf]
  %v4416 = vld [vmem:[%s4409 + $0x18] sm:$0xf]
  %v4417 = vld [vmem:[%s4409 + $0x1c] sm:$0xf]
  %v4418 = vld [vmem:[%s4409 + $0x20] sm:$0xf]
  %v4419 = vld [vmem:[%s4409 + $0x24] sm:$0xf]
  %v4420 = vld [vmem:[%s4409 + $0x28] sm:$0xf]
  %v4421 = vld [vmem:[%s4409 + $0x2c] sm:$0xf]
  %v4422 = vld [vmem:[%s4409 + $0x30] sm:$0xf]
  %v4423 = vld [vmem:[%s4409 + $0x34] sm:$0xf]
  %v4424 = vld [vmem:[%s4409 + $0x38] sm:$0xf]
  %v4425 = vld [vmem:[%s4409 + $0x3c] sm:$0xf]
  %v4442 = vunpack.c.l.b16 %v4410
  %v4443 = vunpack.c.l.b16 %v4411
  %v4444 = vunpack.c.l.b16 %v4412
  %v4445 = vunpack.c.l.b16 %v4413
  %v4446 = vunpack.c.l.b16 %v4414
  %v4447 = vunpack.c.l.b16 %v4415
  %v4448 = vunpack.c.l.b16 %v4416
  %v4449 = vunpack.c.l.b16 %v4417
  %v4450 = vunpack.c.l.b16 %v4418
  %v4451 = vunpack.c.l.b16 %v4419
  %v4452 = vunpack.c.l.b16 %v4420
  %v4453 = vunpack.c.l.b16 %v4421
  %v4454 = vunpack.c.l.b16 %v4422
  %v4455 = vunpack.c.l.b16 %v4423
  %v4456 = vunpack.c.l.b16 %v4424
  %v4457 = vunpack.c.l.b16 %v4425
  %v4458 = vpack.c.b16 %v4443, %v4442
  %v4459 = vpack.c.b16 %v4445, %v4444
  %v4460 = vpack.c.b16 %v4447, %v4446
  %v4461 = vpack.c.b16 %v4449, %v4448
  %v4462 = vpack.c.b16 %v4451, %v4450
  %v4463 = vpack.c.b16 %v4453, %v4452
  %v4464 = vpack.c.b16 %v4455, %v4454
  %v4465 = vpack.c.b16 %v4457, %v4456
  %4474 = vmatprep.subr.bf16.mxu0 0
  %4475 = vmatpush1.bf16.msra.mxu0 %v4465
  %4476 = vmatprep.subr.bf16.mxu0 0
  %4477 = vmatpush1.bf16.msra.mxu0 %v4464
  %4478 = vmatprep.subr.bf16.mxu0 0
  %4479 = vmatpush1.bf16.msra.mxu0 %v4463
  %4480 = vmatprep.subr.bf16.mxu0 0
  %4481 = vmatpush1.bf16.msra.mxu0 %v4462
  %4482 = vmatprep.subr.bf16.mxu0 0
  %4483 = vmatpush1.bf16.msra.mxu0 %v4461
  %4484 = vmatprep.subr.bf16.mxu0 0
  %4485 = vmatpush1.bf16.msra.mxu0 %v4460
  %4486 = vmatprep.subr.bf16.mxu0 0
  %4487 = vmatpush1.bf16.msra.mxu0 %v4459
  %4488 = vmatprep.subr.bf16.mxu0 0
  %4489 = vmatpush1.bf16.msra.mxu0 %v4458
  %4490 = vmatprep.subr.bf16.mxu0 0
  %4491 = vmatpush2.bf16.msra.mxu0 0
  %4492 = vmatprep.subr.bf16.mxu0 0
  %4493 = vmatpush2.bf16.msra.mxu0 0
  %4494 = vmatprep.subr.bf16.mxu0 0
  %4495 = vmatpush2.bf16.msra.mxu0 0
  %4496 = vmatprep.subr.bf16.mxu0 0
  %4497 = vmatpush2.bf16.msra.mxu0 0
  %4498 = vmatprep.subr.bf16.mxu0 0
  %4499 = vmatpush2.bf16.msra.mxu0 0
  %4500 = vmatprep.subr.bf16.mxu0 0
  %4501 = vmatpush2.bf16.msra.mxu0 0
  %4502 = vmatprep.subr.bf16.mxu0 0
  %4503 = vmatpush2.bf16.msra.mxu0 0
  %4504 = vmatprep.subr.bf16.mxu0 0
  %4505 = vmatpush2.bf16.msra.mxu0 0
  %4506 = vmatprep.mubr.bf16.mxu0 0
  %4507 = vmatmul.mubr.bf16.gmra.mxu0 %v4302
  %v4508 = vpop.f32.mrf.mxu0
  %v4509 = vadd.f32 0.0, %v4508
  %v4510 = vpop.f32.mrf.mxu0
  %v4511 = vpop.f32.mrf.mxu0
  %v4512 = vadd.f32 0.0, %v4511
  %v4513 = vpop.f32.mrf.mxu0
  %4514 = vdwg.mxu0
  %s4515 = scalar_lea.vmem %s19, 8
  %v4516 = vld [vmem:[%s4515] sm:$0xff]
  %v4518 = vsel %vm4137, %v4516, 0
  %4520 = vmatprep.subr.mxu0 0.0
  %4521 = vmatpush1.msra.mxu0 0.0
  %4522 = vmatprep.subr.mxu0 0.0
  %4523 = vmatpush1.msra.mxu0 0.0
  %4524 = vmatprep.subr.mxu0 0.0
  %4525 = vmatpush1.msra.mxu0 0.0
  %4526 = vmatprep.subr.mxu0 0.0
  %4527 = vmatpush1.msra.mxu0 0.0
  %4528 = vmatprep.subr.mxu0 0.0
  %4529 = vmatpush1.msra.mxu0 0.0
  %4530 = vmatprep.subr.mxu0 0.0
  %4531 = vmatpush1.msra.mxu0 0.0
  %4532 = vmatprep.subr.mxu0 0.0
  %4533 = vmatpush1.msra.mxu0 0.0
  %4534 = vmatprep.subr.mxu0 0.0
  %4535 = vmatpush1.msra.mxu0 0.0
  %4536 = vmatprep.subr.mxu0 0.0
  %4537 = vmatpush1.msra.mxu0 0.0
  %4538 = vmatprep.subr.mxu0 0.0
  %4539 = vmatpush1.msra.mxu0 0.0
  %4540 = vmatprep.subr.mxu0 0.0
  %4541 = vmatpush1.msra.mxu0 0.0
  %4542 = vmatprep.subr.mxu0 0.0
  %4543 = vmatpush1.msra.mxu0 0.0
  %4544 = vmatprep.subr.mxu0 0.0
  %4545 = vmatpush1.msra.mxu0 0.0
  %4546 = vmatprep.subr.mxu0 0.0
  %4547 = vmatpush1.msra.mxu0 0.0
  %4548 = vmatprep.subr.mxu0 0.0
  %4549 = vmatpush1.msra.mxu0 %v4512
  %4550 = vmatprep.subr.mxu0 0.0
  %4551 = vmatpush1.msra.mxu0 %v4509
  %4552 = vmatprep.subr.mxu0 0.0
  %4553 = vmatpush2.msra.mxu0 0.0
  %4554 = vmatprep.subr.mxu0 0.0
  %4555 = vmatpush2.msra.mxu0 0.0
  %4556 = vmatprep.subr.mxu0 0.0
  %4557 = vmatpush2.msra.mxu0 0.0
  %4558 = vmatprep.subr.mxu0 0.0
  %4559 = vmatpush2.msra.mxu0 0.0
  %4560 = vmatprep.subr.mxu0 0.0
  %4561 = vmatpush2.msra.mxu0 0.0
  %4562 = vmatprep.subr.mxu0 0.0
  %4563 = vmatpush2.msra.mxu0 0.0
  %4564 = vmatprep.subr.mxu0 0.0
  %4565 = vmatpush2.msra.mxu0 0.0
  %4566 = vmatprep.subr.mxu0 0.0
  %4567 = vmatpush2.msra.mxu0 0.0
  %4568 = vmatprep.subr.mxu0 0.0
  %4569 = vmatpush2.msra.mxu0 0.0
  %4570 = vmatprep.subr.mxu0 0.0
  %4571 = vmatpush2.msra.mxu0 0.0
  %4572 = vmatprep.subr.mxu0 0.0
  %4573 = vmatpush2.msra.mxu0 0.0
  %4574 = vmatprep.subr.mxu0 0.0
  %4575 = vmatpush2.msra.mxu0 0.0
  %4576 = vmatprep.subr.mxu0 0.0
  %4577 = vmatpush2.msra.mxu0 0.0
  %4578 = vmatprep.subr.mxu0 0.0
  %4579 = vmatpush2.msra.mxu0 0.0
  %4580 = vmatprep.subr.mxu0 0.0
  %4581 = vmatpush2.msra.mxu0 0.0
  %4582 = vmatprep.subr.mxu0 0.0
  %4583 = vmatpush2.msra.mxu0 0.0
  %4584 = vmatprep.mubr.f32.mxu0 0.0
  %4585 = vmatmul.mubr.f32.gmra.mxu0 %v4518
  %v4586 = vpop.f32.mrf.mxu0
  %v4587 = vadd.f32 0.0, %v4586
  %v4588 = vpop.f32.mrf.mxu0
  %4589 = vdwg.mxu0
  %v4591 = vsel %vm4137, %v4408, 0
  %4593 = vmatprep.subr.mxu0 0.0
  %4594 = vmatpush1.msra.mxu0 0.0
  %4595 = vmatprep.subr.mxu0 0.0
  %4596 = vmatpush1.msra.mxu0 0.0
  %4597 = vmatprep.subr.mxu0 0.0
  %4598 = vmatpush1.msra.mxu0 0.0
  %4599 = vmatprep.subr.mxu0 0.0
  %4600 = vmatpush1.msra.mxu0 0.0
  %4601 = vmatprep.subr.mxu0 0.0
  %4602 = vmatpush1.msra.mxu0 0.0
  %4603 = vmatprep.subr.mxu0 0.0
  %4604 = vmatpush1.msra.mxu0 0.0
  %4605 = vmatprep.subr.mxu0 0.0
  %4606 = vmatpush1.msra.mxu0 0.0
  %4607 = vmatprep.subr.mxu0 0.0
  %4608 = vmatpush1.msra.mxu0 0.0
  %4609 = vmatprep.subr.mxu0 0.0
  %4610 = vmatpush1.msra.mxu0 0.0
  %4611 = vmatprep.subr.mxu0 0.0
  %4612 = vmatpush1.msra.mxu0 0.0
  %4613 = vmatprep.subr.mxu0 0.0
  %4614 = vmatpush1.msra.mxu0 0.0
  %4615 = vmatprep.subr.mxu0 0.0
  %4616 = vmatpush1.msra.mxu0 0.0
  %4617 = vmatprep.subr.mxu0 0.0
  %4618 = vmatpush1.msra.mxu0 0.0
  %4619 = vmatprep.subr.mxu0 0.0
  %4620 = vmatpush1.msra.mxu0 0.0
  %4621 = vmatprep.subr.mxu0 0.0
  %4622 = vmatpush1.msra.mxu0 %v4405
  %4623 = vmatprep.subr.mxu0 0.0
  %4624 = vmatpush1.msra.mxu0 %v4402
  %4625 = vmatprep.subr.mxu0 0.0
  %4626 = vmatpush2.msra.mxu0 0.0
  %4627 = vmatprep.subr.mxu0 0.0
  %4628 = vmatpush2.msra.mxu0 0.0
  %4629 = vmatprep.subr.mxu0 0.0
  %4630 = vmatpush2.msra.mxu0 0.0
  %4631 = vmatprep.subr.mxu0 0.0
  %4632 = vmatpush2.msra.mxu0 0.0
  %4633 = vmatprep.subr.mxu0 0.0
  %4634 = vmatpush2.msra.mxu0 0.0
  %4635 = vmatprep.subr.mxu0 0.0
  %4636 = vmatpush2.msra.mxu0 0.0
  %4637 = vmatprep.subr.mxu0 0.0
  %4638 = vmatpush2.msra.mxu0 0.0
  %4639 = vmatprep.subr.mxu0 0.0
  %4640 = vmatpush2.msra.mxu0 0.0
  %4641 = vmatprep.subr.mxu0 0.0
  %4642 = vmatpush2.msra.mxu0 0.0
  %4643 = vmatprep.subr.mxu0 0.0
  %4644 = vmatpush2.msra.mxu0 0.0
  %4645 = vmatprep.subr.mxu0 0.0
  %4646 = vmatpush2.msra.mxu0 0.0
  %4647 = vmatprep.subr.mxu0 0.0
  %4648 = vmatpush2.msra.mxu0 0.0
  %4649 = vmatprep.subr.mxu0 0.0
  %4650 = vmatpush2.msra.mxu0 0.0
  %4651 = vmatprep.subr.mxu0 0.0
  %4652 = vmatpush2.msra.mxu0 0.0
  %4653 = vmatprep.subr.mxu0 0.0
  %4654 = vmatpush2.msra.mxu0 0.0
  %4655 = vmatprep.subr.mxu0 0.0
  %4656 = vmatpush2.msra.mxu0 0.0
  %4657 = vmatprep.mubr.f32.mxu0 0.0
  %4658 = vmatmul.mubr.f32.gmra.mxu0 %v4591
  %v4659 = vpop.f32.mrf.mxu0
  %v4660 = vadd.f32 %v4587, %v4659
  %v4661 = vpop.f32.mrf.mxu0
  %4662 = vdwg.mxu0
  %s4663 = scalar_lea.vmem %s20, 128
  %v4664 = vld [vmem:[%s4663] sm:$0xf]
  %v4665 = vld [vmem:[%s4663 + $0x4] sm:$0xf]
  %v4666 = vld [vmem:[%s4663 + $0x8] sm:$0xf]
  %v4667 = vld [vmem:[%s4663 + $0xc] sm:$0xf]
  %v4668 = vld [vmem:[%s4663 + $0x10] sm:$0xf]
  %v4669 = vld [vmem:[%s4663 + $0x14] sm:$0xf]
  %v4670 = vld [vmem:[%s4663 + $0x18] sm:$0xf]
  %v4671 = vld [vmem:[%s4663 + $0x1c] sm:$0xf]
  %v4672 = vld [vmem:[%s4663 + $0x20] sm:$0xf]
  %v4673 = vld [vmem:[%s4663 + $0x24] sm:$0xf]
  %v4674 = vld [vmem:[%s4663 + $0x28] sm:$0xf]
  %v4675 = vld [vmem:[%s4663 + $0x2c] sm:$0xf]
  %v4676 = vld [vmem:[%s4663 + $0x30] sm:$0xf]
  %v4677 = vld [vmem:[%s4663 + $0x34] sm:$0xf]
  %v4678 = vld [vmem:[%s4663 + $0x38] sm:$0xf]
  %v4679 = vld [vmem:[%s4663 + $0x3c] sm:$0xf]
  %v4696 = vunpack.c.l.b16 %v4664
  %v4697 = vunpack.c.l.b16 %v4665
  %v4698 = vunpack.c.l.b16 %v4666
  %v4699 = vunpack.c.l.b16 %v4667
  %v4700 = vunpack.c.l.b16 %v4668
  %v4701 = vunpack.c.l.b16 %v4669
  %v4702 = vunpack.c.l.b16 %v4670
  %v4703 = vunpack.c.l.b16 %v4671
  %v4704 = vunpack.c.l.b16 %v4672
  %v4705 = vunpack.c.l.b16 %v4673
  %v4706 = vunpack.c.l.b16 %v4674
  %v4707 = vunpack.c.l.b16 %v4675
  %v4708 = vunpack.c.l.b16 %v4676
  %v4709 = vunpack.c.l.b16 %v4677
  %v4710 = vunpack.c.l.b16 %v4678
  %v4711 = vunpack.c.l.b16 %v4679
  %v4712 = vpack.c.b16 %v4697, %v4696
  %v4713 = vpack.c.b16 %v4699, %v4698
  %v4714 = vpack.c.b16 %v4701, %v4700
  %v4715 = vpack.c.b16 %v4703, %v4702
  %v4716 = vpack.c.b16 %v4705, %v4704
  %v4717 = vpack.c.b16 %v4707, %v4706
  %v4718 = vpack.c.b16 %v4709, %v4708
  %v4719 = vpack.c.b16 %v4711, %v4710
  %4728 = vmatprep.subr.bf16.mxu0 0
  %4729 = vmatpush1.bf16.msra.mxu0 %v4719
  %4730 = vmatprep.subr.bf16.mxu0 0
  %4731 = vmatpush1.bf16.msra.mxu0 %v4718
  %4732 = vmatprep.subr.bf16.mxu0 0
  %4733 = vmatpush1.bf16.msra.mxu0 %v4717
  %4734 = vmatprep.subr.bf16.mxu0 0
  %4735 = vmatpush1.bf16.msra.mxu0 %v4716
  %4736 = vmatprep.subr.bf16.mxu0 0
  %4737 = vmatpush1.bf16.msra.mxu0 %v4715
  %4738 = vmatprep.subr.bf16.mxu0 0
  %4739 = vmatpush1.bf16.msra.mxu0 %v4714
  %4740 = vmatprep.subr.bf16.mxu0 0
  %4741 = vmatpush1.bf16.msra.mxu0 %v4713
  %4742 = vmatprep.subr.bf16.mxu0 0
  %4743 = vmatpush1.bf16.msra.mxu0 %v4712
  %4744 = vmatprep.subr.bf16.mxu0 0
  %4745 = vmatpush2.bf16.msra.mxu0 0
  %4746 = vmatprep.subr.bf16.mxu0 0
  %4747 = vmatpush2.bf16.msra.mxu0 0
  %4748 = vmatprep.subr.bf16.mxu0 0
  %4749 = vmatpush2.bf16.msra.mxu0 0
  %4750 = vmatprep.subr.bf16.mxu0 0
  %4751 = vmatpush2.bf16.msra.mxu0 0
  %4752 = vmatprep.subr.bf16.mxu0 0
  %4753 = vmatpush2.bf16.msra.mxu0 0
  %4754 = vmatprep.subr.bf16.mxu0 0
  %4755 = vmatpush2.bf16.msra.mxu0 0
  %4756 = vmatprep.subr.bf16.mxu0 0
  %4757 = vmatpush2.bf16.msra.mxu0 0
  %4758 = vmatprep.subr.bf16.mxu0 0
  %4759 = vmatpush2.bf16.msra.mxu0 0
  %4760 = vmatprep.mubr.bf16.mxu0 0
  %4761 = vmatmul.mubr.bf16.gmra.mxu0 %v4302
  %v4762 = vpop.f32.mrf.mxu0
  %v4763 = vadd.f32 0.0, %v4762
  %v4764 = vpop.f32.mrf.mxu0
  %v4765 = vpop.f32.mrf.mxu0
  %v4766 = vadd.f32 0.0, %v4765
  %v4767 = vpop.f32.mrf.mxu0
  %4768 = vdwg.mxu0
  %s4769 = scalar_lea.vmem %s19, 16
  %v4770 = vld [vmem:[%s4769] sm:$0xff]
  %v4772 = vsel %vm4137, %v4770, 0
  %4774 = vmatprep.subr.mxu0 0.0
  %4775 = vmatpush1.msra.mxu0 0.0
  %4776 = vmatprep.subr.mxu0 0.0
  %4777 = vmatpush1.msra.mxu0 0.0
  %4778 = vmatprep.subr.mxu0 0.0
  %4779 = vmatpush1.msra.mxu0 0.0
  %4780 = vmatprep.subr.mxu0 0.0
  %4781 = vmatpush1.msra.mxu0 0.0
  %4782 = vmatprep.subr.mxu0 0.0
  %4783 = vmatpush1.msra.mxu0 0.0
  %4784 = vmatprep.subr.mxu0 0.0
  %4785 = vmatpush1.msra.mxu0 0.0
  %4786 = vmatprep.subr.mxu0 0.0
  %4787 = vmatpush1.msra.mxu0 0.0
  %4788 = vmatprep.subr.mxu0 0.0
  %4789 = vmatpush1.msra.mxu0 0.0
  %4790 = vmatprep.subr.mxu0 0.0
  %4791 = vmatpush1.msra.mxu0 0.0
  %4792 = vmatprep.subr.mxu0 0.0
  %4793 = vmatpush1.msra.mxu0 0.0
  %4794 = vmatprep.subr.mxu0 0.0
  %4795 = vmatpush1.msra.mxu0 0.0
  %4796 = vmatprep.subr.mxu0 0.0
  %4797 = vmatpush1.msra.mxu0 0.0
  %4798 = vmatprep.subr.mxu0 0.0
  %4799 = vmatpush1.msra.mxu0 0.0
  %4800 = vmatprep.subr.mxu0 0.0
  %4801 = vmatpush1.msra.mxu0 0.0
  %4802 = vmatprep.subr.mxu0 0.0
  %4803 = vmatpush1.msra.mxu0 %v4766
  %4804 = vmatprep.subr.mxu0 0.0
  %4805 = vmatpush1.msra.mxu0 %v4763
  %4806 = vmatprep.subr.mxu0 0.0
  %4807 = vmatpush2.msra.mxu0 0.0
  %4808 = vmatprep.subr.mxu0 0.0
  %4809 = vmatpush2.msra.mxu0 0.0
  %4810 = vmatprep.subr.mxu0 0.0
  %4811 = vmatpush2.msra.mxu0 0.0
  %4812 = vmatprep.subr.mxu0 0.0
  %4813 = vmatpush2.msra.mxu0 0.0
  %4814 = vmatprep.subr.mxu0 0.0
  %4815 = vmatpush2.msra.mxu0 0.0
  %4816 = vmatprep.subr.mxu0 0.0
  %4817 = vmatpush2.msra.mxu0 0.0
  %4818 = vmatprep.subr.mxu0 0.0
  %4819 = vmatpush2.msra.mxu0 0.0
  %4820 = vmatprep.subr.mxu0 0.0
  %4821 = vmatpush2.msra.mxu0 0.0
  %4822 = vmatprep.subr.mxu0 0.0
  %4823 = vmatpush2.msra.mxu0 0.0
  %4824 = vmatprep.subr.mxu0 0.0
  %4825 = vmatpush2.msra.mxu0 0.0
  %4826 = vmatprep.subr.mxu0 0.0
  %4827 = vmatpush2.msra.mxu0 0.0
  %4828 = vmatprep.subr.mxu0 0.0
  %4829 = vmatpush2.msra.mxu0 0.0
  %4830 = vmatprep.subr.mxu0 0.0
  %4831 = vmatpush2.msra.mxu0 0.0
  %4832 = vmatprep.subr.mxu0 0.0
  %4833 = vmatpush2.msra.mxu0 0.0
  %4834 = vmatprep.subr.mxu0 0.0
  %4835 = vmatpush2.msra.mxu0 0.0
  %4836 = vmatprep.subr.mxu0 0.0
  %4837 = vmatpush2.msra.mxu0 0.0
  %4838 = vmatprep.mubr.f32.mxu0 0.0
  %4839 = vmatmul.mubr.f32.gmra.mxu0 %v4772
  %v4840 = vpop.f32.mrf.mxu0
  %v4841 = vadd.f32 0.0, %v4840
  %v4842 = vpop.f32.mrf.mxu0
  %4843 = vdwg.mxu0
  %v4844 = vadd.f32 %v4660, %v4841
  %s4845 = scalar_lea.vmem %s20, 192
  %v4846 = vld [vmem:[%s4845] sm:$0xf]
  %v4847 = vld [vmem:[%s4845 + $0x4] sm:$0xf]
  %v4848 = vld [vmem:[%s4845 + $0x8] sm:$0xf]
  %v4849 = vld [vmem:[%s4845 + $0xc] sm:$0xf]
  %v4850 = vld [vmem:[%s4845 + $0x10] sm:$0xf]
  %v4851 = vld [vmem:[%s4845 + $0x14] sm:$0xf]
  %v4852 = vld [vmem:[%s4845 + $0x18] sm:$0xf]
  %v4853 = vld [vmem:[%s4845 + $0x1c] sm:$0xf]
  %v4854 = vld [vmem:[%s4845 + $0x20] sm:$0xf]
  %v4855 = vld [vmem:[%s4845 + $0x24] sm:$0xf]
  %v4856 = vld [vmem:[%s4845 + $0x28] sm:$0xf]
  %v4857 = vld [vmem:[%s4845 + $0x2c] sm:$0xf]
  %v4858 = vld [vmem:[%s4845 + $0x30] sm:$0xf]
  %v4859 = vld [vmem:[%s4845 + $0x34] sm:$0xf]
  %v4860 = vld [vmem:[%s4845 + $0x38] sm:$0xf]
  %v4861 = vld [vmem:[%s4845 + $0x3c] sm:$0xf]
  %v4878 = vunpack.c.l.b16 %v4846
  %v4879 = vunpack.c.l.b16 %v4847
  %v4880 = vunpack.c.l.b16 %v4848
  %v4881 = vunpack.c.l.b16 %v4849
  %v4882 = vunpack.c.l.b16 %v4850
  %v4883 = vunpack.c.l.b16 %v4851
  %v4884 = vunpack.c.l.b16 %v4852
  %v4885 = vunpack.c.l.b16 %v4853
  %v4886 = vunpack.c.l.b16 %v4854
  %v4887 = vunpack.c.l.b16 %v4855
  %v4888 = vunpack.c.l.b16 %v4856
  %v4889 = vunpack.c.l.b16 %v4857
  %v4890 = vunpack.c.l.b16 %v4858
  %v4891 = vunpack.c.l.b16 %v4859
  %v4892 = vunpack.c.l.b16 %v4860
  %v4893 = vunpack.c.l.b16 %v4861
  %v4894 = vpack.c.b16 %v4879, %v4878
  %v4895 = vpack.c.b16 %v4881, %v4880
  %v4896 = vpack.c.b16 %v4883, %v4882
  %v4897 = vpack.c.b16 %v4885, %v4884
  %v4898 = vpack.c.b16 %v4887, %v4886
  %v4899 = vpack.c.b16 %v4889, %v4888
  %v4900 = vpack.c.b16 %v4891, %v4890
  %v4901 = vpack.c.b16 %v4893, %v4892
  %4910 = vmatprep.subr.bf16.mxu0 0
  %4911 = vmatpush1.bf16.msra.mxu0 %v4901
  %4912 = vmatprep.subr.bf16.mxu0 0
  %4913 = vmatpush1.bf16.msra.mxu0 %v4900
  %4914 = vmatprep.subr.bf16.mxu0 0
  %4915 = vmatpush1.bf16.msra.mxu0 %v4899
  %4916 = vmatprep.subr.bf16.mxu0 0
  %4917 = vmatpush1.bf16.msra.mxu0 %v4898
  %4918 = vmatprep.subr.bf16.mxu0 0
  %4919 = vmatpush1.bf16.msra.mxu0 %v4897
  %4920 = vmatprep.subr.bf16.mxu0 0
  %4921 = vmatpush1.bf16.msra.mxu0 %v4896
  %4922 = vmatprep.subr.bf16.mxu0 0
  %4923 = vmatpush1.bf16.msra.mxu0 %v4895
  %4924 = vmatprep.subr.bf16.mxu0 0
  %4925 = vmatpush1.bf16.msra.mxu0 %v4894
  %4926 = vmatprep.subr.bf16.mxu0 0
  %4927 = vmatpush2.bf16.msra.mxu0 0
  %4928 = vmatprep.subr.bf16.mxu0 0
  %4929 = vmatpush2.bf16.msra.mxu0 0
  %4930 = vmatprep.subr.bf16.mxu0 0
  %4931 = vmatpush2.bf16.msra.mxu0 0
  %4932 = vmatprep.subr.bf16.mxu0 0
  %4933 = vmatpush2.bf16.msra.mxu0 0
  %4934 = vmatprep.subr.bf16.mxu0 0
  %4935 = vmatpush2.bf16.msra.mxu0 0
  %4936 = vmatprep.subr.bf16.mxu0 0
  %4937 = vmatpush2.bf16.msra.mxu0 0
  %4938 = vmatprep.subr.bf16.mxu0 0
  %4939 = vmatpush2.bf16.msra.mxu0 0
  %4940 = vmatprep.subr.bf16.mxu0 0
  %4941 = vmatpush2.bf16.msra.mxu0 0
  %4942 = vmatprep.mubr.bf16.mxu0 0
  %4943 = vmatmul.mubr.bf16.gmra.mxu0 %v4302
  %v4944 = vpop.f32.mrf.mxu0
  %v4945 = vadd.f32 0.0, %v4944
  %v4946 = vpop.f32.mrf.mxu0
  %v4947 = vpop.f32.mrf.mxu0
  %v4948 = vadd.f32 0.0, %v4947
  %v4949 = vpop.f32.mrf.mxu0
  %4950 = vdwg.mxu0
  %s4951 = scalar_lea.vmem %s19, 24
  %v4952 = vld [vmem:[%s4951] sm:$0xff]
  %v4954 = vsel %vm4137, %v4952, 0
  %4956 = vmatprep.subr.mxu0 0.0
  %4957 = vmatpush1.msra.mxu0 0.0
  %4958 = vmatprep.subr.mxu0 0.0
  %4959 = vmatpush1.msra.mxu0 0.0
  %4960 = vmatprep.subr.mxu0 0.0
  %4961 = vmatpush1.msra.mxu0 0.0
  %4962 = vmatprep.subr.mxu0 0.0
  %4963 = vmatpush1.msra.mxu0 0.0
  %4964 = vmatprep.subr.mxu0 0.0
  %4965 = vmatpush1.msra.mxu0 0.0
  %4966 = vmatprep.subr.mxu0 0.0
  %4967 = vmatpush1.msra.mxu0 0.0
  %4968 = vmatprep.subr.mxu0 0.0
  %4969 = vmatpush1.msra.mxu0 0.0
  %4970 = vmatprep.subr.mxu0 0.0
  %4971 = vmatpush1.msra.mxu0 0.0
  %4972 = vmatprep.subr.mxu0 0.0
  %4973 = vmatpush1.msra.mxu0 0.0
  %4974 = vmatprep.subr.mxu0 0.0
  %4975 = vmatpush1.msra.mxu0 0.0
  %4976 = vmatprep.subr.mxu0 0.0
  %4977 = vmatpush1.msra.mxu0 0.0
  %4978 = vmatprep.subr.mxu0 0.0
  %4979 = vmatpush1.msra.mxu0 0.0
  %4980 = vmatprep.subr.mxu0 0.0
  %4981 = vmatpush1.msra.mxu0 0.0
  %4982 = vmatprep.subr.mxu0 0.0
  %4983 = vmatpush1.msra.mxu0 0.0
  %4984 = vmatprep.subr.mxu0 0.0
  %4985 = vmatpush1.msra.mxu0 %v4948
  %4986 = vmatprep.subr.mxu0 0.0
  %4987 = vmatpush1.msra.mxu0 %v4945
  %4988 = vmatprep.subr.mxu0 0.0
  %4989 = vmatpush2.msra.mxu0 0.0
  %4990 = vmatprep.subr.mxu0 0.0
  %4991 = vmatpush2.msra.mxu0 0.0
  %4992 = vmatprep.subr.mxu0 0.0
  %4993 = vmatpush2.msra.mxu0 0.0
  %4994 = vmatprep.subr.mxu0 0.0
  %4995 = vmatpush2.msra.mxu0 0.0
  %4996 = vmatprep.subr.mxu0 0.0
  %4997 = vmatpush2.msra.mxu0 0.0
  %4998 = vmatprep.subr.mxu0 0.0
  %4999 = vmatpush2.msra.mxu0 0.0
  %5000 = vmatprep.subr.mxu0 0.0
  %5001 = vmatpush2.msra.mxu0 0.0
  %5002 = vmatprep.subr.mxu0 0.0
  %5003 = vmatpush2.msra.mxu0 0.0
  %5004 = vmatprep.subr.mxu0 0.0
  %5005 = vmatpush2.msra.mxu0 0.0
  %5006 = vmatprep.subr.mxu0 0.0
  %5007 = vmatpush2.msra.mxu0 0.0
  %5008 = vmatprep.subr.mxu0 0.0
  %5009 = vmatpush2.msra.mxu0 0.0
  %5010 = vmatprep.subr.mxu0 0.0
  %5011 = vmatpush2.msra.mxu0 0.0
  %5012 = vmatprep.subr.mxu0 0.0
  %5013 = vmatpush2.msra.mxu0 0.0
  %5014 = vmatprep.subr.mxu0 0.0
  %5015 = vmatpush2.msra.mxu0 0.0
  %5016 = vmatprep.subr.mxu0 0.0
  %5017 = vmatpush2.msra.mxu0 0.0
  %5018 = vmatprep.subr.mxu0 0.0
  %5019 = vmatpush2.msra.mxu0 0.0
  %5020 = vmatprep.mubr.f32.mxu0 0.0
  %5021 = vmatmul.mubr.f32.gmra.mxu0 %v4954
  %v5022 = vpop.f32.mrf.mxu0
  %v5023 = vadd.f32 0.0, %v5022
  %v5024 = vpop.f32.mrf.mxu0
  %5025 = vdwg.mxu0
  %v5026 = vadd.f32 %v4844, %v5023
  %v5027 = vld [vmem:[%s21] sm:$0xff]
  %v5028 = vld [vmem:[%s21 + $0x8] sm:$0xff]
  %v5029 = vld [vmem:[%s21 + $0x10] sm:$0xff]
  %v5030 = vld [vmem:[%s21 + $0x18] sm:$0xff]
  %v5031 = vld [vmem:[%s21 + $0x20] sm:$0xff]
  %v5032 = vld [vmem:[%s21 + $0x28] sm:$0xff]
  %v5033 = vld [vmem:[%s21 + $0x30] sm:$0xff]
  %v5034 = vld [vmem:[%s21 + $0x38] sm:$0xff]
  %v5035 = vld [vmem:[%s21 + $0x40] sm:$0xff]
  %v5036 = vld [vmem:[%s21 + $0x48] sm:$0xff]
  %v5037 = vld [vmem:[%s21 + $0x50] sm:$0xff]
  %v5038 = vld [vmem:[%s21 + $0x58] sm:$0xff]
  %v5039 = vld [vmem:[%s21 + $0x60] sm:$0xff]
  %v5040 = vld [vmem:[%s21 + $0x68] sm:$0xff]
  %v5041 = vld [vmem:[%s21 + $0x70] sm:$0xff]
  %v5042 = vld [vmem:[%s21 + $0x78] sm:$0xff]
  %v5043 = vld [vmem:[%s22] sm:$0xff]
  %v5044 = vld [vmem:[%s22 + $0x8] sm:$0xff]
  %v5045 = vld [vmem:[%s22 + $0x10] sm:$0xff]
  %v5046 = vld [vmem:[%s22 + $0x18] sm:$0xff]
  %v5047 = vld [vmem:[%s23] sm:$0x1]
  %v5048 = vld [vmem:[%s24] sm:$0x1]
  %v5049 = vrot.slane %v5026, 4
  %v5050 = vadd.f32 %v5026, %v5049
  %v5051 = vrot.slane %v5050, 2
  %v5052 = vadd.f32 %v5050, %v5051
  %v5053 = vrot.slane %v5052, 1
  %v5054 = vadd.f32 %v5052, %v5053
  %v5055 = vmul.f32 %v5026, %v5026
  %v5056 = vrot.slane %v5055, 4
  %v5057 = vadd.f32 %v5055, %v5056
  %v5058 = vrot.slane %v5057, 2
  %v5059 = vadd.f32 %v5057, %v5058
  %v5060 = vrot.slane %v5059, 1
  %v5061 = vadd.f32 %v5059, %v5060
  %5062 = vmatprep.subr.mxu0 0.0
  %5063 = vmatpush1.msra.mxu0 %v5042
  %5064 = vmatprep.subr.mxu0 0.0
  %5065 = vmatpush1.msra.mxu0 %v5041
  %5066 = vmatprep.subr.mxu0 0.0
  %5067 = vmatpush1.msra.mxu0 %v5040
  %5068 = vmatprep.subr.mxu0 0.0
  %5069 = vmatpush1.msra.mxu0 %v5039
  %5070 = vmatprep.subr.mxu0 0.0
  %5071 = vmatpush1.msra.mxu0 %v5038
  %5072 = vmatprep.subr.mxu0 0.0
  %5073 = vmatpush1.msra.mxu0 %v5037
  %5074 = vmatprep.subr.mxu0 0.0
  %5075 = vmatpush1.msra.mxu0 %v5036
  %5076 = vmatprep.subr.mxu0 0.0
  %5077 = vmatpush1.msra.mxu0 %v5035
  %5078 = vmatprep.subr.mxu0 0.0
  %5079 = vmatpush1.msra.mxu0 %v5034
  %5080 = vmatprep.subr.mxu0 0.0
  %5081 = vmatpush1.msra.mxu0 %v5033
  %5082 = vmatprep.subr.mxu0 0.0
  %5083 = vmatpush1.msra.mxu0 %v5032
  %5084 = vmatprep.subr.mxu0 0.0
  %5085 = vmatpush1.msra.mxu0 %v5031
  %5086 = vmatprep.subr.mxu0 0.0
  %5087 = vmatpush1.msra.mxu0 %v5030
  %5088 = vmatprep.subr.mxu0 0.0
  %5089 = vmatpush1.msra.mxu0 %v5029
  %5090 = vmatprep.subr.mxu0 0.0
  %5091 = vmatpush1.msra.mxu0 %v5028
  %5092 = vmatprep.subr.mxu0 0.0
  %5093 = vmatpush1.msra.mxu0 %v5027
  %5094 = vmatprep.subr.mxu0 0.0
  %5095 = vmatpush2.msra.mxu0 0.0
  %5096 = vmatprep.subr.mxu0 0.0
  %5097 = vmatpush2.msra.mxu0 0.0
  %5098 = vmatprep.subr.mxu0 0.0
  %5099 = vmatpush2.msra.mxu0 0.0
  %5100 = vmatprep.subr.mxu0 0.0
  %5101 = vmatpush2.msra.mxu0 0.0
  %5102 = vmatprep.subr.mxu0 0.0
  %5103 = vmatpush2.msra.mxu0 0.0
  %5104 = vmatprep.subr.mxu0 0.0
  %5105 = vmatpush2.msra.mxu0 0.0
  %5106 = vmatprep.subr.mxu0 0.0
  %5107 = vmatpush2.msra.mxu0 0.0
  %5108 = vmatprep.subr.mxu0 0.0
  %5109 = vmatpush2.msra.mxu0 0.0
  %5110 = vmatprep.subr.mxu0 0.0
  %5111 = vmatpush2.msra.mxu0 0.0
  %5112 = vmatprep.subr.mxu0 0.0
  %5113 = vmatpush2.msra.mxu0 0.0
  %5114 = vmatprep.subr.mxu0 0.0
  %5115 = vmatpush2.msra.mxu0 0.0
  %5116 = vmatprep.subr.mxu0 0.0
  %5117 = vmatpush2.msra.mxu0 0.0
  %5118 = vmatprep.subr.mxu0 0.0
  %5119 = vmatpush2.msra.mxu0 0.0
  %5120 = vmatprep.subr.mxu0 0.0
  %5121 = vmatpush2.msra.mxu0 0.0
  %5122 = vmatprep.subr.mxu0 0.0
  %5123 = vmatpush2.msra.mxu0 0.0
  %5124 = vmatprep.subr.mxu0 0.0
  %5125 = vmatpush2.msra.mxu0 0.0
  %5126 = vmatprep.mubr.f32.mxu0 0.0
  %5127 = vmatmul.mubr.f32.gmra.mxu0 %v5054
  %v5128 = vpop.f32.mrf.mxu0
  %v5129 = vadd.f32 0.0, %v5128
  %v5130 = vpop.f32.mrf.mxu0
  %5131 = vdwg.mxu0
  %v5132 = vmul.f32 %v5129, 0.03125
  %5133 = vmatprep.subr.mxu0 0.0
  %5134 = vmatpush1.msra.mxu0 %v5042
  %5135 = vmatprep.subr.mxu0 0.0
  %5136 = vmatpush1.msra.mxu0 %v5041
  %5137 = vmatprep.subr.mxu0 0.0
  %5138 = vmatpush1.msra.mxu0 %v5040
  %5139 = vmatprep.subr.mxu0 0.0
  %5140 = vmatpush1.msra.mxu0 %v5039
  %5141 = vmatprep.subr.mxu0 0.0
  %5142 = vmatpush1.msra.mxu0 %v5038
  %5143 = vmatprep.subr.mxu0 0.0
  %5144 = vmatpush1.msra.mxu0 %v5037
  %5145 = vmatprep.subr.mxu0 0.0
  %5146 = vmatpush1.msra.mxu0 %v5036
  %5147 = vmatprep.subr.mxu0 0.0
  %5148 = vmatpush1.msra.mxu0 %v5035
  %5149 = vmatprep.subr.mxu0 0.0
  %5150 = vmatpush1.msra.mxu0 %v5034
  %5151 = vmatprep.subr.mxu0 0.0
  %5152 = vmatpush1.msra.mxu0 %v5033
  %5153 = vmatprep.subr.mxu0 0.0
  %5154 = vmatpush1.msra.mxu0 %v5032
  %5155 = vmatprep.subr.mxu0 0.0
  %5156 = vmatpush1.msra.mxu0 %v5031
  %5157 = vmatprep.subr.mxu0 0.0
  %5158 = vmatpush1.msra.mxu0 %v5030
  %5159 = vmatprep.subr.mxu0 0.0
  %5160 = vmatpush1.msra.mxu0 %v5029
  %5161 = vmatprep.subr.mxu0 0.0
  %5162 = vmatpush1.msra.mxu0 %v5028
  %5163 = vmatprep.subr.mxu0 0.0
  %5164 = vmatpush1.msra.mxu0 %v5027
  %5165 = vmatprep.subr.mxu0 0.0
  %5166 = vmatpush2.msra.mxu0 0.0
  %5167 = vmatprep.subr.mxu0 0.0
  %5168 = vmatpush2.msra.mxu0 0.0
  %5169 = vmatprep.subr.mxu0 0.0
  %5170 = vmatpush2.msra.mxu0 0.0
  %5171 = vmatprep.subr.mxu0 0.0
  %5172 = vmatpush2.msra.mxu0 0.0
  %5173 = vmatprep.subr.mxu0 0.0
  %5174 = vmatpush2.msra.mxu0 0.0
  %5175 = vmatprep.subr.mxu0 0.0
  %5176 = vmatpush2.msra.mxu0 0.0
  %5177 = vmatprep.subr.mxu0 0.0
  %5178 = vmatpush2.msra.mxu0 0.0
  %5179 = vmatprep.subr.mxu0 0.0
  %5180 = vmatpush2.msra.mxu0 0.0
  %5181 = vmatprep.subr.mxu0 0.0
  %5182 = vmatpush2.msra.mxu0 0.0
  %5183 = vmatprep.subr.mxu0 0.0
  %5184 = vmatpush2.msra.mxu0 0.0
  %5185 = vmatprep.subr.mxu0 0.0
  %5186 = vmatpush2.msra.mxu0 0.0
  %5187 = vmatprep.subr.mxu0 0.0
  %5188 = vmatpush2.msra.mxu0 0.0
  %5189 = vmatprep.subr.mxu0 0.0
  %5190 = vmatpush2.msra.mxu0 0.0
  %5191 = vmatprep.subr.mxu0 0.0
  %5192 = vmatpush2.msra.mxu0 0.0
  %5193 = vmatprep.subr.mxu0 0.0
  %5194 = vmatpush2.msra.mxu0 0.0
  %5195 = vmatprep.subr.mxu0 0.0
  %5196 = vmatpush2.msra.mxu0 0.0
  %5197 = vmatprep.mubr.f32.mxu0 0.0
  %5198 = vmatmul.mubr.f32.gmra.mxu0 %v5061
  %v5199 = vpop.f32.mrf.mxu0
  %v5200 = vadd.f32 0.0, %v5199
  %v5201 = vpop.f32.mrf.mxu0
  %5202 = vdwg.mxu0
  %v5203 = vmul.f32 %v5200, 0.03125
  %v5204 = vmul.f32 %v5132, %v5132
  %v5205 = vsub.f32 %v5203, %v5204
  %v5206 = vadd.f32 %v5205, 1e-05
  %v5207 = vrsqrt.pop %v5206
  %v5208 = vmul.f32 %v5047, %v5207
  %v5209 = vmul.f32 %v5132, %v5208
  %v5210 = vsub.f32 %v5048, %v5209
  %v5212 = vsel %vm3389, %v5208, 0
  %5214 = vmatprep.subr.mxu0 0.0
  %5215 = vmatpush1.msra.mxu0 0.0
  %5216 = vmatprep.subr.mxu0 0.0
  %5217 = vmatpush1.msra.mxu0 0.0
  %5218 = vmatprep.subr.mxu0 0.0
  %5219 = vmatpush1.msra.mxu0 0.0
  %5220 = vmatprep.subr.mxu0 0.0
  %5221 = vmatpush1.msra.mxu0 0.0
  %5222 = vmatprep.subr.mxu0 0.0
  %5223 = vmatpush1.msra.mxu0 0.0
  %5224 = vmatprep.subr.mxu0 0.0
  %5225 = vmatpush1.msra.mxu0 0.0
  %5226 = vmatprep.subr.mxu0 0.0
  %5227 = vmatpush1.msra.mxu0 0.0
  %5228 = vmatprep.subr.mxu0 0.0
  %5229 = vmatpush1.msra.mxu0 0.0
  %5230 = vmatprep.subr.mxu0 0.0
  %5231 = vmatpush1.msra.mxu0 0.0
  %5232 = vmatprep.subr.mxu0 0.0
  %5233 = vmatpush1.msra.mxu0 0.0
  %5234 = vmatprep.subr.mxu0 0.0
  %5235 = vmatpush1.msra.mxu0 0.0
  %5236 = vmatprep.subr.mxu0 0.0
  %5237 = vmatpush1.msra.mxu0 0.0
  %5238 = vmatprep.subr.mxu0 0.0
  %5239 = vmatpush1.msra.mxu0 %v5046
  %5240 = vmatprep.subr.mxu0 0.0
  %5241 = vmatpush1.msra.mxu0 %v5045
  %5242 = vmatprep.subr.mxu0 0.0
  %5243 = vmatpush1.msra.mxu0 %v5044
  %5244 = vmatprep.subr.mxu0 0.0
  %5245 = vmatpush1.msra.mxu0 %v5043
  %5246 = vmatprep.subr.mxu0 0.0
  %5247 = vmatpush2.msra.mxu0 0.0
  %5248 = vmatprep.subr.mxu0 0.0
  %5249 = vmatpush2.msra.mxu0 0.0
  %5250 = vmatprep.subr.mxu0 0.0
  %5251 = vmatpush2.msra.mxu0 0.0
  %5252 = vmatprep.subr.mxu0 0.0
  %5253 = vmatpush2.msra.mxu0 0.0
  %5254 = vmatprep.subr.mxu0 0.0
  %5255 = vmatpush2.msra.mxu0 0.0
  %5256 = vmatprep.subr.mxu0 0.0
  %5257 = vmatpush2.msra.mxu0 0.0
  %5258 = vmatprep.subr.mxu0 0.0
  %5259 = vmatpush2.msra.mxu0 0.0
  %5260 = vmatprep.subr.mxu0 0.0
  %5261 = vmatpush2.msra.mxu0 0.0
  %5262 = vmatprep.subr.mxu0 0.0
  %5263 = vmatpush2.msra.mxu0 0.0
  %5264 = vmatprep.subr.mxu0 0.0
  %5265 = vmatpush2.msra.mxu0 0.0
  %5266 = vmatprep.subr.mxu0 0.0
  %5267 = vmatpush2.msra.mxu0 0.0
  %5268 = vmatprep.subr.mxu0 0.0
  %5269 = vmatpush2.msra.mxu0 0.0
  %5270 = vmatprep.subr.mxu0 0.0
  %5271 = vmatpush2.msra.mxu0 0.0
  %5272 = vmatprep.subr.mxu0 0.0
  %5273 = vmatpush2.msra.mxu0 0.0
  %5274 = vmatprep.subr.mxu0 0.0
  %5275 = vmatpush2.msra.mxu0 0.0
  %5276 = vmatprep.subr.mxu0 0.0
  %5277 = vmatpush2.msra.mxu0 0.0
  %5278 = vmatprep.mubr.f32.mxu0 0.0
  %5279 = vmatmul.mubr.f32.gmra.mxu0 %v5212
  %v5280 = vpop.f32.mrf.mxu0
  %v5281 = vadd.f32 0.0, %v5280
  %v5282 = vpop.f32.mrf.mxu0
  %5283 = vdwg.mxu0
  %v5284 = vlaneseq
  %v5285 = vshrl.u32 %v5284, 7
  %v5286 = vsub.s32 0, %v5285
  %v5287 = vrot.slane %v5281, %v5286
  %v5288 = vmul.f32 %v5026, %v5287
  %v5290 = vsel %vm3389, %v5210, 0
  %5292 = vmatprep.subr.mxu0 0.0
  %5293 = vmatpush1.msra.mxu0 0.0
  %5294 = vmatprep.subr.mxu0 0.0
  %5295 = vmatpush1.msra.mxu0 0.0
  %5296 = vmatprep.subr.mxu0 0.0
  %5297 = vmatpush1.msra.mxu0 0.0
  %5298 = vmatprep.subr.mxu0 0.0
  %5299 = vmatpush1.msra.mxu0 0.0
  %5300 = vmatprep.subr.mxu0 0.0
  %5301 = vmatpush1.msra.mxu0 0.0
  %5302 = vmatprep.subr.mxu0 0.0
  %5303 = vmatpush1.msra.mxu0 0.0
  %5304 = vmatprep.subr.mxu0 0.0
  %5305 = vmatpush1.msra.mxu0 0.0
  %5306 = vmatprep.subr.mxu0 0.0
  %5307 = vmatpush1.msra.mxu0 0.0
  %5308 = vmatprep.subr.mxu0 0.0
  %5309 = vmatpush1.msra.mxu0 0.0
  %5310 = vmatprep.subr.mxu0 0.0
  %5311 = vmatpush1.msra.mxu0 0.0
  %5312 = vmatprep.subr.mxu0 0.0
  %5313 = vmatpush1.msra.mxu0 0.0
  %5314 = vmatprep.subr.mxu0 0.0
  %5315 = vmatpush1.msra.mxu0 0.0
  %5316 = vmatprep.subr.mxu0 0.0
  %5317 = vmatpush1.msra.mxu0 %v5046
  %5318 = vmatprep.subr.mxu0 0.0
  %5319 = vmatpush1.msra.mxu0 %v5045
  %5320 = vmatprep.subr.mxu0 0.0
  %5321 = vmatpush1.msra.mxu0 %v5044
  %5322 = vmatprep.subr.mxu0 0.0
  %5323 = vmatpush1.msra.mxu0 %v5043
  %5324 = vmatprep.subr.mxu0 0.0
  %5325 = vmatpush2.msra.mxu0 0.0
  %5326 = vmatprep.subr.mxu0 0.0
  %5327 = vmatpush2.msra.mxu0 0.0
  %5328 = vmatprep.subr.mxu0 0.0
  %5329 = vmatpush2.msra.mxu0 0.0
  %5330 = vmatprep.subr.mxu0 0.0
  %5331 = vmatpush2.msra.mxu0 0.0
  %5332 = vmatprep.subr.mxu0 0.0
  %5333 = vmatpush2.msra.mxu0 0.0
  %5334 = vmatprep.subr.mxu0 0.0
  %5335 = vmatpush2.msra.mxu0 0.0
  %5336 = vmatprep.subr.mxu0 0.0
  %5337 = vmatpush2.msra.mxu0 0.0
  %5338 = vmatprep.subr.mxu0 0.0
  %5339 = vmatpush2.msra.mxu0 0.0
  %5340 = vmatprep.subr.mxu0 0.0
  %5341 = vmatpush2.msra.mxu0 0.0
  %5342 = vmatprep.subr.mxu0 0.0
  %5343 = vmatpush2.msra.mxu0 0.0
  %5344 = vmatprep.subr.mxu0 0.0
  %5345 = vmatpush2.msra.mxu0 0.0
  %5346 = vmatprep.subr.mxu0 0.0
  %5347 = vmatpush2.msra.mxu0 0.0
  %5348 = vmatprep.subr.mxu0 0.0
  %5349 = vmatpush2.msra.mxu0 0.0
  %5350 = vmatprep.subr.mxu0 0.0
  %5351 = vmatpush2.msra.mxu0 0.0
  %5352 = vmatprep.subr.mxu0 0.0
  %5353 = vmatpush2.msra.mxu0 0.0
  %5354 = vmatprep.subr.mxu0 0.0
  %5355 = vmatpush2.msra.mxu0 0.0
  %5356 = vmatprep.mubr.f32.mxu0 0.0
  %5357 = vmatmul.mubr.f32.gmra.mxu0 %v5290
  %v5358 = vpop.f32.mrf.mxu0
  %v5359 = vadd.f32 0.0, %v5358
  %v5360 = vpop.f32.mrf.mxu0
  %5361 = vdwg.mxu0
  %v5362 = vlaneseq
  %v5363 = vshrl.u32 %v5362, 7
  %v5364 = vsub.s32 0, %v5363
  %v5365 = vrot.slane %v5359, %v5364
  %v5366 = vadd.f32 %v5288, %v5365
  %vm5367 = vcmp.gt.f32.partialorder %v5366, 0.0
  %v5368 = vmul.f32 %v5366, 0.2
  %v5369 = vsel %vm5367, %v5366, %v5368
  %v5370 = vpack.c.bf16 %v5369, %v5369
  %v5371 = vld [vmem:[%s26] sm:$0xf]
  %v5372 = vld [vmem:[%s26 + $0x4] sm:$0xf]
  %v5373 = vld [vmem:[%s26 + $0x8] sm:$0xf]
  %v5374 = vld [vmem:[%s26 + $0xc] sm:$0xf]
  %v5375 = vld [vmem:[%s26 + $0x10] sm:$0xf]
  %v5376 = vld [vmem:[%s26 + $0x14] sm:$0xf]
  %v5377 = vld [vmem:[%s26 + $0x18] sm:$0xf]
  %v5378 = vld [vmem:[%s26 + $0x1c] sm:$0xf]
  %v5379 = vld [vmem:[%s26 + $0x20] sm:$0xf]
  %v5380 = vld [vmem:[%s26 + $0x24] sm:$0xf]
  %v5381 = vld [vmem:[%s26 + $0x28] sm:$0xf]
  %v5382 = vld [vmem:[%s26 + $0x2c] sm:$0xf]
  %v5383 = vld [vmem:[%s26 + $0x30] sm:$0xf]
  %v5384 = vld [vmem:[%s26 + $0x34] sm:$0xf]
  %v5385 = vld [vmem:[%s26 + $0x38] sm:$0xf]
  %v5386 = vld [vmem:[%s26 + $0x3c] sm:$0xf]
  %v5403 = vunpack.c.l.b16 %v5371
  %v5404 = vunpack.c.l.b16 %v5372
  %v5405 = vunpack.c.l.b16 %v5373
  %v5406 = vunpack.c.l.b16 %v5374
  %v5407 = vunpack.c.l.b16 %v5375
  %v5408 = vunpack.c.l.b16 %v5376
  %v5409 = vunpack.c.l.b16 %v5377
  %v5410 = vunpack.c.l.b16 %v5378
  %v5411 = vunpack.c.l.b16 %v5379
  %v5412 = vunpack.c.l.b16 %v5380
  %v5413 = vunpack.c.l.b16 %v5381
  %v5414 = vunpack.c.l.b16 %v5382
  %v5415 = vunpack.c.l.b16 %v5383
  %v5416 = vunpack.c.l.b16 %v5384
  %v5417 = vunpack.c.l.b16 %v5385
  %v5418 = vunpack.c.l.b16 %v5386
  %v5419 = vpack.c.b16 %v5404, %v5403
  %v5420 = vpack.c.b16 %v5406, %v5405
  %v5421 = vpack.c.b16 %v5408, %v5407
  %v5422 = vpack.c.b16 %v5410, %v5409
  %v5423 = vpack.c.b16 %v5412, %v5411
  %v5424 = vpack.c.b16 %v5414, %v5413
  %v5425 = vpack.c.b16 %v5416, %v5415
  %v5426 = vpack.c.b16 %v5418, %v5417
  %5435 = vmatprep.subr.bf16.mxu0 0
  %5436 = vmatpush1.bf16.msra.mxu0 %v5426
  %5437 = vmatprep.subr.bf16.mxu0 0
  %5438 = vmatpush1.bf16.msra.mxu0 %v5425
  %5439 = vmatprep.subr.bf16.mxu0 0
  %5440 = vmatpush1.bf16.msra.mxu0 %v5424
  %5441 = vmatprep.subr.bf16.mxu0 0
  %5442 = vmatpush1.bf16.msra.mxu0 %v5423
  %5443 = vmatprep.subr.bf16.mxu0 0
  %5444 = vmatpush1.bf16.msra.mxu0 %v5422
  %5445 = vmatprep.subr.bf16.mxu0 0
  %5446 = vmatpush1.bf16.msra.mxu0 %v5421
  %5447 = vmatprep.subr.bf16.mxu0 0
  %5448 = vmatpush1.bf16.msra.mxu0 %v5420
  %5449 = vmatprep.subr.bf16.mxu0 0
  %5450 = vmatpush1.bf16.msra.mxu0 %v5419
  %5451 = vmatprep.subr.bf16.mxu0 0
  %5452 = vmatpush2.bf16.msra.mxu0 0
  %5453 = vmatprep.subr.bf16.mxu0 0
  %5454 = vmatpush2.bf16.msra.mxu0 0
  %5455 = vmatprep.subr.bf16.mxu0 0
  %5456 = vmatpush2.bf16.msra.mxu0 0
  %5457 = vmatprep.subr.bf16.mxu0 0
  %5458 = vmatpush2.bf16.msra.mxu0 0
  %5459 = vmatprep.subr.bf16.mxu0 0
  %5460 = vmatpush2.bf16.msra.mxu0 0
  %5461 = vmatprep.subr.bf16.mxu0 0
  %5462 = vmatpush2.bf16.msra.mxu0 0
  %5463 = vmatprep.subr.bf16.mxu0 0
  %5464 = vmatpush2.bf16.msra.mxu0 0
  %5465 = vmatprep.subr.bf16.mxu0 0
  %5466 = vmatpush2.bf16.msra.mxu0 0
  %5467 = vmatprep.mubr.bf16.mxu0 0
  %5468 = vmatmul.mubr.bf16.gmra.mxu0 %v5370
  %v5469 = vpop.f32.mrf.mxu0
  %v5470 = vadd.f32 0.0, %v5469
  %v5471 = vpop.f32.mrf.mxu0
  %v5472 = vpop.f32.mrf.mxu0
  %v5473 = vpop.f32.mrf.mxu0
  %5474 = vdwg.mxu0
  %v5475 = vld [vmem:[%s25] sm:$0x3]
  %s5476 = scalar_lea.vmem %s26, 64
  %v5477 = vld [vmem:[%s5476] sm:$0xf]
  %v5478 = vld [vmem:[%s5476 + $0x4] sm:$0xf]
  %v5479 = vld [vmem:[%s5476 + $0x8] sm:$0xf]
  %v5480 = vld [vmem:[%s5476 + $0xc] sm:$0xf]
  %v5481 = vld [vmem:[%s5476 + $0x10] sm:$0xf]
  %v5482 = vld [vmem:[%s5476 + $0x14] sm:$0xf]
  %v5483 = vld [vmem:[%s5476 + $0x18] sm:$0xf]
  %v5484 = vld [vmem:[%s5476 + $0x1c] sm:$0xf]
  %v5485 = vld [vmem:[%s5476 + $0x20] sm:$0xf]
  %v5486 = vld [vmem:[%s5476 + $0x24] sm:$0xf]
  %v5487 = vld [vmem:[%s5476 + $0x28] sm:$0xf]
  %v5488 = vld [vmem:[%s5476 + $0x2c] sm:$0xf]
  %v5489 = vld [vmem:[%s5476 + $0x30] sm:$0xf]
  %v5490 = vld [vmem:[%s5476 + $0x34] sm:$0xf]
  %v5491 = vld [vmem:[%s5476 + $0x38] sm:$0xf]
  %v5492 = vld [vmem:[%s5476 + $0x3c] sm:$0xf]
  %v5509 = vunpack.c.l.b16 %v5477
  %v5510 = vunpack.c.l.b16 %v5478
  %v5511 = vunpack.c.l.b16 %v5479
  %v5512 = vunpack.c.l.b16 %v5480
  %v5513 = vunpack.c.l.b16 %v5481
  %v5514 = vunpack.c.l.b16 %v5482
  %v5515 = vunpack.c.l.b16 %v5483
  %v5516 = vunpack.c.l.b16 %v5484
  %v5517 = vunpack.c.l.b16 %v5485
  %v5518 = vunpack.c.l.b16 %v5486
  %v5519 = vunpack.c.l.b16 %v5487
  %v5520 = vunpack.c.l.b16 %v5488
  %v5521 = vunpack.c.l.b16 %v5489
  %v5522 = vunpack.c.l.b16 %v5490
  %v5523 = vunpack.c.l.b16 %v5491
  %v5524 = vunpack.c.l.b16 %v5492
  %v5525 = vpack.c.b16 %v5510, %v5509
  %v5526 = vpack.c.b16 %v5512, %v5511
  %v5527 = vpack.c.b16 %v5514, %v5513
  %v5528 = vpack.c.b16 %v5516, %v5515
  %v5529 = vpack.c.b16 %v5518, %v5517
  %v5530 = vpack.c.b16 %v5520, %v5519
  %v5531 = vpack.c.b16 %v5522, %v5521
  %v5532 = vpack.c.b16 %v5524, %v5523
  %5541 = vmatprep.subr.bf16.mxu0 0
  %5542 = vmatpush1.bf16.msra.mxu0 %v5532
  %5543 = vmatprep.subr.bf16.mxu0 0
  %5544 = vmatpush1.bf16.msra.mxu0 %v5531
  %5545 = vmatprep.subr.bf16.mxu0 0
  %5546 = vmatpush1.bf16.msra.mxu0 %v5530
  %5547 = vmatprep.subr.bf16.mxu0 0
  %5548 = vmatpush1.bf16.msra.mxu0 %v5529
  %5549 = vmatprep.subr.bf16.mxu0 0
  %5550 = vmatpush1.bf16.msra.mxu0 %v5528
  %5551 = vmatprep.subr.bf16.mxu0 0
  %5552 = vmatpush1.bf16.msra.mxu0 %v5527
  %5553 = vmatprep.subr.bf16.mxu0 0
  %5554 = vmatpush1.bf16.msra.mxu0 %v5526
  %5555 = vmatprep.subr.bf16.mxu0 0
  %5556 = vmatpush1.bf16.msra.mxu0 %v5525
  %5557 = vmatprep.subr.bf16.mxu0 0
  %5558 = vmatpush2.bf16.msra.mxu0 0
  %5559 = vmatprep.subr.bf16.mxu0 0
  %5560 = vmatpush2.bf16.msra.mxu0 0
  %5561 = vmatprep.subr.bf16.mxu0 0
  %5562 = vmatpush2.bf16.msra.mxu0 0
  %5563 = vmatprep.subr.bf16.mxu0 0
  %5564 = vmatpush2.bf16.msra.mxu0 0
  %5565 = vmatprep.subr.bf16.mxu0 0
  %5566 = vmatpush2.bf16.msra.mxu0 0
  %5567 = vmatprep.subr.bf16.mxu0 0
  %5568 = vmatpush2.bf16.msra.mxu0 0
  %5569 = vmatprep.subr.bf16.mxu0 0
  %5570 = vmatpush2.bf16.msra.mxu0 0
  %5571 = vmatprep.subr.bf16.mxu0 0
  %5572 = vmatpush2.bf16.msra.mxu0 0
  %5573 = vmatprep.mubr.bf16.mxu0 0
  %5574 = vmatmul.mubr.bf16.gmra.mxu0 %v5370
  %v5575 = vpop.f32.mrf.mxu0
  %v5576 = vadd.f32 0.0, %v5575
  %v5577 = vpop.f32.mrf.mxu0
  %v5578 = vpop.f32.mrf.mxu0
  %v5579 = vpop.f32.mrf.mxu0
  %5580 = vdwg.mxu0
  %s5581 = scalar_lea.vmem %s25, 2
  %v5582 = vld [vmem:[%s5581] sm:$0x3]
  %v5584 = vsel %vm2980, %v5582, 0
  %5586 = vmatprep.subr.mxu0 0.0
  %5587 = vmatpush1.msra.mxu0 0.0
  %5588 = vmatprep.subr.mxu0 0.0
  %5589 = vmatpush1.msra.mxu0 0.0
  %5590 = vmatprep.subr.mxu0 0.0
  %5591 = vmatpush1.msra.mxu0 0.0
  %5592 = vmatprep.subr.mxu0 0.0
  %5593 = vmatpush1.msra.mxu0 0.0
  %5594 = vmatprep.subr.mxu0 0.0
  %5595 = vmatpush1.msra.mxu0 0.0
  %5596 = vmatprep.subr.mxu0 0.0
  %5597 = vmatpush1.msra.mxu0 0.0
  %5598 = vmatprep.subr.mxu0 0.0
  %5599 = vmatpush1.msra.mxu0 0.0
  %5600 = vmatprep.subr.mxu0 0.0
  %5601 = vmatpush1.msra.mxu0 0.0
  %5602 = vmatprep.subr.mxu0 0.0
  %5603 = vmatpush1.msra.mxu0 0.0
  %5604 = vmatprep.subr.mxu0 0.0
  %5605 = vmatpush1.msra.mxu0 0.0
  %5606 = vmatprep.subr.mxu0 0.0
  %5607 = vmatpush1.msra.mxu0 0.0
  %5608 = vmatprep.subr.mxu0 0.0
  %5609 = vmatpush1.msra.mxu0 0.0
  %5610 = vmatprep.subr.mxu0 0.0
  %5611 = vmatpush1.msra.mxu0 0.0
  %5612 = vmatprep.subr.mxu0 0.0
  %5613 = vmatpush1.msra.mxu0 0.0
  %5614 = vmatprep.subr.mxu0 0.0
  %5615 = vmatpush1.msra.mxu0 0.0
  %5616 = vmatprep.subr.mxu0 0.0
  %5617 = vmatpush1.msra.mxu0 %v5576
  %5618 = vmatprep.subr.mxu0 0.0
  %5619 = vmatpush2.msra.mxu0 0.0
  %5620 = vmatprep.subr.mxu0 0.0
  %5621 = vmatpush2.msra.mxu0 0.0
  %5622 = vmatprep.subr.mxu0 0.0
  %5623 = vmatpush2.msra.mxu0 0.0
  %5624 = vmatprep.subr.mxu0 0.0
  %5625 = vmatpush2.msra.mxu0 0.0
  %5626 = vmatprep.subr.mxu0 0.0
  %5627 = vmatpush2.msra.mxu0 0.0
  %5628 = vmatprep.subr.mxu0 0.0
  %5629 = vmatpush2.msra.mxu0 0.0
  %5630 = vmatprep.subr.mxu0 0.0
  %5631 = vmatpush2.msra.mxu0 0.0
  %5632 = vmatprep.subr.mxu0 0.0
  %5633 = vmatpush2.msra.mxu0 0.0
  %5634 = vmatprep.subr.mxu0 0.0
  %5635 = vmatpush2.msra.mxu0 0.0
  %5636 = vmatprep.subr.mxu0 0.0
  %5637 = vmatpush2.msra.mxu0 0.0
  %5638 = vmatprep.subr.mxu0 0.0
  %5639 = vmatpush2.msra.mxu0 0.0
  %5640 = vmatprep.subr.mxu0 0.0
  %5641 = vmatpush2.msra.mxu0 0.0
  %5642 = vmatprep.subr.mxu0 0.0
  %5643 = vmatpush2.msra.mxu0 0.0
  %5644 = vmatprep.subr.mxu0 0.0
  %5645 = vmatpush2.msra.mxu0 0.0
  %5646 = vmatprep.subr.mxu0 0.0
  %5647 = vmatpush2.msra.mxu0 0.0
  %5648 = vmatprep.subr.mxu0 0.0
  %5649 = vmatpush2.msra.mxu0 0.0
  %5650 = vmatprep.mubr.f32.mxu0 0.0
  %5651 = vmatmul.mubr.f32.gmra.mxu0 %v5584
  %v5652 = vpop.f32.mrf.mxu0
  %v5653 = vadd.f32 0.0, %v5652
  %v5654 = vpop.f32.mrf.mxu0
  %5655 = vdwg.mxu0
  %v5657 = vsel %vm2980, %v5475, 0
  %5659 = vmatprep.subr.mxu0 0.0
  %5660 = vmatpush1.msra.mxu0 0.0
  %5661 = vmatprep.subr.mxu0 0.0
  %5662 = vmatpush1.msra.mxu0 0.0
  %5663 = vmatprep.subr.mxu0 0.0
  %5664 = vmatpush1.msra.mxu0 0.0
  %5665 = vmatprep.subr.mxu0 0.0
  %5666 = vmatpush1.msra.mxu0 0.0
  %5667 = vmatprep.subr.mxu0 0.0
  %5668 = vmatpush1.msra.mxu0 0.0
  %5669 = vmatprep.subr.mxu0 0.0
  %5670 = vmatpush1.msra.mxu0 0.0
  %5671 = vmatprep.subr.mxu0 0.0
  %5672 = vmatpush1.msra.mxu0 0.0
  %5673 = vmatprep.subr.mxu0 0.0
  %5674 = vmatpush1.msra.mxu0 0.0
  %5675 = vmatprep.subr.mxu0 0.0
  %5676 = vmatpush1.msra.mxu0 0.0
  %5677 = vmatprep.subr.mxu0 0.0
  %5678 = vmatpush1.msra.mxu0 0.0
  %5679 = vmatprep.subr.mxu0 0.0
  %5680 = vmatpush1.msra.mxu0 0.0
  %5681 = vmatprep.subr.mxu0 0.0
  %5682 = vmatpush1.msra.mxu0 0.0
  %5683 = vmatprep.subr.mxu0 0.0
  %5684 = vmatpush1.msra.mxu0 0.0
  %5685 = vmatprep.subr.mxu0 0.0
  %5686 = vmatpush1.msra.mxu0 0.0
  %5687 = vmatprep.subr.mxu0 0.0
  %5688 = vmatpush1.msra.mxu0 0.0
  %5689 = vmatprep.subr.mxu0 0.0
  %5690 = vmatpush1.msra.mxu0 %v5470
  %5691 = vmatprep.subr.mxu0 0.0
  %5692 = vmatpush2.msra.mxu0 0.0
  %5693 = vmatprep.subr.mxu0 0.0
  %5694 = vmatpush2.msra.mxu0 0.0
  %5695 = vmatprep.subr.mxu0 0.0
  %5696 = vmatpush2.msra.mxu0 0.0
  %5697 = vmatprep.subr.mxu0 0.0
  %5698 = vmatpush2.msra.mxu0 0.0
  %5699 = vmatprep.subr.mxu0 0.0
  %5700 = vmatpush2.msra.mxu0 0.0
  %5701 = vmatprep.subr.mxu0 0.0
  %5702 = vmatpush2.msra.mxu0 0.0
  %5703 = vmatprep.subr.mxu0 0.0
  %5704 = vmatpush2.msra.mxu0 0.0
  %5705 = vmatprep.subr.mxu0 0.0
  %5706 = vmatpush2.msra.mxu0 0.0
  %5707 = vmatprep.subr.mxu0 0.0
  %5708 = vmatpush2.msra.mxu0 0.0
  %5709 = vmatprep.subr.mxu0 0.0
  %5710 = vmatpush2.msra.mxu0 0.0
  %5711 = vmatprep.subr.mxu0 0.0
  %5712 = vmatpush2.msra.mxu0 0.0
  %5713 = vmatprep.subr.mxu0 0.0
  %5714 = vmatpush2.msra.mxu0 0.0
  %5715 = vmatprep.subr.mxu0 0.0
  %5716 = vmatpush2.msra.mxu0 0.0
  %5717 = vmatprep.subr.mxu0 0.0
  %5718 = vmatpush2.msra.mxu0 0.0
  %5719 = vmatprep.subr.mxu0 0.0
  %5720 = vmatpush2.msra.mxu0 0.0
  %5721 = vmatprep.subr.mxu0 0.0
  %5722 = vmatpush2.msra.mxu0 0.0
  %5723 = vmatprep.mubr.f32.mxu0 0.0
  %5724 = vmatmul.mubr.f32.gmra.mxu0 %v5657
  %v5725 = vpop.f32.mrf.mxu0
  %v5726 = vadd.f32 %v5653, %v5725
  %v5727 = vpop.f32.mrf.mxu0
  %5728 = vdwg.mxu0
  %s5729 = scalar_lea.vmem %s26, 128
  %v5730 = vld [vmem:[%s5729] sm:$0xf]
  %v5731 = vld [vmem:[%s5729 + $0x4] sm:$0xf]
  %v5732 = vld [vmem:[%s5729 + $0x8] sm:$0xf]
  %v5733 = vld [vmem:[%s5729 + $0xc] sm:$0xf]
  %v5734 = vld [vmem:[%s5729 + $0x10] sm:$0xf]
  %v5735 = vld [vmem:[%s5729 + $0x14] sm:$0xf]
  %v5736 = vld [vmem:[%s5729 + $0x18] sm:$0xf]
  %v5737 = vld [vmem:[%s5729 + $0x1c] sm:$0xf]
  %v5738 = vld [vmem:[%s5729 + $0x20] sm:$0xf]
  %v5739 = vld [vmem:[%s5729 + $0x24] sm:$0xf]
  %v5740 = vld [vmem:[%s5729 + $0x28] sm:$0xf]
  %v5741 = vld [vmem:[%s5729 + $0x2c] sm:$0xf]
  %v5742 = vld [vmem:[%s5729 + $0x30] sm:$0xf]
  %v5743 = vld [vmem:[%s5729 + $0x34] sm:$0xf]
  %v5744 = vld [vmem:[%s5729 + $0x38] sm:$0xf]
  %v5745 = vld [vmem:[%s5729 + $0x3c] sm:$0xf]
  %v5762 = vunpack.c.l.b16 %v5730
  %v5763 = vunpack.c.l.b16 %v5731
  %v5764 = vunpack.c.l.b16 %v5732
  %v5765 = vunpack.c.l.b16 %v5733
  %v5766 = vunpack.c.l.b16 %v5734
  %v5767 = vunpack.c.l.b16 %v5735
  %v5768 = vunpack.c.l.b16 %v5736
  %v5769 = vunpack.c.l.b16 %v5737
  %v5770 = vunpack.c.l.b16 %v5738
  %v5771 = vunpack.c.l.b16 %v5739
  %v5772 = vunpack.c.l.b16 %v5740
  %v5773 = vunpack.c.l.b16 %v5741
  %v5774 = vunpack.c.l.b16 %v5742
  %v5775 = vunpack.c.l.b16 %v5743
  %v5776 = vunpack.c.l.b16 %v5744
  %v5777 = vunpack.c.l.b16 %v5745
  %v5778 = vpack.c.b16 %v5763, %v5762
  %v5779 = vpack.c.b16 %v5765, %v5764
  %v5780 = vpack.c.b16 %v5767, %v5766
  %v5781 = vpack.c.b16 %v5769, %v5768
  %v5782 = vpack.c.b16 %v5771, %v5770
  %v5783 = vpack.c.b16 %v5773, %v5772
  %v5784 = vpack.c.b16 %v5775, %v5774
  %v5785 = vpack.c.b16 %v5777, %v5776
  %5794 = vmatprep.subr.bf16.mxu0 0
  %5795 = vmatpush1.bf16.msra.mxu0 %v5785
  %5796 = vmatprep.subr.bf16.mxu0 0
  %5797 = vmatpush1.bf16.msra.mxu0 %v5784
  %5798 = vmatprep.subr.bf16.mxu0 0
  %5799 = vmatpush1.bf16.msra.mxu0 %v5783
  %5800 = vmatprep.subr.bf16.mxu0 0
  %5801 = vmatpush1.bf16.msra.mxu0 %v5782
  %5802 = vmatprep.subr.bf16.mxu0 0
  %5803 = vmatpush1.bf16.msra.mxu0 %v5781
  %5804 = vmatprep.subr.bf16.mxu0 0
  %5805 = vmatpush1.bf16.msra.mxu0 %v5780
  %5806 = vmatprep.subr.bf16.mxu0 0
  %5807 = vmatpush1.bf16.msra.mxu0 %v5779
  %5808 = vmatprep.subr.bf16.mxu0 0
  %5809 = vmatpush1.bf16.msra.mxu0 %v5778
  %5810 = vmatprep.subr.bf16.mxu0 0
  %5811 = vmatpush2.bf16.msra.mxu0 0
  %5812 = vmatprep.subr.bf16.mxu0 0
  %5813 = vmatpush2.bf16.msra.mxu0 0
  %5814 = vmatprep.subr.bf16.mxu0 0
  %5815 = vmatpush2.bf16.msra.mxu0 0
  %5816 = vmatprep.subr.bf16.mxu0 0
  %5817 = vmatpush2.bf16.msra.mxu0 0
  %5818 = vmatprep.subr.bf16.mxu0 0
  %5819 = vmatpush2.bf16.msra.mxu0 0
  %5820 = vmatprep.subr.bf16.mxu0 0
  %5821 = vmatpush2.bf16.msra.mxu0 0
  %5822 = vmatprep.subr.bf16.mxu0 0
  %5823 = vmatpush2.bf16.msra.mxu0 0
  %5824 = vmatprep.subr.bf16.mxu0 0
  %5825 = vmatpush2.bf16.msra.mxu0 0
  %5826 = vmatprep.mubr.bf16.mxu0 0
  %5827 = vmatmul.mubr.bf16.gmra.mxu0 %v5370
  %v5828 = vpop.f32.mrf.mxu0
  %v5829 = vadd.f32 0.0, %v5828
  %v5830 = vpop.f32.mrf.mxu0
  %v5831 = vpop.f32.mrf.mxu0
  %v5832 = vpop.f32.mrf.mxu0
  %5833 = vdwg.mxu0
  %s5834 = scalar_lea.vmem %s25, 4
  %v5835 = vld [vmem:[%s5834] sm:$0x3]
  %v5837 = vsel %vm2980, %v5835, 0
  %5839 = vmatprep.subr.mxu0 0.0
  %5840 = vmatpush1.msra.mxu0 0.0
  %5841 = vmatprep.subr.mxu0 0.0
  %5842 = vmatpush1.msra.mxu0 0.0
  %5843 = vmatprep.subr.mxu0 0.0
  %5844 = vmatpush1.msra.mxu0 0.0
  %5845 = vmatprep.subr.mxu0 0.0
  %5846 = vmatpush1.msra.mxu0 0.0
  %5847 = vmatprep.subr.mxu0 0.0
  %5848 = vmatpush1.msra.mxu0 0.0
  %5849 = vmatprep.subr.mxu0 0.0
  %5850 = vmatpush1.msra.mxu0 0.0
  %5851 = vmatprep.subr.mxu0 0.0
  %5852 = vmatpush1.msra.mxu0 0.0
  %5853 = vmatprep.subr.mxu0 0.0
  %5854 = vmatpush1.msra.mxu0 0.0
  %5855 = vmatprep.subr.mxu0 0.0
  %5856 = vmatpush1.msra.mxu0 0.0
  %5857 = vmatprep.subr.mxu0 0.0
  %5858 = vmatpush1.msra.mxu0 0.0
  %5859 = vmatprep.subr.mxu0 0.0
  %5860 = vmatpush1.msra.mxu0 0.0
  %5861 = vmatprep.subr.mxu0 0.0
  %5862 = vmatpush1.msra.mxu0 0.0
  %5863 = vmatprep.subr.mxu0 0.0
  %5864 = vmatpush1.msra.mxu0 0.0
  %5865 = vmatprep.subr.mxu0 0.0
  %5866 = vmatpush1.msra.mxu0 0.0
  %5867 = vmatprep.subr.mxu0 0.0
  %5868 = vmatpush1.msra.mxu0 0.0
  %5869 = vmatprep.subr.mxu0 0.0
  %5870 = vmatpush1.msra.mxu0 %v5829
  %5871 = vmatprep.subr.mxu0 0.0
  %5872 = vmatpush2.msra.mxu0 0.0
  %5873 = vmatprep.subr.mxu0 0.0
  %5874 = vmatpush2.msra.mxu0 0.0
  %5875 = vmatprep.subr.mxu0 0.0
  %5876 = vmatpush2.msra.mxu0 0.0
  %5877 = vmatprep.subr.mxu0 0.0
  %5878 = vmatpush2.msra.mxu0 0.0
  %5879 = vmatprep.subr.mxu0 0.0
  %5880 = vmatpush2.msra.mxu0 0.0
  %5881 = vmatprep.subr.mxu0 0.0
  %5882 = vmatpush2.msra.mxu0 0.0
  %5883 = vmatprep.subr.mxu0 0.0
  %5884 = vmatpush2.msra.mxu0 0.0
  %5885 = vmatprep.subr.mxu0 0.0
  %5886 = vmatpush2.msra.mxu0 0.0
  %5887 = vmatprep.subr.mxu0 0.0
  %5888 = vmatpush2.msra.mxu0 0.0
  %5889 = vmatprep.subr.mxu0 0.0
  %5890 = vmatpush2.msra.mxu0 0.0
  %5891 = vmatprep.subr.mxu0 0.0
  %5892 = vmatpush2.msra.mxu0 0.0
  %5893 = vmatprep.subr.mxu0 0.0
  %5894 = vmatpush2.msra.mxu0 0.0
  %5895 = vmatprep.subr.mxu0 0.0
  %5896 = vmatpush2.msra.mxu0 0.0
  %5897 = vmatprep.subr.mxu0 0.0
  %5898 = vmatpush2.msra.mxu0 0.0
  %5899 = vmatprep.subr.mxu0 0.0
  %5900 = vmatpush2.msra.mxu0 0.0
  %5901 = vmatprep.subr.mxu0 0.0
  %5902 = vmatpush2.msra.mxu0 0.0
  %5903 = vmatprep.mubr.f32.mxu0 0.0
  %5904 = vmatmul.mubr.f32.gmra.mxu0 %v5837
  %v5905 = vpop.f32.mrf.mxu0
  %v5906 = vadd.f32 0.0, %v5905
  %v5907 = vpop.f32.mrf.mxu0
  %5908 = vdwg.mxu0
  %v5909 = vadd.f32 %v5726, %v5906
  %s5910 = scalar_lea.vmem %s26, 192
  %v5911 = vld [vmem:[%s5910] sm:$0xf]
  %v5912 = vld [vmem:[%s5910 + $0x4] sm:$0xf]
  %v5913 = vld [vmem:[%s5910 + $0x8] sm:$0xf]
  %v5914 = vld [vmem:[%s5910 + $0xc] sm:$0xf]
  %v5915 = vld [vmem:[%s5910 + $0x10] sm:$0xf]
  %v5916 = vld [vmem:[%s5910 + $0x14] sm:$0xf]
  %v5917 = vld [vmem:[%s5910 + $0x18] sm:$0xf]
  %v5918 = vld [vmem:[%s5910 + $0x1c] sm:$0xf]
  %v5919 = vld [vmem:[%s5910 + $0x20] sm:$0xf]
  %v5920 = vld [vmem:[%s5910 + $0x24] sm:$0xf]
  %v5921 = vld [vmem:[%s5910 + $0x28] sm:$0xf]
  %v5922 = vld [vmem:[%s5910 + $0x2c] sm:$0xf]
  %v5923 = vld [vmem:[%s5910 + $0x30] sm:$0xf]
  %v5924 = vld [vmem:[%s5910 + $0x34] sm:$0xf]
  %v5925 = vld [vmem:[%s5910 + $0x38] sm:$0xf]
  %v5926 = vld [vmem:[%s5910 + $0x3c] sm:$0xf]
  %v5943 = vunpack.c.l.b16 %v5911
  %v5944 = vunpack.c.l.b16 %v5912
  %v5945 = vunpack.c.l.b16 %v5913
  %v5946 = vunpack.c.l.b16 %v5914
  %v5947 = vunpack.c.l.b16 %v5915
  %v5948 = vunpack.c.l.b16 %v5916
  %v5949 = vunpack.c.l.b16 %v5917
  %v5950 = vunpack.c.l.b16 %v5918
  %v5951 = vunpack.c.l.b16 %v5919
  %v5952 = vunpack.c.l.b16 %v5920
  %v5953 = vunpack.c.l.b16 %v5921
  %v5954 = vunpack.c.l.b16 %v5922
  %v5955 = vunpack.c.l.b16 %v5923
  %v5956 = vunpack.c.l.b16 %v5924
  %v5957 = vunpack.c.l.b16 %v5925
  %v5958 = vunpack.c.l.b16 %v5926
  %v5959 = vpack.c.b16 %v5944, %v5943
  %v5960 = vpack.c.b16 %v5946, %v5945
  %v5961 = vpack.c.b16 %v5948, %v5947
  %v5962 = vpack.c.b16 %v5950, %v5949
  %v5963 = vpack.c.b16 %v5952, %v5951
  %v5964 = vpack.c.b16 %v5954, %v5953
  %v5965 = vpack.c.b16 %v5956, %v5955
  %v5966 = vpack.c.b16 %v5958, %v5957
  %5975 = vmatprep.subr.bf16.mxu0 0
  %5976 = vmatpush1.bf16.msra.mxu0 %v5966
  %5977 = vmatprep.subr.bf16.mxu0 0
  %5978 = vmatpush1.bf16.msra.mxu0 %v5965
  %5979 = vmatprep.subr.bf16.mxu0 0
  %5980 = vmatpush1.bf16.msra.mxu0 %v5964
  %5981 = vmatprep.subr.bf16.mxu0 0
  %5982 = vmatpush1.bf16.msra.mxu0 %v5963
  %5983 = vmatprep.subr.bf16.mxu0 0
  %5984 = vmatpush1.bf16.msra.mxu0 %v5962
  %5985 = vmatprep.subr.bf16.mxu0 0
  %5986 = vmatpush1.bf16.msra.mxu0 %v5961
  %5987 = vmatprep.subr.bf16.mxu0 0
  %5988 = vmatpush1.bf16.msra.mxu0 %v5960
  %5989 = vmatprep.subr.bf16.mxu0 0
  %5990 = vmatpush1.bf16.msra.mxu0 %v5959
  %5991 = vmatprep.subr.bf16.mxu0 0
  %5992 = vmatpush2.bf16.msra.mxu0 0
  %5993 = vmatprep.subr.bf16.mxu0 0
  %5994 = vmatpush2.bf16.msra.mxu0 0
  %5995 = vmatprep.subr.bf16.mxu0 0
  %5996 = vmatpush2.bf16.msra.mxu0 0
  %5997 = vmatprep.subr.bf16.mxu0 0
  %5998 = vmatpush2.bf16.msra.mxu0 0
  %5999 = vmatprep.subr.bf16.mxu0 0
  %6000 = vmatpush2.bf16.msra.mxu0 0
  %6001 = vmatprep.subr.bf16.mxu0 0
  %6002 = vmatpush2.bf16.msra.mxu0 0
  %6003 = vmatprep.subr.bf16.mxu0 0
  %6004 = vmatpush2.bf16.msra.mxu0 0
  %6005 = vmatprep.subr.bf16.mxu0 0
  %6006 = vmatpush2.bf16.msra.mxu0 0
  %6007 = vmatprep.mubr.bf16.mxu0 0
  %6008 = vmatmul.mubr.bf16.gmra.mxu0 %v5370
  %v6009 = vpop.f32.mrf.mxu0
  %v6010 = vadd.f32 0.0, %v6009
  %v6011 = vpop.f32.mrf.mxu0
  %v6012 = vpop.f32.mrf.mxu0
  %v6013 = vpop.f32.mrf.mxu0
  %6014 = vdwg.mxu0
  %s6015 = scalar_lea.vmem %s25, 6
  %v6016 = vld [vmem:[%s6015] sm:$0x3]
  %v6018 = vsel %vm2980, %v6016, 0
  %6020 = vmatprep.subr.mxu0 0.0
  %6021 = vmatpush1.msra.mxu0 0.0
  %6022 = vmatprep.subr.mxu0 0.0
  %6023 = vmatpush1.msra.mxu0 0.0
  %6024 = vmatprep.subr.mxu0 0.0
  %6025 = vmatpush1.msra.mxu0 0.0
  %6026 = vmatprep.subr.mxu0 0.0
  %6027 = vmatpush1.msra.mxu0 0.0
  %6028 = vmatprep.subr.mxu0 0.0
  %6029 = vmatpush1.msra.mxu0 0.0
  %6030 = vmatprep.subr.mxu0 0.0
  %6031 = vmatpush1.msra.mxu0 0.0
  %6032 = vmatprep.subr.mxu0 0.0
  %6033 = vmatpush1.msra.mxu0 0.0
  %6034 = vmatprep.subr.mxu0 0.0
  %6035 = vmatpush1.msra.mxu0 0.0
  %6036 = vmatprep.subr.mxu0 0.0
  %6037 = vmatpush1.msra.mxu0 0.0
  %6038 = vmatprep.subr.mxu0 0.0
  %6039 = vmatpush1.msra.mxu0 0.0
  %6040 = vmatprep.subr.mxu0 0.0
  %6041 = vmatpush1.msra.mxu0 0.0
  %6042 = vmatprep.subr.mxu0 0.0
  %6043 = vmatpush1.msra.mxu0 0.0
  %6044 = vmatprep.subr.mxu0 0.0
  %6045 = vmatpush1.msra.mxu0 0.0
  %6046 = vmatprep.subr.mxu0 0.0
  %6047 = vmatpush1.msra.mxu0 0.0
  %6048 = vmatprep.subr.mxu0 0.0
  %6049 = vmatpush1.msra.mxu0 0.0
  %6050 = vmatprep.subr.mxu0 0.0
  %6051 = vmatpush1.msra.mxu0 %v6010
  %6052 = vmatprep.subr.mxu0 0.0
  %6053 = vmatpush2.msra.mxu0 0.0
  %6054 = vmatprep.subr.mxu0 0.0
  %6055 = vmatpush2.msra.mxu0 0.0
  %6056 = vmatprep.subr.mxu0 0.0
  %6057 = vmatpush2.msra.mxu0 0.0
  %6058 = vmatprep.subr.mxu0 0.0
  %6059 = vmatpush2.msra.mxu0 0.0
  %6060 = vmatprep.subr.mxu0 0.0
  %6061 = vmatpush2.msra.mxu0 0.0
  %6062 = vmatprep.subr.mxu0 0.0
  %6063 = vmatpush2.msra.mxu0 0.0
  %6064 = vmatprep.subr.mxu0 0.0
  %6065 = vmatpush2.msra.mxu0 0.0
  %6066 = vmatprep.subr.mxu0 0.0
  %6067 = vmatpush2.msra.mxu0 0.0
  %6068 = vmatprep.subr.mxu0 0.0
  %6069 = vmatpush2.msra.mxu0 0.0
  %6070 = vmatprep.subr.mxu0 0.0
  %6071 = vmatpush2.msra.mxu0 0.0
  %6072 = vmatprep.subr.mxu0 0.0
  %6073 = vmatpush2.msra.mxu0 0.0
  %6074 = vmatprep.subr.mxu0 0.0
  %6075 = vmatpush2.msra.mxu0 0.0
  %6076 = vmatprep.subr.mxu0 0.0
  %6077 = vmatpush2.msra.mxu0 0.0
  %6078 = vmatprep.subr.mxu0 0.0
  %6079 = vmatpush2.msra.mxu0 0.0
  %6080 = vmatprep.subr.mxu0 0.0
  %6081 = vmatpush2.msra.mxu0 0.0
  %6082 = vmatprep.subr.mxu0 0.0
  %6083 = vmatpush2.msra.mxu0 0.0
  %6084 = vmatprep.mubr.f32.mxu0 0.0
  %6085 = vmatmul.mubr.f32.gmra.mxu0 %v6018
  %v6086 = vpop.f32.mrf.mxu0
  %v6087 = vadd.f32 0.0, %v6086
  %v6088 = vpop.f32.mrf.mxu0
  %6089 = vdwg.mxu0
  %v6090 = vadd.f32 %v5909, %v6087
  %v6091 = vld [vmem:[#allocation2] sm:$0x1]
  %v6093 = vlaneseq
  %v6094 = vshrl.u32 %v6093, 7
  %v6095 = vsub.s32 0, %v6094
  %v6096 = vrot.slane %v6091, %v6095
  %v6098 = vadd.f32 %v6090, %v6096
  %v6099 = vxor.u32 %v6098, 2147483648
  %v6100 = vmul.f32 %v6099, 1.442695
  %v6101 = vpow.pop %v6100
  %v6102 = vadd.f32 %v6101, 1.0
  %v6103 = vrcp.pop %v6102
  %v6104 = vmul.f32 1.0, %v6103
  %vm6105 = vcmask 1024
  %6106 = vst.msk [vmem:[%s28] sm:$0x3] %vm6105, %v6104
  // Predicated region
  $region114: #{discriminator_forward.1} parent=0 // pred_check
    _
  $region115: #{discriminator_forward.1} parent=0 // pred_check_branch
    %6108 = sbr.rel (0) target = $region117
  $region116: #{discriminator_forward.1} parent=0 // pred_region
    _
  $region117: #{discriminator_forward.1} parent=0 // pred_fallthru
    _
  // Predicated region
  $region118: #{discriminator_forward.1} parent=0 // pred_check
    _
  $region119: #{discriminator_forward.1} parent=0 // pred_check_branch
    %6110 = sbr.rel (0) target = $region121
  $region120: #{discriminator_forward.1} parent=0 // pred_region
    _
  $region121: #{discriminator_forward.1} parent=0 // pred_fallthru
    _

</llo_original>
